<compile_context>
chip_gen: v6e
topology: v6e:2x2x1
jax: 0.10.0
libtpu: 0.0.40
codegen_flags: <defaults>
</compile_context>

<pallas_src>
import functools

import jax
import jax.numpy as jnp
from jax.experimental import pallas as pl
from jax.experimental.pallas import tpu as pltpu


# TODO(synk): the custom LayerNorm class is not shown in the spec; eps=1e-6 is
# the common tutorial value (PyTorch nn.LayerNorm default would be 1e-5).
_LN_EPS = 1e-6

# Fused parameter order fed to the kernel (wq|wk|wv pre-concatenated, scale
# pre-folded into the q columns).
_PARAM_ORDER = ("wqkv", "bqkv", "wo", "bo", "g1", "be1",
                "wf1", "bf1", "wf2", "bf2", "g2", "be2")
_ANY_PARAMS = ("wf1", "wf2")   # passed as raw HBM refs, DMA'd manually

_SINGLE_BUFFER_OK = None  # lazily probed: does pl.Buffered(1) lower here?


def _layer_norm(x, gamma, beta, eps=_LN_EPS):
    # LayerNorm over the last dim, f32 math (VPU).
    mu = jnp.mean(x, axis=-1, keepdims=True)
    var = jnp.mean((x - mu) ** 2, axis=-1, keepdims=True)
    return (x - mu) * jax.lax.rsqrt(var + eps) * gamma + beta


# --------------------------------------------------------------------------- #
# Kernel
# --------------------------------------------------------------------------- #
def encoder_block_kernel(
    x_ref,
    wqkv_ref, bqkv_ref,
    wo_ref, bo_ref,
    g1_ref, be1_ref,
    wf1_hbm, bf1_ref, wf2_hbm, bf2_ref,
    g2_ref, be2_ref,
    out_ref,
    attn_scratch, wf1_vmem, wf2_vmem, dma_sem,
    *, n_heads,
):
    Bb, S, D = x_ref.shape
    Dh = D // n_heads
    M = Bb * S

    first = pl.program_id(0) == 0

    # One-time prefetch of the two largest weights (FFN) into VMEM scratch,
    # overlapped with the QKV projection + attention below.  Scratch persists
    # across grid steps, so only step 0 fetches (grid is serial: "arbitrary").
    @pl.when(first)
    def _start_ffn_weight_dma():
        pltpu.make_async_copy(wf1_hbm, wf1_vmem, dma_sem.at[0]).start()
        pltpu.make_async_copy(wf2_hbm, wf2_vmem, dma_sem.at[1]).start()

    # f32 copy for residuals / LayerNorm (VPU math in f32); bf16 feed for MXU.
    x = x_ref[...].astype(jnp.float32).reshape(M, D)
    xb = x.astype(jnp.bfloat16)

    # --- fused QKV projection: one (M, D) @ (D, 3D) MXU matmul ---------------
    # The 1/sqrt(Dh) softmax scale is already folded into the q columns of
    # wqkv/bqkv by the wrapper; cast to bf16 ONCE for the attention matmuls.
    qkv = jnp.dot(xb, wqkv_ref[...], preferred_element_type=jnp.float32)
    qkv = (qkv + bqkv_ref[...]).astype(jnp.bfloat16)

    # --- multi-head self-attention ------------------------------------------
    # Batch tile stays the single leading batch dim of 3-D batched einsums (the
    # form Mosaic supports); heads are lane-aligned static slices (Dh = 128).
    # Per-head outputs are stored straight into the VMEM scratch at lane offset
    # h*Dh (no concat materialization; bounds live ranges).
    for h in range(n_heads):
        lo = h * Dh
        q = qkv[:, lo:lo + Dh].reshape(Bb, S, Dh)
        k = qkv[:, D + lo:D + lo + Dh].reshape(Bb, S, Dh)
        v = qkv[:, 2 * D + lo:2 * D + lo + Dh].reshape(Bb, S, Dh)

        s = jnp.einsum("bqd,bkd->bqk", q, k,
                       preferred_element_type=jnp.float32)        # (Bb,S,S)
        m = jnp.max(s, axis=-1, keepdims=True)
        p = jnp.exp(s - m)
        l = jnp.sum(p, axis=-1, keepdims=True)                    # (Bb,S,1)
        o = jnp.einsum("bqk,bkd->bqd", p.astype(jnp.bfloat16), v,
                       preferred_element_type=jnp.float32)        # (Bb,S,Dh)
        # Normalize AFTER PV: one EUP reciprocal instead of S*S VPU divides.
        o = o * pl.reciprocal(l, approx=True)
        attn_scratch[:, lo:lo + Dh] = o.reshape(M, Dh)

    # One full-width output projection over the concatenated heads.
    attn = jnp.dot(attn_scratch[...].astype(jnp.bfloat16), wo_ref[...],
                   preferred_element_type=jnp.float32) + bo_ref[...]

    # --- residual 1: x + LayerNorm1(attn)   (dropout = identity) -------------
    x1 = x + _layer_norm(attn, g1_ref[...], be1_ref[...])

    # FFN weights must have landed by now (step 0 only; later steps reuse).
    @pl.when(first)
    def _wait_ffn_weight_dma():
        pltpu.make_async_copy(wf1_hbm, wf1_vmem, dma_sem.at[0]).wait()
        pltpu.make_async_copy(wf2_hbm, wf2_vmem, dma_sem.at[1]).wait()

    # --- feed-forward: Linear -> ReLU -> Linear (full-width MXU matmuls) -----
    h1 = jnp.dot(x1.astype(jnp.bfloat16), wf1_vmem[...],
                 preferred_element_type=jnp.float32) + bf1_ref[...]
    h1 = jnp.maximum(h1, 0.0)
    ff = jnp.dot(h1.astype(jnp.bfloat16), wf2_vmem[...],
                 preferred_element_type=jnp.float32) + bf2_ref[...]

    # --- residual 2: x + LayerNorm2(ff) ---------------------------------------
    out = x1 + _layer_norm(ff, g2_ref[...], be2_ref[...])
    out_ref[...] = out.reshape(Bb, S, D).astype(out_ref.dtype)


# --------------------------------------------------------------------------- #
# Wrapper helpers
# --------------------------------------------------------------------------- #
def _single_buffer_supported():
    """Probe once whether pl.Buffered(1) (single-buffered invariant weights)
    lowers on this jax/Mosaic version. The real pallas_call is NOT wrapped in
    try/except — genuine lowering errors there fail loudly."""
    global _SINGLE_BUFFER_OK
    if _SINGLE_BUFFER_OK is None:
        try:
            def _k(x_ref, o_ref):
                o_ref[...] = x_ref[...] + 1.0
            y = pl.pallas_call(
                _k,
                out_shape=jax.ShapeDtypeStruct((8, 128), jnp.float32),
                grid=(2,),
                in_specs=[pl.BlockSpec((8, 128), lambda i: (0, 0),
                                       pipeline_mode=pl.Buffered(1))],
                out_specs=pl.BlockSpec((8, 128), lambda i: (0, 0)),
            )(jnp.zeros((8, 128), jnp.float32))
            jax.block_until_ready(y)
            _SINGLE_BUFFER_OK = True
        except Exception:
            _SINGLE_BUFFER_OK = False
    return _SINGLE_BUFFER_OK


def _vmem_cap_bytes():
    """~80% of physical per-core VMEM (102 MiB on v5e/v6e, ~51 MiB on v7x);
    conservative 64 MiB fallback if the query is unavailable."""
    phys = 64 << 20
    try:
        phys = int(pltpu.get_tpu_info().vmem_capacity_bytes)
    except Exception:
        pass
    return max(32 << 20, int(0.8 * phys))


def _vmem_estimate(bt, S, D, d_ff, x_itemsize, pipe_w_bytes, wf_scratch_bytes):
    """Generous per-step VMEM estimate including in-kernel intermediates."""
    M = bt * S
    io_blocks = 2 * 2 * M * D * x_itemsize          # in + out, double-buffered
    attn_scratch = M * D * 4                        # explicit f32 scratch
    # x/xb, qkv f32+bf16, residuals, ffn hidden, per-head score blocks (f32-eq).
    intermediates = 36 * M * D + 6 * M * d_ff + 10 * bt * S * S
    return pipe_w_bytes + wf_scratch_bytes + io_blocks + attn_scratch + intermediates


def _pick_batch_tile(B, S, D, d_ff, x_itemsize, pipe_w_bytes, wf_scratch_bytes,
                     cap, target_rows=256):
    """Pack batch elements so matmul M ~ target_rows (fills 256-wide v6e/v7x
    MXU).  Do NOT force >=2 grid steps — extra steps are pure overhead on
    single-TC chips.  Shrink only if the VMEM estimate exceeds the cap."""
    bt = max(1, min(B, max(1, target_rows // max(S, 1))))
    while B % bt:
        bt -= 1
    while bt > 1 and _vmem_estimate(bt, S, D, d_ff, x_itemsize,
                                    pipe_w_bytes, wf_scratch_bytes) > cap:
        bt -= 1
        while B % bt:
            bt -= 1
    return bt


def _fuse_block_params(p, n_heads):
    """Pre-concatenate wq|wk|wv (scale folded into q) and the biases; cast
    matmul weights to bf16 (MXU-native)."""
    D = p["wq"].shape[0]
    Dh = D // n_heads
    scale = float(1.0 / (Dh ** 0.5))
    bf16, f32 = jnp.bfloat16, jnp.float32
    wq = (p["wq"].astype(f32) * scale).astype(bf16)
    wqkv = jnp.concatenate([wq, p["wk"].astype(bf16), p["wv"].astype(bf16)], axis=1)
    bqkv = jnp.concatenate([p["bq"].astype(f32) * scale,
                            p["bk"].astype(f32), p["bv"].astype(f32)], axis=1)
    return {
        "wqkv": wqkv, "bqkv": bqkv,
        "wo": p["wo"].astype(bf16), "bo": p["bo"].astype(f32),
        "g1": p["g1"].astype(f32), "be1": p["be1"].astype(f32),
        "wf1": p["wf1"].astype(bf16), "bf1": p["bf1"].astype(f32),
        "wf2": p["wf2"].astype(bf16), "bf2": p["bf2"].astype(f32),
        "g2": p["g2"].astype(f32), "be2": p["be2"].astype(f32),
    }


# --------------------------------------------------------------------------- #
# Per-block Pallas call
# --------------------------------------------------------------------------- #
def encoder_block_pallas(x, fused, *, n_heads, batch_tile=None):
    B, S, D = x.shape
    d_ff = fused["wf1"].shape[1]
    weights = [fused[name] for name in _PARAM_ORDER]
    kernel = functools.partial(encoder_block_kernel, n_heads=n_heads)

    single_buf = _single_buffer_supported()
    buf_count = 1 if single_buf else 2
    pipe_w_bytes = buf_count * sum(
        int(fused[n].size) * fused[n].dtype.itemsize
        for n in _PARAM_ORDER if n not in _ANY_PARAMS)
    wf_scratch_bytes = sum(int(fused[n].size) * fused[n].dtype.itemsize
                           for n in _ANY_PARAMS)

    cap = _vmem_cap_bytes()
    if batch_tile is None:
        batch_tile = _pick_batch_tile(B, S, D, d_ff, x.dtype.itemsize,
                                      pipe_w_bytes, wf_scratch_bytes, cap)
    needed = _vmem_estimate(batch_tile, S, D, d_ff, x.dtype.itemsize,
                            pipe_w_bytes, wf_scratch_bytes)
    vmem_limit = int(min(cap, max(2 * needed, 32 << 20)))

    # --- advisory cost estimate (helps XLA schedule the chain of blocks) -----
    flops = (8 * B * S * D * D          # QKV + output projections
             + 4 * B * S * S * D        # scores + PV (all heads)
             + 4 * B * S * D * d_ff)    # FFN
    transcendentals = B * n_heads * S * S + 4 * B * S
    weight_bytes = sum(int(w.size) * w.dtype.itemsize for w in weights)
    bytes_accessed = 2 * int(x.size) * x.dtype.itemsize + weight_bytes

    def _weight_spec(w):
        # All fused params are 2-D; invariant across the grid.
        if single_buf:
            return pl.BlockSpec(w.shape, lambda b: (0, 0),
                                pipeline_mode=pl.Buffered(1))
        return pl.BlockSpec(w.shape, lambda b: (0, 0))

    in_specs = [pl.BlockSpec((batch_tile, S, D), lambda b: (b, 0, 0))]
    for name, w in zip(_PARAM_ORDER, weights):
        if name in _ANY_PARAMS:
            # Raw HBM ref; DMA'd manually inside the kernel (overlapped).
            in_specs.append(pl.BlockSpec(memory_space=pl.ANY))
        else:
            in_specs.append(_weight_spec(w))

    return pl.pallas_call(
        kernel,
        out_shape=jax.ShapeDtypeStruct((B, S, D), x.dtype),
        grid_spec=pltpu.PrefetchScalarGridSpec(
            num_scalar_prefetch=0,
            grid=(B // batch_tile,),
            in_specs=in_specs,
            out_specs=pl.BlockSpec((batch_tile, S, D), lambda b: (b, 0, 0)),
            scratch_shapes=[
                pltpu.VMEM((batch_tile * S, D), jnp.float32),   # head concat
                pltpu.VMEM(fused["wf1"].shape, fused["wf1"].dtype),
                pltpu.VMEM(fused["wf2"].shape, fused["wf2"].dtype),
                pltpu.SemaphoreType.DMA((2,)),
            ],
        ),
        compiler_params=pltpu.CompilerParams(
            # Serial grid: the one-time FFN-weight prefetch is gated on
            # program_id(0)==0 and reused from scratch on later steps.
            # (Measured parallel vs arbitrary ~0% on single-TC chips anyway.)
            dimension_semantics=("arbitrary",),
            vmem_limit_bytes=vmem_limit,
        ),
        cost_estimate=pl.CostEstimate(
            flops=int(flops),
            transcendentals=int(transcendentals),
            bytes_accessed=int(bytes_accessed),
        ),
    )(x, *weights)


def transformer_encoder_pallas(x, block_params_list, *, n_heads):
    # n_blocks sequential EncoderBlocks; each block is one fused Pallas call.
    # TODO(synk): cross-call (P10) prefetch of the next block's weights.
    for params in block_params_list:
        fused = _fuse_block_params(params, n_heads)
        x = encoder_block_pallas(x, fused, n_heads=n_heads)
    return x


# --------------------------------------------------------------------------- #
# Pure-JAX reference (mirrors the kernel's bf16-matmul / f32-accum math)
# --------------------------------------------------------------------------- #
def encoder_block_ref(x, p, *, n_heads):
    B, S, D = x.shape
    Dh = D // n_heads
    f32, bf16 = jnp.float32, jnp.bfloat16

    def mm(a, w):
        return jnp.dot(a.astype(bf16), w.astype(bf16), preferred_element_type=f32)

    x = x.astype(f32)
    q = (mm(x, p["wq"]) + p["bq"]) * (1.0 / (Dh ** 0.5))
    k = mm(x, p["wk"]) + p["bk"]
    v = mm(x, p["wv"]) + p["bv"]

    def heads(t):
        return t.reshape(B, S, n_heads, Dh).transpose(0, 2, 1, 3)

    qh, kh, vh = heads(q), heads(k), heads(v)
    s = jnp.einsum("bhqd,bhkd->bhqk", qh.astype(bf16), kh.astype(bf16),
                   preferred_element_type=f32)
    m = jnp.max(s, axis=-1, keepdims=True)
    pe = jnp.exp(s - m)
    l = jnp.sum(pe, axis=-1, keepdims=True)
    o = jnp.einsum("bhqk,bhkd->bhqd", pe.astype(bf16), vh.astype(bf16),
                   preferred_element_type=f32) / l
    attn = mm(o.transpose(0, 2, 1, 3).reshape(B, S, D), p["wo"]) + p["bo"]

    x1 = x + _layer_norm(attn, p["g1"], p["be1"])
    h = jnp.maximum(mm(x1, p["wf1"]) + p["bf1"], 0.0)
    ff = mm(h, p["wf2"]) + p["bf2"]
    return x1 + _layer_norm(ff, p["g2"], p["be2"])


def transformer_encoder_ref(x, block_params_list, *, n_heads):
    for p in block_params_list:
        x = encoder_block_ref(x, p, n_heads=n_heads)
    return x


# --------------------------------------------------------------------------- #
# Params
# --------------------------------------------------------------------------- #
def init_block_params(key, d_model, d_ff):
    ks = jax.random.split(key, 6)
    s = 0.05
    f32, bf16 = jnp.float32, jnp.bfloat16
    # Weight matrices stored (in_features, out_features) in bf16 (MXU-native);
    # biases / LayerNorm params stay f32 (VPU math in f32).
    return {
        "wq": (jax.random.normal(ks[0], (d_model, d_model), f32) * s).astype(bf16),
        "bq": jnp.zeros((1, d_model), f32),
        "wk": (jax.random.normal(ks[1], (d_model, d_model), f32) * s).astype(bf16),
        "bk": jnp.zeros((1, d_model), f32),
        "wv": (jax.random.normal(ks[2], (d_model, d_model), f32) * s).astype(bf16),
        "bv": jnp.zeros((1, d_model), f32),
        "wo": (jax.random.normal(ks[3], (d_model, d_model), f32) * s).astype(bf16),
        "bo": jnp.zeros((1, d_model), f32),
        "g1": jnp.ones((1, d_model), f32),
        "be1": jnp.zeros((1, d_model), f32),
        "wf1": (jax.random.normal(ks[4], (d_model, d_ff), f32) * s).astype(bf16),
        "bf1": jnp.zeros((1, d_ff), f32),
        "wf2": (jax.random.normal(ks[5], (d_ff, d_model), f32) * s).astype(bf16),
        "bf2": jnp.zeros((1, d_model), f32),
        "g2": jnp.ones((1, d_model), f32),
        "be2": jnp.zeros((1, d_model), f32),
    }


if __name__ == "__main__":
    # Small but lane-dense / representative shapes: S = 128 (lane-wide score
    # blocks), d_model and d_ff multiples of 128, d_feature = 128.
    B, S = 4, 128
    d_model, n_heads, d_ff, n_blocks = 256, 2, 512, 2

    key = jax.random.PRNGKey(0)
    kx, kp = jax.random.split(key)
    x = jax.random.normal(kx, (B, S, d_model), jnp.float32)

    block_keys = jax.random.split(kp, n_blocks)
    block_params = [init_block_params(k, d_model, d_ff) for k in block_keys]

    y = transformer_encoder_pallas(x, block_params, n_heads=n_heads)
    jax.block_until_ready(y)
    assert y.shape == (B, S, d_model)
    assert bool(jnp.all(jnp.isfinite(y)))

    y_ref = transformer_encoder_ref(x, block_params, n_heads=n_heads)
    assert bool(jnp.allclose(y, y_ref, atol=1e-1, rtol=1e-1)), \
        float(jnp.max(jnp.abs(y - y_ref)))
    print("KERNEL_OK")
</pallas_src>

<mosaic_0001>
module attributes {stable_mosaic.version = 11 : i64} {
  func.func @_k(%arg0: i32, %arg1: memref<8x128xf32, #tpu.memory_space<vmem>>, %arg2: memref<8x128xf32, #tpu.memory_space<vmem>>) attributes {dimension_semantics = [#tpu.dimension_semantics<arbitrary>], iteration_bounds = array<i64: 2>, scalar_prefetch = 0 : i64, scratch_operands = 0 : i64, tpu.core_type = #tpu.core_type<tc>, window_params = [{pipeline_mode = #tpu.pipeline_mode<synchronous>, transform_indices = @transform_0, window_bounds = array<i64: 8, 128>}, {pipeline_mode = #tpu.pipeline_mode<synchronous>, transform_indices = @transform_1, window_bounds = array<i64: 8, 128>}]} {
    %c0 = arith.constant 0 : index
    %c0_0 = arith.constant 0 : index
    %0 = vector.load %arg1[%c0, %c0_0] : memref<8x128xf32, #tpu.memory_space<vmem>>, vector<8x128xf32>
    %cst = arith.constant 1.000000e+00 : f32
    %1 = vector.broadcast %cst : f32 to vector<8x128xf32>
    %2 = arith.addf %0, %1 : vector<8x128xf32>
    %c0_1 = arith.constant 0 : index
    %c0_2 = arith.constant 0 : index
    %3 = vector.load %arg2[%c0_1, %c0_2] : memref<8x128xf32, #tpu.memory_space<vmem>>, vector<8x128xf32>
    tpu.vector_store %arg2[%c0_1, %c0_2], %2 {strides = array<i32>} : memref<8x128xf32, #tpu.memory_space<vmem>>, vector<8x128xf32>,
    return
  }
  func.func @transform_0(%arg0: i32) -> (i32, i32) {
    %c0_i32 = arith.constant 0 : i32
    %c0_i32_0 = arith.constant 0 : i32
    %c0_i32_1 = arith.constant 0 : i32
    return %c0_i32, %c0_i32_0 : i32, i32
  }
  func.func @transform_1(%arg0: i32) -> (i32, i32) {
    %c0_i32 = arith.constant 0 : i32
    %c0_i32_0 = arith.constant 0 : i32
    %c0_i32_1 = arith.constant 0 : i32
    return %c0_i32, %c0_i32_0 : i32, i32
  }
}

module attributes {stable_mosaic.version = 11 : i64} {
  func.func @encoder_block_kernel(%arg0: i32, %arg1: memref<2x128x256xf32, #tpu.memory_space<vmem>>, %arg2: memref<256x768xbf16, #tpu.memory_space<vmem>>, %arg3: memref<1x768xf32, #tpu.memory_space<vmem>>, %arg4: memref<256x256xbf16, #tpu.memory_space<vmem>>, %arg5: memref<1x256xf32, #tpu.memory_space<vmem>>, %arg6: memref<1x256xf32, #tpu.memory_space<vmem>>, %arg7: memref<1x256xf32, #tpu.memory_space<vmem>>, %arg8: memref<256x512xbf16, #tpu.memory_space<any>>, %arg9: memref<1x512xf32, #tpu.memory_space<vmem>>, %arg10: memref<512x256xbf16, #tpu.memory_space<any>>, %arg11: memref<1x256xf32, #tpu.memory_space<vmem>>, %arg12: memref<1x256xf32, #tpu.memory_space<vmem>>, %arg13: memref<1x256xf32, #tpu.memory_space<vmem>>, %arg14: memref<2x128x256xf32, #tpu.memory_space<vmem>>, %arg15: memref<256x256xf32, #tpu.memory_space<vmem>>, %arg16: memref<256x512xbf16, #tpu.memory_space<vmem>>, %arg17: memref<512x256xbf16, #tpu.memory_space<vmem>>, %arg18: memref<2x!tpu.dma_semaphore, #tpu.memory_space<semaphore_mem>>) attributes {dimension_semantics = [#tpu.dimension_semantics<arbitrary>], iteration_bounds = array<i64: 2>, scalar_prefetch = 0 : i64, scratch_operands = 4 : i64, tpu.core_type = #tpu.core_type<tc>, window_params = [{transform_indices = @transform_0, window_bounds = array<i64: 2, 128, 256>}, {pipeline_mode = #tpu.pipeline_mode<synchronous>, transform_indices = @transform_1, window_bounds = array<i64: 256, 768>}, {pipeline_mode = #tpu.pipeline_mode<synchronous>, transform_indices = @transform_2, window_bounds = array<i64: 1, 768>}, {pipeline_mode = #tpu.pipeline_mode<synchronous>, transform_indices = @transform_3, window_bounds = array<i64: 256, 256>}, {pipeline_mode = #tpu.pipeline_mode<synchronous>, transform_indices = @transform_4, window_bounds = array<i64: 1, 256>}, {pipeline_mode = #tpu.pipeline_mode<synchronous>, transform_indices = @transform_5, window_bounds = array<i64: 1, 256>}, {pipeline_mode = #tpu.pipeline_mode<synchronous>, transform_indices = @transform_6, window_bounds = array<i64: 1, 256>}, {}, {pipeline_mode = #tpu.pipeline_mode<synchronous>, transform_indices = @transform_8, window_bounds = array<i64: 1, 512>}, {}, {pipeline_mode = #tpu.pipeline_mode<synchronous>, transform_indices = @transform_10, window_bounds = array<i64: 1, 256>}, {pipeline_mode = #tpu.pipeline_mode<synchronous>, transform_indices = @transform_11, window_bounds = array<i64: 1, 256>}, {pipeline_mode = #tpu.pipeline_mode<synchronous>, transform_indices = @transform_12, window_bounds = array<i64: 1, 256>}, {transform_indices = @transform_13, window_bounds = array<i64: 2, 128, 256>}]} {
    %c0_i32 = arith.constant 0 : i32
    %0 = arith.cmpi eq, %arg0, %c0_i32 : i32
    %1 = arith.extui %0 : i1 to i32
    %c0_i32_0 = arith.constant 0 : i32
    %2 = arith.cmpi ne, %1, %c0_i32_0 : i32
    scf.if %2 {
      %c0_i32_58 = arith.constant 0 : i32
      %129 = tpu.memref_slice %arg18[%c0_i32_58] : memref<2x!tpu.dma_semaphore, #tpu.memory_space<semaphore_mem>> -> memref<1x!tpu.dma_semaphore, #tpu.memory_space<semaphore_mem>>
      %130 = tpu.memref_squeeze %129 : memref<1x!tpu.dma_semaphore, #tpu.memory_space<semaphore_mem>> -> memref<!tpu.dma_semaphore, #tpu.memory_space<semaphore_mem>>
      tpu.enqueue_dma source(%arg8 : memref<256x512xbf16, #tpu.memory_space<any>>) target(%arg16 : memref<256x512xbf16, #tpu.memory_space<vmem>>) target_semaphore(%130 : memref<!tpu.dma_semaphore, #tpu.memory_space<semaphore_mem>>)
      %c1_i32 = arith.constant 1 : i32
      %131 = tpu.memref_slice %arg18[%c1_i32] : memref<2x!tpu.dma_semaphore, #tpu.memory_space<semaphore_mem>> -> memref<1x!tpu.dma_semaphore, #tpu.memory_space<semaphore_mem>>
      %132 = tpu.memref_squeeze %131 : memref<1x!tpu.dma_semaphore, #tpu.memory_space<semaphore_mem>> -> memref<!tpu.dma_semaphore, #tpu.memory_space<semaphore_mem>>
      tpu.enqueue_dma source(%arg10 : memref<512x256xbf16, #tpu.memory_space<any>>) target(%arg17 : memref<512x256xbf16, #tpu.memory_space<vmem>>) target_semaphore(%132 : memref<!tpu.dma_semaphore, #tpu.memory_space<semaphore_mem>>)
    } else {
    }
    %c0 = arith.constant 0 : index
    %c0_1 = arith.constant 0 : index
    %c0_2 = arith.constant 0 : index
    %3 = vector.load %arg1[%c0, %c0_1, %c0_2] : memref<2x128x256xf32, #tpu.memory_space<vmem>>, vector<2x128x256xf32>
    %4 = vector.shape_cast %3 : vector<2x128x256xf32> to vector<256x256xf32>
    %5 = arith.truncf %4 : vector<256x256xf32> to vector<256x256xbf16>
    %c0_3 = arith.constant 0 : index
    %c0_4 = arith.constant 0 : index
    %6 = vector.load %arg2[%c0_3, %c0_4] : memref<256x768xbf16, #tpu.memory_space<vmem>>, vector<256x768xbf16>
    %cst = arith.constant dense<0.000000e+00> : vector<256x768xf32>
    %7 = tpu.matmul %5, %6, %cst {dimension_numbers = #tpu.dot_dimension_numbers<[1], [0], [0], [1], [0, 0, 1, 1], [], []>} : vector<256x256xbf16>, vector<256x768xbf16>, vector<256x768xf32> -> vector<256x768xf32>
    %c0_5 = arith.constant 0 : index
    %c0_6 = arith.constant 0 : index
    %8 = vector.load %arg3[%c0_5, %c0_6] : memref<1x768xf32, #tpu.memory_space<vmem>>, vector<1x768xf32>
    %9 = vector.broadcast %8 : vector<1x768xf32> to vector<256x768xf32>
    %10 = arith.addf %7, %9 : vector<256x768xf32>
    %11 = arith.truncf %10 : vector<256x768xf32> to vector<256x768xbf16>
    %12 = vector.extract_strided_slice %11 {offsets = [0, 0], sizes = [256, 128], strides = [1, 1]} : vector<256x768xbf16> to vector<256x128xbf16>
    %13 = vector.shape_cast %12 : vector<256x128xbf16> to vector<2x128x128xbf16>
    %14 = vector.extract_strided_slice %11 {offsets = [0, 256], sizes = [256, 128], strides = [1, 1]} : vector<256x768xbf16> to vector<256x128xbf16>
    %15 = vector.shape_cast %14 : vector<256x128xbf16> to vector<2x128x128xbf16>
    %16 = vector.extract_strided_slice %11 {offsets = [0, 512], sizes = [256, 128], strides = [1, 1]} : vector<256x768xbf16> to vector<256x128xbf16>
    %17 = vector.shape_cast %16 : vector<256x128xbf16> to vector<2x128x128xbf16>
    "tpu.trace_start"() <{level = 10 : i32, message = "bqd,bkd->bqk"}> : () -> ()
    %cst_7 = arith.constant dense<0.000000e+00> : vector<2x128x128xf32>
    %18 = tpu.matmul %13, %15, %cst_7 {dimension_numbers = #tpu.dot_dimension_numbers<[2], [2], [1], [1], [0, 0, 0, 1, 1, 1], [0], [0]>} : vector<2x128x128xbf16>, vector<2x128x128xbf16>, vector<2x128x128xf32> -> vector<2x128x128xf32>
    "tpu.trace_stop"() : () -> ()
    %cst_8 = arith.constant dense<0xFF800000> : vector<2x128xf32>
    %19 = vector.multi_reduction <maximumf>, %18, %cst_8 [2] : vector<2x128x128xf32> to vector<2x128xf32>
    %20 = vector.shape_cast %19 : vector<2x128xf32> to vector<2x128x1xf32>
    %21 = vector.broadcast %20 : vector<2x128x1xf32> to vector<2x128x128xf32>
    %22 = arith.subf %18, %21 : vector<2x128x128xf32>
    %23 = math.exp %22 : vector<2x128x128xf32>
    %cst_9 = arith.constant dense<0.000000e+00> : vector<2x128xf32>
    %24 = vector.multi_reduction <add>, %23, %cst_9 [2] : vector<2x128x128xf32> to vector<2x128xf32>
    %25 = vector.shape_cast %24 : vector<2x128xf32> to vector<2x128x1xf32>
    %26 = arith.truncf %23 : vector<2x128x128xf32> to vector<2x128x128xbf16>
    "tpu.trace_start"() <{level = 10 : i32, message = "bqk,bkd->bqd"}> : () -> ()
    %cst_10 = arith.constant dense<0.000000e+00> : vector<2x128x128xf32>
    %27 = tpu.matmul %26, %17, %cst_10 {dimension_numbers = #tpu.dot_dimension_numbers<[2], [1], [1], [2], [0, 0, 0, 1, 1, 2], [0], [0]>} : vector<2x128x128xbf16>, vector<2x128x128xbf16>, vector<2x128x128xf32> -> vector<2x128x128xf32>
    "tpu.trace_stop"() : () -> ()
    %28 = tpu.reciprocal %25 {approx = true} : vector<2x128x1xf32> -> vector<2x128x1xf32>
    %29 = vector.broadcast %28 : vector<2x128x1xf32> to vector<2x128x128xf32>
    %30 = arith.mulf %27, %29 : vector<2x128x128xf32>
    %31 = vector.shape_cast %30 : vector<2x128x128xf32> to vector<256x128xf32>
    %c0_11 = arith.constant 0 : index
    %c0_12 = arith.constant 0 : index
    %32 = vector.load %arg15[%c0_11, %c0_12] : memref<256x256xf32, #tpu.memory_space<vmem>>, vector<256x128xf32>
    tpu.vector_store %arg15[%c0_11, %c0_12], %31 {strides = array<i32>} : memref<256x256xf32, #tpu.memory_space<vmem>>, vector<256x128xf32>,
    %33 = vector.extract_strided_slice %11 {offsets = [0, 128], sizes = [256, 128], strides = [1, 1]} : vector<256x768xbf16> to vector<256x128xbf16>
    %34 = vector.shape_cast %33 : vector<256x128xbf16> to vector<2x128x128xbf16>
    %35 = vector.extract_strided_slice %11 {offsets = [0, 384], sizes = [256, 128], strides = [1, 1]} : vector<256x768xbf16> to vector<256x128xbf16>
    %36 = vector.shape_cast %35 : vector<256x128xbf16> to vector<2x128x128xbf16>
    %37 = vector.extract_strided_slice %11 {offsets = [0, 640], sizes = [256, 128], strides = [1, 1]} : vector<256x768xbf16> to vector<256x128xbf16>
    %38 = vector.shape_cast %37 : vector<256x128xbf16> to vector<2x128x128xbf16>
    "tpu.trace_start"() <{level = 10 : i32, message = "bqd,bkd->bqk"}> : () -> ()
    %cst_13 = arith.constant dense<0.000000e+00> : vector<2x128x128xf32>
    %39 = tpu.matmul %34, %36, %cst_13 {dimension_numbers = #tpu.dot_dimension_numbers<[2], [2], [1], [1], [0, 0, 0, 1, 1, 1], [0], [0]>} : vector<2x128x128xbf16>, vector<2x128x128xbf16>, vector<2x128x128xf32> -> vector<2x128x128xf32>
    "tpu.trace_stop"() : () -> ()
    %cst_14 = arith.constant dense<0xFF800000> : vector<2x128xf32>
    %40 = vector.multi_reduction <maximumf>, %39, %cst_14 [2] : vector<2x128x128xf32> to vector<2x128xf32>
    %41 = vector.shape_cast %40 : vector<2x128xf32> to vector<2x128x1xf32>
    %42 = vector.broadcast %41 : vector<2x128x1xf32> to vector<2x128x128xf32>
    %43 = arith.subf %39, %42 : vector<2x128x128xf32>
    %44 = math.exp %43 : vector<2x128x128xf32>
    %cst_15 = arith.constant dense<0.000000e+00> : vector<2x128xf32>
    %45 = vector.multi_reduction <add>, %44, %cst_15 [2] : vector<2x128x128xf32> to vector<2x128xf32>
    %46 = vector.shape_cast %45 : vector<2x128xf32> to vector<2x128x1xf32>
    %47 = arith.truncf %44 : vector<2x128x128xf32> to vector<2x128x128xbf16>
    "tpu.trace_start"() <{level = 10 : i32, message = "bqk,bkd->bqd"}> : () -> ()
    %cst_16 = arith.constant dense<0.000000e+00> : vector<2x128x128xf32>
    %48 = tpu.matmul %47, %38, %cst_16 {dimension_numbers = #tpu.dot_dimension_numbers<[2], [1], [1], [2], [0, 0, 0, 1, 1, 2], [0], [0]>} : vector<2x128x128xbf16>, vector<2x128x128xbf16>, vector<2x128x128xf32> -> vector<2x128x128xf32>
    "tpu.trace_stop"() : () -> ()
    %49 = tpu.reciprocal %46 {approx = true} : vector<2x128x1xf32> -> vector<2x128x1xf32>
    %50 = vector.broadcast %49 : vector<2x128x1xf32> to vector<2x128x128xf32>
    %51 = arith.mulf %48, %50 : vector<2x128x128xf32>
    %52 = vector.shape_cast %51 : vector<2x128x128xf32> to vector<256x128xf32>
    %c0_17 = arith.constant 0 : index
    %c128 = arith.constant 128 : index
    %53 = vector.load %arg15[%c0_17, %c128] : memref<256x256xf32, #tpu.memory_space<vmem>>, vector<256x128xf32>
    tpu.vector_store %arg15[%c0_17, %c128], %52 {strides = array<i32>} : memref<256x256xf32, #tpu.memory_space<vmem>>, vector<256x128xf32>,
    %c0_18 = arith.constant 0 : index
    %c0_19 = arith.constant 0 : index
    %54 = vector.load %arg15[%c0_18, %c0_19] : memref<256x256xf32, #tpu.memory_space<vmem>>, vector<256x256xf32>
    %55 = arith.truncf %54 : vector<256x256xf32> to vector<256x256xbf16>
    %c0_20 = arith.constant 0 : index
    %c0_21 = arith.constant 0 : index
    %56 = vector.load %arg4[%c0_20, %c0_21] : memref<256x256xbf16, #tpu.memory_space<vmem>>, vector<256x256xbf16>
    %cst_22 = arith.constant dense<0.000000e+00> : vector<256x256xf32>
    %57 = tpu.matmul %55, %56, %cst_22 {dimension_numbers = #tpu.dot_dimension_numbers<[1], [0], [0], [1], [0, 0, 1, 1], [], []>} : vector<256x256xbf16>, vector<256x256xbf16>, vector<256x256xf32> -> vector<256x256xf32>
    %c0_23 = arith.constant 0 : index
    %c0_24 = arith.constant 0 : index
    %58 = vector.load %arg5[%c0_23, %c0_24] : memref<1x256xf32, #tpu.memory_space<vmem>>, vector<1x256xf32>
    %59 = vector.broadcast %58 : vector<1x256xf32> to vector<256x256xf32>
    %60 = arith.addf %57, %59 : vector<256x256xf32>
    %c0_25 = arith.constant 0 : index
    %c0_26 = arith.constant 0 : index
    %61 = vector.load %arg6[%c0_25, %c0_26] : memref<1x256xf32, #tpu.memory_space<vmem>>, vector<1x256xf32>
    %c0_27 = arith.constant 0 : index
    %c0_28 = arith.constant 0 : index
    %62 = vector.load %arg7[%c0_27, %c0_28] : memref<1x256xf32, #tpu.memory_space<vmem>>, vector<1x256xf32>
    %cst_29 = arith.constant dense<0.000000e+00> : vector<256xf32>
    %63 = vector.multi_reduction <add>, %60, %cst_29 [1] : vector<256x256xf32> to vector<256xf32>
    %64 = vector.shape_cast %63 : vector<256xf32> to vector<256x1xf32>
    %cst_30 = arith.constant 2.560000e+02 : f32
    %65 = vector.broadcast %cst_30 : f32 to vector<256x1xf32>
    %66 = arith.divf %64, %65 : vector<256x1xf32>
    %67 = vector.broadcast %66 : vector<256x1xf32> to vector<256x256xf32>
    %68 = arith.subf %60, %67 : vector<256x256xf32>
    %69 = arith.mulf %68, %68 : vector<256x256xf32>
    %cst_31 = arith.constant dense<0.000000e+00> : vector<256xf32>
    %70 = vector.multi_reduction <add>, %69, %cst_31 [1] : vector<256x256xf32> to vector<256xf32>
    %71 = vector.shape_cast %70 : vector<256xf32> to vector<256x1xf32>
    %cst_32 = arith.constant 2.560000e+02 : f32
    %72 = vector.broadcast %cst_32 : f32 to vector<256x1xf32>
    %73 = arith.divf %71, %72 : vector<256x1xf32>
    %74 = vector.broadcast %66 : vector<256x1xf32> to vector<256x256xf32>
    %75 = arith.subf %60, %74 : vector<256x256xf32>
    %cst_33 = arith.constant 9.99999997E-7 : f32
    %76 = vector.broadcast %cst_33 : f32 to vector<256x1xf32>
    %77 = arith.addf %73, %76 : vector<256x1xf32>
    %78 = math.rsqrt %77 : vector<256x1xf32>
    %79 = vector.broadcast %78 : vector<256x1xf32> to vector<256x256xf32>
    %80 = arith.mulf %75, %79 : vector<256x256xf32>
    %81 = vector.broadcast %61 : vector<1x256xf32> to vector<256x256xf32>
    %82 = arith.mulf %80, %81 : vector<256x256xf32>
    %83 = vector.broadcast %62 : vector<1x256xf32> to vector<256x256xf32>
    %84 = arith.addf %82, %83 : vector<256x256xf32>
    %85 = arith.addf %4, %84 : vector<256x256xf32>
    %86 = arith.extui %0 : i1 to i32
    %c0_i32_34 = arith.constant 0 : i32
    %87 = arith.cmpi ne, %86, %c0_i32_34 : i32
    scf.if %87 {
      %c0_i32_58 = arith.constant 0 : i32
      %129 = tpu.memref_slice %arg18[%c0_i32_58] : memref<2x!tpu.dma_semaphore, #tpu.memory_space<semaphore_mem>> -> memref<1x!tpu.dma_semaphore, #tpu.memory_space<semaphore_mem>>
      %130 = tpu.memref_squeeze %129 : memref<1x!tpu.dma_semaphore, #tpu.memory_space<semaphore_mem>> -> memref<!tpu.dma_semaphore, #tpu.memory_space<semaphore_mem>>
      tpu.wait_dma2 semaphore(%130 : memref<!tpu.dma_semaphore, #tpu.memory_space<semaphore_mem>>) src(%arg8 : memref<256x512xbf16, #tpu.memory_space<any>>) dst(%arg16 : memref<256x512xbf16, #tpu.memory_space<vmem>>)
      %c1_i32 = arith.constant 1 : i32
      %131 = tpu.memref_slice %arg18[%c1_i32] : memref<2x!tpu.dma_semaphore, #tpu.memory_space<semaphore_mem>> -> memref<1x!tpu.dma_semaphore, #tpu.memory_space<semaphore_mem>>
      %132 = tpu.memref_squeeze %131 : memref<1x!tpu.dma_semaphore, #tpu.memory_space<semaphore_mem>> -> memref<!tpu.dma_semaphore, #tpu.memory_space<semaphore_mem>>
      tpu.wait_dma2 semaphore(%132 : memref<!tpu.dma_semaphore, #tpu.memory_space<semaphore_mem>>) src(%arg10 : memref<512x256xbf16, #tpu.memory_space<any>>) dst(%arg17 : memref<512x256xbf16, #tpu.memory_space<vmem>>)
    } else {
    }
    %88 = arith.truncf %85 : vector<256x256xf32> to vector<256x256xbf16>
    %c0_35 = arith.constant 0 : index
    %c0_36 = arith.constant 0 : index
    %89 = vector.load %arg16[%c0_35, %c0_36] : memref<256x512xbf16, #tpu.memory_space<vmem>>, vector<256x512xbf16>
    %cst_37 = arith.constant dense<0.000000e+00> : vector<256x512xf32>
    %90 = tpu.matmul %88, %89, %cst_37 {dimension_numbers = #tpu.dot_dimension_numbers<[1], [0], [0], [1], [0, 0, 1, 1], [], []>} : vector<256x256xbf16>, vector<256x512xbf16>, vector<256x512xf32> -> vector<256x512xf32>
    %c0_38 = arith.constant 0 : index
    %c0_39 = arith.constant 0 : index
    %91 = vector.load %arg9[%c0_38, %c0_39] : memref<1x512xf32, #tpu.memory_space<vmem>>, vector<1x512xf32>
    %92 = vector.broadcast %91 : vector<1x512xf32> to vector<256x512xf32>
    %93 = arith.addf %90, %92 : vector<256x512xf32>
    %cst_40 = arith.constant 0.000000e+00 : f32
    %94 = vector.broadcast %cst_40 : f32 to vector<256x512xf32>
    %95 = arith.maximumf %93, %94 : vector<256x512xf32>
    %96 = arith.truncf %95 : vector<256x512xf32> to vector<256x512xbf16>
    %c0_41 = arith.constant 0 : index
    %c0_42 = arith.constant 0 : index
    %97 = vector.load %arg17[%c0_41, %c0_42] : memref<512x256xbf16, #tpu.memory_space<vmem>>, vector<512x256xbf16>
    %cst_43 = arith.constant dense<0.000000e+00> : vector<256x256xf32>
    %98 = tpu.matmul %96, %97, %cst_43 {dimension_numbers = #tpu.dot_dimension_numbers<[1], [0], [0], [1], [0, 0, 1, 1], [], []>} : vector<256x512xbf16>, vector<512x256xbf16>, vector<256x256xf32> -> vector<256x256xf32>
    %c0_44 = arith.constant 0 : index
    %c0_45 = arith.constant 0 : index
    %99 = vector.load %arg11[%c0_44, %c0_45] : memref<1x256xf32, #tpu.memory_space<vmem>>, vector<1x256xf32>
    %100 = vector.broadcast %99 : vector<1x256xf32> to vector<256x256xf32>
    %101 = arith.addf %98, %100 : vector<256x256xf32>
    %c0_46 = arith.constant 0 : index
    %c0_47 = arith.constant 0 : index
    %102 = vector.load %arg12[%c0_46, %c0_47] : memref<1x256xf32, #tpu.memory_space<vmem>>, vector<1x256xf32>
    %c0_48 = arith.constant 0 : index
    %c0_49 = arith.constant 0 : index
    %103 = vector.load %arg13[%c0_48, %c0_49] : memref<1x256xf32, #tpu.memory_space<vmem>>, vector<1x256xf32>
    %cst_50 = arith.constant dense<0.000000e+00> : vector<256xf32>
    %104 = vector.multi_reduction <add>, %101, %cst_50 [1] : vector<256x256xf32> to vector<256xf32>
    %105 = vector.shape_cast %104 : vector<256xf32> to vector<256x1xf32>
    %cst_51 = arith.constant 2.560000e+02 : f32
    %106 = vector.broadcast %cst_51 : f32 to vector<256x1xf32>
    %107 = arith.divf %105, %106 : vector<256x1xf32>
    %108 = vector.broadcast %107 : vector<256x1xf32> to vector<256x256xf32>
    %109 = arith.subf %101, %108 : vector<256x256xf32>
    %110 = arith.mulf %109, %109 : vector<256x256xf32>
    %cst_52 = arith.constant dense<0.000000e+00> : vector<256xf32>
    %111 = vector.multi_reduction <add>, %110, %cst_52 [1] : vector<256x256xf32> to vector<256xf32>
    %112 = vector.shape_cast %111 : vector<256xf32> to vector<256x1xf32>
    %cst_53 = arith.constant 2.560000e+02 : f32
    %113 = vector.broadcast %cst_53 : f32 to vector<256x1xf32>
    %114 = arith.divf %112, %113 : vector<256x1xf32>
    %115 = vector.broadcast %107 : vector<256x1xf32> to vector<256x256xf32>
    %116 = arith.subf %101, %115 : vector<256x256xf32>
    %cst_54 = arith.constant 9.99999997E-7 : f32
    %117 = vector.broadcast %cst_54 : f32 to vector<256x1xf32>
    %118 = arith.addf %114, %117 : vector<256x1xf32>
    %119 = math.rsqrt %118 : vector<256x1xf32>
    %120 = vector.broadcast %119 : vector<256x1xf32> to vector<256x256xf32>
    %121 = arith.mulf %116, %120 : vector<256x256xf32>
    %122 = vector.broadcast %102 : vector<1x256xf32> to vector<256x256xf32>
    %123 = arith.mulf %121, %122 : vector<256x256xf32>
    %124 = vector.broadcast %103 : vector<1x256xf32> to vector<256x256xf32>
    %125 = arith.addf %123, %124 : vector<256x256xf32>
    %126 = arith.addf %85, %125 : vector<256x256xf32>
    %127 = vector.shape_cast %126 : vector<256x256xf32> to vector<2x128x256xf32>
    %c0_55 = arith.constant 0 : index
    %c0_56 = arith.constant 0 : index
    %c0_57 = arith.constant 0 : index
    %128 = vector.load %arg14[%c0_55, %c0_56, %c0_57] : memref<2x128x256xf32, #tpu.memory_space<vmem>>, vector<2x128x256xf32>
    tpu.vector_store %arg14[%c0_55, %c0_56, %c0_57], %127 {strides = array<i32>} : memref<2x128x256xf32, #tpu.memory_space<vmem>>, vector<2x128x256xf32>,
    return
  }
  func.func @transform_0(%arg0: i32) -> (i32, i32, i32) {
    %c0_i32 = arith.constant 0 : i32
    %c0_i32_0 = arith.constant 0 : i32
    %c0_i32_1 = arith.constant 0 : i32
    return %arg0, %c0_i32, %c0_i32_0 : i32, i32, i32
  }
  func.func @transform_1(%arg0: i32) -> (i32, i32) {
    %c0_i32 = arith.constant 0 : i32
    %c0_i32_0 = arith.constant 0 : i32
    %c0_i32_1 = arith.constant 0 : i32
    return %c0_i32, %c0_i32_0 : i32, i32
  }
  func.func @transform_2(%arg0: i32) -> (i32, i32) {
    %c0_i32 = arith.constant 0 : i32
    %c0_i32_0 = arith.constant 0 : i32
    %c0_i32_1 = arith.constant 0 : i32
    return %c0_i32, %c0_i32_0 : i32, i32
  }
  func.func @transform_3(%arg0: i32) -> (i32, i32) {
    %c0_i32 = arith.constant 0 : i32
    %c0_i32_0 = arith.constant 0 : i32
    %c0_i32_1 = arith.constant 0 : i32
    return %c0_i32, %c0_i32_0 : i32, i32
  }
  func.func @transform_4(%arg0: i32) -> (i32, i32) {
    %c0_i32 = arith.constant 0 : i32
    %c0_i32_0 = arith.constant 0 : i32
    %c0_i32_1 = arith.constant 0 : i32
    return %c0_i32, %c0_i32_0 : i32, i32
  }
  func.func @transform_5(%arg0: i32) -> (i32, i32) {
    %c0_i32 = arith.constant 0 : i32
    %c0_i32_0 = arith.constant 0 : i32
    %c0_i32_1 = arith.constant 0 : i32
    return %c0_i32, %c0_i32_0 : i32, i32
  }
  func.func @transform_6(%arg0: i32) -> (i32, i32) {
    %c0_i32 = arith.constant 0 : i32
    %c0_i32_0 = arith.constant 0 : i32
    %c0_i32_1 = arith.constant 0 : i32
    return %c0_i32, %c0_i32_0 : i32, i32
  }
  func.func @transform_8(%arg0: i32) -> (i32, i32) {
    %c0_i32 = arith.constant 0 : i32
    %c0_i32_0 = arith.constant 0 : i32
    %c0_i32_1 = arith.constant 0 : i32
    return %c0_i32, %c0_i32_0 : i32, i32
  }
  func.func @transform_10(%arg0: i32) -> (i32, i32) {
    %c0_i32 = arith.constant 0 : i32
    %c0_i32_0 = arith.constant 0 : i32
    %c0_i32_1 = arith.constant 0 : i32
    return %c0_i32, %c0_i32_0 : i32, i32
  }
  func.func @transform_11(%arg0: i32) -> (i32, i32) {
    %c0_i32 = arith.constant 0 : i32
    %c0_i32_0 = arith.constant 0 : i32
    %c0_i32_1 = arith.constant 0 : i32
    return %c0_i32, %c0_i32_0 : i32, i32
  }
  func.func @transform_12(%arg0: i32) -> (i32, i32) {
    %c0_i32 = arith.constant 0 : i32
    %c0_i32_0 = arith.constant 0 : i32
    %c0_i32_1 = arith.constant 0 : i32
    return %c0_i32, %c0_i32_0 : i32, i32
  }
  func.func @transform_13(%arg0: i32) -> (i32, i32, i32) {
    %c0_i32 = arith.constant 0 : i32
    %c0_i32_0 = arith.constant 0 : i32
    %c0_i32_1 = arith.constant 0 : i32
    return %arg0, %c0_i32, %c0_i32_0 : i32, i32, i32
  }
}

</mosaic_0001>

<llo_original>
// kernel: tpu_custom_call.1
$region0: #{tpu_custom_call.1}
  #allocation0 [shape = 'u32[]', space=smem, size = 0x4, offset = 0x4, fixed_abs, tag = 'smem constant byte address 0x4 - core index']
  #allocation1 [shape = 'u32[144,128]{1,0:T(1,128)}', space=vmem, size = 0x12000, scoped, tag = 'internal scratch']
  %s0 = inlined_call_operand.hbm [shape: f32[8,128], index: 0, kind: input, shape index: {}]
  %s1 = inlined_call_operand.hbm [shape: f32[8,128], index: 1, kind: output, shape index: {}]
  %s2 = sld [smem:[#allocation0]]
  $region41: #{tpu_custom_call.1} parent=0
    _
  %s4 = ssub.s32 1, %s2
  %s5 = scalar_select 0, %s4, %s2
  $region1: #{tpu_custom_call.1} parent=0
    #allocation2 [shape = 'u8[4096]{0}', space=vmem, size = 0x1000, scoped, tag = 'input window, operand 0, single buffered']
    #allocation3 [shape = 's32[2]{0}', space=sflag, size = 0x8, scoped, tag = 'scoped memory for tpu_custom_call.1']
    #allocation4 [shape = 's32[2]{0}', space=sflag, size = 0x8, scoped, tag = 'scoped memory for tpu_custom_call.1']
    #allocation5 [shape = 'u8[4096]{0}', space=vmem, size = 0x1000, scoped, tag = 'output window, operand 0, single buffered']
    %6 = vsyncpa [#allocation3], 0
    %7 = vsyncpa [#allocation4], 0
    loop: start=0, step=1, limit=4
    $region2: #{tpu_custom_call.1} parent=1 // loop_pre_header
      _
    $region3: #{tpu_custom_call.1} parent=1 // loop_header
      %s9 = sphi 0, %s13
      %p10 = scmp.ge.s32.totalorder %s9, 4
      %s17 = sphi 0, %s17
      %s19 = sphi 0, %s17
      %s20 = sphi 0, %s19
      %s34 = sphi 0, %s20
      %s38 = sphi 0, %s38
      %s40 = sphi 0, %s38
      %s41 = sphi 0, %s40
      %s55 = sphi 0, %s41
    $region4: #{tpu_custom_call.1} parent=1 // loop_header_branch
      %12 = sbr.rel (%p10) target = $region8
    $region5: #{tpu_custom_call.1} parent=1 // loop_body
      %s14 = ssub.s32 %s9, 1
      %s15 = ssub.s32 %s9, 2
      %s16 = sadd.s32 %s9, 1
      %s18 = sadd.s32 %s17, 1
      %p21 = scmp.eq.s32.totalorder %s9, 1
      %p22 = scmp.ne.s32.totalorder %s17, %s19
      %p23 = scmp.eq.s32.totalorder %s9, 0
      %p24 = por %p22, %p23
      %p25 = scmp.ne.s32.totalorder %s17, %s19
      %p26 = scmp.eq.s32.totalorder %s14, 1
      %p27 = por %p25, %p26
      %p28 = scmp.ne.s32.totalorder %s19, %s20
      %p29 = scmp.eq.s32.totalorder %s14, 0
      %p30 = por %p28, %p29
      %p31 = scmp.ne.s32.totalorder %s19, %s20
      %p32 = scmp.eq.s32.totalorder %s15, 1
      %p33 = por %p31, %p32
      %p35 = scmp.ne.s32.totalorder %s20, %s34
      %p36 = scmp.eq.s32.totalorder %s15, 0
      %p37 = por %p35, %p36
      %s39 = sadd.s32 %s38, 1
      %p42 = scmp.eq.s32.totalorder %s9, 1
      %p43 = scmp.ne.s32.totalorder %s38, %s40
      %p44 = scmp.eq.s32.totalorder %s9, 0
      %p45 = por %p43, %p44
      %p46 = scmp.ne.s32.totalorder %s38, %s40
      %p47 = scmp.eq.s32.totalorder %s14, 1
      %p48 = por %p46, %p47
      %p49 = scmp.ne.s32.totalorder %s40, %s41
      %p50 = scmp.eq.s32.totalorder %s14, 0
      %p51 = por %p49, %p50
      %p52 = scmp.ne.s32.totalorder %s40, %s41
      %p53 = scmp.eq.s32.totalorder %s15, 1
      %p54 = por %p52, %p53
      %p56 = scmp.ne.s32.totalorder %s41, %s55
      %p57 = scmp.eq.s32.totalorder %s15, 0
      %p58 = por %p56, %p57
      %p59 = scmp.le.s32.totalorder 1, %s9
      %p60 = scmp.lt.s32.totalorder %s9, 3
      %p61 = pnand %p59, %p60
      %p62 = pneg %p61
      // Predicated region
      $region9: #{tpu_custom_call.1} parent=5 // pred_check
        _
      $region10: #{tpu_custom_call.1} parent=5 // pred_check_branch
        %64 = sbr.rel (%p61) target = $region12
      $region11: #{tpu_custom_call.1} parent=5 // pred_region
        %s65 = ssub.s32 %s9, 1
        // Predicated region
        $region13: #{tpu_custom_call.1} parent=11 // pred_check
          %p66 = pneg %p30
        $region14: #{tpu_custom_call.1} parent=11 // pred_check_branch
          %68 = sbr.rel (%p66) target = $region16
        $region15: #{tpu_custom_call.1} parent=11 // pred_region
          %s70 = ssub.s32 128, 128
          %71 = vsyncadd [#allocation3], %s70
          %s73 = sshll.u32 [#allocation2], 4
          %s74 = int_to_ptr.vmem [resolvable:$true] %s73
          %76 = dma.hbm_to_vmem [thread:$0]  %s0, 128, %s74, [#allocation3]
        $region16: #{tpu_custom_call.1} parent=11 // pred_fallthru
          _
      $region12: #{tpu_custom_call.1} parent=5 // pred_fallthru
        _
      %p77 = scmp.lt.s32.totalorder %s9, 2
      // Predicated region
      $region17: #{tpu_custom_call.1} parent=5 // pred_check
        %p78 = pneg %p77
      $region18: #{tpu_custom_call.1} parent=5 // pred_check_branch
        %80 = sbr.rel (%p78) target = $region20
      $region19: #{tpu_custom_call.1} parent=5 // pred_region
        _
      $region20: #{tpu_custom_call.1} parent=5 // pred_fallthru
        _
      %p81 = scmp.le.s32.totalorder 1, %s9
      %p82 = scmp.lt.s32.totalorder %s9, 3
      %p83 = pnand %p81, %p82
      %p84 = pneg %p83
      // Predicated region
      $region21: #{tpu_custom_call.1} parent=5 // pred_check
        _
      $region22: #{tpu_custom_call.1} parent=5 // pred_check_branch
        %86 = sbr.rel (%p83) target = $region24
      $region23: #{tpu_custom_call.1} parent=5 // pred_region
        %s87 = ssub.s32 %s9, 1
        // Predicated region
        $region25: #{tpu_custom_call.1} parent=23 // pred_check
          %p88 = pneg %p30
        $region26: #{tpu_custom_call.1} parent=23 // pred_check_branch
          %90 = sbr.rel (%p88) target = $region28
        $region27: #{tpu_custom_call.1} parent=23 // pred_region
          %91 = dma.done [#allocation3], 128
        $region28: #{tpu_custom_call.1} parent=23 // pred_fallthru
          _
        %p92 = pneg %p30
        %p93 = pneg %p27
        %p94 = pneg %p51
        %p95 = pneg %p48
        %v96 = vld [vmem:[#allocation2] sm:$0xff]
        %v97 = vadd.f32 %v96, 1.0
        %98 = vst [vmem:[#allocation5] sm:$0xff] %v97
        // Predicated region
        $region29: #{tpu_custom_call.1} parent=23 // pred_check
          %p99 = pneg %p48
        $region30: #{tpu_custom_call.1} parent=23 // pred_check_branch
          %101 = sbr.rel (%p99) target = $region32
        $region31: #{tpu_custom_call.1} parent=23 // pred_region
          %s103 = ssub.s32 128, 128
          %104 = vsyncadd [#allocation4], %s103
          %s106 = sshll.u32 [#allocation5], 4
          %s107 = int_to_ptr.vmem [resolvable:$true] %s106
          %109 = dma.vmem_to_hbm [thread:$0]  %s107, 128, %s1, [#allocation4]
        $region32: #{tpu_custom_call.1} parent=23 // pred_fallthru
          _
        // Predicated region
        $region33: #{tpu_custom_call.1} parent=23 // pred_check
          %p110 = pneg %p48
        $region34: #{tpu_custom_call.1} parent=23 // pred_check_branch
          %112 = sbr.rel (%p110) target = $region36
        $region35: #{tpu_custom_call.1} parent=23 // pred_region
          %113 = dma.done [#allocation4], 128
        $region36: #{tpu_custom_call.1} parent=23 // pred_fallthru
          _
      $region24: #{tpu_custom_call.1} parent=5 // pred_fallthru
        _
      %p114 = scmp.le.s32.totalorder 2, %s9
      // Predicated region
      $region37: #{tpu_custom_call.1} parent=5 // pred_check
        %p115 = pneg %p114
      $region38: #{tpu_custom_call.1} parent=5 // pred_check_branch
        %117 = sbr.rel (%p115) target = $region40
      $region39: #{tpu_custom_call.1} parent=5 // pred_region
        %s118 = ssub.s32 %s9, 2
      $region40: #{tpu_custom_call.1} parent=5 // pred_fallthru
        _
    $region6: #{tpu_custom_call.1} parent=1 // loop_footer
      %s13 = sadd.s32 1, %s9
    $region7: #{tpu_custom_call.1} parent=1 // loop_footer_branch
      %8 = sbr.rel target = $region3
    $region8: #{tpu_custom_call.1} parent=1 // loop_exit
      _
    %119 = vsyncpa [#allocation3], 1
    %s120 = scalar_lea.sflag [#allocation3], 1
    %121 = vsyncpa %s120, 1
    %122 = vsyncpa [#allocation4], 1
    %s123 = scalar_lea.sflag [#allocation4], 1
    %124 = vsyncpa %s123, 1

// kernel: tpu_custom_call.1
$region0: #{tpu_custom_call.1}
  #allocation0 [shape = 'u32[]', space=smem, size = 0x4, offset = 0x4, fixed_abs, tag = 'smem constant byte address 0x4 - core index']
  #allocation1 [shape = 'u32[144,128]{1,0:T(1,128)}', space=vmem, size = 0x12000, scoped, tag = 'internal scratch']
  #allocation2 [shape = 'f32[256,256]{1,0:T(8,128)}', space=vmem, size = 0x40000, scoped, tag = 'scratch operand']
  #allocation3 [shape = 'bf16[256,512]{1,0:T(8,128)(2,1)}', space=vmem, size = 0x40000, scoped, tag = 'scratch operand']
  #allocation4 [shape = 'bf16[512,256]{1,0:T(8,128)(2,1)}', space=vmem, size = 0x40000, scoped, tag = 'scratch operand']
  #allocation5 [shape = 's32[2]{0}', space=sflag, size = 0x8, scoped, tag = 'scratch operand']
  #allocation15 [shape = 's32[]', space=sflag, size = 0x4, offset = 0, fixed_abs, tag = 'sflag constant byte address 0x0 - dummy sync flag']
  #allocation16 [shape = 's32[]', space=sflag, size = 0x4, offset = 0, fixed_abs, tag = 'sflag constant byte address 0x0 - dummy sync flag']
  #allocation17 [shape = 'u32[]', space=smem, size = 0x4, offset = 0x44, fixed_abs, tag = 'smem constant byte address 0x44 - assertion arg 0']
  #allocation18 [shape = 'u32[]', space=smem, size = 0x4, offset = 0x48, fixed_abs, tag = 'smem constant byte address 0x48 - assertion arg 1']
  #allocation19 [shape = 's32[]', space=sflag, size = 0x4, offset = 0, fixed_abs, tag = 'sflag constant byte address 0x0 - dummy sync flag']
  #allocation20 [shape = 's32[]', space=sflag, size = 0x4, offset = 0, fixed_abs, tag = 'sflag constant byte address 0x0 - dummy sync flag']
  %s0 = inlined_call_operand.hbm [shape: f32[4,128,256], index: 0, kind: input, shape index: {}]
  %s1 = inlined_call_operand.hbm [shape: bf16[256,768], index: 1, kind: input, shape index: {}]
  %s2 = inlined_call_operand.hbm [shape: f32[1,768], index: 2, kind: input, shape index: {}]
  %s3 = inlined_call_operand.hbm [shape: bf16[256,256], index: 3, kind: input, shape index: {}]
  %s4 = inlined_call_operand.vmem [shape: f32[1,256], index: 4, kind: input, shape index: {}]
  %s5 = inlined_call_operand.vmem [shape: f32[1,256], index: 5, kind: input, shape index: {}]
  %s6 = inlined_call_operand.vmem [shape: f32[1,256], index: 6, kind: input, shape index: {}]
  %s7 = inlined_call_operand.hbm [shape: bf16[256,512], index: 7, kind: input, shape index: {}]
  %s8 = inlined_call_operand.vmem [shape: f32[1,512], index: 8, kind: input, shape index: {}]
  %s9 = inlined_call_operand.hbm [shape: bf16[512,256], index: 9, kind: input, shape index: {}]
  %s10 = inlined_call_operand.vmem [shape: f32[1,256], index: 10, kind: input, shape index: {}]
  %s11 = inlined_call_operand.vmem [shape: f32[1,256], index: 11, kind: input, shape index: {}]
  %s12 = inlined_call_operand.vmem [shape: f32[1,256], index: 12, kind: input, shape index: {}]
  %s13 = inlined_call_operand.hbm [shape: f32[4,128,256], index: 13, kind: output, shape index: {}]
  %s14 = sld [smem:[#allocation0]]
  $region109: #{tpu_custom_call.1} parent=0
    _
  %s16 = ssub.s32 1, %s14
  %s17 = scalar_select 0, %s16, %s14
  $region1: #{tpu_custom_call.1} parent=0
    #allocation6 [shape = 'u8[524288]{0}', space=vmem, size = 0x80000, scoped, tag = 'input window, operand 0']
    #allocation7 [shape = 's32[2]{0}', space=sflag, size = 0x8, scoped, tag = 'scoped memory for tpu_custom_call.1']
    #allocation8 [shape = 's32[2]{0}', space=sflag, size = 0x8, scoped, tag = 'scoped memory for tpu_custom_call.1']
    #allocation9 [shape = 'u8[393216]{0}', space=vmem, size = 0x60000, scoped, tag = 'input window, operand 1, single buffered']
    #allocation10 [shape = 's32[1]{0}', space=sflag, size = 0x4, scoped, tag = 'scoped memory for tpu_custom_call.1']
    #allocation11 [shape = 'u8[3072]{0}', space=vmem, size = 0xc00, scoped, tag = 'input window, operand 2, single buffered']
    #allocation12 [shape = 'u8[131072]{0}', space=vmem, size = 0x20000, scoped, tag = 'input window, operand 3, single buffered']
    #allocation13 [shape = 's32[1]{0}', space=sflag, size = 0x4, scoped, tag = 'scoped memory for tpu_custom_call.1']
    #allocation14 [shape = 'u8[524288]{0}', space=vmem, size = 0x80000, scoped, tag = 'output window, operand 0']
    %18 = vsyncpa [#allocation7], 0
    %s19 = scalar_lea.sflag [#allocation7], 1
    %20 = vsyncpa %s19, 0
    %21 = vsyncpa [#allocation10], 0
    %22 = vsyncpa [#allocation13], 0
    %23 = vsyncpa [#allocation8], 0
    %s24 = scalar_lea.sflag [#allocation8], 1
    %25 = vsyncpa %s24, 0
    loop: start=0, step=1, limit=4
    $region2: #{tpu_custom_call.1} parent=1 // loop_pre_header
      _
    $region3: #{tpu_custom_call.1} parent=1 // loop_header
      %s27 = sphi 0, %s31
      %p28 = scmp.ge.s32.totalorder %s27, 4
      %s37 = sphi 0, %s39
      %s40 = sphi 0, %s37
      %s41 = sphi 0, %s40
      %s57 = sphi 0, %s41
      %s61 = sphi 0, %s61
      %s63 = sphi 0, %s61
      %s64 = sphi 0, %s63
      %s78 = sphi 0, %s64
      %s82 = sphi 0, %s82
      %s84 = sphi 0, %s82
      %s85 = sphi 0, %s84
      %s99 = sphi 0, %s85
      %s103 = sphi 0, %s103
      %s105 = sphi 0, %s103
      %s106 = sphi 0, %s105
      %s120 = sphi 0, %s106
      %s124 = sphi 0, %s124
      %s126 = sphi 0, %s124
      %s127 = sphi 0, %s126
      %s141 = sphi 0, %s127
      %s145 = sphi 0, %s145
      %s147 = sphi 0, %s145
      %s148 = sphi 0, %s147
      %s162 = sphi 0, %s148
      %s166 = sphi 0, %s166
      %s168 = sphi 0, %s166
      %s169 = sphi 0, %s168
      %s183 = sphi 0, %s169
      %s187 = sphi 0, %s187
      %s189 = sphi 0, %s187
      %s190 = sphi 0, %s189
      %s204 = sphi 0, %s190
      %s208 = sphi 0, %s208
      %s210 = sphi 0, %s208
      %s211 = sphi 0, %s210
      %s225 = sphi 0, %s211
      %s229 = sphi 0, %s229
      %s231 = sphi 0, %s229
      %s232 = sphi 0, %s231
      %s246 = sphi 0, %s232
      %s250 = sphi 0, %s250
      %s252 = sphi 0, %s250
      %s253 = sphi 0, %s252
      %s267 = sphi 0, %s253
      %s273 = sphi 0, %s275
      %s276 = sphi 0, %s273
      %s277 = sphi 0, %s276
      %s293 = sphi 0, %s277
    $region4: #{tpu_custom_call.1} parent=1 // loop_header_branch
      %30 = sbr.rel (%p28) target = $region8
    $region5: #{tpu_custom_call.1} parent=1 // loop_body
      %s32 = ssub.s32 %s27, 1
      %s33 = ssub.s32 %s27, 2
      %s34 = sadd.s32 %s27, 1
      %s35 = ssub.s32 %s27, %s34
      %p36 = scmp.eq.s32.totalorder %s35, 0
      %s38 = sadd.s32 %s37, 1
      %s39 = scalar_select %p36, %s37, %s38
      %p42 = pneg %p36
      %p43 = scmp.eq.s32.totalorder %s27, 1
      %p44 = por %p42, %p43
      %p45 = scmp.ne.s32.totalorder %s37, %s40
      %p46 = scmp.eq.s32.totalorder %s27, 0
      %p47 = por %p45, %p46
      %p48 = scmp.ne.s32.totalorder %s37, %s40
      %p49 = scmp.eq.s32.totalorder %s32, 1
      %p50 = por %p48, %p49
      %p51 = scmp.ne.s32.totalorder %s40, %s41
      %p52 = scmp.eq.s32.totalorder %s32, 0
      %p53 = por %p51, %p52
      %p54 = scmp.ne.s32.totalorder %s40, %s41
      %p55 = scmp.eq.s32.totalorder %s33, 1
      %p56 = por %p54, %p55
      %p58 = scmp.ne.s32.totalorder %s41, %s57
      %p59 = scmp.eq.s32.totalorder %s33, 0
      %p60 = por %p58, %p59
      %s62 = sadd.s32 %s61, 1
      %p65 = scmp.eq.s32.totalorder %s27, 1
      %p66 = scmp.ne.s32.totalorder %s61, %s63
      %p67 = scmp.eq.s32.totalorder %s27, 0
      %p68 = por %p66, %p67
      %p69 = scmp.ne.s32.totalorder %s61, %s63
      %p70 = scmp.eq.s32.totalorder %s32, 1
      %p71 = por %p69, %p70
      %p72 = scmp.ne.s32.totalorder %s63, %s64
      %p73 = scmp.eq.s32.totalorder %s32, 0
      %p74 = por %p72, %p73
      %p75 = scmp.ne.s32.totalorder %s63, %s64
      %p76 = scmp.eq.s32.totalorder %s33, 1
      %p77 = por %p75, %p76
      %p79 = scmp.ne.s32.totalorder %s64, %s78
      %p80 = scmp.eq.s32.totalorder %s33, 0
      %p81 = por %p79, %p80
      %s83 = sadd.s32 %s82, 1
      %p86 = scmp.eq.s32.totalorder %s27, 1
      %p87 = scmp.ne.s32.totalorder %s82, %s84
      %p88 = scmp.eq.s32.totalorder %s27, 0
      %p89 = por %p87, %p88
      %p90 = scmp.ne.s32.totalorder %s82, %s84
      %p91 = scmp.eq.s32.totalorder %s32, 1
      %p92 = por %p90, %p91
      %p93 = scmp.ne.s32.totalorder %s84, %s85
      %p94 = scmp.eq.s32.totalorder %s32, 0
      %p95 = por %p93, %p94
      %p96 = scmp.ne.s32.totalorder %s84, %s85
      %p97 = scmp.eq.s32.totalorder %s33, 1
      %p98 = por %p96, %p97
      %p100 = scmp.ne.s32.totalorder %s85, %s99
      %p101 = scmp.eq.s32.totalorder %s33, 0
      %p102 = por %p100, %p101
      %s104 = sadd.s32 %s103, 1
      %p107 = scmp.eq.s32.totalorder %s27, 1
      %p108 = scmp.ne.s32.totalorder %s103, %s105
      %p109 = scmp.eq.s32.totalorder %s27, 0
      %p110 = por %p108, %p109
      %p111 = scmp.ne.s32.totalorder %s103, %s105
      %p112 = scmp.eq.s32.totalorder %s32, 1
      %p113 = por %p111, %p112
      %p114 = scmp.ne.s32.totalorder %s105, %s106
      %p115 = scmp.eq.s32.totalorder %s32, 0
      %p116 = por %p114, %p115
      %p117 = scmp.ne.s32.totalorder %s105, %s106
      %p118 = scmp.eq.s32.totalorder %s33, 1
      %p119 = por %p117, %p118
      %p121 = scmp.ne.s32.totalorder %s106, %s120
      %p122 = scmp.eq.s32.totalorder %s33, 0
      %p123 = por %p121, %p122
      %s125 = sadd.s32 %s124, 1
      %p128 = scmp.eq.s32.totalorder %s27, 1
      %p129 = scmp.ne.s32.totalorder %s124, %s126
      %p130 = scmp.eq.s32.totalorder %s27, 0
      %p131 = por %p129, %p130
      %p132 = scmp.ne.s32.totalorder %s124, %s126
      %p133 = scmp.eq.s32.totalorder %s32, 1
      %p134 = por %p132, %p133
      %p135 = scmp.ne.s32.totalorder %s126, %s127
      %p136 = scmp.eq.s32.totalorder %s32, 0
      %p137 = por %p135, %p136
      %p138 = scmp.ne.s32.totalorder %s126, %s127
      %p139 = scmp.eq.s32.totalorder %s33, 1
      %p140 = por %p138, %p139
      %p142 = scmp.ne.s32.totalorder %s127, %s141
      %p143 = scmp.eq.s32.totalorder %s33, 0
      %p144 = por %p142, %p143
      %s146 = sadd.s32 %s145, 1
      %p149 = scmp.eq.s32.totalorder %s27, 1
      %p150 = scmp.ne.s32.totalorder %s145, %s147
      %p151 = scmp.eq.s32.totalorder %s27, 0
      %p152 = por %p150, %p151
      %p153 = scmp.ne.s32.totalorder %s145, %s147
      %p154 = scmp.eq.s32.totalorder %s32, 1
      %p155 = por %p153, %p154
      %p156 = scmp.ne.s32.totalorder %s147, %s148
      %p157 = scmp.eq.s32.totalorder %s32, 0
      %p158 = por %p156, %p157
      %p159 = scmp.ne.s32.totalorder %s147, %s148
      %p160 = scmp.eq.s32.totalorder %s33, 1
      %p161 = por %p159, %p160
      %p163 = scmp.ne.s32.totalorder %s148, %s162
      %p164 = scmp.eq.s32.totalorder %s33, 0
      %p165 = por %p163, %p164
      %s167 = sadd.s32 %s166, 1
      %p170 = scmp.eq.s32.totalorder %s27, 1
      %p171 = scmp.ne.s32.totalorder %s166, %s168
      %p172 = scmp.eq.s32.totalorder %s27, 0
      %p173 = por %p171, %p172
      %p174 = scmp.ne.s32.totalorder %s166, %s168
      %p175 = scmp.eq.s32.totalorder %s32, 1
      %p176 = por %p174, %p175
      %p177 = scmp.ne.s32.totalorder %s168, %s169
      %p178 = scmp.eq.s32.totalorder %s32, 0
      %p179 = por %p177, %p178
      %p180 = scmp.ne.s32.totalorder %s168, %s169
      %p181 = scmp.eq.s32.totalorder %s33, 1
      %p182 = por %p180, %p181
      %p184 = scmp.ne.s32.totalorder %s169, %s183
      %p185 = scmp.eq.s32.totalorder %s33, 0
      %p186 = por %p184, %p185
      %s188 = sadd.s32 %s187, 1
      %p191 = scmp.eq.s32.totalorder %s27, 1
      %p192 = scmp.ne.s32.totalorder %s187, %s189
      %p193 = scmp.eq.s32.totalorder %s27, 0
      %p194 = por %p192, %p193
      %p195 = scmp.ne.s32.totalorder %s187, %s189
      %p196 = scmp.eq.s32.totalorder %s32, 1
      %p197 = por %p195, %p196
      %p198 = scmp.ne.s32.totalorder %s189, %s190
      %p199 = scmp.eq.s32.totalorder %s32, 0
      %p200 = por %p198, %p199
      %p201 = scmp.ne.s32.totalorder %s189, %s190
      %p202 = scmp.eq.s32.totalorder %s33, 1
      %p203 = por %p201, %p202
      %p205 = scmp.ne.s32.totalorder %s190, %s204
      %p206 = scmp.eq.s32.totalorder %s33, 0
      %p207 = por %p205, %p206
      %s209 = sadd.s32 %s208, 1
      %p212 = scmp.eq.s32.totalorder %s27, 1
      %p213 = scmp.ne.s32.totalorder %s208, %s210
      %p214 = scmp.eq.s32.totalorder %s27, 0
      %p215 = por %p213, %p214
      %p216 = scmp.ne.s32.totalorder %s208, %s210
      %p217 = scmp.eq.s32.totalorder %s32, 1
      %p218 = por %p216, %p217
      %p219 = scmp.ne.s32.totalorder %s210, %s211
      %p220 = scmp.eq.s32.totalorder %s32, 0
      %p221 = por %p219, %p220
      %p222 = scmp.ne.s32.totalorder %s210, %s211
      %p223 = scmp.eq.s32.totalorder %s33, 1
      %p224 = por %p222, %p223
      %p226 = scmp.ne.s32.totalorder %s211, %s225
      %p227 = scmp.eq.s32.totalorder %s33, 0
      %p228 = por %p226, %p227
      %s230 = sadd.s32 %s229, 1
      %p233 = scmp.eq.s32.totalorder %s27, 1
      %p234 = scmp.ne.s32.totalorder %s229, %s231
      %p235 = scmp.eq.s32.totalorder %s27, 0
      %p236 = por %p234, %p235
      %p237 = scmp.ne.s32.totalorder %s229, %s231
      %p238 = scmp.eq.s32.totalorder %s32, 1
      %p239 = por %p237, %p238
      %p240 = scmp.ne.s32.totalorder %s231, %s232
      %p241 = scmp.eq.s32.totalorder %s32, 0
      %p242 = por %p240, %p241
      %p243 = scmp.ne.s32.totalorder %s231, %s232
      %p244 = scmp.eq.s32.totalorder %s33, 1
      %p245 = por %p243, %p244
      %p247 = scmp.ne.s32.totalorder %s232, %s246
      %p248 = scmp.eq.s32.totalorder %s33, 0
      %p249 = por %p247, %p248
      %s251 = sadd.s32 %s250, 1
      %p254 = scmp.eq.s32.totalorder %s27, 1
      %p255 = scmp.ne.s32.totalorder %s250, %s252
      %p256 = scmp.eq.s32.totalorder %s27, 0
      %p257 = por %p255, %p256
      %p258 = scmp.ne.s32.totalorder %s250, %s252
      %p259 = scmp.eq.s32.totalorder %s32, 1
      %p260 = por %p258, %p259
      %p261 = scmp.ne.s32.totalorder %s252, %s253
      %p262 = scmp.eq.s32.totalorder %s32, 0
      %p263 = por %p261, %p262
      %p264 = scmp.ne.s32.totalorder %s252, %s253
      %p265 = scmp.eq.s32.totalorder %s33, 1
      %p266 = por %p264, %p265
      %p268 = scmp.ne.s32.totalorder %s253, %s267
      %p269 = scmp.eq.s32.totalorder %s33, 0
      %p270 = por %p268, %p269
      %s271 = ssub.s32 %s27, %s34
      %p272 = scmp.eq.s32.totalorder %s271, 0
      %s274 = sadd.s32 %s273, 1
      %s275 = scalar_select %p272, %s273, %s274
      %p278 = pneg %p272
      %p279 = scmp.eq.s32.totalorder %s27, 1
      %p280 = por %p278, %p279
      %p281 = scmp.ne.s32.totalorder %s273, %s276
      %p282 = scmp.eq.s32.totalorder %s27, 0
      %p283 = por %p281, %p282
      %p284 = scmp.ne.s32.totalorder %s273, %s276
      %p285 = scmp.eq.s32.totalorder %s32, 1
      %p286 = por %p284, %p285
      %p287 = scmp.ne.s32.totalorder %s276, %s277
      %p288 = scmp.eq.s32.totalorder %s32, 0
      %p289 = por %p287, %p288
      %p290 = scmp.ne.s32.totalorder %s276, %s277
      %p291 = scmp.eq.s32.totalorder %s33, 1
      %p292 = por %p290, %p291
      %p294 = scmp.ne.s32.totalorder %s277, %s293
      %p295 = scmp.eq.s32.totalorder %s33, 0
      %p296 = por %p294, %p295
      %p297 = scmp.le.s32.totalorder 1, %s27
      %p298 = scmp.lt.s32.totalorder %s27, 3
      %p299 = pnand %p297, %p298
      %p300 = pneg %p299
      // Predicated region
      $region9: #{tpu_custom_call.1} parent=5 // pred_check
        _
      $region10: #{tpu_custom_call.1} parent=5 // pred_check_branch
        %302 = sbr.rel (%p299) target = $region12
      $region11: #{tpu_custom_call.1} parent=5 // pred_region
        %s303 = ssub.s32 %s27, 1
        // Predicated region
        $region13: #{tpu_custom_call.1} parent=11 // pred_check
          %p304 = pneg %p74
        $region14: #{tpu_custom_call.1} parent=11 // pred_check_branch
          %306 = sbr.rel (%p304) target = $region16
        $region15: #{tpu_custom_call.1} parent=11 // pred_region
          %s308 = ssub.s32 12288, 12288
          %309 = vsyncadd [#allocation10], %s308
          %s310 = sshll.u32 [#allocation9], 4
          %s311 = int_to_ptr.vmem [resolvable:$true] %s310
          %316 = dma.hbm_to_vmem [thread:$0]  %s1, 12288, %s311, [#allocation10], 384, 384, 24
        $region16: #{tpu_custom_call.1} parent=11 // pred_fallthru
          _
        // Predicated region
        $region17: #{tpu_custom_call.1} parent=11 // pred_check
          %p317 = pneg %p95
        $region18: #{tpu_custom_call.1} parent=11 // pred_check_branch
          %319 = sbr.rel (%p317) target = $region20
        $region19: #{tpu_custom_call.1} parent=11 // pred_region
          %s321 = ssub.s32 96, 96
          %322 = vsyncadd [#allocation10], %s321
          %s324 = sshll.u32 [#allocation11], 4
          %s325 = int_to_ptr.vmem [resolvable:$true] %s324
          %327 = dma.hbm_to_vmem [thread:$0]  %s2, 96, %s325, [#allocation10]
        $region20: #{tpu_custom_call.1} parent=11 // pred_fallthru
          _
        // Predicated region
        $region21: #{tpu_custom_call.1} parent=11 // pred_check
          %p328 = pneg %p116
        $region22: #{tpu_custom_call.1} parent=11 // pred_check_branch
          %330 = sbr.rel (%p328) target = $region24
        $region23: #{tpu_custom_call.1} parent=11 // pred_region
          %s332 = ssub.s32 4096, 4096
          %333 = vsyncadd [#allocation13], %s332
          %s334 = sshll.u32 [#allocation12], 4
          %s335 = int_to_ptr.vmem [resolvable:$true] %s334
          %340 = dma.hbm_to_vmem [thread:$0]  %s3, 4096, %s335, [#allocation13], 128, 128, 8
        $region24: #{tpu_custom_call.1} parent=11 // pred_fallthru
          _
        // Predicated region
        $region25: #{tpu_custom_call.1} parent=11 // pred_check
          %p341 = pneg %p137
        $region26: #{tpu_custom_call.1} parent=11 // pred_check_branch
          %343 = sbr.rel (%p341) target = $region28
        $region27: #{tpu_custom_call.1} parent=11 // pred_region
          _
        $region28: #{tpu_custom_call.1} parent=11 // pred_fallthru
          _
        // Predicated region
        $region29: #{tpu_custom_call.1} parent=11 // pred_check
          %p344 = pneg %p158
        $region30: #{tpu_custom_call.1} parent=11 // pred_check_branch
          %346 = sbr.rel (%p344) target = $region32
        $region31: #{tpu_custom_call.1} parent=11 // pred_region
          _
        $region32: #{tpu_custom_call.1} parent=11 // pred_fallthru
          _
        // Predicated region
        $region33: #{tpu_custom_call.1} parent=11 // pred_check
          %p347 = pneg %p179
        $region34: #{tpu_custom_call.1} parent=11 // pred_check_branch
          %349 = sbr.rel (%p347) target = $region36
        $region35: #{tpu_custom_call.1} parent=11 // pred_region
          _
        $region36: #{tpu_custom_call.1} parent=11 // pred_fallthru
          _
        // Predicated region
        $region37: #{tpu_custom_call.1} parent=11 // pred_check
          %p350 = pneg %p200
        $region38: #{tpu_custom_call.1} parent=11 // pred_check_branch
          %352 = sbr.rel (%p350) target = $region40
        $region39: #{tpu_custom_call.1} parent=11 // pred_region
          _
        $region40: #{tpu_custom_call.1} parent=11 // pred_fallthru
          _
        // Predicated region
        $region41: #{tpu_custom_call.1} parent=11 // pred_check
          %p353 = pneg %p221
        $region42: #{tpu_custom_call.1} parent=11 // pred_check_branch
          %355 = sbr.rel (%p353) target = $region44
        $region43: #{tpu_custom_call.1} parent=11 // pred_region
          _
        $region44: #{tpu_custom_call.1} parent=11 // pred_fallthru
          _
        // Predicated region
        $region45: #{tpu_custom_call.1} parent=11 // pred_check
          %p356 = pneg %p242
        $region46: #{tpu_custom_call.1} parent=11 // pred_check_branch
          %358 = sbr.rel (%p356) target = $region48
        $region47: #{tpu_custom_call.1} parent=11 // pred_region
          _
        $region48: #{tpu_custom_call.1} parent=11 // pred_fallthru
          _
        // Predicated region
        $region49: #{tpu_custom_call.1} parent=11 // pred_check
          %p359 = pneg %p263
        $region50: #{tpu_custom_call.1} parent=11 // pred_check_branch
          %361 = sbr.rel (%p359) target = $region52
        $region51: #{tpu_custom_call.1} parent=11 // pred_region
          _
        $region52: #{tpu_custom_call.1} parent=11 // pred_fallthru
          _
      $region12: #{tpu_custom_call.1} parent=5 // pred_fallthru
        _
      %p362 = scmp.lt.s32.totalorder %s27, 2
      // Predicated region
      $region53: #{tpu_custom_call.1} parent=5 // pred_check
        %p363 = pneg %p362
      $region54: #{tpu_custom_call.1} parent=5 // pred_check_branch
        %365 = sbr.rel (%p363) target = $region56
      $region55: #{tpu_custom_call.1} parent=5 // pred_region
        // Predicated region
        $region57: #{tpu_custom_call.1} parent=55 // pred_check
          %p366 = pneg %p47
        $region58: #{tpu_custom_call.1} parent=55 // pred_check_branch
          %368 = sbr.rel (%p366) target = $region60
        $region59: #{tpu_custom_call.1} parent=55 // pred_region
          %s369 = sand.u32 %s37, 1
          %s370 = scalar_lea.sflag [#allocation7], %s369
          %s371 = sand.u32 %s37, 1
          %s372 = smul.addr %s371, 512
          %s373 = scalar_lea.vmem [#allocation6], %s372
          %s374 = smul.u32 2, %s27
          %s376 = ssub.s32 8192, 8192
          %377 = vsyncadd %s370, %s376
          %s378 = smul.addr %s374, 32
          %s379 = smul.addr %s378, 128
          %s380 = scalar_lea.hbm %s0, %s379
          %s381 = sshll.u32 %s373, 4
          %s382 = int_to_ptr.vmem [resolvable:$true] %s381
          %387 = dma.hbm_to_vmem [thread:$0]  %s380, 8192, %s382, %s370, 256, 256, 16
        $region60: #{tpu_custom_call.1} parent=55 // pred_fallthru
          _
      $region56: #{tpu_custom_call.1} parent=5 // pred_fallthru
        _
      %p388 = scmp.le.s32.totalorder 1, %s27
      %p389 = scmp.lt.s32.totalorder %s27, 3
      %p390 = pnand %p388, %p389
      %p391 = pneg %p390
      // Predicated region
      $region61: #{tpu_custom_call.1} parent=5 // pred_check
        _
      $region62: #{tpu_custom_call.1} parent=5 // pred_check_branch
        %393 = sbr.rel (%p390) target = $region64
      $region63: #{tpu_custom_call.1} parent=5 // pred_region
        %s394 = ssub.s32 %s27, 1
        %s395 = sand.u32 %s40, 1
        %s396 = scalar_lea.sflag [#allocation7], %s395
        %s397 = sand.u32 %s40, 1
        %s398 = smul.addr %s397, 512
        %s399 = scalar_lea.vmem [#allocation6], %s398
        // Predicated region
        $region65: #{tpu_custom_call.1} parent=63 // pred_check
          %p400 = pneg %p53
        $region66: #{tpu_custom_call.1} parent=63 // pred_check_branch
          %402 = sbr.rel (%p400) target = $region68
        $region67: #{tpu_custom_call.1} parent=63 // pred_region
          %403 = dma.done %s396, 8192
        $region68: #{tpu_custom_call.1} parent=63 // pred_fallthru
          _
        // Predicated region
        $region69: #{tpu_custom_call.1} parent=63 // pred_check
          %p404 = pneg %p74
        $region70: #{tpu_custom_call.1} parent=63 // pred_check_branch
          %406 = sbr.rel (%p404) target = $region72
        $region71: #{tpu_custom_call.1} parent=63 // pred_region
          %407 = dma.done [#allocation10], 12288
        $region72: #{tpu_custom_call.1} parent=63 // pred_fallthru
          _
        // Predicated region
        $region73: #{tpu_custom_call.1} parent=63 // pred_check
          %p408 = pneg %p95
        $region74: #{tpu_custom_call.1} parent=63 // pred_check_branch
          %410 = sbr.rel (%p408) target = $region76
        $region75: #{tpu_custom_call.1} parent=63 // pred_region
          %411 = dma.done [#allocation10], 96
        $region76: #{tpu_custom_call.1} parent=63 // pred_fallthru
          _
        // Predicated region
        $region77: #{tpu_custom_call.1} parent=63 // pred_check
          %p412 = pneg %p116
        $region78: #{tpu_custom_call.1} parent=63 // pred_check_branch
          %414 = sbr.rel (%p412) target = $region80
        $region79: #{tpu_custom_call.1} parent=63 // pred_region
          %415 = dma.done [#allocation13], 4096
        $region80: #{tpu_custom_call.1} parent=63 // pred_fallthru
          _
        %s416 = sand.u32 %s40, 1
        %s417 = scalar_lea.sflag [#allocation7], %s416
        %s418 = sand.u32 %s40, 1
        %s419 = smul.addr %s418, 512
        %s420 = scalar_lea.vmem [#allocation6], %s419
        %p421 = pneg %p53
        %p422 = pneg %p50
        %p423 = pneg %p74
        %p424 = pneg %p71
        %p425 = pneg %p95
        %p426 = pneg %p92
        %p427 = pneg %p116
        %p428 = pneg %p113
        %p429 = pneg %p137
        %p430 = pneg %p134
        %p431 = pneg %p158
        %p432 = pneg %p155
        %p433 = pneg %p179
        %p434 = pneg %p176
        %p435 = pneg %p200
        %p436 = pneg %p197
        %p437 = pneg %p221
        %p438 = pneg %p218
        %p439 = pneg %p242
        %p440 = pneg %p239
        %p441 = pneg %p263
        %p442 = pneg %p260
        %p443 = pneg %p289
        %p444 = pneg %p286
        %s445 = sand.u32 %s276, 1
        %s446 = scalar_lea.sflag [#allocation8], %s445
        %s447 = sand.u32 %s276, 1
        %s448 = smul.addr %s447, 512
        %s449 = scalar_lea.vmem [#allocation14], %s448
        %s450 = smul.u32 2, %s32
        %s451 = smul.u32 2, %s32
        %p453 = scmp.eq.s32.totalorder %s32, 0
        // Predicated region
        $region81: #{tpu_custom_call.1} parent=63 // pred_check
          %p454 = pneg %p453
        $region82: #{tpu_custom_call.1} parent=63 // pred_check_branch
          %456 = sbr.rel (%p454) target = $region84
        $region83: #{tpu_custom_call.1} parent=63 // pred_region
          // Predicated region
          $region85: #{tpu_custom_call.1} parent=83 // pred_check
            _
          $region86: #{tpu_custom_call.1} parent=83 // pred_check_branch
            %458 = sbr.rel target = $region88
          $region87: #{tpu_custom_call.1} parent=83 // pred_region
            %459 = sst [smem:[#allocation17]] [#allocation16]
            %460 = sst [smem:[#allocation18]] [#allocation15]
          $region88: #{tpu_custom_call.1} parent=83 // pred_fallthru
            _
          %462 = shalt.err (0)
          %s464 = sshll.u32 [#allocation3], 4
          %s465 = int_to_ptr.vmem [resolvable:$true] %s464
          %467 = dma.hbm_to_vmem [thread:$0]  %s7, 8192, %s465, [#allocation5]
          %s468 = scalar_lea.sflag [#allocation5], 1
          // Predicated region
          $region89: #{tpu_custom_call.1} parent=83 // pred_check
            _
          $region90: #{tpu_custom_call.1} parent=83 // pred_check_branch
            %470 = sbr.rel target = $region92
          $region91: #{tpu_custom_call.1} parent=83 // pred_region
            %471 = sst [smem:[#allocation17]] [#allocation20]
            %472 = sst [smem:[#allocation18]] [#allocation19]
          $region92: #{tpu_custom_call.1} parent=83 // pred_fallthru
            _
          %474 = shalt.err (0)
          %s476 = sshll.u32 [#allocation4], 4
          %s477 = int_to_ptr.vmem [resolvable:$true] %s476
          %479 = dma.hbm_to_vmem [thread:$0]  %s9, 8192, %s477, %s468
        $region84: #{tpu_custom_call.1} parent=63 // pred_fallthru
          _
        %v480 = vld [vmem:[%s399] sm:$0xff]
        %v481 = vld [vmem:[%s399 + $0x8] sm:$0xff]
        %v482 = vld [vmem:[%s399 + $0x10] sm:$0xff]
        %v483 = vld [vmem:[%s399 + $0x18] sm:$0xff]
        %v484 = vld [vmem:[%s399 + $0x20] sm:$0xff]
        %v485 = vld [vmem:[%s399 + $0x28] sm:$0xff]
        %v486 = vld [vmem:[%s399 + $0x30] sm:$0xff]
        %v487 = vld [vmem:[%s399 + $0x38] sm:$0xff]
        %v488 = vld [vmem:[%s399 + $0x40] sm:$0xff]
        %v489 = vld [vmem:[%s399 + $0x48] sm:$0xff]
        %v490 = vld [vmem:[%s399 + $0x50] sm:$0xff]
        %v491 = vld [vmem:[%s399 + $0x58] sm:$0xff]
        %v492 = vld [vmem:[%s399 + $0x60] sm:$0xff]
        %v493 = vld [vmem:[%s399 + $0x68] sm:$0xff]
        %v494 = vld [vmem:[%s399 + $0x70] sm:$0xff]
        %v495 = vld [vmem:[%s399 + $0x78] sm:$0xff]
        %v496 = vld [vmem:[%s399 + $0x80] sm:$0xff]
        %v497 = vld [vmem:[%s399 + $0x88] sm:$0xff]
        %v498 = vld [vmem:[%s399 + $0x90] sm:$0xff]
        %v499 = vld [vmem:[%s399 + $0x98] sm:$0xff]
        %v500 = vld [vmem:[%s399 + $0xa0] sm:$0xff]
        %v501 = vld [vmem:[%s399 + $0xa8] sm:$0xff]
        %v502 = vld [vmem:[%s399 + $0xb0] sm:$0xff]
        %v503 = vld [vmem:[%s399 + $0xb8] sm:$0xff]
        %v504 = vld [vmem:[%s399 + $0xc0] sm:$0xff]
        %v505 = vld [vmem:[%s399 + $0xc8] sm:$0xff]
        %v506 = vld [vmem:[%s399 + $0xd0] sm:$0xff]
        %v507 = vld [vmem:[%s399 + $0xd8] sm:$0xff]
        %v508 = vld [vmem:[%s399 + $0xe0] sm:$0xff]
        %v509 = vld [vmem:[%s399 + $0xe8] sm:$0xff]
        %v510 = vld [vmem:[%s399 + $0xf0] sm:$0xff]
        %v511 = vld [vmem:[%s399 + $0xf8] sm:$0xff]
        %v512 = vld [vmem:[%s399 + $0x100] sm:$0xff]
        %v513 = vld [vmem:[%s399 + $0x108] sm:$0xff]
        %v514 = vld [vmem:[%s399 + $0x110] sm:$0xff]
        %v515 = vld [vmem:[%s399 + $0x118] sm:$0xff]
        %v516 = vld [vmem:[%s399 + $0x120] sm:$0xff]
        %v517 = vld [vmem:[%s399 + $0x128] sm:$0xff]
        %v518 = vld [vmem:[%s399 + $0x130] sm:$0xff]
        %v519 = vld [vmem:[%s399 + $0x138] sm:$0xff]
        %v520 = vld [vmem:[%s399 + $0x140] sm:$0xff]
        %v521 = vld [vmem:[%s399 + $0x148] sm:$0xff]
        %v522 = vld [vmem:[%s399 + $0x150] sm:$0xff]
        %v523 = vld [vmem:[%s399 + $0x158] sm:$0xff]
        %v524 = vld [vmem:[%s399 + $0x160] sm:$0xff]
        %v525 = vld [vmem:[%s399 + $0x168] sm:$0xff]
        %v526 = vld [vmem:[%s399 + $0x170] sm:$0xff]
        %v527 = vld [vmem:[%s399 + $0x178] sm:$0xff]
        %v528 = vld [vmem:[%s399 + $0x180] sm:$0xff]
        %v529 = vld [vmem:[%s399 + $0x188] sm:$0xff]
        %v530 = vld [vmem:[%s399 + $0x190] sm:$0xff]
        %v531 = vld [vmem:[%s399 + $0x198] sm:$0xff]
        %v532 = vld [vmem:[%s399 + $0x1a0] sm:$0xff]
        %v533 = vld [vmem:[%s399 + $0x1a8] sm:$0xff]
        %v534 = vld [vmem:[%s399 + $0x1b0] sm:$0xff]
        %v535 = vld [vmem:[%s399 + $0x1b8] sm:$0xff]
        %v536 = vld [vmem:[%s399 + $0x1c0] sm:$0xff]
        %v537 = vld [vmem:[%s399 + $0x1c8] sm:$0xff]
        %v538 = vld [vmem:[%s399 + $0x1d0] sm:$0xff]
        %v539 = vld [vmem:[%s399 + $0x1d8] sm:$0xff]
        %v540 = vld [vmem:[%s399 + $0x1e0] sm:$0xff]
        %v541 = vld [vmem:[%s399 + $0x1e8] sm:$0xff]
        %v542 = vld [vmem:[%s399 + $0x1f0] sm:$0xff]
        %v543 = vld [vmem:[%s399 + $0x1f8] sm:$0xff]
        %v544 = vpack.c.bf16 %v482, %v480
        %v545 = vpack.c.bf16 %v483, %v481
        %v546 = vpack.c.bf16 %v486, %v484
        %v547 = vpack.c.bf16 %v487, %v485
        %v548 = vpack.c.bf16 %v490, %v488
        %v549 = vpack.c.bf16 %v491, %v489
        %v550 = vpack.c.bf16 %v494, %v492
        %v551 = vpack.c.bf16 %v495, %v493
        %v552 = vpack.c.bf16 %v498, %v496
        %v553 = vpack.c.bf16 %v499, %v497
        %v554 = vpack.c.bf16 %v502, %v500
        %v555 = vpack.c.bf16 %v503, %v501
        %v556 = vpack.c.bf16 %v506, %v504
        %v557 = vpack.c.bf16 %v507, %v505
        %v558 = vpack.c.bf16 %v510, %v508
        %v559 = vpack.c.bf16 %v511, %v509
        %v560 = vpack.c.bf16 %v514, %v512
        %v561 = vpack.c.bf16 %v515, %v513
        %v562 = vpack.c.bf16 %v518, %v516
        %v563 = vpack.c.bf16 %v519, %v517
        %v564 = vpack.c.bf16 %v522, %v520
        %v565 = vpack.c.bf16 %v523, %v521
        %v566 = vpack.c.bf16 %v526, %v524
        %v567 = vpack.c.bf16 %v527, %v525
        %v568 = vpack.c.bf16 %v530, %v528
        %v569 = vpack.c.bf16 %v531, %v529
        %v570 = vpack.c.bf16 %v534, %v532
        %v571 = vpack.c.bf16 %v535, %v533
        %v572 = vpack.c.bf16 %v538, %v536
        %v573 = vpack.c.bf16 %v539, %v537
        %v574 = vpack.c.bf16 %v542, %v540
        %v575 = vpack.c.bf16 %v543, %v541
        %v576 = vld [vmem:[#allocation9] sm:$0xff]
        %v577 = vld [vmem:[#allocation9 + $0x8] sm:$0xff]
        %v578 = vld [vmem:[#allocation9 + $0x10] sm:$0xff]
        %v579 = vld [vmem:[#allocation9 + $0x18] sm:$0xff]
        %v580 = vld [vmem:[#allocation9 + $0x20] sm:$0xff]
        %v581 = vld [vmem:[#allocation9 + $0x28] sm:$0xff]
        %v582 = vld [vmem:[#allocation9 + $0x30] sm:$0xff]
        %v583 = vld [vmem:[#allocation9 + $0x38] sm:$0xff]
        %v584 = vld [vmem:[#allocation9 + $0x40] sm:$0xff]
        %v585 = vld [vmem:[#allocation9 + $0x48] sm:$0xff]
        %v586 = vld [vmem:[#allocation9 + $0x50] sm:$0xff]
        %v587 = vld [vmem:[#allocation9 + $0x58] sm:$0xff]
        %v588 = vld [vmem:[#allocation9 + $0x60] sm:$0xff]
        %v589 = vld [vmem:[#allocation9 + $0x68] sm:$0xff]
        %v590 = vld [vmem:[#allocation9 + $0x70] sm:$0xff]
        %v591 = vld [vmem:[#allocation9 + $0x78] sm:$0xff]
        %v592 = vld [vmem:[#allocation9 + $0x80] sm:$0xff]
        %v593 = vld [vmem:[#allocation9 + $0x88] sm:$0xff]
        %v594 = vld [vmem:[#allocation9 + $0x90] sm:$0xff]
        %v595 = vld [vmem:[#allocation9 + $0x98] sm:$0xff]
        %v596 = vld [vmem:[#allocation9 + $0xa0] sm:$0xff]
        %v597 = vld [vmem:[#allocation9 + $0xa8] sm:$0xff]
        %v598 = vld [vmem:[#allocation9 + $0xb0] sm:$0xff]
        %v599 = vld [vmem:[#allocation9 + $0xb8] sm:$0xff]
        %v600 = vld [vmem:[#allocation9 + $0xc0] sm:$0xff]
        %v601 = vld [vmem:[#allocation9 + $0xc8] sm:$0xff]
        %v602 = vld [vmem:[#allocation9 + $0xd0] sm:$0xff]
        %v603 = vld [vmem:[#allocation9 + $0xd8] sm:$0xff]
        %v604 = vld [vmem:[#allocation9 + $0xe0] sm:$0xff]
        %v605 = vld [vmem:[#allocation9 + $0xe8] sm:$0xff]
        %v606 = vld [vmem:[#allocation9 + $0xf0] sm:$0xff]
        %v607 = vld [vmem:[#allocation9 + $0xf8] sm:$0xff]
        %v608 = vld [vmem:[#allocation9 + $0x100] sm:$0xff]
        %v609 = vld [vmem:[#allocation9 + $0x108] sm:$0xff]
        %v610 = vld [vmem:[#allocation9 + $0x110] sm:$0xff]
        %v611 = vld [vmem:[#allocation9 + $0x118] sm:$0xff]
        %v612 = vld [vmem:[#allocation9 + $0x120] sm:$0xff]
        %v613 = vld [vmem:[#allocation9 + $0x128] sm:$0xff]
        %v614 = vld [vmem:[#allocation9 + $0x130] sm:$0xff]
        %v615 = vld [vmem:[#allocation9 + $0x138] sm:$0xff]
        %v616 = vld [vmem:[#allocation9 + $0x140] sm:$0xff]
        %v617 = vld [vmem:[#allocation9 + $0x148] sm:$0xff]
        %v618 = vld [vmem:[#allocation9 + $0x150] sm:$0xff]
        %v619 = vld [vmem:[#allocation9 + $0x158] sm:$0xff]
        %v620 = vld [vmem:[#allocation9 + $0x160] sm:$0xff]
        %v621 = vld [vmem:[#allocation9 + $0x168] sm:$0xff]
        %v622 = vld [vmem:[#allocation9 + $0x170] sm:$0xff]
        %v623 = vld [vmem:[#allocation9 + $0x178] sm:$0xff]
        %v624 = vld [vmem:[#allocation9 + $0x180] sm:$0xff]
        %v625 = vld [vmem:[#allocation9 + $0x188] sm:$0xff]
        %v626 = vld [vmem:[#allocation9 + $0x190] sm:$0xff]
        %v627 = vld [vmem:[#allocation9 + $0x198] sm:$0xff]
        %v628 = vld [vmem:[#allocation9 + $0x1a0] sm:$0xff]
        %v629 = vld [vmem:[#allocation9 + $0x1a8] sm:$0xff]
        %v630 = vld [vmem:[#allocation9 + $0x1b0] sm:$0xff]
        %v631 = vld [vmem:[#allocation9 + $0x1b8] sm:$0xff]
        %v632 = vld [vmem:[#allocation9 + $0x1c0] sm:$0xff]
        %v633 = vld [vmem:[#allocation9 + $0x1c8] sm:$0xff]
        %v634 = vld [vmem:[#allocation9 + $0x1d0] sm:$0xff]
        %v635 = vld [vmem:[#allocation9 + $0x1d8] sm:$0xff]
        %v636 = vld [vmem:[#allocation9 + $0x1e0] sm:$0xff]
        %v637 = vld [vmem:[#allocation9 + $0x1e8] sm:$0xff]
        %v638 = vld [vmem:[#allocation9 + $0x1f0] sm:$0xff]
        %v639 = vld [vmem:[#allocation9 + $0x1f8] sm:$0xff]
        %v640 = vld [vmem:[#allocation9 + $0x200] sm:$0xff]
        %v641 = vld [vmem:[#allocation9 + $0x208] sm:$0xff]
        %v642 = vld [vmem:[#allocation9 + $0x210] sm:$0xff]
        %v643 = vld [vmem:[#allocation9 + $0x218] sm:$0xff]
        %v644 = vld [vmem:[#allocation9 + $0x220] sm:$0xff]
        %v645 = vld [vmem:[#allocation9 + $0x228] sm:$0xff]
        %v646 = vld [vmem:[#allocation9 + $0x230] sm:$0xff]
        %v647 = vld [vmem:[#allocation9 + $0x238] sm:$0xff]
        %v648 = vld [vmem:[#allocation9 + $0x240] sm:$0xff]
        %v649 = vld [vmem:[#allocation9 + $0x248] sm:$0xff]
        %v650 = vld [vmem:[#allocation9 + $0x250] sm:$0xff]
        %v651 = vld [vmem:[#allocation9 + $0x258] sm:$0xff]
        %v652 = vld [vmem:[#allocation9 + $0x260] sm:$0xff]
        %v653 = vld [vmem:[#allocation9 + $0x268] sm:$0xff]
        %v654 = vld [vmem:[#allocation9 + $0x270] sm:$0xff]
        %v655 = vld [vmem:[#allocation9 + $0x278] sm:$0xff]
        %v656 = vld [vmem:[#allocation9 + $0x280] sm:$0xff]
        %v657 = vld [vmem:[#allocation9 + $0x288] sm:$0xff]
        %v658 = vld [vmem:[#allocation9 + $0x290] sm:$0xff]
        %v659 = vld [vmem:[#allocation9 + $0x298] sm:$0xff]
        %v660 = vld [vmem:[#allocation9 + $0x2a0] sm:$0xff]
        %v661 = vld [vmem:[#allocation9 + $0x2a8] sm:$0xff]
        %v662 = vld [vmem:[#allocation9 + $0x2b0] sm:$0xff]
        %v663 = vld [vmem:[#allocation9 + $0x2b8] sm:$0xff]
        %v664 = vld [vmem:[#allocation9 + $0x2c0] sm:$0xff]
        %v665 = vld [vmem:[#allocation9 + $0x2c8] sm:$0xff]
        %v666 = vld [vmem:[#allocation9 + $0x2d0] sm:$0xff]
        %v667 = vld [vmem:[#allocation9 + $0x2d8] sm:$0xff]
        %v668 = vld [vmem:[#allocation9 + $0x2e0] sm:$0xff]
        %v669 = vld [vmem:[#allocation9 + $0x2e8] sm:$0xff]
        %v670 = vld [vmem:[#allocation9 + $0x2f0] sm:$0xff]
        %v671 = vld [vmem:[#allocation9 + $0x2f8] sm:$0xff]
        %v672 = vld [vmem:[#allocation11] sm:$0x3f]
        %v674 = vlaneseq
        %v675 = vshrl.u32 %v674, 7
        %v676 = vsub.s32 0, %v675
        %v677 = vrot.slane %v672, %v676
        %v678 = vlaneseq
        %v679 = vshrl.u32 %v678, 7
        %v680 = vsub.s32 1, %v679
        %v681 = vrot.slane %v672, %v680
        %v682 = vlaneseq
        %v683 = vshrl.u32 %v682, 7
        %v684 = vsub.s32 2, %v683
        %v685 = vrot.slane %v672, %v684
        %v686 = vlaneseq
        %v687 = vshrl.u32 %v686, 7
        %v688 = vsub.s32 3, %v687
        %v689 = vrot.slane %v672, %v688
        %v690 = vlaneseq
        %v691 = vshrl.u32 %v690, 7
        %v692 = vsub.s32 4, %v691
        %v693 = vrot.slane %v672, %v692
        %v694 = vlaneseq
        %v695 = vshrl.u32 %v694, 7
        %v696 = vsub.s32 5, %v695
        %v697 = vrot.slane %v672, %v696
        %v800 = vunpack.c.l.b16 %v576
        %v801 = vunpack.c.h.b16 %v576
        %v802 = vunpack.c.l.b16 %v577
        %v803 = vunpack.c.h.b16 %v577
        %v804 = vunpack.c.l.b16 %v578
        %v805 = vunpack.c.h.b16 %v578
        %v806 = vunpack.c.l.b16 %v579
        %v807 = vunpack.c.h.b16 %v579
        %v808 = vunpack.c.l.b16 %v580
        %v809 = vunpack.c.h.b16 %v580
        %v810 = vunpack.c.l.b16 %v581
        %v811 = vunpack.c.h.b16 %v581
        %v812 = vunpack.c.l.b16 %v582
        %v813 = vunpack.c.h.b16 %v582
        %v814 = vunpack.c.l.b16 %v583
        %v815 = vunpack.c.h.b16 %v583
        %v816 = vunpack.c.l.b16 %v584
        %v817 = vunpack.c.h.b16 %v584
        %v818 = vunpack.c.l.b16 %v585
        %v819 = vunpack.c.h.b16 %v585
        %v820 = vunpack.c.l.b16 %v586
        %v821 = vunpack.c.h.b16 %v586
        %v822 = vunpack.c.l.b16 %v587
        %v823 = vunpack.c.h.b16 %v587
        %v824 = vunpack.c.l.b16 %v588
        %v825 = vunpack.c.h.b16 %v588
        %v826 = vunpack.c.l.b16 %v589
        %v827 = vunpack.c.h.b16 %v589
        %v828 = vunpack.c.l.b16 %v590
        %v829 = vunpack.c.h.b16 %v590
        %v830 = vunpack.c.l.b16 %v591
        %v831 = vunpack.c.h.b16 %v591
        %v832 = vunpack.c.l.b16 %v592
        %v833 = vunpack.c.h.b16 %v592
        %v834 = vunpack.c.l.b16 %v593
        %v835 = vunpack.c.h.b16 %v593
        %v836 = vunpack.c.l.b16 %v594
        %v837 = vunpack.c.h.b16 %v594
        %v838 = vunpack.c.l.b16 %v595
        %v839 = vunpack.c.h.b16 %v595
        %v840 = vunpack.c.l.b16 %v596
        %v841 = vunpack.c.h.b16 %v596
        %v842 = vunpack.c.l.b16 %v597
        %v843 = vunpack.c.h.b16 %v597
        %v844 = vunpack.c.l.b16 %v598
        %v845 = vunpack.c.h.b16 %v598
        %v846 = vunpack.c.l.b16 %v599
        %v847 = vunpack.c.h.b16 %v599
        %v848 = vunpack.c.l.b16 %v600
        %v849 = vunpack.c.h.b16 %v600
        %v850 = vunpack.c.l.b16 %v601
        %v851 = vunpack.c.h.b16 %v601
        %v852 = vunpack.c.l.b16 %v602
        %v853 = vunpack.c.h.b16 %v602
        %v854 = vunpack.c.l.b16 %v603
        %v855 = vunpack.c.h.b16 %v603
        %v856 = vunpack.c.l.b16 %v604
        %v857 = vunpack.c.h.b16 %v604
        %v858 = vunpack.c.l.b16 %v605
        %v859 = vunpack.c.h.b16 %v605
        %v860 = vunpack.c.l.b16 %v606
        %v861 = vunpack.c.h.b16 %v606
        %v862 = vunpack.c.l.b16 %v607
        %v863 = vunpack.c.h.b16 %v607
        %v864 = vunpack.c.l.b16 %v608
        %v865 = vunpack.c.h.b16 %v608
        %v866 = vunpack.c.l.b16 %v609
        %v867 = vunpack.c.h.b16 %v609
        %v868 = vunpack.c.l.b16 %v610
        %v869 = vunpack.c.h.b16 %v610
        %v870 = vunpack.c.l.b16 %v611
        %v871 = vunpack.c.h.b16 %v611
        %v872 = vunpack.c.l.b16 %v612
        %v873 = vunpack.c.h.b16 %v612
        %v874 = vunpack.c.l.b16 %v613
        %v875 = vunpack.c.h.b16 %v613
        %v876 = vunpack.c.l.b16 %v614
        %v877 = vunpack.c.h.b16 %v614
        %v878 = vunpack.c.l.b16 %v615
        %v879 = vunpack.c.h.b16 %v615
        %v880 = vunpack.c.l.b16 %v616
        %v881 = vunpack.c.h.b16 %v616
        %v882 = vunpack.c.l.b16 %v617
        %v883 = vunpack.c.h.b16 %v617
        %v884 = vunpack.c.l.b16 %v618
        %v885 = vunpack.c.h.b16 %v618
        %v886 = vunpack.c.l.b16 %v619
        %v887 = vunpack.c.h.b16 %v619
        %v888 = vunpack.c.l.b16 %v620
        %v889 = vunpack.c.h.b16 %v620
        %v890 = vunpack.c.l.b16 %v621
        %v891 = vunpack.c.h.b16 %v621
        %v892 = vunpack.c.l.b16 %v622
        %v893 = vunpack.c.h.b16 %v622
        %v894 = vunpack.c.l.b16 %v623
        %v895 = vunpack.c.h.b16 %v623
        %v896 = vunpack.c.l.b16 %v624
        %v897 = vunpack.c.h.b16 %v624
        %v898 = vunpack.c.l.b16 %v625
        %v899 = vunpack.c.h.b16 %v625
        %v900 = vunpack.c.l.b16 %v626
        %v901 = vunpack.c.h.b16 %v626
        %v902 = vunpack.c.l.b16 %v627
        %v903 = vunpack.c.h.b16 %v627
        %v904 = vunpack.c.l.b16 %v628
        %v905 = vunpack.c.h.b16 %v628
        %v906 = vunpack.c.l.b16 %v629
        %v907 = vunpack.c.h.b16 %v629
        %v908 = vunpack.c.l.b16 %v630
        %v909 = vunpack.c.h.b16 %v630
        %v910 = vunpack.c.l.b16 %v631
        %v911 = vunpack.c.h.b16 %v631
        %v912 = vunpack.c.l.b16 %v632
        %v913 = vunpack.c.h.b16 %v632
        %v914 = vunpack.c.l.b16 %v633
        %v915 = vunpack.c.h.b16 %v633
        %v916 = vunpack.c.l.b16 %v634
        %v917 = vunpack.c.h.b16 %v634
        %v918 = vunpack.c.l.b16 %v635
        %v919 = vunpack.c.h.b16 %v635
        %v920 = vunpack.c.l.b16 %v636
        %v921 = vunpack.c.h.b16 %v636
        %v922 = vunpack.c.l.b16 %v637
        %v923 = vunpack.c.h.b16 %v637
        %v924 = vunpack.c.l.b16 %v638
        %v925 = vunpack.c.h.b16 %v638
        %v926 = vunpack.c.l.b16 %v639
        %v927 = vunpack.c.h.b16 %v639
        %v928 = vunpack.c.l.b16 %v640
        %v929 = vunpack.c.h.b16 %v640
        %v930 = vunpack.c.l.b16 %v641
        %v931 = vunpack.c.h.b16 %v641
        %v932 = vunpack.c.l.b16 %v642
        %v933 = vunpack.c.h.b16 %v642
        %v934 = vunpack.c.l.b16 %v643
        %v935 = vunpack.c.h.b16 %v643
        %v936 = vunpack.c.l.b16 %v644
        %v937 = vunpack.c.h.b16 %v644
        %v938 = vunpack.c.l.b16 %v645
        %v939 = vunpack.c.h.b16 %v645
        %v940 = vunpack.c.l.b16 %v646
        %v941 = vunpack.c.h.b16 %v646
        %v942 = vunpack.c.l.b16 %v647
        %v943 = vunpack.c.h.b16 %v647
        %v944 = vunpack.c.l.b16 %v648
        %v945 = vunpack.c.h.b16 %v648
        %v946 = vunpack.c.l.b16 %v649
        %v947 = vunpack.c.h.b16 %v649
        %v948 = vunpack.c.l.b16 %v650
        %v949 = vunpack.c.h.b16 %v650
        %v950 = vunpack.c.l.b16 %v651
        %v951 = vunpack.c.h.b16 %v651
        %v952 = vunpack.c.l.b16 %v652
        %v953 = vunpack.c.h.b16 %v652
        %v954 = vunpack.c.l.b16 %v653
        %v955 = vunpack.c.h.b16 %v653
        %v956 = vunpack.c.l.b16 %v654
        %v957 = vunpack.c.h.b16 %v654
        %v958 = vunpack.c.l.b16 %v655
        %v959 = vunpack.c.h.b16 %v655
        %v960 = vunpack.c.l.b16 %v656
        %v961 = vunpack.c.h.b16 %v656
        %v962 = vunpack.c.l.b16 %v657
        %v963 = vunpack.c.h.b16 %v657
        %v964 = vunpack.c.l.b16 %v658
        %v965 = vunpack.c.h.b16 %v658
        %v966 = vunpack.c.l.b16 %v659
        %v967 = vunpack.c.h.b16 %v659
        %v968 = vunpack.c.l.b16 %v660
        %v969 = vunpack.c.h.b16 %v660
        %v970 = vunpack.c.l.b16 %v661
        %v971 = vunpack.c.h.b16 %v661
        %v972 = vunpack.c.l.b16 %v662
        %v973 = vunpack.c.h.b16 %v662
        %v974 = vunpack.c.l.b16 %v663
        %v975 = vunpack.c.h.b16 %v663
        %v976 = vunpack.c.l.b16 %v664
        %v977 = vunpack.c.h.b16 %v664
        %v978 = vunpack.c.l.b16 %v665
        %v979 = vunpack.c.h.b16 %v665
        %v980 = vunpack.c.l.b16 %v666
        %v981 = vunpack.c.h.b16 %v666
        %v982 = vunpack.c.l.b16 %v667
        %v983 = vunpack.c.h.b16 %v667
        %v984 = vunpack.c.l.b16 %v668
        %v985 = vunpack.c.h.b16 %v668
        %v986 = vunpack.c.l.b16 %v669
        %v987 = vunpack.c.h.b16 %v669
        %v988 = vunpack.c.l.b16 %v670
        %v989 = vunpack.c.h.b16 %v670
        %v990 = vunpack.c.l.b16 %v671
        %v991 = vunpack.c.h.b16 %v671
        %v992 = vpack.c.b16 %v806, %v800
        %v993 = vpack.c.b16 %v807, %v801
        %v994 = vpack.c.b16 %v808, %v802
        %v995 = vpack.c.b16 %v809, %v803
        %v996 = vpack.c.b16 %v810, %v804
        %v997 = vpack.c.b16 %v811, %v805
        %v998 = vpack.c.b16 %v818, %v812
        %v999 = vpack.c.b16 %v819, %v813
        %v1000 = vpack.c.b16 %v820, %v814
        %v1001 = vpack.c.b16 %v821, %v815
        %v1002 = vpack.c.b16 %v822, %v816
        %v1003 = vpack.c.b16 %v823, %v817
        %v1004 = vpack.c.b16 %v830, %v824
        %v1005 = vpack.c.b16 %v831, %v825
        %v1006 = vpack.c.b16 %v832, %v826
        %v1007 = vpack.c.b16 %v833, %v827
        %v1008 = vpack.c.b16 %v834, %v828
        %v1009 = vpack.c.b16 %v835, %v829
        %v1010 = vpack.c.b16 %v842, %v836
        %v1011 = vpack.c.b16 %v843, %v837
        %v1012 = vpack.c.b16 %v844, %v838
        %v1013 = vpack.c.b16 %v845, %v839
        %v1014 = vpack.c.b16 %v846, %v840
        %v1015 = vpack.c.b16 %v847, %v841
        %v1016 = vpack.c.b16 %v854, %v848
        %v1017 = vpack.c.b16 %v855, %v849
        %v1018 = vpack.c.b16 %v856, %v850
        %v1019 = vpack.c.b16 %v857, %v851
        %v1020 = vpack.c.b16 %v858, %v852
        %v1021 = vpack.c.b16 %v859, %v853
        %v1022 = vpack.c.b16 %v866, %v860
        %v1023 = vpack.c.b16 %v867, %v861
        %v1024 = vpack.c.b16 %v868, %v862
        %v1025 = vpack.c.b16 %v869, %v863
        %v1026 = vpack.c.b16 %v870, %v864
        %v1027 = vpack.c.b16 %v871, %v865
        %v1028 = vpack.c.b16 %v878, %v872
        %v1029 = vpack.c.b16 %v879, %v873
        %v1030 = vpack.c.b16 %v880, %v874
        %v1031 = vpack.c.b16 %v881, %v875
        %v1032 = vpack.c.b16 %v882, %v876
        %v1033 = vpack.c.b16 %v883, %v877
        %v1034 = vpack.c.b16 %v890, %v884
        %v1035 = vpack.c.b16 %v891, %v885
        %v1036 = vpack.c.b16 %v892, %v886
        %v1037 = vpack.c.b16 %v893, %v887
        %v1038 = vpack.c.b16 %v894, %v888
        %v1039 = vpack.c.b16 %v895, %v889
        %v1040 = vpack.c.b16 %v902, %v896
        %v1041 = vpack.c.b16 %v903, %v897
        %v1042 = vpack.c.b16 %v904, %v898
        %v1043 = vpack.c.b16 %v905, %v899
        %v1044 = vpack.c.b16 %v906, %v900
        %v1045 = vpack.c.b16 %v907, %v901
        %v1046 = vpack.c.b16 %v914, %v908
        %v1047 = vpack.c.b16 %v915, %v909
        %v1048 = vpack.c.b16 %v916, %v910
        %v1049 = vpack.c.b16 %v917, %v911
        %v1050 = vpack.c.b16 %v918, %v912
        %v1051 = vpack.c.b16 %v919, %v913
        %v1052 = vpack.c.b16 %v926, %v920
        %v1053 = vpack.c.b16 %v927, %v921
        %v1054 = vpack.c.b16 %v928, %v922
        %v1055 = vpack.c.b16 %v929, %v923
        %v1056 = vpack.c.b16 %v930, %v924
        %v1057 = vpack.c.b16 %v931, %v925
        %v1058 = vpack.c.b16 %v938, %v932
        %v1059 = vpack.c.b16 %v939, %v933
        %v1060 = vpack.c.b16 %v940, %v934
        %v1061 = vpack.c.b16 %v941, %v935
        %v1062 = vpack.c.b16 %v942, %v936
        %v1063 = vpack.c.b16 %v943, %v937
        %v1064 = vpack.c.b16 %v950, %v944
        %v1065 = vpack.c.b16 %v951, %v945
        %v1066 = vpack.c.b16 %v952, %v946
        %v1067 = vpack.c.b16 %v953, %v947
        %v1068 = vpack.c.b16 %v954, %v948
        %v1069 = vpack.c.b16 %v955, %v949
        %v1070 = vpack.c.b16 %v962, %v956
        %v1071 = vpack.c.b16 %v963, %v957
        %v1072 = vpack.c.b16 %v964, %v958
        %v1073 = vpack.c.b16 %v965, %v959
        %v1074 = vpack.c.b16 %v966, %v960
        %v1075 = vpack.c.b16 %v967, %v961
        %v1076 = vpack.c.b16 %v974, %v968
        %v1077 = vpack.c.b16 %v975, %v969
        %v1078 = vpack.c.b16 %v976, %v970
        %v1079 = vpack.c.b16 %v977, %v971
        %v1080 = vpack.c.b16 %v978, %v972
        %v1081 = vpack.c.b16 %v979, %v973
        %v1082 = vpack.c.b16 %v986, %v980
        %v1083 = vpack.c.b16 %v987, %v981
        %v1084 = vpack.c.b16 %v988, %v982
        %v1085 = vpack.c.b16 %v989, %v983
        %v1086 = vpack.c.b16 %v990, %v984
        %v1087 = vpack.c.b16 %v991, %v985
        %1184 = vmatprep.subr.bf16.mxu0 %v1035
        %1185 = vmatpush1.bf16.msra.mxu0 %v1034
        %1186 = vmatprep.subr.bf16.mxu0 %v1029
        %1187 = vmatpush1.bf16.msra.mxu0 %v1028
        %1188 = vmatprep.subr.bf16.mxu0 %v1023
        %1189 = vmatpush1.bf16.msra.mxu0 %v1022
        %1190 = vmatprep.subr.bf16.mxu0 %v1017
        %1191 = vmatpush1.bf16.msra.mxu0 %v1016
        %1192 = vmatprep.subr.bf16.mxu0 %v1011
        %1193 = vmatpush1.bf16.msra.mxu0 %v1010
        %1194 = vmatprep.subr.bf16.mxu0 %v1005
        %1195 = vmatpush1.bf16.msra.mxu0 %v1004
        %1196 = vmatprep.subr.bf16.mxu0 %v999
        %1197 = vmatpush1.bf16.msra.mxu0 %v998
        %1198 = vmatprep.subr.bf16.mxu0 %v993
        %1199 = vmatpush1.bf16.msra.mxu0 %v992
        %1200 = vmatprep.subr.bf16.mxu0 %v1083
        %1201 = vmatpush2.bf16.msra.mxu0 %v1082
        %1202 = vmatprep.subr.bf16.mxu0 %v1077
        %1203 = vmatpush2.bf16.msra.mxu0 %v1076
        %1204 = vmatprep.subr.bf16.mxu0 %v1071
        %1205 = vmatpush2.bf16.msra.mxu0 %v1070
        %1206 = vmatprep.subr.bf16.mxu0 %v1065
        %1207 = vmatpush2.bf16.msra.mxu0 %v1064
        %1208 = vmatprep.subr.bf16.mxu0 %v1059
        %1209 = vmatpush2.bf16.msra.mxu0 %v1058
        %1210 = vmatprep.subr.bf16.mxu0 %v1053
        %1211 = vmatpush2.bf16.msra.mxu0 %v1052
        %1212 = vmatprep.subr.bf16.mxu0 %v1047
        %1213 = vmatpush2.bf16.msra.mxu0 %v1046
        %1214 = vmatprep.subr.bf16.mxu0 %v1041
        %1215 = vmatpush2.bf16.msra.mxu0 %v1040
        %1216 = vmatprep.mubr.bf16.mxu0 %v545
        %1217 = vmatmul.mubr.bf16.gmra.mxu0 %v544
        %v1218 = vpop.f32.mrf.mxu0
        %v1219 = vadd.f32 %v677, %v1218
        %v1220 = vpop.f32.mrf.mxu0
        %v1221 = vadd.f32 %v681, %v1220
        %v1222 = vpop.f32.mrf.mxu0
        %v1223 = vadd.f32 %v677, %v1222
        %v1224 = vpop.f32.mrf.mxu0
        %v1225 = vadd.f32 %v681, %v1224
        %1226 = vmatprep.mubr.bf16.mxu0 %v547
        %1227 = vmatmul.mubr.bf16.gmra.mxu0 %v546
        %v1228 = vpop.f32.mrf.mxu0
        %v1229 = vadd.f32 %v677, %v1228
        %v1230 = vpop.f32.mrf.mxu0
        %v1231 = vadd.f32 %v681, %v1230
        %v1232 = vpop.f32.mrf.mxu0
        %v1233 = vadd.f32 %v677, %v1232
        %v1234 = vpop.f32.mrf.mxu0
        %v1235 = vadd.f32 %v681, %v1234
        %1236 = vmatprep.mubr.bf16.mxu0 %v549
        %1237 = vmatmul.mubr.bf16.gmra.mxu0 %v548
        %v1238 = vpop.f32.mrf.mxu0
        %v1239 = vadd.f32 %v677, %v1238
        %v1240 = vpop.f32.mrf.mxu0
        %v1241 = vadd.f32 %v681, %v1240
        %v1242 = vpop.f32.mrf.mxu0
        %v1243 = vadd.f32 %v677, %v1242
        %v1244 = vpop.f32.mrf.mxu0
        %v1245 = vadd.f32 %v681, %v1244
        %1246 = vmatprep.mubr.bf16.mxu0 %v551
        %1247 = vmatmul.mubr.bf16.gmra.mxu0 %v550
        %v1248 = vpop.f32.mrf.mxu0
        %v1249 = vadd.f32 %v677, %v1248
        %v1250 = vpop.f32.mrf.mxu0
        %v1251 = vadd.f32 %v681, %v1250
        %v1252 = vpop.f32.mrf.mxu0
        %v1253 = vadd.f32 %v677, %v1252
        %v1254 = vpop.f32.mrf.mxu0
        %v1255 = vadd.f32 %v681, %v1254
        %1256 = vmatprep.mubr.bf16.mxu0 %v553
        %1257 = vmatmul.mubr.bf16.gmra.mxu0 %v552
        %v1258 = vpop.f32.mrf.mxu0
        %v1259 = vadd.f32 %v677, %v1258
        %v1260 = vpop.f32.mrf.mxu0
        %v1261 = vadd.f32 %v681, %v1260
        %v1262 = vpop.f32.mrf.mxu0
        %v1263 = vadd.f32 %v677, %v1262
        %v1264 = vpop.f32.mrf.mxu0
        %v1265 = vadd.f32 %v681, %v1264
        %1266 = vmatprep.mubr.bf16.mxu0 %v555
        %1267 = vmatmul.mubr.bf16.gmra.mxu0 %v554
        %v1268 = vpop.f32.mrf.mxu0
        %v1269 = vadd.f32 %v677, %v1268
        %v1270 = vpop.f32.mrf.mxu0
        %v1271 = vadd.f32 %v681, %v1270
        %v1272 = vpop.f32.mrf.mxu0
        %v1273 = vadd.f32 %v677, %v1272
        %v1274 = vpop.f32.mrf.mxu0
        %v1275 = vadd.f32 %v681, %v1274
        %1276 = vmatprep.mubr.bf16.mxu0 %v557
        %1277 = vmatmul.mubr.bf16.gmra.mxu0 %v556
        %v1278 = vpop.f32.mrf.mxu0
        %v1279 = vadd.f32 %v677, %v1278
        %v1280 = vpop.f32.mrf.mxu0
        %v1281 = vadd.f32 %v681, %v1280
        %v1282 = vpop.f32.mrf.mxu0
        %v1283 = vadd.f32 %v677, %v1282
        %v1284 = vpop.f32.mrf.mxu0
        %v1285 = vadd.f32 %v681, %v1284
        %1286 = vmatprep.mubr.bf16.mxu0 %v559
        %1287 = vmatmul.mubr.bf16.gmra.mxu0 %v558
        %v1288 = vpop.f32.mrf.mxu0
        %v1289 = vadd.f32 %v677, %v1288
        %v1290 = vpop.f32.mrf.mxu0
        %v1291 = vadd.f32 %v681, %v1290
        %v1292 = vpop.f32.mrf.mxu0
        %v1293 = vadd.f32 %v677, %v1292
        %v1294 = vpop.f32.mrf.mxu0
        %v1295 = vadd.f32 %v681, %v1294
        %1296 = vmatprep.mubr.bf16.mxu0 %v561
        %1297 = vmatmul.mubr.bf16.gmra.mxu0 %v560
        %v1298 = vpop.f32.mrf.mxu0
        %v1299 = vadd.f32 %v677, %v1298
        %v1300 = vpop.f32.mrf.mxu0
        %v1301 = vadd.f32 %v681, %v1300
        %v1302 = vpop.f32.mrf.mxu0
        %v1303 = vadd.f32 %v677, %v1302
        %v1304 = vpop.f32.mrf.mxu0
        %v1305 = vadd.f32 %v681, %v1304
        %1306 = vmatprep.mubr.bf16.mxu0 %v563
        %1307 = vmatmul.mubr.bf16.gmra.mxu0 %v562
        %v1308 = vpop.f32.mrf.mxu0
        %v1309 = vadd.f32 %v677, %v1308
        %v1310 = vpop.f32.mrf.mxu0
        %v1311 = vadd.f32 %v681, %v1310
        %v1312 = vpop.f32.mrf.mxu0
        %v1313 = vadd.f32 %v677, %v1312
        %v1314 = vpop.f32.mrf.mxu0
        %v1315 = vadd.f32 %v681, %v1314
        %1316 = vmatprep.mubr.bf16.mxu0 %v565
        %1317 = vmatmul.mubr.bf16.gmra.mxu0 %v564
        %v1318 = vpop.f32.mrf.mxu0
        %v1319 = vadd.f32 %v677, %v1318
        %v1320 = vpop.f32.mrf.mxu0
        %v1321 = vadd.f32 %v681, %v1320
        %v1322 = vpop.f32.mrf.mxu0
        %v1323 = vadd.f32 %v677, %v1322
        %v1324 = vpop.f32.mrf.mxu0
        %v1325 = vadd.f32 %v681, %v1324
        %1326 = vmatprep.mubr.bf16.mxu0 %v567
        %1327 = vmatmul.mubr.bf16.gmra.mxu0 %v566
        %v1328 = vpop.f32.mrf.mxu0
        %v1329 = vadd.f32 %v677, %v1328
        %v1330 = vpop.f32.mrf.mxu0
        %v1331 = vadd.f32 %v681, %v1330
        %v1332 = vpop.f32.mrf.mxu0
        %v1333 = vadd.f32 %v677, %v1332
        %v1334 = vpop.f32.mrf.mxu0
        %v1335 = vadd.f32 %v681, %v1334
        %1336 = vmatprep.mubr.bf16.mxu0 %v569
        %1337 = vmatmul.mubr.bf16.gmra.mxu0 %v568
        %v1338 = vpop.f32.mrf.mxu0
        %v1339 = vadd.f32 %v677, %v1338
        %v1340 = vpop.f32.mrf.mxu0
        %v1341 = vadd.f32 %v681, %v1340
        %v1342 = vpop.f32.mrf.mxu0
        %v1343 = vadd.f32 %v677, %v1342
        %v1344 = vpop.f32.mrf.mxu0
        %v1345 = vadd.f32 %v681, %v1344
        %1346 = vmatprep.mubr.bf16.mxu0 %v571
        %1347 = vmatmul.mubr.bf16.gmra.mxu0 %v570
        %v1348 = vpop.f32.mrf.mxu0
        %v1349 = vadd.f32 %v677, %v1348
        %v1350 = vpop.f32.mrf.mxu0
        %v1351 = vadd.f32 %v681, %v1350
        %v1352 = vpop.f32.mrf.mxu0
        %v1353 = vadd.f32 %v677, %v1352
        %v1354 = vpop.f32.mrf.mxu0
        %v1355 = vadd.f32 %v681, %v1354
        %1356 = vmatprep.mubr.bf16.mxu0 %v573
        %1357 = vmatmul.mubr.bf16.gmra.mxu0 %v572
        %v1358 = vpop.f32.mrf.mxu0
        %v1359 = vadd.f32 %v677, %v1358
        %v1360 = vpop.f32.mrf.mxu0
        %v1361 = vadd.f32 %v681, %v1360
        %v1362 = vpop.f32.mrf.mxu0
        %v1363 = vadd.f32 %v677, %v1362
        %v1364 = vpop.f32.mrf.mxu0
        %v1365 = vadd.f32 %v681, %v1364
        %1366 = vmatprep.mubr.bf16.mxu0 %v575
        %1367 = vmatmul.mubr.bf16.gmra.mxu0 %v574
        %v1368 = vpop.f32.mrf.mxu0
        %v1369 = vadd.f32 %v677, %v1368
        %v1370 = vpop.f32.mrf.mxu0
        %v1371 = vadd.f32 %v681, %v1370
        %v1372 = vpop.f32.mrf.mxu0
        %v1373 = vadd.f32 %v677, %v1372
        %v1374 = vpop.f32.mrf.mxu0
        %v1375 = vadd.f32 %v681, %v1374
        %1376 = vdwg.mxu0
        %1377 = vmatprep.subr.bf16.mxu0 %v1037
        %1378 = vmatpush1.bf16.msra.mxu0 %v1036
        %1379 = vmatprep.subr.bf16.mxu0 %v1031
        %1380 = vmatpush1.bf16.msra.mxu0 %v1030
        %1381 = vmatprep.subr.bf16.mxu0 %v1025
        %1382 = vmatpush1.bf16.msra.mxu0 %v1024
        %1383 = vmatprep.subr.bf16.mxu0 %v1019
        %1384 = vmatpush1.bf16.msra.mxu0 %v1018
        %1385 = vmatprep.subr.bf16.mxu0 %v1013
        %1386 = vmatpush1.bf16.msra.mxu0 %v1012
        %1387 = vmatprep.subr.bf16.mxu0 %v1007
        %1388 = vmatpush1.bf16.msra.mxu0 %v1006
        %1389 = vmatprep.subr.bf16.mxu0 %v1001
        %1390 = vmatpush1.bf16.msra.mxu0 %v1000
        %1391 = vmatprep.subr.bf16.mxu0 %v995
        %1392 = vmatpush1.bf16.msra.mxu0 %v994
        %1393 = vmatprep.subr.bf16.mxu0 %v1085
        %1394 = vmatpush2.bf16.msra.mxu0 %v1084
        %1395 = vmatprep.subr.bf16.mxu0 %v1079
        %1396 = vmatpush2.bf16.msra.mxu0 %v1078
        %1397 = vmatprep.subr.bf16.mxu0 %v1073
        %1398 = vmatpush2.bf16.msra.mxu0 %v1072
        %1399 = vmatprep.subr.bf16.mxu0 %v1067
        %1400 = vmatpush2.bf16.msra.mxu0 %v1066
        %1401 = vmatprep.subr.bf16.mxu0 %v1061
        %1402 = vmatpush2.bf16.msra.mxu0 %v1060
        %1403 = vmatprep.subr.bf16.mxu0 %v1055
        %1404 = vmatpush2.bf16.msra.mxu0 %v1054
        %1405 = vmatprep.subr.bf16.mxu0 %v1049
        %1406 = vmatpush2.bf16.msra.mxu0 %v1048
        %1407 = vmatprep.subr.bf16.mxu0 %v1043
        %1408 = vmatpush2.bf16.msra.mxu0 %v1042
        %1409 = vmatprep.mubr.bf16.mxu0 %v545
        %1410 = vmatmul.mubr.bf16.gmra.mxu0 %v544
        %v1411 = vpop.f32.mrf.mxu0
        %v1412 = vadd.f32 %v685, %v1411
        %v1413 = vpop.f32.mrf.mxu0
        %v1414 = vadd.f32 %v689, %v1413
        %v1415 = vpop.f32.mrf.mxu0
        %v1416 = vadd.f32 %v685, %v1415
        %v1417 = vpop.f32.mrf.mxu0
        %v1418 = vadd.f32 %v689, %v1417
        %1419 = vmatprep.mubr.bf16.mxu0 %v547
        %1420 = vmatmul.mubr.bf16.gmra.mxu0 %v546
        %v1421 = vpop.f32.mrf.mxu0
        %v1422 = vadd.f32 %v685, %v1421
        %v1423 = vpop.f32.mrf.mxu0
        %v1424 = vadd.f32 %v689, %v1423
        %v1425 = vpop.f32.mrf.mxu0
        %v1426 = vadd.f32 %v685, %v1425
        %v1427 = vpop.f32.mrf.mxu0
        %v1428 = vadd.f32 %v689, %v1427
        %1429 = vmatprep.mubr.bf16.mxu0 %v549
        %1430 = vmatmul.mubr.bf16.gmra.mxu0 %v548
        %v1431 = vpop.f32.mrf.mxu0
        %v1432 = vadd.f32 %v685, %v1431
        %v1433 = vpop.f32.mrf.mxu0
        %v1434 = vadd.f32 %v689, %v1433
        %v1435 = vpop.f32.mrf.mxu0
        %v1436 = vadd.f32 %v685, %v1435
        %v1437 = vpop.f32.mrf.mxu0
        %v1438 = vadd.f32 %v689, %v1437
        %1439 = vmatprep.mubr.bf16.mxu0 %v551
        %1440 = vmatmul.mubr.bf16.gmra.mxu0 %v550
        %v1441 = vpop.f32.mrf.mxu0
        %v1442 = vadd.f32 %v685, %v1441
        %v1443 = vpop.f32.mrf.mxu0
        %v1444 = vadd.f32 %v689, %v1443
        %v1445 = vpop.f32.mrf.mxu0
        %v1446 = vadd.f32 %v685, %v1445
        %v1447 = vpop.f32.mrf.mxu0
        %v1448 = vadd.f32 %v689, %v1447
        %1449 = vmatprep.mubr.bf16.mxu0 %v553
        %1450 = vmatmul.mubr.bf16.gmra.mxu0 %v552
        %v1451 = vpop.f32.mrf.mxu0
        %v1452 = vadd.f32 %v685, %v1451
        %v1453 = vpop.f32.mrf.mxu0
        %v1454 = vadd.f32 %v689, %v1453
        %v1455 = vpop.f32.mrf.mxu0
        %v1456 = vadd.f32 %v685, %v1455
        %v1457 = vpop.f32.mrf.mxu0
        %v1458 = vadd.f32 %v689, %v1457
        %1459 = vmatprep.mubr.bf16.mxu0 %v555
        %1460 = vmatmul.mubr.bf16.gmra.mxu0 %v554
        %v1461 = vpop.f32.mrf.mxu0
        %v1462 = vadd.f32 %v685, %v1461
        %v1463 = vpop.f32.mrf.mxu0
        %v1464 = vadd.f32 %v689, %v1463
        %v1465 = vpop.f32.mrf.mxu0
        %v1466 = vadd.f32 %v685, %v1465
        %v1467 = vpop.f32.mrf.mxu0
        %v1468 = vadd.f32 %v689, %v1467
        %1469 = vmatprep.mubr.bf16.mxu0 %v557
        %1470 = vmatmul.mubr.bf16.gmra.mxu0 %v556
        %v1471 = vpop.f32.mrf.mxu0
        %v1472 = vadd.f32 %v685, %v1471
        %v1473 = vpop.f32.mrf.mxu0
        %v1474 = vadd.f32 %v689, %v1473
        %v1475 = vpop.f32.mrf.mxu0
        %v1476 = vadd.f32 %v685, %v1475
        %v1477 = vpop.f32.mrf.mxu0
        %v1478 = vadd.f32 %v689, %v1477
        %1479 = vmatprep.mubr.bf16.mxu0 %v559
        %1480 = vmatmul.mubr.bf16.gmra.mxu0 %v558
        %v1481 = vpop.f32.mrf.mxu0
        %v1482 = vadd.f32 %v685, %v1481
        %v1483 = vpop.f32.mrf.mxu0
        %v1484 = vadd.f32 %v689, %v1483
        %v1485 = vpop.f32.mrf.mxu0
        %v1486 = vadd.f32 %v685, %v1485
        %v1487 = vpop.f32.mrf.mxu0
        %v1488 = vadd.f32 %v689, %v1487
        %1489 = vmatprep.mubr.bf16.mxu0 %v561
        %1490 = vmatmul.mubr.bf16.gmra.mxu0 %v560
        %v1491 = vpop.f32.mrf.mxu0
        %v1492 = vadd.f32 %v685, %v1491
        %v1493 = vpop.f32.mrf.mxu0
        %v1494 = vadd.f32 %v689, %v1493
        %v1495 = vpop.f32.mrf.mxu0
        %v1496 = vadd.f32 %v685, %v1495
        %v1497 = vpop.f32.mrf.mxu0
        %v1498 = vadd.f32 %v689, %v1497
        %1499 = vmatprep.mubr.bf16.mxu0 %v563
        %1500 = vmatmul.mubr.bf16.gmra.mxu0 %v562
        %v1501 = vpop.f32.mrf.mxu0
        %v1502 = vadd.f32 %v685, %v1501
        %v1503 = vpop.f32.mrf.mxu0
        %v1504 = vadd.f32 %v689, %v1503
        %v1505 = vpop.f32.mrf.mxu0
        %v1506 = vadd.f32 %v685, %v1505
        %v1507 = vpop.f32.mrf.mxu0
        %v1508 = vadd.f32 %v689, %v1507
        %1509 = vmatprep.mubr.bf16.mxu0 %v565
        %1510 = vmatmul.mubr.bf16.gmra.mxu0 %v564
        %v1511 = vpop.f32.mrf.mxu0
        %v1512 = vadd.f32 %v685, %v1511
        %v1513 = vpop.f32.mrf.mxu0
        %v1514 = vadd.f32 %v689, %v1513
        %v1515 = vpop.f32.mrf.mxu0
        %v1516 = vadd.f32 %v685, %v1515
        %v1517 = vpop.f32.mrf.mxu0
        %v1518 = vadd.f32 %v689, %v1517
        %1519 = vmatprep.mubr.bf16.mxu0 %v567
        %1520 = vmatmul.mubr.bf16.gmra.mxu0 %v566
        %v1521 = vpop.f32.mrf.mxu0
        %v1522 = vadd.f32 %v685, %v1521
        %v1523 = vpop.f32.mrf.mxu0
        %v1524 = vadd.f32 %v689, %v1523
        %v1525 = vpop.f32.mrf.mxu0
        %v1526 = vadd.f32 %v685, %v1525
        %v1527 = vpop.f32.mrf.mxu0
        %v1528 = vadd.f32 %v689, %v1527
        %1529 = vmatprep.mubr.bf16.mxu0 %v569
        %1530 = vmatmul.mubr.bf16.gmra.mxu0 %v568
        %v1531 = vpop.f32.mrf.mxu0
        %v1532 = vadd.f32 %v685, %v1531
        %v1533 = vpop.f32.mrf.mxu0
        %v1534 = vadd.f32 %v689, %v1533
        %v1535 = vpop.f32.mrf.mxu0
        %v1536 = vadd.f32 %v685, %v1535
        %v1537 = vpop.f32.mrf.mxu0
        %v1538 = vadd.f32 %v689, %v1537
        %1539 = vmatprep.mubr.bf16.mxu0 %v571
        %1540 = vmatmul.mubr.bf16.gmra.mxu0 %v570
        %v1541 = vpop.f32.mrf.mxu0
        %v1542 = vadd.f32 %v685, %v1541
        %v1543 = vpop.f32.mrf.mxu0
        %v1544 = vadd.f32 %v689, %v1543
        %v1545 = vpop.f32.mrf.mxu0
        %v1546 = vadd.f32 %v685, %v1545
        %v1547 = vpop.f32.mrf.mxu0
        %v1548 = vadd.f32 %v689, %v1547
        %1549 = vmatprep.mubr.bf16.mxu0 %v573
        %1550 = vmatmul.mubr.bf16.gmra.mxu0 %v572
        %v1551 = vpop.f32.mrf.mxu0
        %v1552 = vadd.f32 %v685, %v1551
        %v1553 = vpop.f32.mrf.mxu0
        %v1554 = vadd.f32 %v689, %v1553
        %v1555 = vpop.f32.mrf.mxu0
        %v1556 = vadd.f32 %v685, %v1555
        %v1557 = vpop.f32.mrf.mxu0
        %v1558 = vadd.f32 %v689, %v1557
        %1559 = vmatprep.mubr.bf16.mxu0 %v575
        %1560 = vmatmul.mubr.bf16.gmra.mxu0 %v574
        %v1561 = vpop.f32.mrf.mxu0
        %v1562 = vadd.f32 %v685, %v1561
        %v1563 = vpop.f32.mrf.mxu0
        %v1564 = vadd.f32 %v689, %v1563
        %v1565 = vpop.f32.mrf.mxu0
        %v1566 = vadd.f32 %v685, %v1565
        %v1567 = vpop.f32.mrf.mxu0
        %v1568 = vadd.f32 %v689, %v1567
        %1569 = vdwg.mxu0
        %1570 = vmatprep.subr.bf16.mxu0 %v1039
        %1571 = vmatpush1.bf16.msra.mxu0 %v1038
        %1572 = vmatprep.subr.bf16.mxu0 %v1033
        %1573 = vmatpush1.bf16.msra.mxu0 %v1032
        %1574 = vmatprep.subr.bf16.mxu0 %v1027
        %1575 = vmatpush1.bf16.msra.mxu0 %v1026
        %1576 = vmatprep.subr.bf16.mxu0 %v1021
        %1577 = vmatpush1.bf16.msra.mxu0 %v1020
        %1578 = vmatprep.subr.bf16.mxu0 %v1015
        %1579 = vmatpush1.bf16.msra.mxu0 %v1014
        %1580 = vmatprep.subr.bf16.mxu0 %v1009
        %1581 = vmatpush1.bf16.msra.mxu0 %v1008
        %1582 = vmatprep.subr.bf16.mxu0 %v1003
        %1583 = vmatpush1.bf16.msra.mxu0 %v1002
        %1584 = vmatprep.subr.bf16.mxu0 %v997
        %1585 = vmatpush1.bf16.msra.mxu0 %v996
        %1586 = vmatprep.subr.bf16.mxu0 %v1087
        %1587 = vmatpush2.bf16.msra.mxu0 %v1086
        %1588 = vmatprep.subr.bf16.mxu0 %v1081
        %1589 = vmatpush2.bf16.msra.mxu0 %v1080
        %1590 = vmatprep.subr.bf16.mxu0 %v1075
        %1591 = vmatpush2.bf16.msra.mxu0 %v1074
        %1592 = vmatprep.subr.bf16.mxu0 %v1069
        %1593 = vmatpush2.bf16.msra.mxu0 %v1068
        %1594 = vmatprep.subr.bf16.mxu0 %v1063
        %1595 = vmatpush2.bf16.msra.mxu0 %v1062
        %1596 = vmatprep.subr.bf16.mxu0 %v1057
        %1597 = vmatpush2.bf16.msra.mxu0 %v1056
        %1598 = vmatprep.subr.bf16.mxu0 %v1051
        %1599 = vmatpush2.bf16.msra.mxu0 %v1050
        %1600 = vmatprep.subr.bf16.mxu0 %v1045
        %1601 = vmatpush2.bf16.msra.mxu0 %v1044
        %1602 = vmatprep.mubr.bf16.mxu0 %v545
        %1603 = vmatmul.mubr.bf16.gmra.mxu0 %v544
        %v1604 = vpop.f32.mrf.mxu0
        %v1605 = vadd.f32 %v693, %v1604
        %v1606 = vpop.f32.mrf.mxu0
        %v1607 = vadd.f32 %v697, %v1606
        %v1608 = vpop.f32.mrf.mxu0
        %v1609 = vadd.f32 %v693, %v1608
        %v1610 = vpop.f32.mrf.mxu0
        %v1611 = vadd.f32 %v697, %v1610
        %1612 = vmatprep.mubr.bf16.mxu0 %v547
        %1613 = vmatmul.mubr.bf16.gmra.mxu0 %v546
        %v1614 = vpop.f32.mrf.mxu0
        %v1615 = vadd.f32 %v693, %v1614
        %v1616 = vpop.f32.mrf.mxu0
        %v1617 = vadd.f32 %v697, %v1616
        %v1618 = vpop.f32.mrf.mxu0
        %v1619 = vadd.f32 %v693, %v1618
        %v1620 = vpop.f32.mrf.mxu0
        %v1621 = vadd.f32 %v697, %v1620
        %1622 = vmatprep.mubr.bf16.mxu0 %v549
        %1623 = vmatmul.mubr.bf16.gmra.mxu0 %v548
        %v1624 = vpop.f32.mrf.mxu0
        %v1625 = vadd.f32 %v693, %v1624
        %v1626 = vpop.f32.mrf.mxu0
        %v1627 = vadd.f32 %v697, %v1626
        %v1628 = vpop.f32.mrf.mxu0
        %v1629 = vadd.f32 %v693, %v1628
        %v1630 = vpop.f32.mrf.mxu0
        %v1631 = vadd.f32 %v697, %v1630
        %1632 = vmatprep.mubr.bf16.mxu0 %v551
        %1633 = vmatmul.mubr.bf16.gmra.mxu0 %v550
        %v1634 = vpop.f32.mrf.mxu0
        %v1635 = vadd.f32 %v693, %v1634
        %v1636 = vpop.f32.mrf.mxu0
        %v1637 = vadd.f32 %v697, %v1636
        %v1638 = vpop.f32.mrf.mxu0
        %v1639 = vadd.f32 %v693, %v1638
        %v1640 = vpop.f32.mrf.mxu0
        %v1641 = vadd.f32 %v697, %v1640
        %1642 = vmatprep.mubr.bf16.mxu0 %v553
        %1643 = vmatmul.mubr.bf16.gmra.mxu0 %v552
        %v1644 = vpop.f32.mrf.mxu0
        %v1645 = vadd.f32 %v693, %v1644
        %v1646 = vpop.f32.mrf.mxu0
        %v1647 = vadd.f32 %v697, %v1646
        %v1648 = vpop.f32.mrf.mxu0
        %v1649 = vadd.f32 %v693, %v1648
        %v1650 = vpop.f32.mrf.mxu0
        %v1651 = vadd.f32 %v697, %v1650
        %1652 = vmatprep.mubr.bf16.mxu0 %v555
        %1653 = vmatmul.mubr.bf16.gmra.mxu0 %v554
        %v1654 = vpop.f32.mrf.mxu0
        %v1655 = vadd.f32 %v693, %v1654
        %v1656 = vpop.f32.mrf.mxu0
        %v1657 = vadd.f32 %v697, %v1656
        %v1658 = vpop.f32.mrf.mxu0
        %v1659 = vadd.f32 %v693, %v1658
        %v1660 = vpop.f32.mrf.mxu0
        %v1661 = vadd.f32 %v697, %v1660
        %1662 = vmatprep.mubr.bf16.mxu0 %v557
        %1663 = vmatmul.mubr.bf16.gmra.mxu0 %v556
        %v1664 = vpop.f32.mrf.mxu0
        %v1665 = vadd.f32 %v693, %v1664
        %v1666 = vpop.f32.mrf.mxu0
        %v1667 = vadd.f32 %v697, %v1666
        %v1668 = vpop.f32.mrf.mxu0
        %v1669 = vadd.f32 %v693, %v1668
        %v1670 = vpop.f32.mrf.mxu0
        %v1671 = vadd.f32 %v697, %v1670
        %1672 = vmatprep.mubr.bf16.mxu0 %v559
        %1673 = vmatmul.mubr.bf16.gmra.mxu0 %v558
        %v1674 = vpop.f32.mrf.mxu0
        %v1675 = vadd.f32 %v693, %v1674
        %v1676 = vpop.f32.mrf.mxu0
        %v1677 = vadd.f32 %v697, %v1676
        %v1678 = vpop.f32.mrf.mxu0
        %v1679 = vadd.f32 %v693, %v1678
        %v1680 = vpop.f32.mrf.mxu0
        %v1681 = vadd.f32 %v697, %v1680
        %1682 = vmatprep.mubr.bf16.mxu0 %v561
        %1683 = vmatmul.mubr.bf16.gmra.mxu0 %v560
        %v1684 = vpop.f32.mrf.mxu0
        %v1685 = vadd.f32 %v693, %v1684
        %v1686 = vpop.f32.mrf.mxu0
        %v1687 = vadd.f32 %v697, %v1686
        %v1688 = vpop.f32.mrf.mxu0
        %v1689 = vadd.f32 %v693, %v1688
        %v1690 = vpop.f32.mrf.mxu0
        %v1691 = vadd.f32 %v697, %v1690
        %1692 = vmatprep.mubr.bf16.mxu0 %v563
        %1693 = vmatmul.mubr.bf16.gmra.mxu0 %v562
        %v1694 = vpop.f32.mrf.mxu0
        %v1695 = vadd.f32 %v693, %v1694
        %v1696 = vpop.f32.mrf.mxu0
        %v1697 = vadd.f32 %v697, %v1696
        %v1698 = vpop.f32.mrf.mxu0
        %v1699 = vadd.f32 %v693, %v1698
        %v1700 = vpop.f32.mrf.mxu0
        %v1701 = vadd.f32 %v697, %v1700
        %1702 = vmatprep.mubr.bf16.mxu0 %v565
        %1703 = vmatmul.mubr.bf16.gmra.mxu0 %v564
        %v1704 = vpop.f32.mrf.mxu0
        %v1705 = vadd.f32 %v693, %v1704
        %v1706 = vpop.f32.mrf.mxu0
        %v1707 = vadd.f32 %v697, %v1706
        %v1708 = vpop.f32.mrf.mxu0
        %v1709 = vadd.f32 %v693, %v1708
        %v1710 = vpop.f32.mrf.mxu0
        %v1711 = vadd.f32 %v697, %v1710
        %1712 = vmatprep.mubr.bf16.mxu0 %v567
        %1713 = vmatmul.mubr.bf16.gmra.mxu0 %v566
        %v1714 = vpop.f32.mrf.mxu0
        %v1715 = vadd.f32 %v693, %v1714
        %v1716 = vpop.f32.mrf.mxu0
        %v1717 = vadd.f32 %v697, %v1716
        %v1718 = vpop.f32.mrf.mxu0
        %v1719 = vadd.f32 %v693, %v1718
        %v1720 = vpop.f32.mrf.mxu0
        %v1721 = vadd.f32 %v697, %v1720
        %1722 = vmatprep.mubr.bf16.mxu0 %v569
        %1723 = vmatmul.mubr.bf16.gmra.mxu0 %v568
        %v1724 = vpop.f32.mrf.mxu0
        %v1725 = vadd.f32 %v693, %v1724
        %v1726 = vpop.f32.mrf.mxu0
        %v1727 = vadd.f32 %v697, %v1726
        %v1728 = vpop.f32.mrf.mxu0
        %v1729 = vadd.f32 %v693, %v1728
        %v1730 = vpop.f32.mrf.mxu0
        %v1731 = vadd.f32 %v697, %v1730
        %1732 = vmatprep.mubr.bf16.mxu0 %v571
        %1733 = vmatmul.mubr.bf16.gmra.mxu0 %v570
        %v1734 = vpop.f32.mrf.mxu0
        %v1735 = vadd.f32 %v693, %v1734
        %v1736 = vpop.f32.mrf.mxu0
        %v1737 = vadd.f32 %v697, %v1736
        %v1738 = vpop.f32.mrf.mxu0
        %v1739 = vadd.f32 %v693, %v1738
        %v1740 = vpop.f32.mrf.mxu0
        %v1741 = vadd.f32 %v697, %v1740
        %1742 = vmatprep.mubr.bf16.mxu0 %v573
        %1743 = vmatmul.mubr.bf16.gmra.mxu0 %v572
        %v1744 = vpop.f32.mrf.mxu0
        %v1745 = vadd.f32 %v693, %v1744
        %v1746 = vpop.f32.mrf.mxu0
        %v1747 = vadd.f32 %v697, %v1746
        %v1748 = vpop.f32.mrf.mxu0
        %v1749 = vadd.f32 %v693, %v1748
        %v1750 = vpop.f32.mrf.mxu0
        %v1751 = vadd.f32 %v697, %v1750
        %1752 = vmatprep.mubr.bf16.mxu0 %v575
        %1753 = vmatmul.mubr.bf16.gmra.mxu0 %v574
        %v1754 = vpop.f32.mrf.mxu0
        %v1755 = vadd.f32 %v693, %v1754
        %v1756 = vpop.f32.mrf.mxu0
        %v1757 = vadd.f32 %v697, %v1756
        %v1758 = vpop.f32.mrf.mxu0
        %v1759 = vadd.f32 %v693, %v1758
        %v1760 = vpop.f32.mrf.mxu0
        %v1761 = vadd.f32 %v697, %v1760
        %1762 = vdwg.mxu0
        %v1763 = vpack.c.bf16 %v1223, %v1219
        %v1764 = vpack.c.bf16 %v1225, %v1221
        %v1765 = vpack.c.bf16 %v1416, %v1412
        %v1766 = vpack.c.bf16 %v1418, %v1414
        %v1767 = vpack.c.bf16 %v1609, %v1605
        %v1768 = vpack.c.bf16 %v1611, %v1607
        %v1769 = vpack.c.bf16 %v1233, %v1229
        %v1770 = vpack.c.bf16 %v1235, %v1231
        %v1771 = vpack.c.bf16 %v1426, %v1422
        %v1772 = vpack.c.bf16 %v1428, %v1424
        %v1773 = vpack.c.bf16 %v1619, %v1615
        %v1774 = vpack.c.bf16 %v1621, %v1617
        %v1775 = vpack.c.bf16 %v1243, %v1239
        %v1776 = vpack.c.bf16 %v1245, %v1241
        %v1777 = vpack.c.bf16 %v1436, %v1432
        %v1778 = vpack.c.bf16 %v1438, %v1434
        %v1779 = vpack.c.bf16 %v1629, %v1625
        %v1780 = vpack.c.bf16 %v1631, %v1627
        %v1781 = vpack.c.bf16 %v1253, %v1249
        %v1782 = vpack.c.bf16 %v1255, %v1251
        %v1783 = vpack.c.bf16 %v1446, %v1442
        %v1784 = vpack.c.bf16 %v1448, %v1444
        %v1785 = vpack.c.bf16 %v1639, %v1635
        %v1786 = vpack.c.bf16 %v1641, %v1637
        %v1787 = vpack.c.bf16 %v1263, %v1259
        %v1788 = vpack.c.bf16 %v1265, %v1261
        %v1789 = vpack.c.bf16 %v1456, %v1452
        %v1790 = vpack.c.bf16 %v1458, %v1454
        %v1791 = vpack.c.bf16 %v1649, %v1645
        %v1792 = vpack.c.bf16 %v1651, %v1647
        %v1793 = vpack.c.bf16 %v1273, %v1269
        %v1794 = vpack.c.bf16 %v1275, %v1271
        %v1795 = vpack.c.bf16 %v1466, %v1462
        %v1796 = vpack.c.bf16 %v1468, %v1464
        %v1797 = vpack.c.bf16 %v1659, %v1655
        %v1798 = vpack.c.bf16 %v1661, %v1657
        %v1799 = vpack.c.bf16 %v1283, %v1279
        %v1800 = vpack.c.bf16 %v1285, %v1281
        %v1801 = vpack.c.bf16 %v1476, %v1472
        %v1802 = vpack.c.bf16 %v1478, %v1474
        %v1803 = vpack.c.bf16 %v1669, %v1665
        %v1804 = vpack.c.bf16 %v1671, %v1667
        %v1805 = vpack.c.bf16 %v1293, %v1289
        %v1806 = vpack.c.bf16 %v1295, %v1291
        %v1807 = vpack.c.bf16 %v1486, %v1482
        %v1808 = vpack.c.bf16 %v1488, %v1484
        %v1809 = vpack.c.bf16 %v1679, %v1675
        %v1810 = vpack.c.bf16 %v1681, %v1677
        %v1811 = vpack.c.bf16 %v1303, %v1299
        %v1812 = vpack.c.bf16 %v1305, %v1301
        %v1813 = vpack.c.bf16 %v1496, %v1492
        %v1814 = vpack.c.bf16 %v1498, %v1494
        %v1815 = vpack.c.bf16 %v1689, %v1685
        %v1816 = vpack.c.bf16 %v1691, %v1687
        %v1817 = vpack.c.bf16 %v1313, %v1309
        %v1818 = vpack.c.bf16 %v1315, %v1311
        %v1819 = vpack.c.bf16 %v1506, %v1502
        %v1820 = vpack.c.bf16 %v1508, %v1504
        %v1821 = vpack.c.bf16 %v1699, %v1695
        %v1822 = vpack.c.bf16 %v1701, %v1697
        %v1823 = vpack.c.bf16 %v1323, %v1319
        %v1824 = vpack.c.bf16 %v1325, %v1321
        %v1825 = vpack.c.bf16 %v1516, %v1512
        %v1826 = vpack.c.bf16 %v1518, %v1514
        %v1827 = vpack.c.bf16 %v1709, %v1705
        %v1828 = vpack.c.bf16 %v1711, %v1707
        %v1829 = vpack.c.bf16 %v1333, %v1329
        %v1830 = vpack.c.bf16 %v1335, %v1331
        %v1831 = vpack.c.bf16 %v1526, %v1522
        %v1832 = vpack.c.bf16 %v1528, %v1524
        %v1833 = vpack.c.bf16 %v1719, %v1715
        %v1834 = vpack.c.bf16 %v1721, %v1717
        %v1835 = vpack.c.bf16 %v1343, %v1339
        %v1836 = vpack.c.bf16 %v1345, %v1341
        %v1837 = vpack.c.bf16 %v1536, %v1532
        %v1838 = vpack.c.bf16 %v1538, %v1534
        %v1839 = vpack.c.bf16 %v1729, %v1725
        %v1840 = vpack.c.bf16 %v1731, %v1727
        %v1841 = vpack.c.bf16 %v1353, %v1349
        %v1842 = vpack.c.bf16 %v1355, %v1351
        %v1843 = vpack.c.bf16 %v1546, %v1542
        %v1844 = vpack.c.bf16 %v1548, %v1544
        %v1845 = vpack.c.bf16 %v1739, %v1735
        %v1846 = vpack.c.bf16 %v1741, %v1737
        %v1847 = vpack.c.bf16 %v1363, %v1359
        %v1848 = vpack.c.bf16 %v1365, %v1361
        %v1849 = vpack.c.bf16 %v1556, %v1552
        %v1850 = vpack.c.bf16 %v1558, %v1554
        %v1851 = vpack.c.bf16 %v1749, %v1745
        %v1852 = vpack.c.bf16 %v1751, %v1747
        %v1853 = vpack.c.bf16 %v1373, %v1369
        %v1854 = vpack.c.bf16 %v1375, %v1371
        %v1855 = vpack.c.bf16 %v1566, %v1562
        %v1856 = vpack.c.bf16 %v1568, %v1564
        %v1857 = vpack.c.bf16 %v1759, %v1755
        %v1858 = vpack.c.bf16 %v1761, %v1757
        %1859 = vmatprep.subr.bf16.mxu0 0
        %1860 = vmatpush1.bf16.xpose.msra.mxu0 %v1807
        %1861 = vmatprep.subr.bf16.mxu0 0
        %1862 = vmatpush1.bf16.xpose.msra.mxu0 %v1801
        %1863 = vmatprep.subr.bf16.mxu0 0
        %1864 = vmatpush1.bf16.xpose.msra.mxu0 %v1795
        %1865 = vmatprep.subr.bf16.mxu0 0
        %1866 = vmatpush1.bf16.xpose.msra.mxu0 %v1789
        %1867 = vmatprep.subr.bf16.mxu0 0
        %1868 = vmatpush1.bf16.xpose.msra.mxu0 %v1783
        %1869 = vmatprep.subr.bf16.mxu0 0
        %1870 = vmatpush1.bf16.xpose.msra.mxu0 %v1777
        %1871 = vmatprep.subr.bf16.mxu0 0
        %1872 = vmatpush1.bf16.xpose.msra.mxu0 %v1771
        %1873 = vmatprep.subr.bf16.mxu0 0
        %1874 = vmatpush1.bf16.xpose.msra.mxu0 %v1765
        %1875 = vmatprep.subr.bf16.mxu0 0
        %1876 = vmatpush2.bf16.xpose.msra.mxu0 0
        %1877 = vmatprep.subr.bf16.mxu0 0
        %1878 = vmatpush2.bf16.xpose.msra.mxu0 0
        %1879 = vmatprep.subr.bf16.mxu0 0
        %1880 = vmatpush2.bf16.xpose.msra.mxu0 0
        %1881 = vmatprep.subr.bf16.mxu0 0
        %1882 = vmatpush2.bf16.xpose.msra.mxu0 0
        %1883 = vmatprep.subr.bf16.mxu0 0
        %1884 = vmatpush2.bf16.xpose.msra.mxu0 0
        %1885 = vmatprep.subr.bf16.mxu0 0
        %1886 = vmatpush2.bf16.xpose.msra.mxu0 0
        %1887 = vmatprep.subr.bf16.mxu0 0
        %1888 = vmatpush2.bf16.xpose.msra.mxu0 0
        %1889 = vmatprep.subr.bf16.mxu0 0
        %1890 = vmatpush2.bf16.xpose.msra.mxu0 0
        %1891 = vmatprep.mubr.bf16.mxu0 0
        %1892 = vmatmul.mubr.bf16.gmra.mxu0 %v1763
        %v1893 = vpop.f32.mrf.mxu0
        %v1894 = vadd.f32 0.0, %v1893
        %v1895 = vpop.f32.mrf.mxu0
        %v1896 = vpop.f32.mrf.mxu0
        %v1897 = vadd.f32 0.0, %v1896
        %v1898 = vpop.f32.mrf.mxu0
        %1899 = vmatprep.mubr.bf16.mxu0 0
        %1900 = vmatmul.mubr.bf16.gmra.mxu0 %v1769
        %v1901 = vpop.f32.mrf.mxu0
        %v1902 = vadd.f32 0.0, %v1901
        %v1903 = vpop.f32.mrf.mxu0
        %v1904 = vpop.f32.mrf.mxu0
        %v1905 = vadd.f32 0.0, %v1904
        %v1906 = vpop.f32.mrf.mxu0
        %1907 = vmatprep.mubr.bf16.mxu0 0
        %1908 = vmatmul.mubr.bf16.gmra.mxu0 %v1775
        %v1909 = vpop.f32.mrf.mxu0
        %v1910 = vadd.f32 0.0, %v1909
        %v1911 = vpop.f32.mrf.mxu0
        %v1912 = vpop.f32.mrf.mxu0
        %v1913 = vadd.f32 0.0, %v1912
        %v1914 = vpop.f32.mrf.mxu0
        %1915 = vmatprep.mubr.bf16.mxu0 0
        %1916 = vmatmul.mubr.bf16.gmra.mxu0 %v1781
        %v1917 = vpop.f32.mrf.mxu0
        %v1918 = vadd.f32 0.0, %v1917
        %v1919 = vpop.f32.mrf.mxu0
        %v1920 = vpop.f32.mrf.mxu0
        %v1921 = vadd.f32 0.0, %v1920
        %v1922 = vpop.f32.mrf.mxu0
        %1923 = vmatprep.mubr.bf16.mxu0 0
        %1924 = vmatmul.mubr.bf16.gmra.mxu0 %v1787
        %v1925 = vpop.f32.mrf.mxu0
        %v1926 = vadd.f32 0.0, %v1925
        %v1927 = vpop.f32.mrf.mxu0
        %v1928 = vpop.f32.mrf.mxu0
        %v1929 = vadd.f32 0.0, %v1928
        %v1930 = vpop.f32.mrf.mxu0
        %1931 = vmatprep.mubr.bf16.mxu0 0
        %1932 = vmatmul.mubr.bf16.gmra.mxu0 %v1793
        %v1933 = vpop.f32.mrf.mxu0
        %v1934 = vadd.f32 0.0, %v1933
        %v1935 = vpop.f32.mrf.mxu0
        %v1936 = vpop.f32.mrf.mxu0
        %v1937 = vadd.f32 0.0, %v1936
        %v1938 = vpop.f32.mrf.mxu0
        %1939 = vmatprep.mubr.bf16.mxu0 0
        %1940 = vmatmul.mubr.bf16.gmra.mxu0 %v1799
        %v1941 = vpop.f32.mrf.mxu0
        %v1942 = vadd.f32 0.0, %v1941
        %v1943 = vpop.f32.mrf.mxu0
        %v1944 = vpop.f32.mrf.mxu0
        %v1945 = vadd.f32 0.0, %v1944
        %v1946 = vpop.f32.mrf.mxu0
        %1947 = vmatprep.mubr.bf16.mxu0 0
        %1948 = vmatmul.mubr.bf16.gmra.mxu0 %v1805
        %v1949 = vpop.f32.mrf.mxu0
        %v1950 = vadd.f32 0.0, %v1949
        %v1951 = vpop.f32.mrf.mxu0
        %v1952 = vpop.f32.mrf.mxu0
        %v1953 = vadd.f32 0.0, %v1952
        %v1954 = vpop.f32.mrf.mxu0
        %1955 = vdwg.mxu0
        %1956 = vmatprep.subr.bf16.mxu0 0
        %1957 = vmatpush1.bf16.xpose.msra.mxu0 %v1855
        %1958 = vmatprep.subr.bf16.mxu0 0
        %1959 = vmatpush1.bf16.xpose.msra.mxu0 %v1849
        %1960 = vmatprep.subr.bf16.mxu0 0
        %1961 = vmatpush1.bf16.xpose.msra.mxu0 %v1843
        %1962 = vmatprep.subr.bf16.mxu0 0
        %1963 = vmatpush1.bf16.xpose.msra.mxu0 %v1837
        %1964 = vmatprep.subr.bf16.mxu0 0
        %1965 = vmatpush1.bf16.xpose.msra.mxu0 %v1831
        %1966 = vmatprep.subr.bf16.mxu0 0
        %1967 = vmatpush1.bf16.xpose.msra.mxu0 %v1825
        %1968 = vmatprep.subr.bf16.mxu0 0
        %1969 = vmatpush1.bf16.xpose.msra.mxu0 %v1819
        %1970 = vmatprep.subr.bf16.mxu0 0
        %1971 = vmatpush1.bf16.xpose.msra.mxu0 %v1813
        %1972 = vmatprep.subr.bf16.mxu0 0
        %1973 = vmatpush2.bf16.xpose.msra.mxu0 0
        %1974 = vmatprep.subr.bf16.mxu0 0
        %1975 = vmatpush2.bf16.xpose.msra.mxu0 0
        %1976 = vmatprep.subr.bf16.mxu0 0
        %1977 = vmatpush2.bf16.xpose.msra.mxu0 0
        %1978 = vmatprep.subr.bf16.mxu0 0
        %1979 = vmatpush2.bf16.xpose.msra.mxu0 0
        %1980 = vmatprep.subr.bf16.mxu0 0
        %1981 = vmatpush2.bf16.xpose.msra.mxu0 0
        %1982 = vmatprep.subr.bf16.mxu0 0
        %1983 = vmatpush2.bf16.xpose.msra.mxu0 0
        %1984 = vmatprep.subr.bf16.mxu0 0
        %1985 = vmatpush2.bf16.xpose.msra.mxu0 0
        %1986 = vmatprep.subr.bf16.mxu0 0
        %1987 = vmatpush2.bf16.xpose.msra.mxu0 0
        %1988 = vmatprep.mubr.bf16.mxu0 0
        %1989 = vmatmul.mubr.bf16.gmra.mxu0 %v1811
        %v1990 = vpop.f32.mrf.mxu0
        %v1991 = vadd.f32 0.0, %v1990
        %v1992 = vpop.f32.mrf.mxu0
        %v1993 = vpop.f32.mrf.mxu0
        %v1994 = vadd.f32 0.0, %v1993
        %v1995 = vpop.f32.mrf.mxu0
        %1996 = vmatprep.mubr.bf16.mxu0 0
        %1997 = vmatmul.mubr.bf16.gmra.mxu0 %v1817
        %v1998 = vpop.f32.mrf.mxu0
        %v1999 = vadd.f32 0.0, %v1998
        %v2000 = vpop.f32.mrf.mxu0
        %v2001 = vpop.f32.mrf.mxu0
        %v2002 = vadd.f32 0.0, %v2001
        %v2003 = vpop.f32.mrf.mxu0
        %2004 = vmatprep.mubr.bf16.mxu0 0
        %2005 = vmatmul.mubr.bf16.gmra.mxu0 %v1823
        %v2006 = vpop.f32.mrf.mxu0
        %v2007 = vadd.f32 0.0, %v2006
        %v2008 = vpop.f32.mrf.mxu0
        %v2009 = vpop.f32.mrf.mxu0
        %v2010 = vadd.f32 0.0, %v2009
        %v2011 = vpop.f32.mrf.mxu0
        %2012 = vmatprep.mubr.bf16.mxu0 0
        %2013 = vmatmul.mubr.bf16.gmra.mxu0 %v1829
        %v2014 = vpop.f32.mrf.mxu0
        %v2015 = vadd.f32 0.0, %v2014
        %v2016 = vpop.f32.mrf.mxu0
        %v2017 = vpop.f32.mrf.mxu0
        %v2018 = vadd.f32 0.0, %v2017
        %v2019 = vpop.f32.mrf.mxu0
        %2020 = vmatprep.mubr.bf16.mxu0 0
        %2021 = vmatmul.mubr.bf16.gmra.mxu0 %v1835
        %v2022 = vpop.f32.mrf.mxu0
        %v2023 = vadd.f32 0.0, %v2022
        %v2024 = vpop.f32.mrf.mxu0
        %v2025 = vpop.f32.mrf.mxu0
        %v2026 = vadd.f32 0.0, %v2025
        %v2027 = vpop.f32.mrf.mxu0
        %2028 = vmatprep.mubr.bf16.mxu0 0
        %2029 = vmatmul.mubr.bf16.gmra.mxu0 %v1841
        %v2030 = vpop.f32.mrf.mxu0
        %v2031 = vadd.f32 0.0, %v2030
        %v2032 = vpop.f32.mrf.mxu0
        %v2033 = vpop.f32.mrf.mxu0
        %v2034 = vadd.f32 0.0, %v2033
        %v2035 = vpop.f32.mrf.mxu0
        %2036 = vmatprep.mubr.bf16.mxu0 0
        %2037 = vmatmul.mubr.bf16.gmra.mxu0 %v1847
        %v2038 = vpop.f32.mrf.mxu0
        %v2039 = vadd.f32 0.0, %v2038
        %v2040 = vpop.f32.mrf.mxu0
        %v2041 = vpop.f32.mrf.mxu0
        %v2042 = vadd.f32 0.0, %v2041
        %v2043 = vpop.f32.mrf.mxu0
        %2044 = vmatprep.mubr.bf16.mxu0 0
        %2045 = vmatmul.mubr.bf16.gmra.mxu0 %v1853
        %v2046 = vpop.f32.mrf.mxu0
        %v2047 = vadd.f32 0.0, %v2046
        %v2048 = vpop.f32.mrf.mxu0
        %v2049 = vpop.f32.mrf.mxu0
        %v2050 = vadd.f32 0.0, %v2049
        %v2051 = vpop.f32.mrf.mxu0
        %2052 = vdwg.mxu0
        %2053 = vmax.xlane.f32.xlu0 %v1894
        %v2054 = vpop.xlane.xlu0 %2053
        %2055 = vmax.xlane.f32.xlu0 %v1897
        %v2056 = vpop.xlane.xlu0 %2055
        %2057 = vmax.xlane.f32.xlu0 %v1902
        %v2058 = vpop.xlane.xlu0 %2057
        %2059 = vmax.xlane.f32.xlu0 %v1905
        %v2060 = vpop.xlane.xlu0 %2059
        %2061 = vmax.xlane.f32.xlu0 %v1910
        %v2062 = vpop.xlane.xlu0 %2061
        %2063 = vmax.xlane.f32.xlu0 %v1913
        %v2064 = vpop.xlane.xlu0 %2063
        %2065 = vmax.xlane.f32.xlu0 %v1918
        %v2066 = vpop.xlane.xlu0 %2065
        %2067 = vmax.xlane.f32.xlu0 %v1921
        %v2068 = vpop.xlane.xlu0 %2067
        %2069 = vmax.xlane.f32.xlu0 %v1926
        %v2070 = vpop.xlane.xlu0 %2069
        %2071 = vmax.xlane.f32.xlu0 %v1929
        %v2072 = vpop.xlane.xlu0 %2071
        %2073 = vmax.xlane.f32.xlu0 %v1934
        %v2074 = vpop.xlane.xlu0 %2073
        %2075 = vmax.xlane.f32.xlu0 %v1937
        %v2076 = vpop.xlane.xlu0 %2075
        %2077 = vmax.xlane.f32.xlu0 %v1942
        %v2078 = vpop.xlane.xlu0 %2077
        %2079 = vmax.xlane.f32.xlu0 %v1945
        %v2080 = vpop.xlane.xlu0 %2079
        %2081 = vmax.xlane.f32.xlu0 %v1950
        %v2082 = vpop.xlane.xlu0 %2081
        %2083 = vmax.xlane.f32.xlu0 %v1953
        %v2084 = vpop.xlane.xlu0 %2083
        %2085 = vmax.xlane.f32.xlu0 %v1991
        %v2086 = vpop.xlane.xlu0 %2085
        %2087 = vmax.xlane.f32.xlu0 %v1994
        %v2088 = vpop.xlane.xlu0 %2087
        %2089 = vmax.xlane.f32.xlu0 %v1999
        %v2090 = vpop.xlane.xlu0 %2089
        %2091 = vmax.xlane.f32.xlu0 %v2002
        %v2092 = vpop.xlane.xlu0 %2091
        %2093 = vmax.xlane.f32.xlu0 %v2007
        %v2094 = vpop.xlane.xlu0 %2093
        %2095 = vmax.xlane.f32.xlu0 %v2010
        %v2096 = vpop.xlane.xlu0 %2095
        %2097 = vmax.xlane.f32.xlu0 %v2015
        %v2098 = vpop.xlane.xlu0 %2097
        %2099 = vmax.xlane.f32.xlu0 %v2018
        %v2100 = vpop.xlane.xlu0 %2099
        %2101 = vmax.xlane.f32.xlu0 %v2023
        %v2102 = vpop.xlane.xlu0 %2101
        %2103 = vmax.xlane.f32.xlu0 %v2026
        %v2104 = vpop.xlane.xlu0 %2103
        %2105 = vmax.xlane.f32.xlu0 %v2031
        %v2106 = vpop.xlane.xlu0 %2105
        %2107 = vmax.xlane.f32.xlu0 %v2034
        %v2108 = vpop.xlane.xlu0 %2107
        %2109 = vmax.xlane.f32.xlu0 %v2039
        %v2110 = vpop.xlane.xlu0 %2109
        %2111 = vmax.xlane.f32.xlu0 %v2042
        %v2112 = vpop.xlane.xlu0 %2111
        %2113 = vmax.xlane.f32.xlu0 %v2047
        %v2114 = vpop.xlane.xlu0 %2113
        %2115 = vmax.xlane.f32.xlu0 %v2050
        %v2116 = vpop.xlane.xlu0 %2115
        %v2117 = vsub.f32 %v1894, %v2054
        %v2118 = vsub.f32 %v1897, %v2056
        %v2119 = vsub.f32 %v1902, %v2058
        %v2120 = vsub.f32 %v1905, %v2060
        %v2121 = vsub.f32 %v1910, %v2062
        %v2122 = vsub.f32 %v1913, %v2064
        %v2123 = vsub.f32 %v1918, %v2066
        %v2124 = vsub.f32 %v1921, %v2068
        %v2125 = vsub.f32 %v1926, %v2070
        %v2126 = vsub.f32 %v1929, %v2072
        %v2127 = vsub.f32 %v1934, %v2074
        %v2128 = vsub.f32 %v1937, %v2076
        %v2129 = vsub.f32 %v1942, %v2078
        %v2130 = vsub.f32 %v1945, %v2080
        %v2131 = vsub.f32 %v1950, %v2082
        %v2132 = vsub.f32 %v1953, %v2084
        %v2133 = vsub.f32 %v1991, %v2086
        %v2134 = vsub.f32 %v1994, %v2088
        %v2135 = vsub.f32 %v1999, %v2090
        %v2136 = vsub.f32 %v2002, %v2092
        %v2137 = vsub.f32 %v2007, %v2094
        %v2138 = vsub.f32 %v2010, %v2096
        %v2139 = vsub.f32 %v2015, %v2098
        %v2140 = vsub.f32 %v2018, %v2100
        %v2141 = vsub.f32 %v2023, %v2102
        %v2142 = vsub.f32 %v2026, %v2104
        %v2143 = vsub.f32 %v2031, %v2106
        %v2144 = vsub.f32 %v2034, %v2108
        %v2145 = vsub.f32 %v2039, %v2110
        %v2146 = vsub.f32 %v2042, %v2112
        %v2147 = vsub.f32 %v2047, %v2114
        %v2148 = vsub.f32 %v2050, %v2116
        %v2149 = vmul.f32 %v2117, 1.442695
        %v2150 = vpow.pop %v2149
        %v2151 = vmul.f32 %v2118, 1.442695
        %v2152 = vpow.pop %v2151
        %v2153 = vmul.f32 %v2119, 1.442695
        %v2154 = vpow.pop %v2153
        %v2155 = vmul.f32 %v2120, 1.442695
        %v2156 = vpow.pop %v2155
        %v2157 = vmul.f32 %v2121, 1.442695
        %v2158 = vpow.pop %v2157
        %v2159 = vmul.f32 %v2122, 1.442695
        %v2160 = vpow.pop %v2159
        %v2161 = vmul.f32 %v2123, 1.442695
        %v2162 = vpow.pop %v2161
        %v2163 = vmul.f32 %v2124, 1.442695
        %v2164 = vpow.pop %v2163
        %v2165 = vmul.f32 %v2125, 1.442695
        %v2166 = vpow.pop %v2165
        %v2167 = vmul.f32 %v2126, 1.442695
        %v2168 = vpow.pop %v2167
        %v2169 = vmul.f32 %v2127, 1.442695
        %v2170 = vpow.pop %v2169
        %v2171 = vmul.f32 %v2128, 1.442695
        %v2172 = vpow.pop %v2171
        %v2173 = vmul.f32 %v2129, 1.442695
        %v2174 = vpow.pop %v2173
        %v2175 = vmul.f32 %v2130, 1.442695
        %v2176 = vpow.pop %v2175
        %v2177 = vmul.f32 %v2131, 1.442695
        %v2178 = vpow.pop %v2177
        %v2179 = vmul.f32 %v2132, 1.442695
        %v2180 = vpow.pop %v2179
        %v2181 = vmul.f32 %v2133, 1.442695
        %v2182 = vpow.pop %v2181
        %v2183 = vmul.f32 %v2134, 1.442695
        %v2184 = vpow.pop %v2183
        %v2185 = vmul.f32 %v2135, 1.442695
        %v2186 = vpow.pop %v2185
        %v2187 = vmul.f32 %v2136, 1.442695
        %v2188 = vpow.pop %v2187
        %v2189 = vmul.f32 %v2137, 1.442695
        %v2190 = vpow.pop %v2189
        %v2191 = vmul.f32 %v2138, 1.442695
        %v2192 = vpow.pop %v2191
        %v2193 = vmul.f32 %v2139, 1.442695
        %v2194 = vpow.pop %v2193
        %v2195 = vmul.f32 %v2140, 1.442695
        %v2196 = vpow.pop %v2195
        %v2197 = vmul.f32 %v2141, 1.442695
        %v2198 = vpow.pop %v2197
        %v2199 = vmul.f32 %v2142, 1.442695
        %v2200 = vpow.pop %v2199
        %v2201 = vmul.f32 %v2143, 1.442695
        %v2202 = vpow.pop %v2201
        %v2203 = vmul.f32 %v2144, 1.442695
        %v2204 = vpow.pop %v2203
        %v2205 = vmul.f32 %v2145, 1.442695
        %v2206 = vpow.pop %v2205
        %v2207 = vmul.f32 %v2146, 1.442695
        %v2208 = vpow.pop %v2207
        %v2209 = vmul.f32 %v2147, 1.442695
        %v2210 = vpow.pop %v2209
        %v2211 = vmul.f32 %v2148, 1.442695
        %v2212 = vpow.pop %v2211
        %2213 = vadd.xlane.f32.xlu0 %v2150
        %v2214 = vpop.xlane.xlu0 %2213
        %2215 = vadd.xlane.f32.xlu0 %v2152
        %v2216 = vpop.xlane.xlu0 %2215
        %2217 = vadd.xlane.f32.xlu0 %v2154
        %v2218 = vpop.xlane.xlu0 %2217
        %2219 = vadd.xlane.f32.xlu0 %v2156
        %v2220 = vpop.xlane.xlu0 %2219
        %2221 = vadd.xlane.f32.xlu0 %v2158
        %v2222 = vpop.xlane.xlu0 %2221
        %2223 = vadd.xlane.f32.xlu0 %v2160
        %v2224 = vpop.xlane.xlu0 %2223
        %2225 = vadd.xlane.f32.xlu0 %v2162
        %v2226 = vpop.xlane.xlu0 %2225
        %2227 = vadd.xlane.f32.xlu0 %v2164
        %v2228 = vpop.xlane.xlu0 %2227
        %2229 = vadd.xlane.f32.xlu0 %v2166
        %v2230 = vpop.xlane.xlu0 %2229
        %2231 = vadd.xlane.f32.xlu0 %v2168
        %v2232 = vpop.xlane.xlu0 %2231
        %2233 = vadd.xlane.f32.xlu0 %v2170
        %v2234 = vpop.xlane.xlu0 %2233
        %2235 = vadd.xlane.f32.xlu0 %v2172
        %v2236 = vpop.xlane.xlu0 %2235
        %2237 = vadd.xlane.f32.xlu0 %v2174
        %v2238 = vpop.xlane.xlu0 %2237
        %2239 = vadd.xlane.f32.xlu0 %v2176
        %v2240 = vpop.xlane.xlu0 %2239
        %2241 = vadd.xlane.f32.xlu0 %v2178
        %v2242 = vpop.xlane.xlu0 %2241
        %2243 = vadd.xlane.f32.xlu0 %v2180
        %v2244 = vpop.xlane.xlu0 %2243
        %2245 = vadd.xlane.f32.xlu0 %v2182
        %v2246 = vpop.xlane.xlu0 %2245
        %2247 = vadd.xlane.f32.xlu0 %v2184
        %v2248 = vpop.xlane.xlu0 %2247
        %2249 = vadd.xlane.f32.xlu0 %v2186
        %v2250 = vpop.xlane.xlu0 %2249
        %2251 = vadd.xlane.f32.xlu0 %v2188
        %v2252 = vpop.xlane.xlu0 %2251
        %2253 = vadd.xlane.f32.xlu0 %v2190
        %v2254 = vpop.xlane.xlu0 %2253
        %2255 = vadd.xlane.f32.xlu0 %v2192
        %v2256 = vpop.xlane.xlu0 %2255
        %2257 = vadd.xlane.f32.xlu0 %v2194
        %v2258 = vpop.xlane.xlu0 %2257
        %2259 = vadd.xlane.f32.xlu0 %v2196
        %v2260 = vpop.xlane.xlu0 %2259
        %2261 = vadd.xlane.f32.xlu0 %v2198
        %v2262 = vpop.xlane.xlu0 %2261
        %2263 = vadd.xlane.f32.xlu0 %v2200
        %v2264 = vpop.xlane.xlu0 %2263
        %2265 = vadd.xlane.f32.xlu0 %v2202
        %v2266 = vpop.xlane.xlu0 %2265
        %2267 = vadd.xlane.f32.xlu0 %v2204
        %v2268 = vpop.xlane.xlu0 %2267
        %2269 = vadd.xlane.f32.xlu0 %v2206
        %v2270 = vpop.xlane.xlu0 %2269
        %2271 = vadd.xlane.f32.xlu0 %v2208
        %v2272 = vpop.xlane.xlu0 %2271
        %2273 = vadd.xlane.f32.xlu0 %v2210
        %v2274 = vpop.xlane.xlu0 %2273
        %2275 = vadd.xlane.f32.xlu0 %v2212
        %v2276 = vpop.xlane.xlu0 %2275
        %v2277 = vpack.c.bf16 %v2152, %v2150
        %v2278 = vpack.c.bf16 %v2156, %v2154
        %v2279 = vpack.c.bf16 %v2160, %v2158
        %v2280 = vpack.c.bf16 %v2164, %v2162
        %v2281 = vpack.c.bf16 %v2168, %v2166
        %v2282 = vpack.c.bf16 %v2172, %v2170
        %v2283 = vpack.c.bf16 %v2176, %v2174
        %v2284 = vpack.c.bf16 %v2180, %v2178
        %v2285 = vpack.c.bf16 %v2184, %v2182
        %v2286 = vpack.c.bf16 %v2188, %v2186
        %v2287 = vpack.c.bf16 %v2192, %v2190
        %v2288 = vpack.c.bf16 %v2196, %v2194
        %v2289 = vpack.c.bf16 %v2200, %v2198
        %v2290 = vpack.c.bf16 %v2204, %v2202
        %v2291 = vpack.c.bf16 %v2208, %v2206
        %v2292 = vpack.c.bf16 %v2212, %v2210
        %2293 = vmatprep.subr.bf16.mxu0 0
        %2294 = vmatpush1.bf16.msra.mxu0 %v1809
        %2295 = vmatprep.subr.bf16.mxu0 0
        %2296 = vmatpush1.bf16.msra.mxu0 %v1803
        %2297 = vmatprep.subr.bf16.mxu0 0
        %2298 = vmatpush1.bf16.msra.mxu0 %v1797
        %2299 = vmatprep.subr.bf16.mxu0 0
        %2300 = vmatpush1.bf16.msra.mxu0 %v1791
        %2301 = vmatprep.subr.bf16.mxu0 0
        %2302 = vmatpush1.bf16.msra.mxu0 %v1785
        %2303 = vmatprep.subr.bf16.mxu0 0
        %2304 = vmatpush1.bf16.msra.mxu0 %v1779
        %2305 = vmatprep.subr.bf16.mxu0 0
        %2306 = vmatpush1.bf16.msra.mxu0 %v1773
        %2307 = vmatprep.subr.bf16.mxu0 0
        %2308 = vmatpush1.bf16.msra.mxu0 %v1767
        %2309 = vmatprep.subr.bf16.mxu0 0
        %2310 = vmatpush2.bf16.msra.mxu0 0
        %2311 = vmatprep.subr.bf16.mxu0 0
        %2312 = vmatpush2.bf16.msra.mxu0 0
        %2313 = vmatprep.subr.bf16.mxu0 0
        %2314 = vmatpush2.bf16.msra.mxu0 0
        %2315 = vmatprep.subr.bf16.mxu0 0
        %2316 = vmatpush2.bf16.msra.mxu0 0
        %2317 = vmatprep.subr.bf16.mxu0 0
        %2318 = vmatpush2.bf16.msra.mxu0 0
        %2319 = vmatprep.subr.bf16.mxu0 0
        %2320 = vmatpush2.bf16.msra.mxu0 0
        %2321 = vmatprep.subr.bf16.mxu0 0
        %2322 = vmatpush2.bf16.msra.mxu0 0
        %2323 = vmatprep.subr.bf16.mxu0 0
        %2324 = vmatpush2.bf16.msra.mxu0 0
        %2325 = vmatprep.mubr.bf16.mxu0 0
        %2326 = vmatmul.mubr.bf16.gmra.mxu0 %v2277
        %v2327 = vpop.f32.mrf.mxu0
        %v2328 = vadd.f32 0.0, %v2327
        %v2329 = vpop.f32.mrf.mxu0
        %v2330 = vpop.f32.mrf.mxu0
        %v2331 = vadd.f32 0.0, %v2330
        %v2332 = vpop.f32.mrf.mxu0
        %2333 = vmatprep.mubr.bf16.mxu0 0
        %2334 = vmatmul.mubr.bf16.gmra.mxu0 %v2278
        %v2335 = vpop.f32.mrf.mxu0
        %v2336 = vadd.f32 0.0, %v2335
        %v2337 = vpop.f32.mrf.mxu0
        %v2338 = vpop.f32.mrf.mxu0
        %v2339 = vadd.f32 0.0, %v2338
        %v2340 = vpop.f32.mrf.mxu0
        %2341 = vmatprep.mubr.bf16.mxu0 0
        %2342 = vmatmul.mubr.bf16.gmra.mxu0 %v2279
        %v2343 = vpop.f32.mrf.mxu0
        %v2344 = vadd.f32 0.0, %v2343
        %v2345 = vpop.f32.mrf.mxu0
        %v2346 = vpop.f32.mrf.mxu0
        %v2347 = vadd.f32 0.0, %v2346
        %v2348 = vpop.f32.mrf.mxu0
        %2349 = vmatprep.mubr.bf16.mxu0 0
        %2350 = vmatmul.mubr.bf16.gmra.mxu0 %v2280
        %v2351 = vpop.f32.mrf.mxu0
        %v2352 = vadd.f32 0.0, %v2351
        %v2353 = vpop.f32.mrf.mxu0
        %v2354 = vpop.f32.mrf.mxu0
        %v2355 = vadd.f32 0.0, %v2354
        %v2356 = vpop.f32.mrf.mxu0
        %2357 = vmatprep.mubr.bf16.mxu0 0
        %2358 = vmatmul.mubr.bf16.gmra.mxu0 %v2281
        %v2359 = vpop.f32.mrf.mxu0
        %v2360 = vadd.f32 0.0, %v2359
        %v2361 = vpop.f32.mrf.mxu0
        %v2362 = vpop.f32.mrf.mxu0
        %v2363 = vadd.f32 0.0, %v2362
        %v2364 = vpop.f32.mrf.mxu0
        %2365 = vmatprep.mubr.bf16.mxu0 0
        %2366 = vmatmul.mubr.bf16.gmra.mxu0 %v2282
        %v2367 = vpop.f32.mrf.mxu0
        %v2368 = vadd.f32 0.0, %v2367
        %v2369 = vpop.f32.mrf.mxu0
        %v2370 = vpop.f32.mrf.mxu0
        %v2371 = vadd.f32 0.0, %v2370
        %v2372 = vpop.f32.mrf.mxu0
        %2373 = vmatprep.mubr.bf16.mxu0 0
        %2374 = vmatmul.mubr.bf16.gmra.mxu0 %v2283
        %v2375 = vpop.f32.mrf.mxu0
        %v2376 = vadd.f32 0.0, %v2375
        %v2377 = vpop.f32.mrf.mxu0
        %v2378 = vpop.f32.mrf.mxu0
        %v2379 = vadd.f32 0.0, %v2378
        %v2380 = vpop.f32.mrf.mxu0
        %2381 = vmatprep.mubr.bf16.mxu0 0
        %2382 = vmatmul.mubr.bf16.gmra.mxu0 %v2284
        %v2383 = vpop.f32.mrf.mxu0
        %v2384 = vadd.f32 0.0, %v2383
        %v2385 = vpop.f32.mrf.mxu0
        %v2386 = vpop.f32.mrf.mxu0
        %v2387 = vadd.f32 0.0, %v2386
        %v2388 = vpop.f32.mrf.mxu0
        %2389 = vdwg.mxu0
        %2390 = vmatprep.subr.bf16.mxu0 0
        %2391 = vmatpush1.bf16.msra.mxu0 %v1857
        %2392 = vmatprep.subr.bf16.mxu0 0
        %2393 = vmatpush1.bf16.msra.mxu0 %v1851
        %2394 = vmatprep.subr.bf16.mxu0 0
        %2395 = vmatpush1.bf16.msra.mxu0 %v1845
        %2396 = vmatprep.subr.bf16.mxu0 0
        %2397 = vmatpush1.bf16.msra.mxu0 %v1839
        %2398 = vmatprep.subr.bf16.mxu0 0
        %2399 = vmatpush1.bf16.msra.mxu0 %v1833
        %2400 = vmatprep.subr.bf16.mxu0 0
        %2401 = vmatpush1.bf16.msra.mxu0 %v1827
        %2402 = vmatprep.subr.bf16.mxu0 0
        %2403 = vmatpush1.bf16.msra.mxu0 %v1821
        %2404 = vmatprep.subr.bf16.mxu0 0
        %2405 = vmatpush1.bf16.msra.mxu0 %v1815
        %2406 = vmatprep.subr.bf16.mxu0 0
        %2407 = vmatpush2.bf16.msra.mxu0 0
        %2408 = vmatprep.subr.bf16.mxu0 0
        %2409 = vmatpush2.bf16.msra.mxu0 0
        %2410 = vmatprep.subr.bf16.mxu0 0
        %2411 = vmatpush2.bf16.msra.mxu0 0
        %2412 = vmatprep.subr.bf16.mxu0 0
        %2413 = vmatpush2.bf16.msra.mxu0 0
        %2414 = vmatprep.subr.bf16.mxu0 0
        %2415 = vmatpush2.bf16.msra.mxu0 0
        %2416 = vmatprep.subr.bf16.mxu0 0
        %2417 = vmatpush2.bf16.msra.mxu0 0
        %2418 = vmatprep.subr.bf16.mxu0 0
        %2419 = vmatpush2.bf16.msra.mxu0 0
        %2420 = vmatprep.subr.bf16.mxu0 0
        %2421 = vmatpush2.bf16.msra.mxu0 0
        %2422 = vmatprep.mubr.bf16.mxu0 0
        %2423 = vmatmul.mubr.bf16.gmra.mxu0 %v2285
        %v2424 = vpop.f32.mrf.mxu0
        %v2425 = vadd.f32 0.0, %v2424
        %v2426 = vpop.f32.mrf.mxu0
        %v2427 = vpop.f32.mrf.mxu0
        %v2428 = vadd.f32 0.0, %v2427
        %v2429 = vpop.f32.mrf.mxu0
        %2430 = vmatprep.mubr.bf16.mxu0 0
        %2431 = vmatmul.mubr.bf16.gmra.mxu0 %v2286
        %v2432 = vpop.f32.mrf.mxu0
        %v2433 = vadd.f32 0.0, %v2432
        %v2434 = vpop.f32.mrf.mxu0
        %v2435 = vpop.f32.mrf.mxu0
        %v2436 = vadd.f32 0.0, %v2435
        %v2437 = vpop.f32.mrf.mxu0
        %2438 = vmatprep.mubr.bf16.mxu0 0
        %2439 = vmatmul.mubr.bf16.gmra.mxu0 %v2287
        %v2440 = vpop.f32.mrf.mxu0
        %v2441 = vadd.f32 0.0, %v2440
        %v2442 = vpop.f32.mrf.mxu0
        %v2443 = vpop.f32.mrf.mxu0
        %v2444 = vadd.f32 0.0, %v2443
        %v2445 = vpop.f32.mrf.mxu0
        %2446 = vmatprep.mubr.bf16.mxu0 0
        %2447 = vmatmul.mubr.bf16.gmra.mxu0 %v2288
        %v2448 = vpop.f32.mrf.mxu0
        %v2449 = vadd.f32 0.0, %v2448
        %v2450 = vpop.f32.mrf.mxu0
        %v2451 = vpop.f32.mrf.mxu0
        %v2452 = vadd.f32 0.0, %v2451
        %v2453 = vpop.f32.mrf.mxu0
        %2454 = vmatprep.mubr.bf16.mxu0 0
        %2455 = vmatmul.mubr.bf16.gmra.mxu0 %v2289
        %v2456 = vpop.f32.mrf.mxu0
        %v2457 = vadd.f32 0.0, %v2456
        %v2458 = vpop.f32.mrf.mxu0
        %v2459 = vpop.f32.mrf.mxu0
        %v2460 = vadd.f32 0.0, %v2459
        %v2461 = vpop.f32.mrf.mxu0
        %2462 = vmatprep.mubr.bf16.mxu0 0
        %2463 = vmatmul.mubr.bf16.gmra.mxu0 %v2290
        %v2464 = vpop.f32.mrf.mxu0
        %v2465 = vadd.f32 0.0, %v2464
        %v2466 = vpop.f32.mrf.mxu0
        %v2467 = vpop.f32.mrf.mxu0
        %v2468 = vadd.f32 0.0, %v2467
        %v2469 = vpop.f32.mrf.mxu0
        %2470 = vmatprep.mubr.bf16.mxu0 0
        %2471 = vmatmul.mubr.bf16.gmra.mxu0 %v2291
        %v2472 = vpop.f32.mrf.mxu0
        %v2473 = vadd.f32 0.0, %v2472
        %v2474 = vpop.f32.mrf.mxu0
        %v2475 = vpop.f32.mrf.mxu0
        %v2476 = vadd.f32 0.0, %v2475
        %v2477 = vpop.f32.mrf.mxu0
        %2478 = vmatprep.mubr.bf16.mxu0 0
        %2479 = vmatmul.mubr.bf16.gmra.mxu0 %v2292
        %v2480 = vpop.f32.mrf.mxu0
        %v2481 = vadd.f32 0.0, %v2480
        %v2482 = vpop.f32.mrf.mxu0
        %v2483 = vpop.f32.mrf.mxu0
        %v2484 = vadd.f32 0.0, %v2483
        %v2485 = vpop.f32.mrf.mxu0
        %2486 = vdwg.mxu0
        %v2487 = vrcp.pop %v2214
        %v2488 = vrcp.pop %v2216
        %v2489 = vrcp.pop %v2218
        %v2490 = vrcp.pop %v2220
        %v2491 = vrcp.pop %v2222
        %v2492 = vrcp.pop %v2224
        %v2493 = vrcp.pop %v2226
        %v2494 = vrcp.pop %v2228
        %v2495 = vrcp.pop %v2230
        %v2496 = vrcp.pop %v2232
        %v2497 = vrcp.pop %v2234
        %v2498 = vrcp.pop %v2236
        %v2499 = vrcp.pop %v2238
        %v2500 = vrcp.pop %v2240
        %v2501 = vrcp.pop %v2242
        %v2502 = vrcp.pop %v2244
        %v2503 = vrcp.pop %v2246
        %v2504 = vrcp.pop %v2248
        %v2505 = vrcp.pop %v2250
        %v2506 = vrcp.pop %v2252
        %v2507 = vrcp.pop %v2254
        %v2508 = vrcp.pop %v2256
        %v2509 = vrcp.pop %v2258
        %v2510 = vrcp.pop %v2260
        %v2511 = vrcp.pop %v2262
        %v2512 = vrcp.pop %v2264
        %v2513 = vrcp.pop %v2266
        %v2514 = vrcp.pop %v2268
        %v2515 = vrcp.pop %v2270
        %v2516 = vrcp.pop %v2272
        %v2517 = vrcp.pop %v2274
        %v2518 = vrcp.pop %v2276
        %v2519 = vmul.f32 %v2328, %v2487
        %v2520 = vmul.f32 %v2331, %v2488
        %v2521 = vmul.f32 %v2336, %v2489
        %v2522 = vmul.f32 %v2339, %v2490
        %v2523 = vmul.f32 %v2344, %v2491
        %v2524 = vmul.f32 %v2347, %v2492
        %v2525 = vmul.f32 %v2352, %v2493
        %v2526 = vmul.f32 %v2355, %v2494
        %v2527 = vmul.f32 %v2360, %v2495
        %v2528 = vmul.f32 %v2363, %v2496
        %v2529 = vmul.f32 %v2368, %v2497
        %v2530 = vmul.f32 %v2371, %v2498
        %v2531 = vmul.f32 %v2376, %v2499
        %v2532 = vmul.f32 %v2379, %v2500
        %v2533 = vmul.f32 %v2384, %v2501
        %v2534 = vmul.f32 %v2387, %v2502
        %v2535 = vmul.f32 %v2425, %v2503
        %v2536 = vmul.f32 %v2428, %v2504
        %v2537 = vmul.f32 %v2433, %v2505
        %v2538 = vmul.f32 %v2436, %v2506
        %v2539 = vmul.f32 %v2441, %v2507
        %v2540 = vmul.f32 %v2444, %v2508
        %v2541 = vmul.f32 %v2449, %v2509
        %v2542 = vmul.f32 %v2452, %v2510
        %v2543 = vmul.f32 %v2457, %v2511
        %v2544 = vmul.f32 %v2460, %v2512
        %v2545 = vmul.f32 %v2465, %v2513
        %v2546 = vmul.f32 %v2468, %v2514
        %v2547 = vmul.f32 %v2473, %v2515
        %v2548 = vmul.f32 %v2476, %v2516
        %v2549 = vmul.f32 %v2481, %v2517
        %v2550 = vmul.f32 %v2484, %v2518
        %2551 = vst [vmem:[#allocation2] sm:$0xff] %v2519
        %2552 = vst [vmem:[#allocation2 + $0x10] sm:$0xff] %v2520
        %2553 = vst [vmem:[#allocation2 + $0x20] sm:$0xff] %v2521
        %2554 = vst [vmem:[#allocation2 + $0x30] sm:$0xff] %v2522
        %2555 = vst [vmem:[#allocation2 + $0x40] sm:$0xff] %v2523
        %2556 = vst [vmem:[#allocation2 + $0x50] sm:$0xff] %v2524
        %2557 = vst [vmem:[#allocation2 + $0x60] sm:$0xff] %v2525
        %2558 = vst [vmem:[#allocation2 + $0x70] sm:$0xff] %v2526
        %2559 = vst [vmem:[#allocation2 + $0x80] sm:$0xff] %v2527
        %2560 = vst [vmem:[#allocation2 + $0x90] sm:$0xff] %v2528
        %2561 = vst [vmem:[#allocation2 + $0xa0] sm:$0xff] %v2529
        %2562 = vst [vmem:[#allocation2 + $0xb0] sm:$0xff] %v2530
        %2563 = vst [vmem:[#allocation2 + $0xc0] sm:$0xff] %v2531
        %2564 = vst [vmem:[#allocation2 + $0xd0] sm:$0xff] %v2532
        %2565 = vst [vmem:[#allocation2 + $0xe0] sm:$0xff] %v2533
        %2566 = vst [vmem:[#allocation2 + $0xf0] sm:$0xff] %v2534
        %2567 = vst [vmem:[#allocation2 + $0x100] sm:$0xff] %v2535
        %2568 = vst [vmem:[#allocation2 + $0x110] sm:$0xff] %v2536
        %2569 = vst [vmem:[#allocation2 + $0x120] sm:$0xff] %v2537
        %2570 = vst [vmem:[#allocation2 + $0x130] sm:$0xff] %v2538
        %2571 = vst [vmem:[#allocation2 + $0x140] sm:$0xff] %v2539
        %2572 = vst [vmem:[#allocation2 + $0x150] sm:$0xff] %v2540
        %2573 = vst [vmem:[#allocation2 + $0x160] sm:$0xff] %v2541
        %2574 = vst [vmem:[#allocation2 + $0x170] sm:$0xff] %v2542
        %2575 = vst [vmem:[#allocation2 + $0x180] sm:$0xff] %v2543
        %2576 = vst [vmem:[#allocation2 + $0x190] sm:$0xff] %v2544
        %2577 = vst [vmem:[#allocation2 + $0x1a0] sm:$0xff] %v2545
        %2578 = vst [vmem:[#allocation2 + $0x1b0] sm:$0xff] %v2546
        %2579 = vst [vmem:[#allocation2 + $0x1c0] sm:$0xff] %v2547
        %2580 = vst [vmem:[#allocation2 + $0x1d0] sm:$0xff] %v2548
        %2581 = vst [vmem:[#allocation2 + $0x1e0] sm:$0xff] %v2549
        %2582 = vst [vmem:[#allocation2 + $0x1f0] sm:$0xff] %v2550
        %2583 = vmatprep.subr.bf16.mxu0 0
        %2584 = vmatpush1.bf16.xpose.msra.mxu0 %v1808
        %2585 = vmatprep.subr.bf16.mxu0 0
        %2586 = vmatpush1.bf16.xpose.msra.mxu0 %v1802
        %2587 = vmatprep.subr.bf16.mxu0 0
        %2588 = vmatpush1.bf16.xpose.msra.mxu0 %v1796
        %2589 = vmatprep.subr.bf16.mxu0 0
        %2590 = vmatpush1.bf16.xpose.msra.mxu0 %v1790
        %2591 = vmatprep.subr.bf16.mxu0 0
        %2592 = vmatpush1.bf16.xpose.msra.mxu0 %v1784
        %2593 = vmatprep.subr.bf16.mxu0 0
        %2594 = vmatpush1.bf16.xpose.msra.mxu0 %v1778
        %2595 = vmatprep.subr.bf16.mxu0 0
        %2596 = vmatpush1.bf16.xpose.msra.mxu0 %v1772
        %2597 = vmatprep.subr.bf16.mxu0 0
        %2598 = vmatpush1.bf16.xpose.msra.mxu0 %v1766
        %2599 = vmatprep.subr.bf16.mxu0 0
        %2600 = vmatpush2.bf16.xpose.msra.mxu0 0
        %2601 = vmatprep.subr.bf16.mxu0 0
        %2602 = vmatpush2.bf16.xpose.msra.mxu0 0
        %2603 = vmatprep.subr.bf16.mxu0 0
        %2604 = vmatpush2.bf16.xpose.msra.mxu0 0
        %2605 = vmatprep.subr.bf16.mxu0 0
        %2606 = vmatpush2.bf16.xpose.msra.mxu0 0
        %2607 = vmatprep.subr.bf16.mxu0 0
        %2608 = vmatpush2.bf16.xpose.msra.mxu0 0
        %2609 = vmatprep.subr.bf16.mxu0 0
        %2610 = vmatpush2.bf16.xpose.msra.mxu0 0
        %2611 = vmatprep.subr.bf16.mxu0 0
        %2612 = vmatpush2.bf16.xpose.msra.mxu0 0
        %2613 = vmatprep.subr.bf16.mxu0 0
        %2614 = vmatpush2.bf16.xpose.msra.mxu0 0
        %2615 = vmatprep.mubr.bf16.mxu0 0
        %2616 = vmatmul.mubr.bf16.gmra.mxu0 %v1764
        %v2617 = vpop.f32.mrf.mxu0
        %v2618 = vadd.f32 0.0, %v2617
        %v2619 = vpop.f32.mrf.mxu0
        %v2620 = vpop.f32.mrf.mxu0
        %v2621 = vadd.f32 0.0, %v2620
        %v2622 = vpop.f32.mrf.mxu0
        %2623 = vmatprep.mubr.bf16.mxu0 0
        %2624 = vmatmul.mubr.bf16.gmra.mxu0 %v1770
        %v2625 = vpop.f32.mrf.mxu0
        %v2626 = vadd.f32 0.0, %v2625
        %v2627 = vpop.f32.mrf.mxu0
        %v2628 = vpop.f32.mrf.mxu0
        %v2629 = vadd.f32 0.0, %v2628
        %v2630 = vpop.f32.mrf.mxu0
        %2631 = vmatprep.mubr.bf16.mxu0 0
        %2632 = vmatmul.mubr.bf16.gmra.mxu0 %v1776
        %v2633 = vpop.f32.mrf.mxu0
        %v2634 = vadd.f32 0.0, %v2633
        %v2635 = vpop.f32.mrf.mxu0
        %v2636 = vpop.f32.mrf.mxu0
        %v2637 = vadd.f32 0.0, %v2636
        %v2638 = vpop.f32.mrf.mxu0
        %2639 = vmatprep.mubr.bf16.mxu0 0
        %2640 = vmatmul.mubr.bf16.gmra.mxu0 %v1782
        %v2641 = vpop.f32.mrf.mxu0
        %v2642 = vadd.f32 0.0, %v2641
        %v2643 = vpop.f32.mrf.mxu0
        %v2644 = vpop.f32.mrf.mxu0
        %v2645 = vadd.f32 0.0, %v2644
        %v2646 = vpop.f32.mrf.mxu0
        %2647 = vmatprep.mubr.bf16.mxu0 0
        %2648 = vmatmul.mubr.bf16.gmra.mxu0 %v1788
        %v2649 = vpop.f32.mrf.mxu0
        %v2650 = vadd.f32 0.0, %v2649
        %v2651 = vpop.f32.mrf.mxu0
        %v2652 = vpop.f32.mrf.mxu0
        %v2653 = vadd.f32 0.0, %v2652
        %v2654 = vpop.f32.mrf.mxu0
        %2655 = vmatprep.mubr.bf16.mxu0 0
        %2656 = vmatmul.mubr.bf16.gmra.mxu0 %v1794
        %v2657 = vpop.f32.mrf.mxu0
        %v2658 = vadd.f32 0.0, %v2657
        %v2659 = vpop.f32.mrf.mxu0
        %v2660 = vpop.f32.mrf.mxu0
        %v2661 = vadd.f32 0.0, %v2660
        %v2662 = vpop.f32.mrf.mxu0
        %2663 = vmatprep.mubr.bf16.mxu0 0
        %2664 = vmatmul.mubr.bf16.gmra.mxu0 %v1800
        %v2665 = vpop.f32.mrf.mxu0
        %v2666 = vadd.f32 0.0, %v2665
        %v2667 = vpop.f32.mrf.mxu0
        %v2668 = vpop.f32.mrf.mxu0
        %v2669 = vadd.f32 0.0, %v2668
        %v2670 = vpop.f32.mrf.mxu0
        %2671 = vmatprep.mubr.bf16.mxu0 0
        %2672 = vmatmul.mubr.bf16.gmra.mxu0 %v1806
        %v2673 = vpop.f32.mrf.mxu0
        %v2674 = vadd.f32 0.0, %v2673
        %v2675 = vpop.f32.mrf.mxu0
        %v2676 = vpop.f32.mrf.mxu0
        %v2677 = vadd.f32 0.0, %v2676
        %v2678 = vpop.f32.mrf.mxu0
        %2679 = vdwg.mxu0
        %2680 = vmatprep.subr.bf16.mxu0 0
        %2681 = vmatpush1.bf16.xpose.msra.mxu0 %v1856
        %2682 = vmatprep.subr.bf16.mxu0 0
        %2683 = vmatpush1.bf16.xpose.msra.mxu0 %v1850
        %2684 = vmatprep.subr.bf16.mxu0 0
        %2685 = vmatpush1.bf16.xpose.msra.mxu0 %v1844
        %2686 = vmatprep.subr.bf16.mxu0 0
        %2687 = vmatpush1.bf16.xpose.msra.mxu0 %v1838
        %2688 = vmatprep.subr.bf16.mxu0 0
        %2689 = vmatpush1.bf16.xpose.msra.mxu0 %v1832
        %2690 = vmatprep.subr.bf16.mxu0 0
        %2691 = vmatpush1.bf16.xpose.msra.mxu0 %v1826
        %2692 = vmatprep.subr.bf16.mxu0 0
        %2693 = vmatpush1.bf16.xpose.msra.mxu0 %v1820
        %2694 = vmatprep.subr.bf16.mxu0 0
        %2695 = vmatpush1.bf16.xpose.msra.mxu0 %v1814
        %2696 = vmatprep.subr.bf16.mxu0 0
        %2697 = vmatpush2.bf16.xpose.msra.mxu0 0
        %2698 = vmatprep.subr.bf16.mxu0 0
        %2699 = vmatpush2.bf16.xpose.msra.mxu0 0
        %2700 = vmatprep.subr.bf16.mxu0 0
        %2701 = vmatpush2.bf16.xpose.msra.mxu0 0
        %2702 = vmatprep.subr.bf16.mxu0 0
        %2703 = vmatpush2.bf16.xpose.msra.mxu0 0
        %2704 = vmatprep.subr.bf16.mxu0 0
        %2705 = vmatpush2.bf16.xpose.msra.mxu0 0
        %2706 = vmatprep.subr.bf16.mxu0 0
        %2707 = vmatpush2.bf16.xpose.msra.mxu0 0
        %2708 = vmatprep.subr.bf16.mxu0 0
        %2709 = vmatpush2.bf16.xpose.msra.mxu0 0
        %2710 = vmatprep.subr.bf16.mxu0 0
        %2711 = vmatpush2.bf16.xpose.msra.mxu0 0
        %2712 = vmatprep.mubr.bf16.mxu0 0
        %2713 = vmatmul.mubr.bf16.gmra.mxu0 %v1812
        %v2714 = vpop.f32.mrf.mxu0
        %v2715 = vadd.f32 0.0, %v2714
        %v2716 = vpop.f32.mrf.mxu0
        %v2717 = vpop.f32.mrf.mxu0
        %v2718 = vadd.f32 0.0, %v2717
        %v2719 = vpop.f32.mrf.mxu0
        %2720 = vmatprep.mubr.bf16.mxu0 0
        %2721 = vmatmul.mubr.bf16.gmra.mxu0 %v1818
        %v2722 = vpop.f32.mrf.mxu0
        %v2723 = vadd.f32 0.0, %v2722
        %v2724 = vpop.f32.mrf.mxu0
        %v2725 = vpop.f32.mrf.mxu0
        %v2726 = vadd.f32 0.0, %v2725
        %v2727 = vpop.f32.mrf.mxu0
        %2728 = vmatprep.mubr.bf16.mxu0 0
        %2729 = vmatmul.mubr.bf16.gmra.mxu0 %v1824
        %v2730 = vpop.f32.mrf.mxu0
        %v2731 = vadd.f32 0.0, %v2730
        %v2732 = vpop.f32.mrf.mxu0
        %v2733 = vpop.f32.mrf.mxu0
        %v2734 = vadd.f32 0.0, %v2733
        %v2735 = vpop.f32.mrf.mxu0
        %2736 = vmatprep.mubr.bf16.mxu0 0
        %2737 = vmatmul.mubr.bf16.gmra.mxu0 %v1830
        %v2738 = vpop.f32.mrf.mxu0
        %v2739 = vadd.f32 0.0, %v2738
        %v2740 = vpop.f32.mrf.mxu0
        %v2741 = vpop.f32.mrf.mxu0
        %v2742 = vadd.f32 0.0, %v2741
        %v2743 = vpop.f32.mrf.mxu0
        %2744 = vmatprep.mubr.bf16.mxu0 0
        %2745 = vmatmul.mubr.bf16.gmra.mxu0 %v1836
        %v2746 = vpop.f32.mrf.mxu0
        %v2747 = vadd.f32 0.0, %v2746
        %v2748 = vpop.f32.mrf.mxu0
        %v2749 = vpop.f32.mrf.mxu0
        %v2750 = vadd.f32 0.0, %v2749
        %v2751 = vpop.f32.mrf.mxu0
        %2752 = vmatprep.mubr.bf16.mxu0 0
        %2753 = vmatmul.mubr.bf16.gmra.mxu0 %v1842
        %v2754 = vpop.f32.mrf.mxu0
        %v2755 = vadd.f32 0.0, %v2754
        %v2756 = vpop.f32.mrf.mxu0
        %v2757 = vpop.f32.mrf.mxu0
        %v2758 = vadd.f32 0.0, %v2757
        %v2759 = vpop.f32.mrf.mxu0
        %2760 = vmatprep.mubr.bf16.mxu0 0
        %2761 = vmatmul.mubr.bf16.gmra.mxu0 %v1848
        %v2762 = vpop.f32.mrf.mxu0
        %v2763 = vadd.f32 0.0, %v2762
        %v2764 = vpop.f32.mrf.mxu0
        %v2765 = vpop.f32.mrf.mxu0
        %v2766 = vadd.f32 0.0, %v2765
        %v2767 = vpop.f32.mrf.mxu0
        %2768 = vmatprep.mubr.bf16.mxu0 0
        %2769 = vmatmul.mubr.bf16.gmra.mxu0 %v1854
        %v2770 = vpop.f32.mrf.mxu0
        %v2771 = vadd.f32 0.0, %v2770
        %v2772 = vpop.f32.mrf.mxu0
        %v2773 = vpop.f32.mrf.mxu0
        %v2774 = vadd.f32 0.0, %v2773
        %v2775 = vpop.f32.mrf.mxu0
        %2776 = vdwg.mxu0
        %2777 = vmax.xlane.f32.xlu0 %v2618
        %v2778 = vpop.xlane.xlu0 %2777
        %2779 = vmax.xlane.f32.xlu0 %v2621
        %v2780 = vpop.xlane.xlu0 %2779
        %2781 = vmax.xlane.f32.xlu0 %v2626
        %v2782 = vpop.xlane.xlu0 %2781
        %2783 = vmax.xlane.f32.xlu0 %v2629
        %v2784 = vpop.xlane.xlu0 %2783
        %2785 = vmax.xlane.f32.xlu0 %v2634
        %v2786 = vpop.xlane.xlu0 %2785
        %2787 = vmax.xlane.f32.xlu0 %v2637
        %v2788 = vpop.xlane.xlu0 %2787
        %2789 = vmax.xlane.f32.xlu0 %v2642
        %v2790 = vpop.xlane.xlu0 %2789
        %2791 = vmax.xlane.f32.xlu0 %v2645
        %v2792 = vpop.xlane.xlu0 %2791
        %2793 = vmax.xlane.f32.xlu0 %v2650
        %v2794 = vpop.xlane.xlu0 %2793
        %2795 = vmax.xlane.f32.xlu0 %v2653
        %v2796 = vpop.xlane.xlu0 %2795
        %2797 = vmax.xlane.f32.xlu0 %v2658
        %v2798 = vpop.xlane.xlu0 %2797
        %2799 = vmax.xlane.f32.xlu0 %v2661
        %v2800 = vpop.xlane.xlu0 %2799
        %2801 = vmax.xlane.f32.xlu0 %v2666
        %v2802 = vpop.xlane.xlu0 %2801
        %2803 = vmax.xlane.f32.xlu0 %v2669
        %v2804 = vpop.xlane.xlu0 %2803
        %2805 = vmax.xlane.f32.xlu0 %v2674
        %v2806 = vpop.xlane.xlu0 %2805
        %2807 = vmax.xlane.f32.xlu0 %v2677
        %v2808 = vpop.xlane.xlu0 %2807
        %2809 = vmax.xlane.f32.xlu0 %v2715
        %v2810 = vpop.xlane.xlu0 %2809
        %2811 = vmax.xlane.f32.xlu0 %v2718
        %v2812 = vpop.xlane.xlu0 %2811
        %2813 = vmax.xlane.f32.xlu0 %v2723
        %v2814 = vpop.xlane.xlu0 %2813
        %2815 = vmax.xlane.f32.xlu0 %v2726
        %v2816 = vpop.xlane.xlu0 %2815
        %2817 = vmax.xlane.f32.xlu0 %v2731
        %v2818 = vpop.xlane.xlu0 %2817
        %2819 = vmax.xlane.f32.xlu0 %v2734
        %v2820 = vpop.xlane.xlu0 %2819
        %2821 = vmax.xlane.f32.xlu0 %v2739
        %v2822 = vpop.xlane.xlu0 %2821
        %2823 = vmax.xlane.f32.xlu0 %v2742
        %v2824 = vpop.xlane.xlu0 %2823
        %2825 = vmax.xlane.f32.xlu0 %v2747
        %v2826 = vpop.xlane.xlu0 %2825
        %2827 = vmax.xlane.f32.xlu0 %v2750
        %v2828 = vpop.xlane.xlu0 %2827
        %2829 = vmax.xlane.f32.xlu0 %v2755
        %v2830 = vpop.xlane.xlu0 %2829
        %2831 = vmax.xlane.f32.xlu0 %v2758
        %v2832 = vpop.xlane.xlu0 %2831
        %2833 = vmax.xlane.f32.xlu0 %v2763
        %v2834 = vpop.xlane.xlu0 %2833
        %2835 = vmax.xlane.f32.xlu0 %v2766
        %v2836 = vpop.xlane.xlu0 %2835
        %2837 = vmax.xlane.f32.xlu0 %v2771
        %v2838 = vpop.xlane.xlu0 %2837
        %2839 = vmax.xlane.f32.xlu0 %v2774
        %v2840 = vpop.xlane.xlu0 %2839
        %v2841 = vsub.f32 %v2618, %v2778
        %v2842 = vsub.f32 %v2621, %v2780
        %v2843 = vsub.f32 %v2626, %v2782
        %v2844 = vsub.f32 %v2629, %v2784
        %v2845 = vsub.f32 %v2634, %v2786
        %v2846 = vsub.f32 %v2637, %v2788
        %v2847 = vsub.f32 %v2642, %v2790
        %v2848 = vsub.f32 %v2645, %v2792
        %v2849 = vsub.f32 %v2650, %v2794
        %v2850 = vsub.f32 %v2653, %v2796
        %v2851 = vsub.f32 %v2658, %v2798
        %v2852 = vsub.f32 %v2661, %v2800
        %v2853 = vsub.f32 %v2666, %v2802
        %v2854 = vsub.f32 %v2669, %v2804
        %v2855 = vsub.f32 %v2674, %v2806
        %v2856 = vsub.f32 %v2677, %v2808
        %v2857 = vsub.f32 %v2715, %v2810
        %v2858 = vsub.f32 %v2718, %v2812
        %v2859 = vsub.f32 %v2723, %v2814
        %v2860 = vsub.f32 %v2726, %v2816
        %v2861 = vsub.f32 %v2731, %v2818
        %v2862 = vsub.f32 %v2734, %v2820
        %v2863 = vsub.f32 %v2739, %v2822
        %v2864 = vsub.f32 %v2742, %v2824
        %v2865 = vsub.f32 %v2747, %v2826
        %v2866 = vsub.f32 %v2750, %v2828
        %v2867 = vsub.f32 %v2755, %v2830
        %v2868 = vsub.f32 %v2758, %v2832
        %v2869 = vsub.f32 %v2763, %v2834
        %v2870 = vsub.f32 %v2766, %v2836
        %v2871 = vsub.f32 %v2771, %v2838
        %v2872 = vsub.f32 %v2774, %v2840
        %v2873 = vmul.f32 %v2841, 1.442695
        %v2874 = vpow.pop %v2873
        %v2875 = vmul.f32 %v2842, 1.442695
        %v2876 = vpow.pop %v2875
        %v2877 = vmul.f32 %v2843, 1.442695
        %v2878 = vpow.pop %v2877
        %v2879 = vmul.f32 %v2844, 1.442695
        %v2880 = vpow.pop %v2879
        %v2881 = vmul.f32 %v2845, 1.442695
        %v2882 = vpow.pop %v2881
        %v2883 = vmul.f32 %v2846, 1.442695
        %v2884 = vpow.pop %v2883
        %v2885 = vmul.f32 %v2847, 1.442695
        %v2886 = vpow.pop %v2885
        %v2887 = vmul.f32 %v2848, 1.442695
        %v2888 = vpow.pop %v2887
        %v2889 = vmul.f32 %v2849, 1.442695
        %v2890 = vpow.pop %v2889
        %v2891 = vmul.f32 %v2850, 1.442695
        %v2892 = vpow.pop %v2891
        %v2893 = vmul.f32 %v2851, 1.442695
        %v2894 = vpow.pop %v2893
        %v2895 = vmul.f32 %v2852, 1.442695
        %v2896 = vpow.pop %v2895
        %v2897 = vmul.f32 %v2853, 1.442695
        %v2898 = vpow.pop %v2897
        %v2899 = vmul.f32 %v2854, 1.442695
        %v2900 = vpow.pop %v2899
        %v2901 = vmul.f32 %v2855, 1.442695
        %v2902 = vpow.pop %v2901
        %v2903 = vmul.f32 %v2856, 1.442695
        %v2904 = vpow.pop %v2903
        %v2905 = vmul.f32 %v2857, 1.442695
        %v2906 = vpow.pop %v2905
        %v2907 = vmul.f32 %v2858, 1.442695
        %v2908 = vpow.pop %v2907
        %v2909 = vmul.f32 %v2859, 1.442695
        %v2910 = vpow.pop %v2909
        %v2911 = vmul.f32 %v2860, 1.442695
        %v2912 = vpow.pop %v2911
        %v2913 = vmul.f32 %v2861, 1.442695
        %v2914 = vpow.pop %v2913
        %v2915 = vmul.f32 %v2862, 1.442695
        %v2916 = vpow.pop %v2915
        %v2917 = vmul.f32 %v2863, 1.442695
        %v2918 = vpow.pop %v2917
        %v2919 = vmul.f32 %v2864, 1.442695
        %v2920 = vpow.pop %v2919
        %v2921 = vmul.f32 %v2865, 1.442695
        %v2922 = vpow.pop %v2921
        %v2923 = vmul.f32 %v2866, 1.442695
        %v2924 = vpow.pop %v2923
        %v2925 = vmul.f32 %v2867, 1.442695
        %v2926 = vpow.pop %v2925
        %v2927 = vmul.f32 %v2868, 1.442695
        %v2928 = vpow.pop %v2927
        %v2929 = vmul.f32 %v2869, 1.442695
        %v2930 = vpow.pop %v2929
        %v2931 = vmul.f32 %v2870, 1.442695
        %v2932 = vpow.pop %v2931
        %v2933 = vmul.f32 %v2871, 1.442695
        %v2934 = vpow.pop %v2933
        %v2935 = vmul.f32 %v2872, 1.442695
        %v2936 = vpow.pop %v2935
        %2937 = vadd.xlane.f32.xlu0 %v2874
        %v2938 = vpop.xlane.xlu0 %2937
        %2939 = vadd.xlane.f32.xlu0 %v2876
        %v2940 = vpop.xlane.xlu0 %2939
        %2941 = vadd.xlane.f32.xlu0 %v2878
        %v2942 = vpop.xlane.xlu0 %2941
        %2943 = vadd.xlane.f32.xlu0 %v2880
        %v2944 = vpop.xlane.xlu0 %2943
        %2945 = vadd.xlane.f32.xlu0 %v2882
        %v2946 = vpop.xlane.xlu0 %2945
        %2947 = vadd.xlane.f32.xlu0 %v2884
        %v2948 = vpop.xlane.xlu0 %2947
        %2949 = vadd.xlane.f32.xlu0 %v2886
        %v2950 = vpop.xlane.xlu0 %2949
        %2951 = vadd.xlane.f32.xlu0 %v2888
        %v2952 = vpop.xlane.xlu0 %2951
        %2953 = vadd.xlane.f32.xlu0 %v2890
        %v2954 = vpop.xlane.xlu0 %2953
        %2955 = vadd.xlane.f32.xlu0 %v2892
        %v2956 = vpop.xlane.xlu0 %2955
        %2957 = vadd.xlane.f32.xlu0 %v2894
        %v2958 = vpop.xlane.xlu0 %2957
        %2959 = vadd.xlane.f32.xlu0 %v2896
        %v2960 = vpop.xlane.xlu0 %2959
        %2961 = vadd.xlane.f32.xlu0 %v2898
        %v2962 = vpop.xlane.xlu0 %2961
        %2963 = vadd.xlane.f32.xlu0 %v2900
        %v2964 = vpop.xlane.xlu0 %2963
        %2965 = vadd.xlane.f32.xlu0 %v2902
        %v2966 = vpop.xlane.xlu0 %2965
        %2967 = vadd.xlane.f32.xlu0 %v2904
        %v2968 = vpop.xlane.xlu0 %2967
        %2969 = vadd.xlane.f32.xlu0 %v2906
        %v2970 = vpop.xlane.xlu0 %2969
        %2971 = vadd.xlane.f32.xlu0 %v2908
        %v2972 = vpop.xlane.xlu0 %2971
        %2973 = vadd.xlane.f32.xlu0 %v2910
        %v2974 = vpop.xlane.xlu0 %2973
        %2975 = vadd.xlane.f32.xlu0 %v2912
        %v2976 = vpop.xlane.xlu0 %2975
        %2977 = vadd.xlane.f32.xlu0 %v2914
        %v2978 = vpop.xlane.xlu0 %2977
        %2979 = vadd.xlane.f32.xlu0 %v2916
        %v2980 = vpop.xlane.xlu0 %2979
        %2981 = vadd.xlane.f32.xlu0 %v2918
        %v2982 = vpop.xlane.xlu0 %2981
        %2983 = vadd.xlane.f32.xlu0 %v2920
        %v2984 = vpop.xlane.xlu0 %2983
        %2985 = vadd.xlane.f32.xlu0 %v2922
        %v2986 = vpop.xlane.xlu0 %2985
        %2987 = vadd.xlane.f32.xlu0 %v2924
        %v2988 = vpop.xlane.xlu0 %2987
        %2989 = vadd.xlane.f32.xlu0 %v2926
        %v2990 = vpop.xlane.xlu0 %2989
        %2991 = vadd.xlane.f32.xlu0 %v2928
        %v2992 = vpop.xlane.xlu0 %2991
        %2993 = vadd.xlane.f32.xlu0 %v2930
        %v2994 = vpop.xlane.xlu0 %2993
        %2995 = vadd.xlane.f32.xlu0 %v2932
        %v2996 = vpop.xlane.xlu0 %2995
        %2997 = vadd.xlane.f32.xlu0 %v2934
        %v2998 = vpop.xlane.xlu0 %2997
        %2999 = vadd.xlane.f32.xlu0 %v2936
        %v3000 = vpop.xlane.xlu0 %2999
        %v3001 = vpack.c.bf16 %v2876, %v2874
        %v3002 = vpack.c.bf16 %v2880, %v2878
        %v3003 = vpack.c.bf16 %v2884, %v2882
        %v3004 = vpack.c.bf16 %v2888, %v2886
        %v3005 = vpack.c.bf16 %v2892, %v2890
        %v3006 = vpack.c.bf16 %v2896, %v2894
        %v3007 = vpack.c.bf16 %v2900, %v2898
        %v3008 = vpack.c.bf16 %v2904, %v2902
        %v3009 = vpack.c.bf16 %v2908, %v2906
        %v3010 = vpack.c.bf16 %v2912, %v2910
        %v3011 = vpack.c.bf16 %v2916, %v2914
        %v3012 = vpack.c.bf16 %v2920, %v2918
        %v3013 = vpack.c.bf16 %v2924, %v2922
        %v3014 = vpack.c.bf16 %v2928, %v2926
        %v3015 = vpack.c.bf16 %v2932, %v2930
        %v3016 = vpack.c.bf16 %v2936, %v2934
        %3017 = vmatprep.subr.bf16.mxu0 0
        %3018 = vmatpush1.bf16.msra.mxu0 %v1810
        %3019 = vmatprep.subr.bf16.mxu0 0
        %3020 = vmatpush1.bf16.msra.mxu0 %v1804
        %3021 = vmatprep.subr.bf16.mxu0 0
        %3022 = vmatpush1.bf16.msra.mxu0 %v1798
        %3023 = vmatprep.subr.bf16.mxu0 0
        %3024 = vmatpush1.bf16.msra.mxu0 %v1792
        %3025 = vmatprep.subr.bf16.mxu0 0
        %3026 = vmatpush1.bf16.msra.mxu0 %v1786
        %3027 = vmatprep.subr.bf16.mxu0 0
        %3028 = vmatpush1.bf16.msra.mxu0 %v1780
        %3029 = vmatprep.subr.bf16.mxu0 0
        %3030 = vmatpush1.bf16.msra.mxu0 %v1774
        %3031 = vmatprep.subr.bf16.mxu0 0
        %3032 = vmatpush1.bf16.msra.mxu0 %v1768
        %3033 = vmatprep.subr.bf16.mxu0 0
        %3034 = vmatpush2.bf16.msra.mxu0 0
        %3035 = vmatprep.subr.bf16.mxu0 0
        %3036 = vmatpush2.bf16.msra.mxu0 0
        %3037 = vmatprep.subr.bf16.mxu0 0
        %3038 = vmatpush2.bf16.msra.mxu0 0
        %3039 = vmatprep.subr.bf16.mxu0 0
        %3040 = vmatpush2.bf16.msra.mxu0 0
        %3041 = vmatprep.subr.bf16.mxu0 0
        %3042 = vmatpush2.bf16.msra.mxu0 0
        %3043 = vmatprep.subr.bf16.mxu0 0
        %3044 = vmatpush2.bf16.msra.mxu0 0
        %3045 = vmatprep.subr.bf16.mxu0 0
        %3046 = vmatpush2.bf16.msra.mxu0 0
        %3047 = vmatprep.subr.bf16.mxu0 0
        %3048 = vmatpush2.bf16.msra.mxu0 0
        %3049 = vmatprep.mubr.bf16.mxu0 0
        %3050 = vmatmul.mubr.bf16.gmra.mxu0 %v3001
        %v3051 = vpop.f32.mrf.mxu0
        %v3052 = vadd.f32 0.0, %v3051
        %v3053 = vpop.f32.mrf.mxu0
        %v3054 = vpop.f32.mrf.mxu0
        %v3055 = vadd.f32 0.0, %v3054
        %v3056 = vpop.f32.mrf.mxu0
        %3057 = vmatprep.mubr.bf16.mxu0 0
        %3058 = vmatmul.mubr.bf16.gmra.mxu0 %v3002
        %v3059 = vpop.f32.mrf.mxu0
        %v3060 = vadd.f32 0.0, %v3059
        %v3061 = vpop.f32.mrf.mxu0
        %v3062 = vpop.f32.mrf.mxu0
        %v3063 = vadd.f32 0.0, %v3062
        %v3064 = vpop.f32.mrf.mxu0
        %3065 = vmatprep.mubr.bf16.mxu0 0
        %3066 = vmatmul.mubr.bf16.gmra.mxu0 %v3003
        %v3067 = vpop.f32.mrf.mxu0
        %v3068 = vadd.f32 0.0, %v3067
        %v3069 = vpop.f32.mrf.mxu0
        %v3070 = vpop.f32.mrf.mxu0
        %v3071 = vadd.f32 0.0, %v3070
        %v3072 = vpop.f32.mrf.mxu0
        %3073 = vmatprep.mubr.bf16.mxu0 0
        %3074 = vmatmul.mubr.bf16.gmra.mxu0 %v3004
        %v3075 = vpop.f32.mrf.mxu0
        %v3076 = vadd.f32 0.0, %v3075
        %v3077 = vpop.f32.mrf.mxu0
        %v3078 = vpop.f32.mrf.mxu0
        %v3079 = vadd.f32 0.0, %v3078
        %v3080 = vpop.f32.mrf.mxu0
        %3081 = vmatprep.mubr.bf16.mxu0 0
        %3082 = vmatmul.mubr.bf16.gmra.mxu0 %v3005
        %v3083 = vpop.f32.mrf.mxu0
        %v3084 = vadd.f32 0.0, %v3083
        %v3085 = vpop.f32.mrf.mxu0
        %v3086 = vpop.f32.mrf.mxu0
        %v3087 = vadd.f32 0.0, %v3086
        %v3088 = vpop.f32.mrf.mxu0
        %3089 = vmatprep.mubr.bf16.mxu0 0
        %3090 = vmatmul.mubr.bf16.gmra.mxu0 %v3006
        %v3091 = vpop.f32.mrf.mxu0
        %v3092 = vadd.f32 0.0, %v3091
        %v3093 = vpop.f32.mrf.mxu0
        %v3094 = vpop.f32.mrf.mxu0
        %v3095 = vadd.f32 0.0, %v3094
        %v3096 = vpop.f32.mrf.mxu0
        %3097 = vmatprep.mubr.bf16.mxu0 0
        %3098 = vmatmul.mubr.bf16.gmra.mxu0 %v3007
        %v3099 = vpop.f32.mrf.mxu0
        %v3100 = vadd.f32 0.0, %v3099
        %v3101 = vpop.f32.mrf.mxu0
        %v3102 = vpop.f32.mrf.mxu0
        %v3103 = vadd.f32 0.0, %v3102
        %v3104 = vpop.f32.mrf.mxu0
        %3105 = vmatprep.mubr.bf16.mxu0 0
        %3106 = vmatmul.mubr.bf16.gmra.mxu0 %v3008
        %v3107 = vpop.f32.mrf.mxu0
        %v3108 = vadd.f32 0.0, %v3107
        %v3109 = vpop.f32.mrf.mxu0
        %v3110 = vpop.f32.mrf.mxu0
        %v3111 = vadd.f32 0.0, %v3110
        %v3112 = vpop.f32.mrf.mxu0
        %3113 = vdwg.mxu0
        %3114 = vmatprep.subr.bf16.mxu0 0
        %3115 = vmatpush1.bf16.msra.mxu0 %v1858
        %3116 = vmatprep.subr.bf16.mxu0 0
        %3117 = vmatpush1.bf16.msra.mxu0 %v1852
        %3118 = vmatprep.subr.bf16.mxu0 0
        %3119 = vmatpush1.bf16.msra.mxu0 %v1846
        %3120 = vmatprep.subr.bf16.mxu0 0
        %3121 = vmatpush1.bf16.msra.mxu0 %v1840
        %3122 = vmatprep.subr.bf16.mxu0 0
        %3123 = vmatpush1.bf16.msra.mxu0 %v1834
        %3124 = vmatprep.subr.bf16.mxu0 0
        %3125 = vmatpush1.bf16.msra.mxu0 %v1828
        %3126 = vmatprep.subr.bf16.mxu0 0
        %3127 = vmatpush1.bf16.msra.mxu0 %v1822
        %3128 = vmatprep.subr.bf16.mxu0 0
        %3129 = vmatpush1.bf16.msra.mxu0 %v1816
        %3130 = vmatprep.subr.bf16.mxu0 0
        %3131 = vmatpush2.bf16.msra.mxu0 0
        %3132 = vmatprep.subr.bf16.mxu0 0
        %3133 = vmatpush2.bf16.msra.mxu0 0
        %3134 = vmatprep.subr.bf16.mxu0 0
        %3135 = vmatpush2.bf16.msra.mxu0 0
        %3136 = vmatprep.subr.bf16.mxu0 0
        %3137 = vmatpush2.bf16.msra.mxu0 0
        %3138 = vmatprep.subr.bf16.mxu0 0
        %3139 = vmatpush2.bf16.msra.mxu0 0
        %3140 = vmatprep.subr.bf16.mxu0 0
        %3141 = vmatpush2.bf16.msra.mxu0 0
        %3142 = vmatprep.subr.bf16.mxu0 0
        %3143 = vmatpush2.bf16.msra.mxu0 0
        %3144 = vmatprep.subr.bf16.mxu0 0
        %3145 = vmatpush2.bf16.msra.mxu0 0
        %3146 = vmatprep.mubr.bf16.mxu0 0
        %3147 = vmatmul.mubr.bf16.gmra.mxu0 %v3009
        %v3148 = vpop.f32.mrf.mxu0
        %v3149 = vadd.f32 0.0, %v3148
        %v3150 = vpop.f32.mrf.mxu0
        %v3151 = vpop.f32.mrf.mxu0
        %v3152 = vadd.f32 0.0, %v3151
        %v3153 = vpop.f32.mrf.mxu0
        %3154 = vmatprep.mubr.bf16.mxu0 0
        %3155 = vmatmul.mubr.bf16.gmra.mxu0 %v3010
        %v3156 = vpop.f32.mrf.mxu0
        %v3157 = vadd.f32 0.0, %v3156
        %v3158 = vpop.f32.mrf.mxu0
        %v3159 = vpop.f32.mrf.mxu0
        %v3160 = vadd.f32 0.0, %v3159
        %v3161 = vpop.f32.mrf.mxu0
        %3162 = vmatprep.mubr.bf16.mxu0 0
        %3163 = vmatmul.mubr.bf16.gmra.mxu0 %v3011
        %v3164 = vpop.f32.mrf.mxu0
        %v3165 = vadd.f32 0.0, %v3164
        %v3166 = vpop.f32.mrf.mxu0
        %v3167 = vpop.f32.mrf.mxu0
        %v3168 = vadd.f32 0.0, %v3167
        %v3169 = vpop.f32.mrf.mxu0
        %3170 = vmatprep.mubr.bf16.mxu0 0
        %3171 = vmatmul.mubr.bf16.gmra.mxu0 %v3012
        %v3172 = vpop.f32.mrf.mxu0
        %v3173 = vadd.f32 0.0, %v3172
        %v3174 = vpop.f32.mrf.mxu0
        %v3175 = vpop.f32.mrf.mxu0
        %v3176 = vadd.f32 0.0, %v3175
        %v3177 = vpop.f32.mrf.mxu0
        %3178 = vmatprep.mubr.bf16.mxu0 0
        %3179 = vmatmul.mubr.bf16.gmra.mxu0 %v3013
        %v3180 = vpop.f32.mrf.mxu0
        %v3181 = vadd.f32 0.0, %v3180
        %v3182 = vpop.f32.mrf.mxu0
        %v3183 = vpop.f32.mrf.mxu0
        %v3184 = vadd.f32 0.0, %v3183
        %v3185 = vpop.f32.mrf.mxu0
        %3186 = vmatprep.mubr.bf16.mxu0 0
        %3187 = vmatmul.mubr.bf16.gmra.mxu0 %v3014
        %v3188 = vpop.f32.mrf.mxu0
        %v3189 = vadd.f32 0.0, %v3188
        %v3190 = vpop.f32.mrf.mxu0
        %v3191 = vpop.f32.mrf.mxu0
        %v3192 = vadd.f32 0.0, %v3191
        %v3193 = vpop.f32.mrf.mxu0
        %3194 = vmatprep.mubr.bf16.mxu0 0
        %3195 = vmatmul.mubr.bf16.gmra.mxu0 %v3015
        %v3196 = vpop.f32.mrf.mxu0
        %v3197 = vadd.f32 0.0, %v3196
        %v3198 = vpop.f32.mrf.mxu0
        %v3199 = vpop.f32.mrf.mxu0
        %v3200 = vadd.f32 0.0, %v3199
        %v3201 = vpop.f32.mrf.mxu0
        %3202 = vmatprep.mubr.bf16.mxu0 0
        %3203 = vmatmul.mubr.bf16.gmra.mxu0 %v3016
        %v3204 = vpop.f32.mrf.mxu0
        %v3205 = vadd.f32 0.0, %v3204
        %v3206 = vpop.f32.mrf.mxu0
        %v3207 = vpop.f32.mrf.mxu0
        %v3208 = vadd.f32 0.0, %v3207
        %v3209 = vpop.f32.mrf.mxu0
        %3210 = vdwg.mxu0
        %v3211 = vrcp.pop %v2938
        %v3212 = vrcp.pop %v2940
        %v3213 = vrcp.pop %v2942
        %v3214 = vrcp.pop %v2944
        %v3215 = vrcp.pop %v2946
        %v3216 = vrcp.pop %v2948
        %v3217 = vrcp.pop %v2950
        %v3218 = vrcp.pop %v2952
        %v3219 = vrcp.pop %v2954
        %v3220 = vrcp.pop %v2956
        %v3221 = vrcp.pop %v2958
        %v3222 = vrcp.pop %v2960
        %v3223 = vrcp.pop %v2962
        %v3224 = vrcp.pop %v2964
        %v3225 = vrcp.pop %v2966
        %v3226 = vrcp.pop %v2968
        %v3227 = vrcp.pop %v2970
        %v3228 = vrcp.pop %v2972
        %v3229 = vrcp.pop %v2974
        %v3230 = vrcp.pop %v2976
        %v3231 = vrcp.pop %v2978
        %v3232 = vrcp.pop %v2980
        %v3233 = vrcp.pop %v2982
        %v3234 = vrcp.pop %v2984
        %v3235 = vrcp.pop %v2986
        %v3236 = vrcp.pop %v2988
        %v3237 = vrcp.pop %v2990
        %v3238 = vrcp.pop %v2992
        %v3239 = vrcp.pop %v2994
        %v3240 = vrcp.pop %v2996
        %v3241 = vrcp.pop %v2998
        %v3242 = vrcp.pop %v3000
        %v3243 = vmul.f32 %v3052, %v3211
        %v3244 = vmul.f32 %v3055, %v3212
        %v3245 = vmul.f32 %v3060, %v3213
        %v3246 = vmul.f32 %v3063, %v3214
        %v3247 = vmul.f32 %v3068, %v3215
        %v3248 = vmul.f32 %v3071, %v3216
        %v3249 = vmul.f32 %v3076, %v3217
        %v3250 = vmul.f32 %v3079, %v3218
        %v3251 = vmul.f32 %v3084, %v3219
        %v3252 = vmul.f32 %v3087, %v3220
        %v3253 = vmul.f32 %v3092, %v3221
        %v3254 = vmul.f32 %v3095, %v3222
        %v3255 = vmul.f32 %v3100, %v3223
        %v3256 = vmul.f32 %v3103, %v3224
        %v3257 = vmul.f32 %v3108, %v3225
        %v3258 = vmul.f32 %v3111, %v3226
        %v3259 = vmul.f32 %v3149, %v3227
        %v3260 = vmul.f32 %v3152, %v3228
        %v3261 = vmul.f32 %v3157, %v3229
        %v3262 = vmul.f32 %v3160, %v3230
        %v3263 = vmul.f32 %v3165, %v3231
        %v3264 = vmul.f32 %v3168, %v3232
        %v3265 = vmul.f32 %v3173, %v3233
        %v3266 = vmul.f32 %v3176, %v3234
        %v3267 = vmul.f32 %v3181, %v3235
        %v3268 = vmul.f32 %v3184, %v3236
        %v3269 = vmul.f32 %v3189, %v3237
        %v3270 = vmul.f32 %v3192, %v3238
        %v3271 = vmul.f32 %v3197, %v3239
        %v3272 = vmul.f32 %v3200, %v3240
        %v3273 = vmul.f32 %v3205, %v3241
        %v3274 = vmul.f32 %v3208, %v3242
        %3275 = vst [vmem:[#allocation2 + $0x8] sm:$0xff] %v3243
        %3276 = vst [vmem:[#allocation2 + $0x18] sm:$0xff] %v3244
        %3277 = vst [vmem:[#allocation2 + $0x28] sm:$0xff] %v3245
        %3278 = vst [vmem:[#allocation2 + $0x38] sm:$0xff] %v3246
        %3279 = vst [vmem:[#allocation2 + $0x48] sm:$0xff] %v3247
        %3280 = vst [vmem:[#allocation2 + $0x58] sm:$0xff] %v3248
        %3281 = vst [vmem:[#allocation2 + $0x68] sm:$0xff] %v3249
        %3282 = vst [vmem:[#allocation2 + $0x78] sm:$0xff] %v3250
        %3283 = vst [vmem:[#allocation2 + $0x88] sm:$0xff] %v3251
        %3284 = vst [vmem:[#allocation2 + $0x98] sm:$0xff] %v3252
        %3285 = vst [vmem:[#allocation2 + $0xa8] sm:$0xff] %v3253
        %3286 = vst [vmem:[#allocation2 + $0xb8] sm:$0xff] %v3254
        %3287 = vst [vmem:[#allocation2 + $0xc8] sm:$0xff] %v3255
        %3288 = vst [vmem:[#allocation2 + $0xd8] sm:$0xff] %v3256
        %3289 = vst [vmem:[#allocation2 + $0xe8] sm:$0xff] %v3257
        %3290 = vst [vmem:[#allocation2 + $0xf8] sm:$0xff] %v3258
        %3291 = vst [vmem:[#allocation2 + $0x108] sm:$0xff] %v3259
        %3292 = vst [vmem:[#allocation2 + $0x118] sm:$0xff] %v3260
        %3293 = vst [vmem:[#allocation2 + $0x128] sm:$0xff] %v3261
        %3294 = vst [vmem:[#allocation2 + $0x138] sm:$0xff] %v3262
        %3295 = vst [vmem:[#allocation2 + $0x148] sm:$0xff] %v3263
        %3296 = vst [vmem:[#allocation2 + $0x158] sm:$0xff] %v3264
        %3297 = vst [vmem:[#allocation2 + $0x168] sm:$0xff] %v3265
        %3298 = vst [vmem:[#allocation2 + $0x178] sm:$0xff] %v3266
        %3299 = vst [vmem:[#allocation2 + $0x188] sm:$0xff] %v3267
        %3300 = vst [vmem:[#allocation2 + $0x198] sm:$0xff] %v3268
        %3301 = vst [vmem:[#allocation2 + $0x1a8] sm:$0xff] %v3269
        %3302 = vst [vmem:[#allocation2 + $0x1b8] sm:$0xff] %v3270
        %3303 = vst [vmem:[#allocation2 + $0x1c8] sm:$0xff] %v3271
        %3304 = vst [vmem:[#allocation2 + $0x1d8] sm:$0xff] %v3272
        %3305 = vst [vmem:[#allocation2 + $0x1e8] sm:$0xff] %v3273
        %3306 = vst [vmem:[#allocation2 + $0x1f8] sm:$0xff] %v3274
        %v3307 = vld [vmem:[#allocation2] sm:$0xff]
        %v3308 = vld [vmem:[#allocation2 + $0x8] sm:$0xff]
        %v3309 = vld [vmem:[#allocation2 + $0x10] sm:$0xff]
        %v3310 = vld [vmem:[#allocation2 + $0x18] sm:$0xff]
        %v3311 = vld [vmem:[#allocation2 + $0x20] sm:$0xff]
        %v3312 = vld [vmem:[#allocation2 + $0x28] sm:$0xff]
        %v3313 = vld [vmem:[#allocation2 + $0x30] sm:$0xff]
        %v3314 = vld [vmem:[#allocation2 + $0x38] sm:$0xff]
        %v3315 = vld [vmem:[#allocation2 + $0x40] sm:$0xff]
        %v3316 = vld [vmem:[#allocation2 + $0x48] sm:$0xff]
        %v3317 = vld [vmem:[#allocation2 + $0x50] sm:$0xff]
        %v3318 = vld [vmem:[#allocation2 + $0x58] sm:$0xff]
        %v3319 = vld [vmem:[#allocation2 + $0x60] sm:$0xff]
        %v3320 = vld [vmem:[#allocation2 + $0x68] sm:$0xff]
        %v3321 = vld [vmem:[#allocation2 + $0x70] sm:$0xff]
        %v3322 = vld [vmem:[#allocation2 + $0x78] sm:$0xff]
        %v3323 = vld [vmem:[#allocation2 + $0x80] sm:$0xff]
        %v3324 = vld [vmem:[#allocation2 + $0x88] sm:$0xff]
        %v3325 = vld [vmem:[#allocation2 + $0x90] sm:$0xff]
        %v3326 = vld [vmem:[#allocation2 + $0x98] sm:$0xff]
        %v3327 = vld [vmem:[#allocation2 + $0xa0] sm:$0xff]
        %v3328 = vld [vmem:[#allocation2 + $0xa8] sm:$0xff]
        %v3329 = vld [vmem:[#allocation2 + $0xb0] sm:$0xff]
        %v3330 = vld [vmem:[#allocation2 + $0xb8] sm:$0xff]
        %v3331 = vld [vmem:[#allocation2 + $0xc0] sm:$0xff]
        %v3332 = vld [vmem:[#allocation2 + $0xc8] sm:$0xff]
        %v3333 = vld [vmem:[#allocation2 + $0xd0] sm:$0xff]
        %v3334 = vld [vmem:[#allocation2 + $0xd8] sm:$0xff]
        %v3335 = vld [vmem:[#allocation2 + $0xe0] sm:$0xff]
        %v3336 = vld [vmem:[#allocation2 + $0xe8] sm:$0xff]
        %v3337 = vld [vmem:[#allocation2 + $0xf0] sm:$0xff]
        %v3338 = vld [vmem:[#allocation2 + $0xf8] sm:$0xff]
        %v3339 = vld [vmem:[#allocation2 + $0x100] sm:$0xff]
        %v3340 = vld [vmem:[#allocation2 + $0x108] sm:$0xff]
        %v3341 = vld [vmem:[#allocation2 + $0x110] sm:$0xff]
        %v3342 = vld [vmem:[#allocation2 + $0x118] sm:$0xff]
        %v3343 = vld [vmem:[#allocation2 + $0x120] sm:$0xff]
        %v3344 = vld [vmem:[#allocation2 + $0x128] sm:$0xff]
        %v3345 = vld [vmem:[#allocation2 + $0x130] sm:$0xff]
        %v3346 = vld [vmem:[#allocation2 + $0x138] sm:$0xff]
        %v3347 = vld [vmem:[#allocation2 + $0x140] sm:$0xff]
        %v3348 = vld [vmem:[#allocation2 + $0x148] sm:$0xff]
        %v3349 = vld [vmem:[#allocation2 + $0x150] sm:$0xff]
        %v3350 = vld [vmem:[#allocation2 + $0x158] sm:$0xff]
        %v3351 = vld [vmem:[#allocation2 + $0x160] sm:$0xff]
        %v3352 = vld [vmem:[#allocation2 + $0x168] sm:$0xff]
        %v3353 = vld [vmem:[#allocation2 + $0x170] sm:$0xff]
        %v3354 = vld [vmem:[#allocation2 + $0x178] sm:$0xff]
        %v3355 = vld [vmem:[#allocation2 + $0x180] sm:$0xff]
        %v3356 = vld [vmem:[#allocation2 + $0x188] sm:$0xff]
        %v3357 = vld [vmem:[#allocation2 + $0x190] sm:$0xff]
        %v3358 = vld [vmem:[#allocation2 + $0x198] sm:$0xff]
        %v3359 = vld [vmem:[#allocation2 + $0x1a0] sm:$0xff]
        %v3360 = vld [vmem:[#allocation2 + $0x1a8] sm:$0xff]
        %v3361 = vld [vmem:[#allocation2 + $0x1b0] sm:$0xff]
        %v3362 = vld [vmem:[#allocation2 + $0x1b8] sm:$0xff]
        %v3363 = vld [vmem:[#allocation2 + $0x1c0] sm:$0xff]
        %v3364 = vld [vmem:[#allocation2 + $0x1c8] sm:$0xff]
        %v3365 = vld [vmem:[#allocation2 + $0x1d0] sm:$0xff]
        %v3366 = vld [vmem:[#allocation2 + $0x1d8] sm:$0xff]
        %v3367 = vld [vmem:[#allocation2 + $0x1e0] sm:$0xff]
        %v3368 = vld [vmem:[#allocation2 + $0x1e8] sm:$0xff]
        %v3369 = vld [vmem:[#allocation2 + $0x1f0] sm:$0xff]
        %v3370 = vld [vmem:[#allocation2 + $0x1f8] sm:$0xff]
        %v3371 = vpack.c.bf16 %v3309, %v3307
        %v3372 = vpack.c.bf16 %v3310, %v3308
        %v3373 = vpack.c.bf16 %v3313, %v3311
        %v3374 = vpack.c.bf16 %v3314, %v3312
        %v3375 = vpack.c.bf16 %v3317, %v3315
        %v3376 = vpack.c.bf16 %v3318, %v3316
        %v3377 = vpack.c.bf16 %v3321, %v3319
        %v3378 = vpack.c.bf16 %v3322, %v3320
        %v3379 = vpack.c.bf16 %v3325, %v3323
        %v3380 = vpack.c.bf16 %v3326, %v3324
        %v3381 = vpack.c.bf16 %v3329, %v3327
        %v3382 = vpack.c.bf16 %v3330, %v3328
        %v3383 = vpack.c.bf16 %v3333, %v3331
        %v3384 = vpack.c.bf16 %v3334, %v3332
        %v3385 = vpack.c.bf16 %v3337, %v3335
        %v3386 = vpack.c.bf16 %v3338, %v3336
        %v3387 = vpack.c.bf16 %v3341, %v3339
        %v3388 = vpack.c.bf16 %v3342, %v3340
        %v3389 = vpack.c.bf16 %v3345, %v3343
        %v3390 = vpack.c.bf16 %v3346, %v3344
        %v3391 = vpack.c.bf16 %v3349, %v3347
        %v3392 = vpack.c.bf16 %v3350, %v3348
        %v3393 = vpack.c.bf16 %v3353, %v3351
        %v3394 = vpack.c.bf16 %v3354, %v3352
        %v3395 = vpack.c.bf16 %v3357, %v3355
        %v3396 = vpack.c.bf16 %v3358, %v3356
        %v3397 = vpack.c.bf16 %v3361, %v3359
        %v3398 = vpack.c.bf16 %v3362, %v3360
        %v3399 = vpack.c.bf16 %v3365, %v3363
        %v3400 = vpack.c.bf16 %v3366, %v3364
        %v3401 = vpack.c.bf16 %v3369, %v3367
        %v3402 = vpack.c.bf16 %v3370, %v3368
        %v3403 = vld [vmem:[#allocation12] sm:$0xff]
        %v3404 = vld [vmem:[#allocation12 + $0x8] sm:$0xff]
        %v3405 = vld [vmem:[#allocation12 + $0x10] sm:$0xff]
        %v3406 = vld [vmem:[#allocation12 + $0x18] sm:$0xff]
        %v3407 = vld [vmem:[#allocation12 + $0x20] sm:$0xff]
        %v3408 = vld [vmem:[#allocation12 + $0x28] sm:$0xff]
        %v3409 = vld [vmem:[#allocation12 + $0x30] sm:$0xff]
        %v3410 = vld [vmem:[#allocation12 + $0x38] sm:$0xff]
        %v3411 = vld [vmem:[#allocation12 + $0x40] sm:$0xff]
        %v3412 = vld [vmem:[#allocation12 + $0x48] sm:$0xff]
        %v3413 = vld [vmem:[#allocation12 + $0x50] sm:$0xff]
        %v3414 = vld [vmem:[#allocation12 + $0x58] sm:$0xff]
        %v3415 = vld [vmem:[#allocation12 + $0x60] sm:$0xff]
        %v3416 = vld [vmem:[#allocation12 + $0x68] sm:$0xff]
        %v3417 = vld [vmem:[#allocation12 + $0x70] sm:$0xff]
        %v3418 = vld [vmem:[#allocation12 + $0x78] sm:$0xff]
        %v3419 = vld [vmem:[#allocation12 + $0x80] sm:$0xff]
        %v3420 = vld [vmem:[#allocation12 + $0x88] sm:$0xff]
        %v3421 = vld [vmem:[#allocation12 + $0x90] sm:$0xff]
        %v3422 = vld [vmem:[#allocation12 + $0x98] sm:$0xff]
        %v3423 = vld [vmem:[#allocation12 + $0xa0] sm:$0xff]
        %v3424 = vld [vmem:[#allocation12 + $0xa8] sm:$0xff]
        %v3425 = vld [vmem:[#allocation12 + $0xb0] sm:$0xff]
        %v3426 = vld [vmem:[#allocation12 + $0xb8] sm:$0xff]
        %v3427 = vld [vmem:[#allocation12 + $0xc0] sm:$0xff]
        %v3428 = vld [vmem:[#allocation12 + $0xc8] sm:$0xff]
        %v3429 = vld [vmem:[#allocation12 + $0xd0] sm:$0xff]
        %v3430 = vld [vmem:[#allocation12 + $0xd8] sm:$0xff]
        %v3431 = vld [vmem:[#allocation12 + $0xe0] sm:$0xff]
        %v3432 = vld [vmem:[#allocation12 + $0xe8] sm:$0xff]
        %v3433 = vld [vmem:[#allocation12 + $0xf0] sm:$0xff]
        %v3434 = vld [vmem:[#allocation12 + $0xf8] sm:$0xff]
        %v3435 = vld [vmem:[%s4] sm:$0x3]
        %v3437 = vlaneseq
        %v3438 = vshrl.u32 %v3437, 7
        %v3439 = vsub.s32 0, %v3438
        %v3440 = vrot.slane %v3435, %v3439
        %v3441 = vlaneseq
        %v3442 = vshrl.u32 %v3441, 7
        %v3443 = vsub.s32 1, %v3442
        %v3444 = vrot.slane %v3435, %v3443
        %v3479 = vunpack.c.l.b16 %v3403
        %v3480 = vunpack.c.h.b16 %v3403
        %v3481 = vunpack.c.l.b16 %v3404
        %v3482 = vunpack.c.h.b16 %v3404
        %v3483 = vunpack.c.l.b16 %v3405
        %v3484 = vunpack.c.h.b16 %v3405
        %v3485 = vunpack.c.l.b16 %v3406
        %v3486 = vunpack.c.h.b16 %v3406
        %v3487 = vunpack.c.l.b16 %v3407
        %v3488 = vunpack.c.h.b16 %v3407
        %v3489 = vunpack.c.l.b16 %v3408
        %v3490 = vunpack.c.h.b16 %v3408
        %v3491 = vunpack.c.l.b16 %v3409
        %v3492 = vunpack.c.h.b16 %v3409
        %v3493 = vunpack.c.l.b16 %v3410
        %v3494 = vunpack.c.h.b16 %v3410
        %v3495 = vunpack.c.l.b16 %v3411
        %v3496 = vunpack.c.h.b16 %v3411
        %v3497 = vunpack.c.l.b16 %v3412
        %v3498 = vunpack.c.h.b16 %v3412
        %v3499 = vunpack.c.l.b16 %v3413
        %v3500 = vunpack.c.h.b16 %v3413
        %v3501 = vunpack.c.l.b16 %v3414
        %v3502 = vunpack.c.h.b16 %v3414
        %v3503 = vunpack.c.l.b16 %v3415
        %v3504 = vunpack.c.h.b16 %v3415
        %v3505 = vunpack.c.l.b16 %v3416
        %v3506 = vunpack.c.h.b16 %v3416
        %v3507 = vunpack.c.l.b16 %v3417
        %v3508 = vunpack.c.h.b16 %v3417
        %v3509 = vunpack.c.l.b16 %v3418
        %v3510 = vunpack.c.h.b16 %v3418
        %v3511 = vunpack.c.l.b16 %v3419
        %v3512 = vunpack.c.h.b16 %v3419
        %v3513 = vunpack.c.l.b16 %v3420
        %v3514 = vunpack.c.h.b16 %v3420
        %v3515 = vunpack.c.l.b16 %v3421
        %v3516 = vunpack.c.h.b16 %v3421
        %v3517 = vunpack.c.l.b16 %v3422
        %v3518 = vunpack.c.h.b16 %v3422
        %v3519 = vunpack.c.l.b16 %v3423
        %v3520 = vunpack.c.h.b16 %v3423
        %v3521 = vunpack.c.l.b16 %v3424
        %v3522 = vunpack.c.h.b16 %v3424
        %v3523 = vunpack.c.l.b16 %v3425
        %v3524 = vunpack.c.h.b16 %v3425
        %v3525 = vunpack.c.l.b16 %v3426
        %v3526 = vunpack.c.h.b16 %v3426
        %v3527 = vunpack.c.l.b16 %v3427
        %v3528 = vunpack.c.h.b16 %v3427
        %v3529 = vunpack.c.l.b16 %v3428
        %v3530 = vunpack.c.h.b16 %v3428
        %v3531 = vunpack.c.l.b16 %v3429
        %v3532 = vunpack.c.h.b16 %v3429
        %v3533 = vunpack.c.l.b16 %v3430
        %v3534 = vunpack.c.h.b16 %v3430
        %v3535 = vunpack.c.l.b16 %v3431
        %v3536 = vunpack.c.h.b16 %v3431
        %v3537 = vunpack.c.l.b16 %v3432
        %v3538 = vunpack.c.h.b16 %v3432
        %v3539 = vunpack.c.l.b16 %v3433
        %v3540 = vunpack.c.h.b16 %v3433
        %v3541 = vunpack.c.l.b16 %v3434
        %v3542 = vunpack.c.h.b16 %v3434
        %v3543 = vpack.c.b16 %v3481, %v3479
        %v3544 = vpack.c.b16 %v3482, %v3480
        %v3545 = vpack.c.b16 %v3485, %v3483
        %v3546 = vpack.c.b16 %v3486, %v3484
        %v3547 = vpack.c.b16 %v3489, %v3487
        %v3548 = vpack.c.b16 %v3490, %v3488
        %v3549 = vpack.c.b16 %v3493, %v3491
        %v3550 = vpack.c.b16 %v3494, %v3492
        %v3551 = vpack.c.b16 %v3497, %v3495
        %v3552 = vpack.c.b16 %v3498, %v3496
        %v3553 = vpack.c.b16 %v3501, %v3499
        %v3554 = vpack.c.b16 %v3502, %v3500
        %v3555 = vpack.c.b16 %v3505, %v3503
        %v3556 = vpack.c.b16 %v3506, %v3504
        %v3557 = vpack.c.b16 %v3509, %v3507
        %v3558 = vpack.c.b16 %v3510, %v3508
        %v3559 = vpack.c.b16 %v3513, %v3511
        %v3560 = vpack.c.b16 %v3514, %v3512
        %v3561 = vpack.c.b16 %v3517, %v3515
        %v3562 = vpack.c.b16 %v3518, %v3516
        %v3563 = vpack.c.b16 %v3521, %v3519
        %v3564 = vpack.c.b16 %v3522, %v3520
        %v3565 = vpack.c.b16 %v3525, %v3523
        %v3566 = vpack.c.b16 %v3526, %v3524
        %v3567 = vpack.c.b16 %v3529, %v3527
        %v3568 = vpack.c.b16 %v3530, %v3528
        %v3569 = vpack.c.b16 %v3533, %v3531
        %v3570 = vpack.c.b16 %v3534, %v3532
        %v3571 = vpack.c.b16 %v3537, %v3535
        %v3572 = vpack.c.b16 %v3538, %v3536
        %v3573 = vpack.c.b16 %v3541, %v3539
        %v3574 = vpack.c.b16 %v3542, %v3540
        %3607 = vmatprep.subr.bf16.mxu0 %v3558
        %3608 = vmatpush1.bf16.msra.mxu0 %v3557
        %3609 = vmatprep.subr.bf16.mxu0 %v3556
        %3610 = vmatpush1.bf16.msra.mxu0 %v3555
        %3611 = vmatprep.subr.bf16.mxu0 %v3554
        %3612 = vmatpush1.bf16.msra.mxu0 %v3553
        %3613 = vmatprep.subr.bf16.mxu0 %v3552
        %3614 = vmatpush1.bf16.msra.mxu0 %v3551
        %3615 = vmatprep.subr.bf16.mxu0 %v3550
        %3616 = vmatpush1.bf16.msra.mxu0 %v3549
        %3617 = vmatprep.subr.bf16.mxu0 %v3548
        %3618 = vmatpush1.bf16.msra.mxu0 %v3547
        %3619 = vmatprep.subr.bf16.mxu0 %v3546
        %3620 = vmatpush1.bf16.msra.mxu0 %v3545
        %3621 = vmatprep.subr.bf16.mxu0 %v3544
        %3622 = vmatpush1.bf16.msra.mxu0 %v3543
        %3623 = vmatprep.subr.bf16.mxu0 %v3574
        %3624 = vmatpush2.bf16.msra.mxu0 %v3573
        %3625 = vmatprep.subr.bf16.mxu0 %v3572
        %3626 = vmatpush2.bf16.msra.mxu0 %v3571
        %3627 = vmatprep.subr.bf16.mxu0 %v3570
        %3628 = vmatpush2.bf16.msra.mxu0 %v3569
        %3629 = vmatprep.subr.bf16.mxu0 %v3568
        %3630 = vmatpush2.bf16.msra.mxu0 %v3567
        %3631 = vmatprep.subr.bf16.mxu0 %v3566
        %3632 = vmatpush2.bf16.msra.mxu0 %v3565
        %3633 = vmatprep.subr.bf16.mxu0 %v3564
        %3634 = vmatpush2.bf16.msra.mxu0 %v3563
        %3635 = vmatprep.subr.bf16.mxu0 %v3562
        %3636 = vmatpush2.bf16.msra.mxu0 %v3561
        %3637 = vmatprep.subr.bf16.mxu0 %v3560
        %3638 = vmatpush2.bf16.msra.mxu0 %v3559
        %3639 = vmatprep.mubr.bf16.mxu0 %v3372
        %3640 = vmatmul.mubr.bf16.gmra.mxu0 %v3371
        %v3641 = vpop.f32.mrf.mxu0
        %v3642 = vadd.f32 %v3440, %v3641
        %v3643 = vpop.f32.mrf.mxu0
        %v3644 = vadd.f32 %v3444, %v3643
        %v3645 = vpop.f32.mrf.mxu0
        %v3646 = vadd.f32 %v3440, %v3645
        %v3647 = vpop.f32.mrf.mxu0
        %v3648 = vadd.f32 %v3444, %v3647
        %3649 = vmatprep.mubr.bf16.mxu0 %v3374
        %3650 = vmatmul.mubr.bf16.gmra.mxu0 %v3373
        %v3651 = vpop.f32.mrf.mxu0
        %v3652 = vadd.f32 %v3440, %v3651
        %v3653 = vpop.f32.mrf.mxu0
        %v3654 = vadd.f32 %v3444, %v3653
        %v3655 = vpop.f32.mrf.mxu0
        %v3656 = vadd.f32 %v3440, %v3655
        %v3657 = vpop.f32.mrf.mxu0
        %v3658 = vadd.f32 %v3444, %v3657
        %3659 = vmatprep.mubr.bf16.mxu0 %v3376
        %3660 = vmatmul.mubr.bf16.gmra.mxu0 %v3375
        %v3661 = vpop.f32.mrf.mxu0
        %v3662 = vadd.f32 %v3440, %v3661
        %v3663 = vpop.f32.mrf.mxu0
        %v3664 = vadd.f32 %v3444, %v3663
        %v3665 = vpop.f32.mrf.mxu0
        %v3666 = vadd.f32 %v3440, %v3665
        %v3667 = vpop.f32.mrf.mxu0
        %v3668 = vadd.f32 %v3444, %v3667
        %3669 = vmatprep.mubr.bf16.mxu0 %v3378
        %3670 = vmatmul.mubr.bf16.gmra.mxu0 %v3377
        %v3671 = vpop.f32.mrf.mxu0
        %v3672 = vadd.f32 %v3440, %v3671
        %v3673 = vpop.f32.mrf.mxu0
        %v3674 = vadd.f32 %v3444, %v3673
        %v3675 = vpop.f32.mrf.mxu0
        %v3676 = vadd.f32 %v3440, %v3675
        %v3677 = vpop.f32.mrf.mxu0
        %v3678 = vadd.f32 %v3444, %v3677
        %3679 = vmatprep.mubr.bf16.mxu0 %v3380
        %3680 = vmatmul.mubr.bf16.gmra.mxu0 %v3379
        %v3681 = vpop.f32.mrf.mxu0
        %v3682 = vadd.f32 %v3440, %v3681
        %v3683 = vpop.f32.mrf.mxu0
        %v3684 = vadd.f32 %v3444, %v3683
        %v3685 = vpop.f32.mrf.mxu0
        %v3686 = vadd.f32 %v3440, %v3685
        %v3687 = vpop.f32.mrf.mxu0
        %v3688 = vadd.f32 %v3444, %v3687
        %3689 = vmatprep.mubr.bf16.mxu0 %v3382
        %3690 = vmatmul.mubr.bf16.gmra.mxu0 %v3381
        %v3691 = vpop.f32.mrf.mxu0
        %v3692 = vadd.f32 %v3440, %v3691
        %v3693 = vpop.f32.mrf.mxu0
        %v3694 = vadd.f32 %v3444, %v3693
        %v3695 = vpop.f32.mrf.mxu0
        %v3696 = vadd.f32 %v3440, %v3695
        %v3697 = vpop.f32.mrf.mxu0
        %v3698 = vadd.f32 %v3444, %v3697
        %3699 = vmatprep.mubr.bf16.mxu0 %v3384
        %3700 = vmatmul.mubr.bf16.gmra.mxu0 %v3383
        %v3701 = vpop.f32.mrf.mxu0
        %v3702 = vadd.f32 %v3440, %v3701
        %v3703 = vpop.f32.mrf.mxu0
        %v3704 = vadd.f32 %v3444, %v3703
        %v3705 = vpop.f32.mrf.mxu0
        %v3706 = vadd.f32 %v3440, %v3705
        %v3707 = vpop.f32.mrf.mxu0
        %v3708 = vadd.f32 %v3444, %v3707
        %3709 = vmatprep.mubr.bf16.mxu0 %v3386
        %3710 = vmatmul.mubr.bf16.gmra.mxu0 %v3385
        %v3711 = vpop.f32.mrf.mxu0
        %v3712 = vadd.f32 %v3440, %v3711
        %v3713 = vpop.f32.mrf.mxu0
        %v3714 = vadd.f32 %v3444, %v3713
        %v3715 = vpop.f32.mrf.mxu0
        %v3716 = vadd.f32 %v3440, %v3715
        %v3717 = vpop.f32.mrf.mxu0
        %v3718 = vadd.f32 %v3444, %v3717
        %3719 = vmatprep.mubr.bf16.mxu0 %v3388
        %3720 = vmatmul.mubr.bf16.gmra.mxu0 %v3387
        %v3721 = vpop.f32.mrf.mxu0
        %v3722 = vadd.f32 %v3440, %v3721
        %v3723 = vpop.f32.mrf.mxu0
        %v3724 = vadd.f32 %v3444, %v3723
        %v3725 = vpop.f32.mrf.mxu0
        %v3726 = vadd.f32 %v3440, %v3725
        %v3727 = vpop.f32.mrf.mxu0
        %v3728 = vadd.f32 %v3444, %v3727
        %3729 = vmatprep.mubr.bf16.mxu0 %v3390
        %3730 = vmatmul.mubr.bf16.gmra.mxu0 %v3389
        %v3731 = vpop.f32.mrf.mxu0
        %v3732 = vadd.f32 %v3440, %v3731
        %v3733 = vpop.f32.mrf.mxu0
        %v3734 = vadd.f32 %v3444, %v3733
        %v3735 = vpop.f32.mrf.mxu0
        %v3736 = vadd.f32 %v3440, %v3735
        %v3737 = vpop.f32.mrf.mxu0
        %v3738 = vadd.f32 %v3444, %v3737
        %3739 = vmatprep.mubr.bf16.mxu0 %v3392
        %3740 = vmatmul.mubr.bf16.gmra.mxu0 %v3391
        %v3741 = vpop.f32.mrf.mxu0
        %v3742 = vadd.f32 %v3440, %v3741
        %v3743 = vpop.f32.mrf.mxu0
        %v3744 = vadd.f32 %v3444, %v3743
        %v3745 = vpop.f32.mrf.mxu0
        %v3746 = vadd.f32 %v3440, %v3745
        %v3747 = vpop.f32.mrf.mxu0
        %v3748 = vadd.f32 %v3444, %v3747
        %3749 = vmatprep.mubr.bf16.mxu0 %v3394
        %3750 = vmatmul.mubr.bf16.gmra.mxu0 %v3393
        %v3751 = vpop.f32.mrf.mxu0
        %v3752 = vadd.f32 %v3440, %v3751
        %v3753 = vpop.f32.mrf.mxu0
        %v3754 = vadd.f32 %v3444, %v3753
        %v3755 = vpop.f32.mrf.mxu0
        %v3756 = vadd.f32 %v3440, %v3755
        %v3757 = vpop.f32.mrf.mxu0
        %v3758 = vadd.f32 %v3444, %v3757
        %3759 = vmatprep.mubr.bf16.mxu0 %v3396
        %3760 = vmatmul.mubr.bf16.gmra.mxu0 %v3395
        %v3761 = vpop.f32.mrf.mxu0
        %v3762 = vadd.f32 %v3440, %v3761
        %v3763 = vpop.f32.mrf.mxu0
        %v3764 = vadd.f32 %v3444, %v3763
        %v3765 = vpop.f32.mrf.mxu0
        %v3766 = vadd.f32 %v3440, %v3765
        %v3767 = vpop.f32.mrf.mxu0
        %v3768 = vadd.f32 %v3444, %v3767
        %3769 = vmatprep.mubr.bf16.mxu0 %v3398
        %3770 = vmatmul.mubr.bf16.gmra.mxu0 %v3397
        %v3771 = vpop.f32.mrf.mxu0
        %v3772 = vadd.f32 %v3440, %v3771
        %v3773 = vpop.f32.mrf.mxu0
        %v3774 = vadd.f32 %v3444, %v3773
        %v3775 = vpop.f32.mrf.mxu0
        %v3776 = vadd.f32 %v3440, %v3775
        %v3777 = vpop.f32.mrf.mxu0
        %v3778 = vadd.f32 %v3444, %v3777
        %3779 = vmatprep.mubr.bf16.mxu0 %v3400
        %3780 = vmatmul.mubr.bf16.gmra.mxu0 %v3399
        %v3781 = vpop.f32.mrf.mxu0
        %v3782 = vadd.f32 %v3440, %v3781
        %v3783 = vpop.f32.mrf.mxu0
        %v3784 = vadd.f32 %v3444, %v3783
        %v3785 = vpop.f32.mrf.mxu0
        %v3786 = vadd.f32 %v3440, %v3785
        %v3787 = vpop.f32.mrf.mxu0
        %v3788 = vadd.f32 %v3444, %v3787
        %3789 = vmatprep.mubr.bf16.mxu0 %v3402
        %3790 = vmatmul.mubr.bf16.gmra.mxu0 %v3401
        %v3791 = vpop.f32.mrf.mxu0
        %v3792 = vadd.f32 %v3440, %v3791
        %v3793 = vpop.f32.mrf.mxu0
        %v3794 = vadd.f32 %v3444, %v3793
        %v3795 = vpop.f32.mrf.mxu0
        %v3796 = vadd.f32 %v3440, %v3795
        %v3797 = vpop.f32.mrf.mxu0
        %v3798 = vadd.f32 %v3444, %v3797
        %3799 = vdwg.mxu0
        %v3800 = vld [vmem:[%s5] sm:$0x3]
        %v3801 = vld [vmem:[%s6] sm:$0x3]
        %v3802 = vadd.f32 %v3642, %v3644
        %3803 = vadd.xlane.f32.xlu0 %v3802
        %v3804 = vpop.xlane.xlu0 %3803
        %v3805 = vadd.f32 %v3646, %v3648
        %3806 = vadd.xlane.f32.xlu0 %v3805
        %v3807 = vpop.xlane.xlu0 %3806
        %v3808 = vadd.f32 %v3652, %v3654
        %3809 = vadd.xlane.f32.xlu0 %v3808
        %v3810 = vpop.xlane.xlu0 %3809
        %v3811 = vadd.f32 %v3656, %v3658
        %3812 = vadd.xlane.f32.xlu0 %v3811
        %v3813 = vpop.xlane.xlu0 %3812
        %v3814 = vadd.f32 %v3662, %v3664
        %3815 = vadd.xlane.f32.xlu0 %v3814
        %v3816 = vpop.xlane.xlu0 %3815
        %v3817 = vadd.f32 %v3666, %v3668
        %3818 = vadd.xlane.f32.xlu0 %v3817
        %v3819 = vpop.xlane.xlu0 %3818
        %v3820 = vadd.f32 %v3672, %v3674
        %3821 = vadd.xlane.f32.xlu0 %v3820
        %v3822 = vpop.xlane.xlu0 %3821
        %v3823 = vadd.f32 %v3676, %v3678
        %3824 = vadd.xlane.f32.xlu0 %v3823
        %v3825 = vpop.xlane.xlu0 %3824
        %v3826 = vadd.f32 %v3682, %v3684
        %3827 = vadd.xlane.f32.xlu0 %v3826
        %v3828 = vpop.xlane.xlu0 %3827
        %v3829 = vadd.f32 %v3686, %v3688
        %3830 = vadd.xlane.f32.xlu0 %v3829
        %v3831 = vpop.xlane.xlu0 %3830
        %v3832 = vadd.f32 %v3692, %v3694
        %3833 = vadd.xlane.f32.xlu0 %v3832
        %v3834 = vpop.xlane.xlu0 %3833
        %v3835 = vadd.f32 %v3696, %v3698
        %3836 = vadd.xlane.f32.xlu0 %v3835
        %v3837 = vpop.xlane.xlu0 %3836
        %v3838 = vadd.f32 %v3702, %v3704
        %3839 = vadd.xlane.f32.xlu0 %v3838
        %v3840 = vpop.xlane.xlu0 %3839
        %v3841 = vadd.f32 %v3706, %v3708
        %3842 = vadd.xlane.f32.xlu0 %v3841
        %v3843 = vpop.xlane.xlu0 %3842
        %v3844 = vadd.f32 %v3712, %v3714
        %3845 = vadd.xlane.f32.xlu0 %v3844
        %v3846 = vpop.xlane.xlu0 %3845
        %v3847 = vadd.f32 %v3716, %v3718
        %3848 = vadd.xlane.f32.xlu0 %v3847
        %v3849 = vpop.xlane.xlu0 %3848
        %v3850 = vadd.f32 %v3722, %v3724
        %3851 = vadd.xlane.f32.xlu0 %v3850
        %v3852 = vpop.xlane.xlu0 %3851
        %v3853 = vadd.f32 %v3726, %v3728
        %3854 = vadd.xlane.f32.xlu0 %v3853
        %v3855 = vpop.xlane.xlu0 %3854
        %v3856 = vadd.f32 %v3732, %v3734
        %3857 = vadd.xlane.f32.xlu0 %v3856
        %v3858 = vpop.xlane.xlu0 %3857
        %v3859 = vadd.f32 %v3736, %v3738
        %3860 = vadd.xlane.f32.xlu0 %v3859
        %v3861 = vpop.xlane.xlu0 %3860
        %v3862 = vadd.f32 %v3742, %v3744
        %3863 = vadd.xlane.f32.xlu0 %v3862
        %v3864 = vpop.xlane.xlu0 %3863
        %v3865 = vadd.f32 %v3746, %v3748
        %3866 = vadd.xlane.f32.xlu0 %v3865
        %v3867 = vpop.xlane.xlu0 %3866
        %v3868 = vadd.f32 %v3752, %v3754
        %3869 = vadd.xlane.f32.xlu0 %v3868
        %v3870 = vpop.xlane.xlu0 %3869
        %v3871 = vadd.f32 %v3756, %v3758
        %3872 = vadd.xlane.f32.xlu0 %v3871
        %v3873 = vpop.xlane.xlu0 %3872
        %v3874 = vadd.f32 %v3762, %v3764
        %3875 = vadd.xlane.f32.xlu0 %v3874
        %v3876 = vpop.xlane.xlu0 %3875
        %v3877 = vadd.f32 %v3766, %v3768
        %3878 = vadd.xlane.f32.xlu0 %v3877
        %v3879 = vpop.xlane.xlu0 %3878
        %v3880 = vadd.f32 %v3772, %v3774
        %3881 = vadd.xlane.f32.xlu0 %v3880
        %v3882 = vpop.xlane.xlu0 %3881
        %v3883 = vadd.f32 %v3776, %v3778
        %3884 = vadd.xlane.f32.xlu0 %v3883
        %v3885 = vpop.xlane.xlu0 %3884
        %v3886 = vadd.f32 %v3782, %v3784
        %3887 = vadd.xlane.f32.xlu0 %v3886
        %v3888 = vpop.xlane.xlu0 %3887
        %v3889 = vadd.f32 %v3786, %v3788
        %3890 = vadd.xlane.f32.xlu0 %v3889
        %v3891 = vpop.xlane.xlu0 %3890
        %v3892 = vadd.f32 %v3792, %v3794
        %3893 = vadd.xlane.f32.xlu0 %v3892
        %v3894 = vpop.xlane.xlu0 %3893
        %v3895 = vadd.f32 %v3796, %v3798
        %3896 = vadd.xlane.f32.xlu0 %v3895
        %v3897 = vpop.xlane.xlu0 %3896
        %v3898 = vrcp.pop 256.0
        %v3899 = vmul.f32 %v3804, %v3898
        %v3900 = vmul.f32 %v3807, %v3898
        %v3901 = vmul.f32 %v3810, %v3898
        %v3902 = vmul.f32 %v3813, %v3898
        %v3903 = vmul.f32 %v3816, %v3898
        %v3904 = vmul.f32 %v3819, %v3898
        %v3905 = vmul.f32 %v3822, %v3898
        %v3906 = vmul.f32 %v3825, %v3898
        %v3907 = vmul.f32 %v3828, %v3898
        %v3908 = vmul.f32 %v3831, %v3898
        %v3909 = vmul.f32 %v3834, %v3898
        %v3910 = vmul.f32 %v3837, %v3898
        %v3911 = vmul.f32 %v3840, %v3898
        %v3912 = vmul.f32 %v3843, %v3898
        %v3913 = vmul.f32 %v3846, %v3898
        %v3914 = vmul.f32 %v3849, %v3898
        %v3915 = vmul.f32 %v3852, %v3898
        %v3916 = vmul.f32 %v3855, %v3898
        %v3917 = vmul.f32 %v3858, %v3898
        %v3918 = vmul.f32 %v3861, %v3898
        %v3919 = vmul.f32 %v3864, %v3898
        %v3920 = vmul.f32 %v3867, %v3898
        %v3921 = vmul.f32 %v3870, %v3898
        %v3922 = vmul.f32 %v3873, %v3898
        %v3923 = vmul.f32 %v3876, %v3898
        %v3924 = vmul.f32 %v3879, %v3898
        %v3925 = vmul.f32 %v3882, %v3898
        %v3926 = vmul.f32 %v3885, %v3898
        %v3927 = vmul.f32 %v3888, %v3898
        %v3928 = vmul.f32 %v3891, %v3898
        %v3929 = vmul.f32 %v3894, %v3898
        %v3930 = vmul.f32 %v3897, %v3898
        %v3931 = vsub.f32 %v3642, %v3899
        %v3932 = vsub.f32 %v3644, %v3899
        %v3933 = vsub.f32 %v3646, %v3900
        %v3934 = vsub.f32 %v3648, %v3900
        %v3935 = vsub.f32 %v3652, %v3901
        %v3936 = vsub.f32 %v3654, %v3901
        %v3937 = vsub.f32 %v3656, %v3902
        %v3938 = vsub.f32 %v3658, %v3902
        %v3939 = vsub.f32 %v3662, %v3903
        %v3940 = vsub.f32 %v3664, %v3903
        %v3941 = vsub.f32 %v3666, %v3904
        %v3942 = vsub.f32 %v3668, %v3904
        %v3943 = vsub.f32 %v3672, %v3905
        %v3944 = vsub.f32 %v3674, %v3905
        %v3945 = vsub.f32 %v3676, %v3906
        %v3946 = vsub.f32 %v3678, %v3906
        %v3947 = vsub.f32 %v3682, %v3907
        %v3948 = vsub.f32 %v3684, %v3907
        %v3949 = vsub.f32 %v3686, %v3908
        %v3950 = vsub.f32 %v3688, %v3908
        %v3951 = vsub.f32 %v3692, %v3909
        %v3952 = vsub.f32 %v3694, %v3909
        %v3953 = vsub.f32 %v3696, %v3910
        %v3954 = vsub.f32 %v3698, %v3910
        %v3955 = vsub.f32 %v3702, %v3911
        %v3956 = vsub.f32 %v3704, %v3911
        %v3957 = vsub.f32 %v3706, %v3912
        %v3958 = vsub.f32 %v3708, %v3912
        %v3959 = vsub.f32 %v3712, %v3913
        %v3960 = vsub.f32 %v3714, %v3913
        %v3961 = vsub.f32 %v3716, %v3914
        %v3962 = vsub.f32 %v3718, %v3914
        %v3963 = vsub.f32 %v3722, %v3915
        %v3964 = vsub.f32 %v3724, %v3915
        %v3965 = vsub.f32 %v3726, %v3916
        %v3966 = vsub.f32 %v3728, %v3916
        %v3967 = vsub.f32 %v3732, %v3917
        %v3968 = vsub.f32 %v3734, %v3917
        %v3969 = vsub.f32 %v3736, %v3918
        %v3970 = vsub.f32 %v3738, %v3918
        %v3971 = vsub.f32 %v3742, %v3919
        %v3972 = vsub.f32 %v3744, %v3919
        %v3973 = vsub.f32 %v3746, %v3920
        %v3974 = vsub.f32 %v3748, %v3920
        %v3975 = vsub.f32 %v3752, %v3921
        %v3976 = vsub.f32 %v3754, %v3921
        %v3977 = vsub.f32 %v3756, %v3922
        %v3978 = vsub.f32 %v3758, %v3922
        %v3979 = vsub.f32 %v3762, %v3923
        %v3980 = vsub.f32 %v3764, %v3923
        %v3981 = vsub.f32 %v3766, %v3924
        %v3982 = vsub.f32 %v3768, %v3924
        %v3983 = vsub.f32 %v3772, %v3925
        %v3984 = vsub.f32 %v3774, %v3925
        %v3985 = vsub.f32 %v3776, %v3926
        %v3986 = vsub.f32 %v3778, %v3926
        %v3987 = vsub.f32 %v3782, %v3927
        %v3988 = vsub.f32 %v3784, %v3927
        %v3989 = vsub.f32 %v3786, %v3928
        %v3990 = vsub.f32 %v3788, %v3928
        %v3991 = vsub.f32 %v3792, %v3929
        %v3992 = vsub.f32 %v3794, %v3929
        %v3993 = vsub.f32 %v3796, %v3930
        %v3994 = vsub.f32 %v3798, %v3930
        %v3995 = vmul.f32 %v3931, %v3931
        %v3996 = vmul.f32 %v3932, %v3932
        %v3997 = vmul.f32 %v3933, %v3933
        %v3998 = vmul.f32 %v3934, %v3934
        %v3999 = vmul.f32 %v3935, %v3935
        %v4000 = vmul.f32 %v3936, %v3936
        %v4001 = vmul.f32 %v3937, %v3937
        %v4002 = vmul.f32 %v3938, %v3938
        %v4003 = vmul.f32 %v3939, %v3939
        %v4004 = vmul.f32 %v3940, %v3940
        %v4005 = vmul.f32 %v3941, %v3941
        %v4006 = vmul.f32 %v3942, %v3942
        %v4007 = vmul.f32 %v3943, %v3943
        %v4008 = vmul.f32 %v3944, %v3944
        %v4009 = vmul.f32 %v3945, %v3945
        %v4010 = vmul.f32 %v3946, %v3946
        %v4011 = vmul.f32 %v3947, %v3947
        %v4012 = vmul.f32 %v3948, %v3948
        %v4013 = vmul.f32 %v3949, %v3949
        %v4014 = vmul.f32 %v3950, %v3950
        %v4015 = vmul.f32 %v3951, %v3951
        %v4016 = vmul.f32 %v3952, %v3952
        %v4017 = vmul.f32 %v3953, %v3953
        %v4018 = vmul.f32 %v3954, %v3954
        %v4019 = vmul.f32 %v3955, %v3955
        %v4020 = vmul.f32 %v3956, %v3956
        %v4021 = vmul.f32 %v3957, %v3957
        %v4022 = vmul.f32 %v3958, %v3958
        %v4023 = vmul.f32 %v3959, %v3959
        %v4024 = vmul.f32 %v3960, %v3960
        %v4025 = vmul.f32 %v3961, %v3961
        %v4026 = vmul.f32 %v3962, %v3962
        %v4027 = vmul.f32 %v3963, %v3963
        %v4028 = vmul.f32 %v3964, %v3964
        %v4029 = vmul.f32 %v3965, %v3965
        %v4030 = vmul.f32 %v3966, %v3966
        %v4031 = vmul.f32 %v3967, %v3967
        %v4032 = vmul.f32 %v3968, %v3968
        %v4033 = vmul.f32 %v3969, %v3969
        %v4034 = vmul.f32 %v3970, %v3970
        %v4035 = vmul.f32 %v3971, %v3971
        %v4036 = vmul.f32 %v3972, %v3972
        %v4037 = vmul.f32 %v3973, %v3973
        %v4038 = vmul.f32 %v3974, %v3974
        %v4039 = vmul.f32 %v3975, %v3975
        %v4040 = vmul.f32 %v3976, %v3976
        %v4041 = vmul.f32 %v3977, %v3977
        %v4042 = vmul.f32 %v3978, %v3978
        %v4043 = vmul.f32 %v3979, %v3979
        %v4044 = vmul.f32 %v3980, %v3980
        %v4045 = vmul.f32 %v3981, %v3981
        %v4046 = vmul.f32 %v3982, %v3982
        %v4047 = vmul.f32 %v3983, %v3983
        %v4048 = vmul.f32 %v3984, %v3984
        %v4049 = vmul.f32 %v3985, %v3985
        %v4050 = vmul.f32 %v3986, %v3986
        %v4051 = vmul.f32 %v3987, %v3987
        %v4052 = vmul.f32 %v3988, %v3988
        %v4053 = vmul.f32 %v3989, %v3989
        %v4054 = vmul.f32 %v3990, %v3990
        %v4055 = vmul.f32 %v3991, %v3991
        %v4056 = vmul.f32 %v3992, %v3992
        %v4057 = vmul.f32 %v3993, %v3993
        %v4058 = vmul.f32 %v3994, %v3994
        %v4059 = vadd.f32 %v3995, %v3996
        %4060 = vadd.xlane.f32.xlu0 %v4059
        %v4061 = vpop.xlane.xlu0 %4060
        %v4062 = vadd.f32 %v3997, %v3998
        %4063 = vadd.xlane.f32.xlu0 %v4062
        %v4064 = vpop.xlane.xlu0 %4063
        %v4065 = vadd.f32 %v3999, %v4000
        %4066 = vadd.xlane.f32.xlu0 %v4065
        %v4067 = vpop.xlane.xlu0 %4066
        %v4068 = vadd.f32 %v4001, %v4002
        %4069 = vadd.xlane.f32.xlu0 %v4068
        %v4070 = vpop.xlane.xlu0 %4069
        %v4071 = vadd.f32 %v4003, %v4004
        %4072 = vadd.xlane.f32.xlu0 %v4071
        %v4073 = vpop.xlane.xlu0 %4072
        %v4074 = vadd.f32 %v4005, %v4006
        %4075 = vadd.xlane.f32.xlu0 %v4074
        %v4076 = vpop.xlane.xlu0 %4075
        %v4077 = vadd.f32 %v4007, %v4008
        %4078 = vadd.xlane.f32.xlu0 %v4077
        %v4079 = vpop.xlane.xlu0 %4078
        %v4080 = vadd.f32 %v4009, %v4010
        %4081 = vadd.xlane.f32.xlu0 %v4080
        %v4082 = vpop.xlane.xlu0 %4081
        %v4083 = vadd.f32 %v4011, %v4012
        %4084 = vadd.xlane.f32.xlu0 %v4083
        %v4085 = vpop.xlane.xlu0 %4084
        %v4086 = vadd.f32 %v4013, %v4014
        %4087 = vadd.xlane.f32.xlu0 %v4086
        %v4088 = vpop.xlane.xlu0 %4087
        %v4089 = vadd.f32 %v4015, %v4016
        %4090 = vadd.xlane.f32.xlu0 %v4089
        %v4091 = vpop.xlane.xlu0 %4090
        %v4092 = vadd.f32 %v4017, %v4018
        %4093 = vadd.xlane.f32.xlu0 %v4092
        %v4094 = vpop.xlane.xlu0 %4093
        %v4095 = vadd.f32 %v4019, %v4020
        %4096 = vadd.xlane.f32.xlu0 %v4095
        %v4097 = vpop.xlane.xlu0 %4096
        %v4098 = vadd.f32 %v4021, %v4022
        %4099 = vadd.xlane.f32.xlu0 %v4098
        %v4100 = vpop.xlane.xlu0 %4099
        %v4101 = vadd.f32 %v4023, %v4024
        %4102 = vadd.xlane.f32.xlu0 %v4101
        %v4103 = vpop.xlane.xlu0 %4102
        %v4104 = vadd.f32 %v4025, %v4026
        %4105 = vadd.xlane.f32.xlu0 %v4104
        %v4106 = vpop.xlane.xlu0 %4105
        %v4107 = vadd.f32 %v4027, %v4028
        %4108 = vadd.xlane.f32.xlu0 %v4107
        %v4109 = vpop.xlane.xlu0 %4108
        %v4110 = vadd.f32 %v4029, %v4030
        %4111 = vadd.xlane.f32.xlu0 %v4110
        %v4112 = vpop.xlane.xlu0 %4111
        %v4113 = vadd.f32 %v4031, %v4032
        %4114 = vadd.xlane.f32.xlu0 %v4113
        %v4115 = vpop.xlane.xlu0 %4114
        %v4116 = vadd.f32 %v4033, %v4034
        %4117 = vadd.xlane.f32.xlu0 %v4116
        %v4118 = vpop.xlane.xlu0 %4117
        %v4119 = vadd.f32 %v4035, %v4036
        %4120 = vadd.xlane.f32.xlu0 %v4119
        %v4121 = vpop.xlane.xlu0 %4120
        %v4122 = vadd.f32 %v4037, %v4038
        %4123 = vadd.xlane.f32.xlu0 %v4122
        %v4124 = vpop.xlane.xlu0 %4123
        %v4125 = vadd.f32 %v4039, %v4040
        %4126 = vadd.xlane.f32.xlu0 %v4125
        %v4127 = vpop.xlane.xlu0 %4126
        %v4128 = vadd.f32 %v4041, %v4042
        %4129 = vadd.xlane.f32.xlu0 %v4128
        %v4130 = vpop.xlane.xlu0 %4129
        %v4131 = vadd.f32 %v4043, %v4044
        %4132 = vadd.xlane.f32.xlu0 %v4131
        %v4133 = vpop.xlane.xlu0 %4132
        %v4134 = vadd.f32 %v4045, %v4046
        %4135 = vadd.xlane.f32.xlu0 %v4134
        %v4136 = vpop.xlane.xlu0 %4135
        %v4137 = vadd.f32 %v4047, %v4048
        %4138 = vadd.xlane.f32.xlu0 %v4137
        %v4139 = vpop.xlane.xlu0 %4138
        %v4140 = vadd.f32 %v4049, %v4050
        %4141 = vadd.xlane.f32.xlu0 %v4140
        %v4142 = vpop.xlane.xlu0 %4141
        %v4143 = vadd.f32 %v4051, %v4052
        %4144 = vadd.xlane.f32.xlu0 %v4143
        %v4145 = vpop.xlane.xlu0 %4144
        %v4146 = vadd.f32 %v4053, %v4054
        %4147 = vadd.xlane.f32.xlu0 %v4146
        %v4148 = vpop.xlane.xlu0 %4147
        %v4149 = vadd.f32 %v4055, %v4056
        %4150 = vadd.xlane.f32.xlu0 %v4149
        %v4151 = vpop.xlane.xlu0 %4150
        %v4152 = vadd.f32 %v4057, %v4058
        %4153 = vadd.xlane.f32.xlu0 %v4152
        %v4154 = vpop.xlane.xlu0 %4153
        %v4155 = vmul.f32 %v4061, %v3898
        %v4156 = vmul.f32 %v4064, %v3898
        %v4157 = vmul.f32 %v4067, %v3898
        %v4158 = vmul.f32 %v4070, %v3898
        %v4159 = vmul.f32 %v4073, %v3898
        %v4160 = vmul.f32 %v4076, %v3898
        %v4161 = vmul.f32 %v4079, %v3898
        %v4162 = vmul.f32 %v4082, %v3898
        %v4163 = vmul.f32 %v4085, %v3898
        %v4164 = vmul.f32 %v4088, %v3898
        %v4165 = vmul.f32 %v4091, %v3898
        %v4166 = vmul.f32 %v4094, %v3898
        %v4167 = vmul.f32 %v4097, %v3898
        %v4168 = vmul.f32 %v4100, %v3898
        %v4169 = vmul.f32 %v4103, %v3898
        %v4170 = vmul.f32 %v4106, %v3898
        %v4171 = vmul.f32 %v4109, %v3898
        %v4172 = vmul.f32 %v4112, %v3898
        %v4173 = vmul.f32 %v4115, %v3898
        %v4174 = vmul.f32 %v4118, %v3898
        %v4175 = vmul.f32 %v4121, %v3898
        %v4176 = vmul.f32 %v4124, %v3898
        %v4177 = vmul.f32 %v4127, %v3898
        %v4178 = vmul.f32 %v4130, %v3898
        %v4179 = vmul.f32 %v4133, %v3898
        %v4180 = vmul.f32 %v4136, %v3898
        %v4181 = vmul.f32 %v4139, %v3898
        %v4182 = vmul.f32 %v4142, %v3898
        %v4183 = vmul.f32 %v4145, %v3898
        %v4184 = vmul.f32 %v4148, %v3898
        %v4185 = vmul.f32 %v4151, %v3898
        %v4186 = vmul.f32 %v4154, %v3898
        %v4187 = vadd.f32 %v4155, 1e-06
        %v4188 = vadd.f32 %v4156, 1e-06
        %v4189 = vadd.f32 %v4157, 1e-06
        %v4190 = vadd.f32 %v4158, 1e-06
        %v4191 = vadd.f32 %v4159, 1e-06
        %v4192 = vadd.f32 %v4160, 1e-06
        %v4193 = vadd.f32 %v4161, 1e-06
        %v4194 = vadd.f32 %v4162, 1e-06
        %v4195 = vadd.f32 %v4163, 1e-06
        %v4196 = vadd.f32 %v4164, 1e-06
        %v4197 = vadd.f32 %v4165, 1e-06
        %v4198 = vadd.f32 %v4166, 1e-06
        %v4199 = vadd.f32 %v4167, 1e-06
        %v4200 = vadd.f32 %v4168, 1e-06
        %v4201 = vadd.f32 %v4169, 1e-06
        %v4202 = vadd.f32 %v4170, 1e-06
        %v4203 = vadd.f32 %v4171, 1e-06
        %v4204 = vadd.f32 %v4172, 1e-06
        %v4205 = vadd.f32 %v4173, 1e-06
        %v4206 = vadd.f32 %v4174, 1e-06
        %v4207 = vadd.f32 %v4175, 1e-06
        %v4208 = vadd.f32 %v4176, 1e-06
        %v4209 = vadd.f32 %v4177, 1e-06
        %v4210 = vadd.f32 %v4178, 1e-06
        %v4211 = vadd.f32 %v4179, 1e-06
        %v4212 = vadd.f32 %v4180, 1e-06
        %v4213 = vadd.f32 %v4181, 1e-06
        %v4214 = vadd.f32 %v4182, 1e-06
        %v4215 = vadd.f32 %v4183, 1e-06
        %v4216 = vadd.f32 %v4184, 1e-06
        %v4217 = vadd.f32 %v4185, 1e-06
        %v4218 = vadd.f32 %v4186, 1e-06
        %v4219 = vrsqrt.pop %v4187
        %v4220 = vrsqrt.pop %v4188
        %v4221 = vrsqrt.pop %v4189
        %v4222 = vrsqrt.pop %v4190
        %v4223 = vrsqrt.pop %v4191
        %v4224 = vrsqrt.pop %v4192
        %v4225 = vrsqrt.pop %v4193
        %v4226 = vrsqrt.pop %v4194
        %v4227 = vrsqrt.pop %v4195
        %v4228 = vrsqrt.pop %v4196
        %v4229 = vrsqrt.pop %v4197
        %v4230 = vrsqrt.pop %v4198
        %v4231 = vrsqrt.pop %v4199
        %v4232 = vrsqrt.pop %v4200
        %v4233 = vrsqrt.pop %v4201
        %v4234 = vrsqrt.pop %v4202
        %v4235 = vrsqrt.pop %v4203
        %v4236 = vrsqrt.pop %v4204
        %v4237 = vrsqrt.pop %v4205
        %v4238 = vrsqrt.pop %v4206
        %v4239 = vrsqrt.pop %v4207
        %v4240 = vrsqrt.pop %v4208
        %v4241 = vrsqrt.pop %v4209
        %v4242 = vrsqrt.pop %v4210
        %v4243 = vrsqrt.pop %v4211
        %v4244 = vrsqrt.pop %v4212
        %v4245 = vrsqrt.pop %v4213
        %v4246 = vrsqrt.pop %v4214
        %v4247 = vrsqrt.pop %v4215
        %v4248 = vrsqrt.pop %v4216
        %v4249 = vrsqrt.pop %v4217
        %v4250 = vrsqrt.pop %v4218
        %v4251 = vmul.f32 %v3931, %v4219
        %v4252 = vmul.f32 %v3932, %v4219
        %v4253 = vmul.f32 %v3933, %v4220
        %v4254 = vmul.f32 %v3934, %v4220
        %v4255 = vmul.f32 %v3935, %v4221
        %v4256 = vmul.f32 %v3936, %v4221
        %v4257 = vmul.f32 %v3937, %v4222
        %v4258 = vmul.f32 %v3938, %v4222
        %v4259 = vmul.f32 %v3939, %v4223
        %v4260 = vmul.f32 %v3940, %v4223
        %v4261 = vmul.f32 %v3941, %v4224
        %v4262 = vmul.f32 %v3942, %v4224
        %v4263 = vmul.f32 %v3943, %v4225
        %v4264 = vmul.f32 %v3944, %v4225
        %v4265 = vmul.f32 %v3945, %v4226
        %v4266 = vmul.f32 %v3946, %v4226
        %v4267 = vmul.f32 %v3947, %v4227
        %v4268 = vmul.f32 %v3948, %v4227
        %v4269 = vmul.f32 %v3949, %v4228
        %v4270 = vmul.f32 %v3950, %v4228
        %v4271 = vmul.f32 %v3951, %v4229
        %v4272 = vmul.f32 %v3952, %v4229
        %v4273 = vmul.f32 %v3953, %v4230
        %v4274 = vmul.f32 %v3954, %v4230
        %v4275 = vmul.f32 %v3955, %v4231
        %v4276 = vmul.f32 %v3956, %v4231
        %v4277 = vmul.f32 %v3957, %v4232
        %v4278 = vmul.f32 %v3958, %v4232
        %v4279 = vmul.f32 %v3959, %v4233
        %v4280 = vmul.f32 %v3960, %v4233
        %v4281 = vmul.f32 %v3961, %v4234
        %v4282 = vmul.f32 %v3962, %v4234
        %v4283 = vmul.f32 %v3963, %v4235
        %v4284 = vmul.f32 %v3964, %v4235
        %v4285 = vmul.f32 %v3965, %v4236
        %v4286 = vmul.f32 %v3966, %v4236
        %v4287 = vmul.f32 %v3967, %v4237
        %v4288 = vmul.f32 %v3968, %v4237
        %v4289 = vmul.f32 %v3969, %v4238
        %v4290 = vmul.f32 %v3970, %v4238
        %v4291 = vmul.f32 %v3971, %v4239
        %v4292 = vmul.f32 %v3972, %v4239
        %v4293 = vmul.f32 %v3973, %v4240
        %v4294 = vmul.f32 %v3974, %v4240
        %v4295 = vmul.f32 %v3975, %v4241
        %v4296 = vmul.f32 %v3976, %v4241
        %v4297 = vmul.f32 %v3977, %v4242
        %v4298 = vmul.f32 %v3978, %v4242
        %v4299 = vmul.f32 %v3979, %v4243
        %v4300 = vmul.f32 %v3980, %v4243
        %v4301 = vmul.f32 %v3981, %v4244
        %v4302 = vmul.f32 %v3982, %v4244
        %v4303 = vmul.f32 %v3983, %v4245
        %v4304 = vmul.f32 %v3984, %v4245
        %v4305 = vmul.f32 %v3985, %v4246
        %v4306 = vmul.f32 %v3986, %v4246
        %v4307 = vmul.f32 %v3987, %v4247
        %v4308 = vmul.f32 %v3988, %v4247
        %v4309 = vmul.f32 %v3989, %v4248
        %v4310 = vmul.f32 %v3990, %v4248
        %v4311 = vmul.f32 %v3991, %v4249
        %v4312 = vmul.f32 %v3992, %v4249
        %v4313 = vmul.f32 %v3993, %v4250
        %v4314 = vmul.f32 %v3994, %v4250
        %v4316 = vlaneseq
        %v4317 = vshrl.u32 %v4316, 7
        %v4318 = vsub.s32 0, %v4317
        %v4319 = vrot.slane %v3800, %v4318
        %v4320 = vlaneseq
        %v4321 = vshrl.u32 %v4320, 7
        %v4322 = vsub.s32 1, %v4321
        %v4323 = vrot.slane %v3800, %v4322
        %v4326 = vmul.f32 %v4251, %v4319
        %v4327 = vmul.f32 %v4252, %v4323
        %v4328 = vmul.f32 %v4253, %v4319
        %v4329 = vmul.f32 %v4254, %v4323
        %v4330 = vmul.f32 %v4255, %v4319
        %v4331 = vmul.f32 %v4256, %v4323
        %v4332 = vmul.f32 %v4257, %v4319
        %v4333 = vmul.f32 %v4258, %v4323
        %v4334 = vmul.f32 %v4259, %v4319
        %v4335 = vmul.f32 %v4260, %v4323
        %v4336 = vmul.f32 %v4261, %v4319
        %v4337 = vmul.f32 %v4262, %v4323
        %v4338 = vmul.f32 %v4263, %v4319
        %v4339 = vmul.f32 %v4264, %v4323
        %v4340 = vmul.f32 %v4265, %v4319
        %v4341 = vmul.f32 %v4266, %v4323
        %v4342 = vmul.f32 %v4267, %v4319
        %v4343 = vmul.f32 %v4268, %v4323
        %v4344 = vmul.f32 %v4269, %v4319
        %v4345 = vmul.f32 %v4270, %v4323
        %v4346 = vmul.f32 %v4271, %v4319
        %v4347 = vmul.f32 %v4272, %v4323
        %v4348 = vmul.f32 %v4273, %v4319
        %v4349 = vmul.f32 %v4274, %v4323
        %v4350 = vmul.f32 %v4275, %v4319
        %v4351 = vmul.f32 %v4276, %v4323
        %v4352 = vmul.f32 %v4277, %v4319
        %v4353 = vmul.f32 %v4278, %v4323
        %v4354 = vmul.f32 %v4279, %v4319
        %v4355 = vmul.f32 %v4280, %v4323
        %v4356 = vmul.f32 %v4281, %v4319
        %v4357 = vmul.f32 %v4282, %v4323
        %v4358 = vmul.f32 %v4283, %v4319
        %v4359 = vmul.f32 %v4284, %v4323
        %v4360 = vmul.f32 %v4285, %v4319
        %v4361 = vmul.f32 %v4286, %v4323
        %v4362 = vmul.f32 %v4287, %v4319
        %v4363 = vmul.f32 %v4288, %v4323
        %v4364 = vmul.f32 %v4289, %v4319
        %v4365 = vmul.f32 %v4290, %v4323
        %v4366 = vmul.f32 %v4291, %v4319
        %v4367 = vmul.f32 %v4292, %v4323
        %v4368 = vmul.f32 %v4293, %v4319
        %v4369 = vmul.f32 %v4294, %v4323
        %v4370 = vmul.f32 %v4295, %v4319
        %v4371 = vmul.f32 %v4296, %v4323
        %v4372 = vmul.f32 %v4297, %v4319
        %v4373 = vmul.f32 %v4298, %v4323
        %v4374 = vmul.f32 %v4299, %v4319
        %v4375 = vmul.f32 %v4300, %v4323
        %v4376 = vmul.f32 %v4301, %v4319
        %v4377 = vmul.f32 %v4302, %v4323
        %v4378 = vmul.f32 %v4303, %v4319
        %v4379 = vmul.f32 %v4304, %v4323
        %v4380 = vmul.f32 %v4305, %v4319
        %v4381 = vmul.f32 %v4306, %v4323
        %v4382 = vmul.f32 %v4307, %v4319
        %v4383 = vmul.f32 %v4308, %v4323
        %v4384 = vmul.f32 %v4309, %v4319
        %v4385 = vmul.f32 %v4310, %v4323
        %v4386 = vmul.f32 %v4311, %v4319
        %v4387 = vmul.f32 %v4312, %v4323
        %v4388 = vmul.f32 %v4313, %v4319
        %v4389 = vmul.f32 %v4314, %v4323
        %v4391 = vlaneseq
        %v4392 = vshrl.u32 %v4391, 7
        %v4393 = vsub.s32 0, %v4392
        %v4394 = vrot.slane %v3801, %v4393
        %v4395 = vlaneseq
        %v4396 = vshrl.u32 %v4395, 7
        %v4397 = vsub.s32 1, %v4396
        %v4398 = vrot.slane %v3801, %v4397
        %v4401 = vadd.f32 %v4326, %v4394
        %v4402 = vadd.f32 %v4327, %v4398
        %v4403 = vadd.f32 %v4328, %v4394
        %v4404 = vadd.f32 %v4329, %v4398
        %v4405 = vadd.f32 %v4330, %v4394
        %v4406 = vadd.f32 %v4331, %v4398
        %v4407 = vadd.f32 %v4332, %v4394
        %v4408 = vadd.f32 %v4333, %v4398
        %v4409 = vadd.f32 %v4334, %v4394
        %v4410 = vadd.f32 %v4335, %v4398
        %v4411 = vadd.f32 %v4336, %v4394
        %v4412 = vadd.f32 %v4337, %v4398
        %v4413 = vadd.f32 %v4338, %v4394
        %v4414 = vadd.f32 %v4339, %v4398
        %v4415 = vadd.f32 %v4340, %v4394
        %v4416 = vadd.f32 %v4341, %v4398
        %v4417 = vadd.f32 %v4342, %v4394
        %v4418 = vadd.f32 %v4343, %v4398
        %v4419 = vadd.f32 %v4344, %v4394
        %v4420 = vadd.f32 %v4345, %v4398
        %v4421 = vadd.f32 %v4346, %v4394
        %v4422 = vadd.f32 %v4347, %v4398
        %v4423 = vadd.f32 %v4348, %v4394
        %v4424 = vadd.f32 %v4349, %v4398
        %v4425 = vadd.f32 %v4350, %v4394
        %v4426 = vadd.f32 %v4351, %v4398
        %v4427 = vadd.f32 %v4352, %v4394
        %v4428 = vadd.f32 %v4353, %v4398
        %v4429 = vadd.f32 %v4354, %v4394
        %v4430 = vadd.f32 %v4355, %v4398
        %v4431 = vadd.f32 %v4356, %v4394
        %v4432 = vadd.f32 %v4357, %v4398
        %v4433 = vadd.f32 %v4358, %v4394
        %v4434 = vadd.f32 %v4359, %v4398
        %v4435 = vadd.f32 %v4360, %v4394
        %v4436 = vadd.f32 %v4361, %v4398
        %v4437 = vadd.f32 %v4362, %v4394
        %v4438 = vadd.f32 %v4363, %v4398
        %v4439 = vadd.f32 %v4364, %v4394
        %v4440 = vadd.f32 %v4365, %v4398
        %v4441 = vadd.f32 %v4366, %v4394
        %v4442 = vadd.f32 %v4367, %v4398
        %v4443 = vadd.f32 %v4368, %v4394
        %v4444 = vadd.f32 %v4369, %v4398
        %v4445 = vadd.f32 %v4370, %v4394
        %v4446 = vadd.f32 %v4371, %v4398
        %v4447 = vadd.f32 %v4372, %v4394
        %v4448 = vadd.f32 %v4373, %v4398
        %v4449 = vadd.f32 %v4374, %v4394
        %v4450 = vadd.f32 %v4375, %v4398
        %v4451 = vadd.f32 %v4376, %v4394
        %v4452 = vadd.f32 %v4377, %v4398
        %v4453 = vadd.f32 %v4378, %v4394
        %v4454 = vadd.f32 %v4379, %v4398
        %v4455 = vadd.f32 %v4380, %v4394
        %v4456 = vadd.f32 %v4381, %v4398
        %v4457 = vadd.f32 %v4382, %v4394
        %v4458 = vadd.f32 %v4383, %v4398
        %v4459 = vadd.f32 %v4384, %v4394
        %v4460 = vadd.f32 %v4385, %v4398
        %v4461 = vadd.f32 %v4386, %v4394
        %v4462 = vadd.f32 %v4387, %v4398
        %v4463 = vadd.f32 %v4388, %v4394
        %v4464 = vadd.f32 %v4389, %v4398
        %v4465 = vadd.f32 %v480, %v4401
        %v4466 = vadd.f32 %v481, %v4402
        %v4467 = vadd.f32 %v482, %v4403
        %v4468 = vadd.f32 %v483, %v4404
        %v4469 = vadd.f32 %v484, %v4405
        %v4470 = vadd.f32 %v485, %v4406
        %v4471 = vadd.f32 %v486, %v4407
        %v4472 = vadd.f32 %v487, %v4408
        %v4473 = vadd.f32 %v488, %v4409
        %v4474 = vadd.f32 %v489, %v4410
        %v4475 = vadd.f32 %v490, %v4411
        %v4476 = vadd.f32 %v491, %v4412
        %v4477 = vadd.f32 %v492, %v4413
        %v4478 = vadd.f32 %v493, %v4414
        %v4479 = vadd.f32 %v494, %v4415
        %v4480 = vadd.f32 %v495, %v4416
        %v4481 = vadd.f32 %v496, %v4417
        %v4482 = vadd.f32 %v497, %v4418
        %v4483 = vadd.f32 %v498, %v4419
        %v4484 = vadd.f32 %v499, %v4420
        %v4485 = vadd.f32 %v500, %v4421
        %v4486 = vadd.f32 %v501, %v4422
        %v4487 = vadd.f32 %v502, %v4423
        %v4488 = vadd.f32 %v503, %v4424
        %v4489 = vadd.f32 %v504, %v4425
        %v4490 = vadd.f32 %v505, %v4426
        %v4491 = vadd.f32 %v506, %v4427
        %v4492 = vadd.f32 %v507, %v4428
        %v4493 = vadd.f32 %v508, %v4429
        %v4494 = vadd.f32 %v509, %v4430
        %v4495 = vadd.f32 %v510, %v4431
        %v4496 = vadd.f32 %v511, %v4432
        %v4497 = vadd.f32 %v512, %v4433
        %v4498 = vadd.f32 %v513, %v4434
        %v4499 = vadd.f32 %v514, %v4435
        %v4500 = vadd.f32 %v515, %v4436
        %v4501 = vadd.f32 %v516, %v4437
        %v4502 = vadd.f32 %v517, %v4438
        %v4503 = vadd.f32 %v518, %v4439
        %v4504 = vadd.f32 %v519, %v4440
        %v4505 = vadd.f32 %v520, %v4441
        %v4506 = vadd.f32 %v521, %v4442
        %v4507 = vadd.f32 %v522, %v4443
        %v4508 = vadd.f32 %v523, %v4444
        %v4509 = vadd.f32 %v524, %v4445
        %v4510 = vadd.f32 %v525, %v4446
        %v4511 = vadd.f32 %v526, %v4447
        %v4512 = vadd.f32 %v527, %v4448
        %v4513 = vadd.f32 %v528, %v4449
        %v4514 = vadd.f32 %v529, %v4450
        %v4515 = vadd.f32 %v530, %v4451
        %v4516 = vadd.f32 %v531, %v4452
        %v4517 = vadd.f32 %v532, %v4453
        %v4518 = vadd.f32 %v533, %v4454
        %v4519 = vadd.f32 %v534, %v4455
        %v4520 = vadd.f32 %v535, %v4456
        %v4521 = vadd.f32 %v536, %v4457
        %v4522 = vadd.f32 %v537, %v4458
        %v4523 = vadd.f32 %v538, %v4459
        %v4524 = vadd.f32 %v539, %v4460
        %v4525 = vadd.f32 %v540, %v4461
        %v4526 = vadd.f32 %v541, %v4462
        %v4527 = vadd.f32 %v542, %v4463
        %v4528 = vadd.f32 %v543, %v4464
        // Predicated region
        $region93: #{tpu_custom_call.1} parent=63 // pred_check
          %p4529 = pneg %p453
        $region94: #{tpu_custom_call.1} parent=63 // pred_check_branch
          %4531 = sbr.rel (%p4529) target = $region96
        $region95: #{tpu_custom_call.1} parent=63 // pred_region
          %s4532 = smul.u32 4, 32
          %s4533 = smul.u32 %s4532, 4
          %s4534 = sshll.u32 %s4533, 4
          %4535 = dma.done [#allocation5], %s4534
          %s4536 = scalar_lea.sflag [#allocation5], 1
          %s4537 = smul.u32 4, 64
          %s4538 = smul.u32 %s4537, 2
          %s4539 = sshll.u32 %s4538, 4
          %4540 = dma.done %s4536, %s4539
        $region96: #{tpu_custom_call.1} parent=63 // pred_fallthru
          _
        %v4541 = vpack.c.bf16 %v4467, %v4465
        %v4542 = vpack.c.bf16 %v4468, %v4466
        %v4543 = vpack.c.bf16 %v4471, %v4469
        %v4544 = vpack.c.bf16 %v4472, %v4470
        %v4545 = vpack.c.bf16 %v4475, %v4473
        %v4546 = vpack.c.bf16 %v4476, %v4474
        %v4547 = vpack.c.bf16 %v4479, %v4477
        %v4548 = vpack.c.bf16 %v4480, %v4478
        %v4549 = vpack.c.bf16 %v4483, %v4481
        %v4550 = vpack.c.bf16 %v4484, %v4482
        %v4551 = vpack.c.bf16 %v4487, %v4485
        %v4552 = vpack.c.bf16 %v4488, %v4486
        %v4553 = vpack.c.bf16 %v4491, %v4489
        %v4554 = vpack.c.bf16 %v4492, %v4490
        %v4555 = vpack.c.bf16 %v4495, %v4493
        %v4556 = vpack.c.bf16 %v4496, %v4494
        %v4557 = vpack.c.bf16 %v4499, %v4497
        %v4558 = vpack.c.bf16 %v4500, %v4498
        %v4559 = vpack.c.bf16 %v4503, %v4501
        %v4560 = vpack.c.bf16 %v4504, %v4502
        %v4561 = vpack.c.bf16 %v4507, %v4505
        %v4562 = vpack.c.bf16 %v4508, %v4506
        %v4563 = vpack.c.bf16 %v4511, %v4509
        %v4564 = vpack.c.bf16 %v4512, %v4510
        %v4565 = vpack.c.bf16 %v4515, %v4513
        %v4566 = vpack.c.bf16 %v4516, %v4514
        %v4567 = vpack.c.bf16 %v4519, %v4517
        %v4568 = vpack.c.bf16 %v4520, %v4518
        %v4569 = vpack.c.bf16 %v4523, %v4521
        %v4570 = vpack.c.bf16 %v4524, %v4522
        %v4571 = vpack.c.bf16 %v4527, %v4525
        %v4572 = vpack.c.bf16 %v4528, %v4526
        %v4573 = vld [vmem:[#allocation3] sm:$0xff]
        %v4574 = vld [vmem:[#allocation3 + $0x8] sm:$0xff]
        %v4575 = vld [vmem:[#allocation3 + $0x10] sm:$0xff]
        %v4576 = vld [vmem:[#allocation3 + $0x18] sm:$0xff]
        %v4577 = vld [vmem:[#allocation3 + $0x20] sm:$0xff]
        %v4578 = vld [vmem:[#allocation3 + $0x28] sm:$0xff]
        %v4579 = vld [vmem:[#allocation3 + $0x30] sm:$0xff]
        %v4580 = vld [vmem:[#allocation3 + $0x38] sm:$0xff]
        %v4581 = vld [vmem:[#allocation3 + $0x40] sm:$0xff]
        %v4582 = vld [vmem:[#allocation3 + $0x48] sm:$0xff]
        %v4583 = vld [vmem:[#allocation3 + $0x50] sm:$0xff]
        %v4584 = vld [vmem:[#allocation3 + $0x58] sm:$0xff]
        %v4585 = vld [vmem:[#allocation3 + $0x60] sm:$0xff]
        %v4586 = vld [vmem:[#allocation3 + $0x68] sm:$0xff]
        %v4587 = vld [vmem:[#allocation3 + $0x70] sm:$0xff]
        %v4588 = vld [vmem:[#allocation3 + $0x78] sm:$0xff]
        %v4589 = vld [vmem:[#allocation3 + $0x80] sm:$0xff]
        %v4590 = vld [vmem:[#allocation3 + $0x88] sm:$0xff]
        %v4591 = vld [vmem:[#allocation3 + $0x90] sm:$0xff]
        %v4592 = vld [vmem:[#allocation3 + $0x98] sm:$0xff]
        %v4593 = vld [vmem:[#allocation3 + $0xa0] sm:$0xff]
        %v4594 = vld [vmem:[#allocation3 + $0xa8] sm:$0xff]
        %v4595 = vld [vmem:[#allocation3 + $0xb0] sm:$0xff]
        %v4596 = vld [vmem:[#allocation3 + $0xb8] sm:$0xff]
        %v4597 = vld [vmem:[#allocation3 + $0xc0] sm:$0xff]
        %v4598 = vld [vmem:[#allocation3 + $0xc8] sm:$0xff]
        %v4599 = vld [vmem:[#allocation3 + $0xd0] sm:$0xff]
        %v4600 = vld [vmem:[#allocation3 + $0xd8] sm:$0xff]
        %v4601 = vld [vmem:[#allocation3 + $0xe0] sm:$0xff]
        %v4602 = vld [vmem:[#allocation3 + $0xe8] sm:$0xff]
        %v4603 = vld [vmem:[#allocation3 + $0xf0] sm:$0xff]
        %v4604 = vld [vmem:[#allocation3 + $0xf8] sm:$0xff]
        %v4605 = vld [vmem:[#allocation3 + $0x100] sm:$0xff]
        %v4606 = vld [vmem:[#allocation3 + $0x108] sm:$0xff]
        %v4607 = vld [vmem:[#allocation3 + $0x110] sm:$0xff]
        %v4608 = vld [vmem:[#allocation3 + $0x118] sm:$0xff]
        %v4609 = vld [vmem:[#allocation3 + $0x120] sm:$0xff]
        %v4610 = vld [vmem:[#allocation3 + $0x128] sm:$0xff]
        %v4611 = vld [vmem:[#allocation3 + $0x130] sm:$0xff]
        %v4612 = vld [vmem:[#allocation3 + $0x138] sm:$0xff]
        %v4613 = vld [vmem:[#allocation3 + $0x140] sm:$0xff]
        %v4614 = vld [vmem:[#allocation3 + $0x148] sm:$0xff]
        %v4615 = vld [vmem:[#allocation3 + $0x150] sm:$0xff]
        %v4616 = vld [vmem:[#allocation3 + $0x158] sm:$0xff]
        %v4617 = vld [vmem:[#allocation3 + $0x160] sm:$0xff]
        %v4618 = vld [vmem:[#allocation3 + $0x168] sm:$0xff]
        %v4619 = vld [vmem:[#allocation3 + $0x170] sm:$0xff]
        %v4620 = vld [vmem:[#allocation3 + $0x178] sm:$0xff]
        %v4621 = vld [vmem:[#allocation3 + $0x180] sm:$0xff]
        %v4622 = vld [vmem:[#allocation3 + $0x188] sm:$0xff]
        %v4623 = vld [vmem:[#allocation3 + $0x190] sm:$0xff]
        %v4624 = vld [vmem:[#allocation3 + $0x198] sm:$0xff]
        %v4625 = vld [vmem:[#allocation3 + $0x1a0] sm:$0xff]
        %v4626 = vld [vmem:[#allocation3 + $0x1a8] sm:$0xff]
        %v4627 = vld [vmem:[#allocation3 + $0x1b0] sm:$0xff]
        %v4628 = vld [vmem:[#allocation3 + $0x1b8] sm:$0xff]
        %v4629 = vld [vmem:[#allocation3 + $0x1c0] sm:$0xff]
        %v4630 = vld [vmem:[#allocation3 + $0x1c8] sm:$0xff]
        %v4631 = vld [vmem:[#allocation3 + $0x1d0] sm:$0xff]
        %v4632 = vld [vmem:[#allocation3 + $0x1d8] sm:$0xff]
        %v4633 = vld [vmem:[#allocation3 + $0x1e0] sm:$0xff]
        %v4634 = vld [vmem:[#allocation3 + $0x1e8] sm:$0xff]
        %v4635 = vld [vmem:[#allocation3 + $0x1f0] sm:$0xff]
        %v4636 = vld [vmem:[#allocation3 + $0x1f8] sm:$0xff]
        %v4637 = vld [vmem:[%s8] sm:$0xf]
        %v4639 = vlaneseq
        %v4640 = vshrl.u32 %v4639, 7
        %v4641 = vsub.s32 0, %v4640
        %v4642 = vrot.slane %v4637, %v4641
        %v4643 = vlaneseq
        %v4644 = vshrl.u32 %v4643, 7
        %v4645 = vsub.s32 1, %v4644
        %v4646 = vrot.slane %v4637, %v4645
        %v4647 = vlaneseq
        %v4648 = vshrl.u32 %v4647, 7
        %v4649 = vsub.s32 2, %v4648
        %v4650 = vrot.slane %v4637, %v4649
        %v4651 = vlaneseq
        %v4652 = vshrl.u32 %v4651, 7
        %v4653 = vsub.s32 3, %v4652
        %v4654 = vrot.slane %v4637, %v4653
        %v4723 = vunpack.c.l.b16 %v4573
        %v4724 = vunpack.c.h.b16 %v4573
        %v4725 = vunpack.c.l.b16 %v4574
        %v4726 = vunpack.c.h.b16 %v4574
        %v4727 = vunpack.c.l.b16 %v4575
        %v4728 = vunpack.c.h.b16 %v4575
        %v4729 = vunpack.c.l.b16 %v4576
        %v4730 = vunpack.c.h.b16 %v4576
        %v4731 = vunpack.c.l.b16 %v4577
        %v4732 = vunpack.c.h.b16 %v4577
        %v4733 = vunpack.c.l.b16 %v4578
        %v4734 = vunpack.c.h.b16 %v4578
        %v4735 = vunpack.c.l.b16 %v4579
        %v4736 = vunpack.c.h.b16 %v4579
        %v4737 = vunpack.c.l.b16 %v4580
        %v4738 = vunpack.c.h.b16 %v4580
        %v4739 = vunpack.c.l.b16 %v4581
        %v4740 = vunpack.c.h.b16 %v4581
        %v4741 = vunpack.c.l.b16 %v4582
        %v4742 = vunpack.c.h.b16 %v4582
        %v4743 = vunpack.c.l.b16 %v4583
        %v4744 = vunpack.c.h.b16 %v4583
        %v4745 = vunpack.c.l.b16 %v4584
        %v4746 = vunpack.c.h.b16 %v4584
        %v4747 = vunpack.c.l.b16 %v4585
        %v4748 = vunpack.c.h.b16 %v4585
        %v4749 = vunpack.c.l.b16 %v4586
        %v4750 = vunpack.c.h.b16 %v4586
        %v4751 = vunpack.c.l.b16 %v4587
        %v4752 = vunpack.c.h.b16 %v4587
        %v4753 = vunpack.c.l.b16 %v4588
        %v4754 = vunpack.c.h.b16 %v4588
        %v4755 = vunpack.c.l.b16 %v4589
        %v4756 = vunpack.c.h.b16 %v4589
        %v4757 = vunpack.c.l.b16 %v4590
        %v4758 = vunpack.c.h.b16 %v4590
        %v4759 = vunpack.c.l.b16 %v4591
        %v4760 = vunpack.c.h.b16 %v4591
        %v4761 = vunpack.c.l.b16 %v4592
        %v4762 = vunpack.c.h.b16 %v4592
        %v4763 = vunpack.c.l.b16 %v4593
        %v4764 = vunpack.c.h.b16 %v4593
        %v4765 = vunpack.c.l.b16 %v4594
        %v4766 = vunpack.c.h.b16 %v4594
        %v4767 = vunpack.c.l.b16 %v4595
        %v4768 = vunpack.c.h.b16 %v4595
        %v4769 = vunpack.c.l.b16 %v4596
        %v4770 = vunpack.c.h.b16 %v4596
        %v4771 = vunpack.c.l.b16 %v4597
        %v4772 = vunpack.c.h.b16 %v4597
        %v4773 = vunpack.c.l.b16 %v4598
        %v4774 = vunpack.c.h.b16 %v4598
        %v4775 = vunpack.c.l.b16 %v4599
        %v4776 = vunpack.c.h.b16 %v4599
        %v4777 = vunpack.c.l.b16 %v4600
        %v4778 = vunpack.c.h.b16 %v4600
        %v4779 = vunpack.c.l.b16 %v4601
        %v4780 = vunpack.c.h.b16 %v4601
        %v4781 = vunpack.c.l.b16 %v4602
        %v4782 = vunpack.c.h.b16 %v4602
        %v4783 = vunpack.c.l.b16 %v4603
        %v4784 = vunpack.c.h.b16 %v4603
        %v4785 = vunpack.c.l.b16 %v4604
        %v4786 = vunpack.c.h.b16 %v4604
        %v4787 = vunpack.c.l.b16 %v4605
        %v4788 = vunpack.c.h.b16 %v4605
        %v4789 = vunpack.c.l.b16 %v4606
        %v4790 = vunpack.c.h.b16 %v4606
        %v4791 = vunpack.c.l.b16 %v4607
        %v4792 = vunpack.c.h.b16 %v4607
        %v4793 = vunpack.c.l.b16 %v4608
        %v4794 = vunpack.c.h.b16 %v4608
        %v4795 = vunpack.c.l.b16 %v4609
        %v4796 = vunpack.c.h.b16 %v4609
        %v4797 = vunpack.c.l.b16 %v4610
        %v4798 = vunpack.c.h.b16 %v4610
        %v4799 = vunpack.c.l.b16 %v4611
        %v4800 = vunpack.c.h.b16 %v4611
        %v4801 = vunpack.c.l.b16 %v4612
        %v4802 = vunpack.c.h.b16 %v4612
        %v4803 = vunpack.c.l.b16 %v4613
        %v4804 = vunpack.c.h.b16 %v4613
        %v4805 = vunpack.c.l.b16 %v4614
        %v4806 = vunpack.c.h.b16 %v4614
        %v4807 = vunpack.c.l.b16 %v4615
        %v4808 = vunpack.c.h.b16 %v4615
        %v4809 = vunpack.c.l.b16 %v4616
        %v4810 = vunpack.c.h.b16 %v4616
        %v4811 = vunpack.c.l.b16 %v4617
        %v4812 = vunpack.c.h.b16 %v4617
        %v4813 = vunpack.c.l.b16 %v4618
        %v4814 = vunpack.c.h.b16 %v4618
        %v4815 = vunpack.c.l.b16 %v4619
        %v4816 = vunpack.c.h.b16 %v4619
        %v4817 = vunpack.c.l.b16 %v4620
        %v4818 = vunpack.c.h.b16 %v4620
        %v4819 = vunpack.c.l.b16 %v4621
        %v4820 = vunpack.c.h.b16 %v4621
        %v4821 = vunpack.c.l.b16 %v4622
        %v4822 = vunpack.c.h.b16 %v4622
        %v4823 = vunpack.c.l.b16 %v4623
        %v4824 = vunpack.c.h.b16 %v4623
        %v4825 = vunpack.c.l.b16 %v4624
        %v4826 = vunpack.c.h.b16 %v4624
        %v4827 = vunpack.c.l.b16 %v4625
        %v4828 = vunpack.c.h.b16 %v4625
        %v4829 = vunpack.c.l.b16 %v4626
        %v4830 = vunpack.c.h.b16 %v4626
        %v4831 = vunpack.c.l.b16 %v4627
        %v4832 = vunpack.c.h.b16 %v4627
        %v4833 = vunpack.c.l.b16 %v4628
        %v4834 = vunpack.c.h.b16 %v4628
        %v4835 = vunpack.c.l.b16 %v4629
        %v4836 = vunpack.c.h.b16 %v4629
        %v4837 = vunpack.c.l.b16 %v4630
        %v4838 = vunpack.c.h.b16 %v4630
        %v4839 = vunpack.c.l.b16 %v4631
        %v4840 = vunpack.c.h.b16 %v4631
        %v4841 = vunpack.c.l.b16 %v4632
        %v4842 = vunpack.c.h.b16 %v4632
        %v4843 = vunpack.c.l.b16 %v4633
        %v4844 = vunpack.c.h.b16 %v4633
        %v4845 = vunpack.c.l.b16 %v4634
        %v4846 = vunpack.c.h.b16 %v4634
        %v4847 = vunpack.c.l.b16 %v4635
        %v4848 = vunpack.c.h.b16 %v4635
        %v4849 = vunpack.c.l.b16 %v4636
        %v4850 = vunpack.c.h.b16 %v4636
        %v4851 = vpack.c.b16 %v4727, %v4723
        %v4852 = vpack.c.b16 %v4728, %v4724
        %v4853 = vpack.c.b16 %v4729, %v4725
        %v4854 = vpack.c.b16 %v4730, %v4726
        %v4855 = vpack.c.b16 %v4735, %v4731
        %v4856 = vpack.c.b16 %v4736, %v4732
        %v4857 = vpack.c.b16 %v4737, %v4733
        %v4858 = vpack.c.b16 %v4738, %v4734
        %v4859 = vpack.c.b16 %v4743, %v4739
        %v4860 = vpack.c.b16 %v4744, %v4740
        %v4861 = vpack.c.b16 %v4745, %v4741
        %v4862 = vpack.c.b16 %v4746, %v4742
        %v4863 = vpack.c.b16 %v4751, %v4747
        %v4864 = vpack.c.b16 %v4752, %v4748
        %v4865 = vpack.c.b16 %v4753, %v4749
        %v4866 = vpack.c.b16 %v4754, %v4750
        %v4867 = vpack.c.b16 %v4759, %v4755
        %v4868 = vpack.c.b16 %v4760, %v4756
        %v4869 = vpack.c.b16 %v4761, %v4757
        %v4870 = vpack.c.b16 %v4762, %v4758
        %v4871 = vpack.c.b16 %v4767, %v4763
        %v4872 = vpack.c.b16 %v4768, %v4764
        %v4873 = vpack.c.b16 %v4769, %v4765
        %v4874 = vpack.c.b16 %v4770, %v4766
        %v4875 = vpack.c.b16 %v4775, %v4771
        %v4876 = vpack.c.b16 %v4776, %v4772
        %v4877 = vpack.c.b16 %v4777, %v4773
        %v4878 = vpack.c.b16 %v4778, %v4774
        %v4879 = vpack.c.b16 %v4783, %v4779
        %v4880 = vpack.c.b16 %v4784, %v4780
        %v4881 = vpack.c.b16 %v4785, %v4781
        %v4882 = vpack.c.b16 %v4786, %v4782
        %v4883 = vpack.c.b16 %v4791, %v4787
        %v4884 = vpack.c.b16 %v4792, %v4788
        %v4885 = vpack.c.b16 %v4793, %v4789
        %v4886 = vpack.c.b16 %v4794, %v4790
        %v4887 = vpack.c.b16 %v4799, %v4795
        %v4888 = vpack.c.b16 %v4800, %v4796
        %v4889 = vpack.c.b16 %v4801, %v4797
        %v4890 = vpack.c.b16 %v4802, %v4798
        %v4891 = vpack.c.b16 %v4807, %v4803
        %v4892 = vpack.c.b16 %v4808, %v4804
        %v4893 = vpack.c.b16 %v4809, %v4805
        %v4894 = vpack.c.b16 %v4810, %v4806
        %v4895 = vpack.c.b16 %v4815, %v4811
        %v4896 = vpack.c.b16 %v4816, %v4812
        %v4897 = vpack.c.b16 %v4817, %v4813
        %v4898 = vpack.c.b16 %v4818, %v4814
        %v4899 = vpack.c.b16 %v4823, %v4819
        %v4900 = vpack.c.b16 %v4824, %v4820
        %v4901 = vpack.c.b16 %v4825, %v4821
        %v4902 = vpack.c.b16 %v4826, %v4822
        %v4903 = vpack.c.b16 %v4831, %v4827
        %v4904 = vpack.c.b16 %v4832, %v4828
        %v4905 = vpack.c.b16 %v4833, %v4829
        %v4906 = vpack.c.b16 %v4834, %v4830
        %v4907 = vpack.c.b16 %v4839, %v4835
        %v4908 = vpack.c.b16 %v4840, %v4836
        %v4909 = vpack.c.b16 %v4841, %v4837
        %v4910 = vpack.c.b16 %v4842, %v4838
        %v4911 = vpack.c.b16 %v4847, %v4843
        %v4912 = vpack.c.b16 %v4848, %v4844
        %v4913 = vpack.c.b16 %v4849, %v4845
        %v4914 = vpack.c.b16 %v4850, %v4846
        %4979 = vmatprep.subr.bf16.mxu0 %v4880
        %4980 = vmatpush1.bf16.msra.mxu0 %v4879
        %4981 = vmatprep.subr.bf16.mxu0 %v4876
        %4982 = vmatpush1.bf16.msra.mxu0 %v4875
        %4983 = vmatprep.subr.bf16.mxu0 %v4872
        %4984 = vmatpush1.bf16.msra.mxu0 %v4871
        %4985 = vmatprep.subr.bf16.mxu0 %v4868
        %4986 = vmatpush1.bf16.msra.mxu0 %v4867
        %4987 = vmatprep.subr.bf16.mxu0 %v4864
        %4988 = vmatpush1.bf16.msra.mxu0 %v4863
        %4989 = vmatprep.subr.bf16.mxu0 %v4860
        %4990 = vmatpush1.bf16.msra.mxu0 %v4859
        %4991 = vmatprep.subr.bf16.mxu0 %v4856
        %4992 = vmatpush1.bf16.msra.mxu0 %v4855
        %4993 = vmatprep.subr.bf16.mxu0 %v4852
        %4994 = vmatpush1.bf16.msra.mxu0 %v4851
        %4995 = vmatprep.subr.bf16.mxu0 %v4912
        %4996 = vmatpush2.bf16.msra.mxu0 %v4911
        %4997 = vmatprep.subr.bf16.mxu0 %v4908
        %4998 = vmatpush2.bf16.msra.mxu0 %v4907
        %4999 = vmatprep.subr.bf16.mxu0 %v4904
        %5000 = vmatpush2.bf16.msra.mxu0 %v4903
        %5001 = vmatprep.subr.bf16.mxu0 %v4900
        %5002 = vmatpush2.bf16.msra.mxu0 %v4899
        %5003 = vmatprep.subr.bf16.mxu0 %v4896
        %5004 = vmatpush2.bf16.msra.mxu0 %v4895
        %5005 = vmatprep.subr.bf16.mxu0 %v4892
        %5006 = vmatpush2.bf16.msra.mxu0 %v4891
        %5007 = vmatprep.subr.bf16.mxu0 %v4888
        %5008 = vmatpush2.bf16.msra.mxu0 %v4887
        %5009 = vmatprep.subr.bf16.mxu0 %v4884
        %5010 = vmatpush2.bf16.msra.mxu0 %v4883
        %5011 = vmatprep.mubr.bf16.mxu0 %v4542
        %5012 = vmatmul.mubr.bf16.gmra.mxu0 %v4541
        %v5013 = vpop.f32.mrf.mxu0
        %v5014 = vadd.f32 %v4642, %v5013
        %v5015 = vpop.f32.mrf.mxu0
        %v5016 = vadd.f32 %v4646, %v5015
        %v5017 = vpop.f32.mrf.mxu0
        %v5018 = vadd.f32 %v4642, %v5017
        %v5019 = vpop.f32.mrf.mxu0
        %v5020 = vadd.f32 %v4646, %v5019
        %5021 = vmatprep.mubr.bf16.mxu0 %v4544
        %5022 = vmatmul.mubr.bf16.gmra.mxu0 %v4543
        %v5023 = vpop.f32.mrf.mxu0
        %v5024 = vadd.f32 %v4642, %v5023
        %v5025 = vpop.f32.mrf.mxu0
        %v5026 = vadd.f32 %v4646, %v5025
        %v5027 = vpop.f32.mrf.mxu0
        %v5028 = vadd.f32 %v4642, %v5027
        %v5029 = vpop.f32.mrf.mxu0
        %v5030 = vadd.f32 %v4646, %v5029
        %5031 = vmatprep.mubr.bf16.mxu0 %v4546
        %5032 = vmatmul.mubr.bf16.gmra.mxu0 %v4545
        %v5033 = vpop.f32.mrf.mxu0
        %v5034 = vadd.f32 %v4642, %v5033
        %v5035 = vpop.f32.mrf.mxu0
        %v5036 = vadd.f32 %v4646, %v5035
        %v5037 = vpop.f32.mrf.mxu0
        %v5038 = vadd.f32 %v4642, %v5037
        %v5039 = vpop.f32.mrf.mxu0
        %v5040 = vadd.f32 %v4646, %v5039
        %5041 = vmatprep.mubr.bf16.mxu0 %v4548
        %5042 = vmatmul.mubr.bf16.gmra.mxu0 %v4547
        %v5043 = vpop.f32.mrf.mxu0
        %v5044 = vadd.f32 %v4642, %v5043
        %v5045 = vpop.f32.mrf.mxu0
        %v5046 = vadd.f32 %v4646, %v5045
        %v5047 = vpop.f32.mrf.mxu0
        %v5048 = vadd.f32 %v4642, %v5047
        %v5049 = vpop.f32.mrf.mxu0
        %v5050 = vadd.f32 %v4646, %v5049
        %5051 = vmatprep.mubr.bf16.mxu0 %v4550
        %5052 = vmatmul.mubr.bf16.gmra.mxu0 %v4549
        %v5053 = vpop.f32.mrf.mxu0
        %v5054 = vadd.f32 %v4642, %v5053
        %v5055 = vpop.f32.mrf.mxu0
        %v5056 = vadd.f32 %v4646, %v5055
        %v5057 = vpop.f32.mrf.mxu0
        %v5058 = vadd.f32 %v4642, %v5057
        %v5059 = vpop.f32.mrf.mxu0
        %v5060 = vadd.f32 %v4646, %v5059
        %5061 = vmatprep.mubr.bf16.mxu0 %v4552
        %5062 = vmatmul.mubr.bf16.gmra.mxu0 %v4551
        %v5063 = vpop.f32.mrf.mxu0
        %v5064 = vadd.f32 %v4642, %v5063
        %v5065 = vpop.f32.mrf.mxu0
        %v5066 = vadd.f32 %v4646, %v5065
        %v5067 = vpop.f32.mrf.mxu0
        %v5068 = vadd.f32 %v4642, %v5067
        %v5069 = vpop.f32.mrf.mxu0
        %v5070 = vadd.f32 %v4646, %v5069
        %5071 = vmatprep.mubr.bf16.mxu0 %v4554
        %5072 = vmatmul.mubr.bf16.gmra.mxu0 %v4553
        %v5073 = vpop.f32.mrf.mxu0
        %v5074 = vadd.f32 %v4642, %v5073
        %v5075 = vpop.f32.mrf.mxu0
        %v5076 = vadd.f32 %v4646, %v5075
        %v5077 = vpop.f32.mrf.mxu0
        %v5078 = vadd.f32 %v4642, %v5077
        %v5079 = vpop.f32.mrf.mxu0
        %v5080 = vadd.f32 %v4646, %v5079
        %5081 = vmatprep.mubr.bf16.mxu0 %v4556
        %5082 = vmatmul.mubr.bf16.gmra.mxu0 %v4555
        %v5083 = vpop.f32.mrf.mxu0
        %v5084 = vadd.f32 %v4642, %v5083
        %v5085 = vpop.f32.mrf.mxu0
        %v5086 = vadd.f32 %v4646, %v5085
        %v5087 = vpop.f32.mrf.mxu0
        %v5088 = vadd.f32 %v4642, %v5087
        %v5089 = vpop.f32.mrf.mxu0
        %v5090 = vadd.f32 %v4646, %v5089
        %5091 = vmatprep.mubr.bf16.mxu0 %v4558
        %5092 = vmatmul.mubr.bf16.gmra.mxu0 %v4557
        %v5093 = vpop.f32.mrf.mxu0
        %v5094 = vadd.f32 %v4642, %v5093
        %v5095 = vpop.f32.mrf.mxu0
        %v5096 = vadd.f32 %v4646, %v5095
        %v5097 = vpop.f32.mrf.mxu0
        %v5098 = vadd.f32 %v4642, %v5097
        %v5099 = vpop.f32.mrf.mxu0
        %v5100 = vadd.f32 %v4646, %v5099
        %5101 = vmatprep.mubr.bf16.mxu0 %v4560
        %5102 = vmatmul.mubr.bf16.gmra.mxu0 %v4559
        %v5103 = vpop.f32.mrf.mxu0
        %v5104 = vadd.f32 %v4642, %v5103
        %v5105 = vpop.f32.mrf.mxu0
        %v5106 = vadd.f32 %v4646, %v5105
        %v5107 = vpop.f32.mrf.mxu0
        %v5108 = vadd.f32 %v4642, %v5107
        %v5109 = vpop.f32.mrf.mxu0
        %v5110 = vadd.f32 %v4646, %v5109
        %5111 = vmatprep.mubr.bf16.mxu0 %v4562
        %5112 = vmatmul.mubr.bf16.gmra.mxu0 %v4561
        %v5113 = vpop.f32.mrf.mxu0
        %v5114 = vadd.f32 %v4642, %v5113
        %v5115 = vpop.f32.mrf.mxu0
        %v5116 = vadd.f32 %v4646, %v5115
        %v5117 = vpop.f32.mrf.mxu0
        %v5118 = vadd.f32 %v4642, %v5117
        %v5119 = vpop.f32.mrf.mxu0
        %v5120 = vadd.f32 %v4646, %v5119
        %5121 = vmatprep.mubr.bf16.mxu0 %v4564
        %5122 = vmatmul.mubr.bf16.gmra.mxu0 %v4563
        %v5123 = vpop.f32.mrf.mxu0
        %v5124 = vadd.f32 %v4642, %v5123
        %v5125 = vpop.f32.mrf.mxu0
        %v5126 = vadd.f32 %v4646, %v5125
        %v5127 = vpop.f32.mrf.mxu0
        %v5128 = vadd.f32 %v4642, %v5127
        %v5129 = vpop.f32.mrf.mxu0
        %v5130 = vadd.f32 %v4646, %v5129
        %5131 = vmatprep.mubr.bf16.mxu0 %v4566
        %5132 = vmatmul.mubr.bf16.gmra.mxu0 %v4565
        %v5133 = vpop.f32.mrf.mxu0
        %v5134 = vadd.f32 %v4642, %v5133
        %v5135 = vpop.f32.mrf.mxu0
        %v5136 = vadd.f32 %v4646, %v5135
        %v5137 = vpop.f32.mrf.mxu0
        %v5138 = vadd.f32 %v4642, %v5137
        %v5139 = vpop.f32.mrf.mxu0
        %v5140 = vadd.f32 %v4646, %v5139
        %5141 = vmatprep.mubr.bf16.mxu0 %v4568
        %5142 = vmatmul.mubr.bf16.gmra.mxu0 %v4567
        %v5143 = vpop.f32.mrf.mxu0
        %v5144 = vadd.f32 %v4642, %v5143
        %v5145 = vpop.f32.mrf.mxu0
        %v5146 = vadd.f32 %v4646, %v5145
        %v5147 = vpop.f32.mrf.mxu0
        %v5148 = vadd.f32 %v4642, %v5147
        %v5149 = vpop.f32.mrf.mxu0
        %v5150 = vadd.f32 %v4646, %v5149
        %5151 = vmatprep.mubr.bf16.mxu0 %v4570
        %5152 = vmatmul.mubr.bf16.gmra.mxu0 %v4569
        %v5153 = vpop.f32.mrf.mxu0
        %v5154 = vadd.f32 %v4642, %v5153
        %v5155 = vpop.f32.mrf.mxu0
        %v5156 = vadd.f32 %v4646, %v5155
        %v5157 = vpop.f32.mrf.mxu0
        %v5158 = vadd.f32 %v4642, %v5157
        %v5159 = vpop.f32.mrf.mxu0
        %v5160 = vadd.f32 %v4646, %v5159
        %5161 = vmatprep.mubr.bf16.mxu0 %v4572
        %5162 = vmatmul.mubr.bf16.gmra.mxu0 %v4571
        %v5163 = vpop.f32.mrf.mxu0
        %v5164 = vadd.f32 %v4642, %v5163
        %v5165 = vpop.f32.mrf.mxu0
        %v5166 = vadd.f32 %v4646, %v5165
        %v5167 = vpop.f32.mrf.mxu0
        %v5168 = vadd.f32 %v4642, %v5167
        %v5169 = vpop.f32.mrf.mxu0
        %v5170 = vadd.f32 %v4646, %v5169
        %5171 = vdwg.mxu0
        %5172 = vmatprep.subr.bf16.mxu0 %v4882
        %5173 = vmatpush1.bf16.msra.mxu0 %v4881
        %5174 = vmatprep.subr.bf16.mxu0 %v4878
        %5175 = vmatpush1.bf16.msra.mxu0 %v4877
        %5176 = vmatprep.subr.bf16.mxu0 %v4874
        %5177 = vmatpush1.bf16.msra.mxu0 %v4873
        %5178 = vmatprep.subr.bf16.mxu0 %v4870
        %5179 = vmatpush1.bf16.msra.mxu0 %v4869
        %5180 = vmatprep.subr.bf16.mxu0 %v4866
        %5181 = vmatpush1.bf16.msra.mxu0 %v4865
        %5182 = vmatprep.subr.bf16.mxu0 %v4862
        %5183 = vmatpush1.bf16.msra.mxu0 %v4861
        %5184 = vmatprep.subr.bf16.mxu0 %v4858
        %5185 = vmatpush1.bf16.msra.mxu0 %v4857
        %5186 = vmatprep.subr.bf16.mxu0 %v4854
        %5187 = vmatpush1.bf16.msra.mxu0 %v4853
        %5188 = vmatprep.subr.bf16.mxu0 %v4914
        %5189 = vmatpush2.bf16.msra.mxu0 %v4913
        %5190 = vmatprep.subr.bf16.mxu0 %v4910
        %5191 = vmatpush2.bf16.msra.mxu0 %v4909
        %5192 = vmatprep.subr.bf16.mxu0 %v4906
        %5193 = vmatpush2.bf16.msra.mxu0 %v4905
        %5194 = vmatprep.subr.bf16.mxu0 %v4902
        %5195 = vmatpush2.bf16.msra.mxu0 %v4901
        %5196 = vmatprep.subr.bf16.mxu0 %v4898
        %5197 = vmatpush2.bf16.msra.mxu0 %v4897
        %5198 = vmatprep.subr.bf16.mxu0 %v4894
        %5199 = vmatpush2.bf16.msra.mxu0 %v4893
        %5200 = vmatprep.subr.bf16.mxu0 %v4890
        %5201 = vmatpush2.bf16.msra.mxu0 %v4889
        %5202 = vmatprep.subr.bf16.mxu0 %v4886
        %5203 = vmatpush2.bf16.msra.mxu0 %v4885
        %5204 = vmatprep.mubr.bf16.mxu0 %v4542
        %5205 = vmatmul.mubr.bf16.gmra.mxu0 %v4541
        %v5206 = vpop.f32.mrf.mxu0
        %v5207 = vadd.f32 %v4650, %v5206
        %v5208 = vpop.f32.mrf.mxu0
        %v5209 = vadd.f32 %v4654, %v5208
        %v5210 = vpop.f32.mrf.mxu0
        %v5211 = vadd.f32 %v4650, %v5210
        %v5212 = vpop.f32.mrf.mxu0
        %v5213 = vadd.f32 %v4654, %v5212
        %5214 = vmatprep.mubr.bf16.mxu0 %v4544
        %5215 = vmatmul.mubr.bf16.gmra.mxu0 %v4543
        %v5216 = vpop.f32.mrf.mxu0
        %v5217 = vadd.f32 %v4650, %v5216
        %v5218 = vpop.f32.mrf.mxu0
        %v5219 = vadd.f32 %v4654, %v5218
        %v5220 = vpop.f32.mrf.mxu0
        %v5221 = vadd.f32 %v4650, %v5220
        %v5222 = vpop.f32.mrf.mxu0
        %v5223 = vadd.f32 %v4654, %v5222
        %5224 = vmatprep.mubr.bf16.mxu0 %v4546
        %5225 = vmatmul.mubr.bf16.gmra.mxu0 %v4545
        %v5226 = vpop.f32.mrf.mxu0
        %v5227 = vadd.f32 %v4650, %v5226
        %v5228 = vpop.f32.mrf.mxu0
        %v5229 = vadd.f32 %v4654, %v5228
        %v5230 = vpop.f32.mrf.mxu0
        %v5231 = vadd.f32 %v4650, %v5230
        %v5232 = vpop.f32.mrf.mxu0
        %v5233 = vadd.f32 %v4654, %v5232
        %5234 = vmatprep.mubr.bf16.mxu0 %v4548
        %5235 = vmatmul.mubr.bf16.gmra.mxu0 %v4547
        %v5236 = vpop.f32.mrf.mxu0
        %v5237 = vadd.f32 %v4650, %v5236
        %v5238 = vpop.f32.mrf.mxu0
        %v5239 = vadd.f32 %v4654, %v5238
        %v5240 = vpop.f32.mrf.mxu0
        %v5241 = vadd.f32 %v4650, %v5240
        %v5242 = vpop.f32.mrf.mxu0
        %v5243 = vadd.f32 %v4654, %v5242
        %5244 = vmatprep.mubr.bf16.mxu0 %v4550
        %5245 = vmatmul.mubr.bf16.gmra.mxu0 %v4549
        %v5246 = vpop.f32.mrf.mxu0
        %v5247 = vadd.f32 %v4650, %v5246
        %v5248 = vpop.f32.mrf.mxu0
        %v5249 = vadd.f32 %v4654, %v5248
        %v5250 = vpop.f32.mrf.mxu0
        %v5251 = vadd.f32 %v4650, %v5250
        %v5252 = vpop.f32.mrf.mxu0
        %v5253 = vadd.f32 %v4654, %v5252
        %5254 = vmatprep.mubr.bf16.mxu0 %v4552
        %5255 = vmatmul.mubr.bf16.gmra.mxu0 %v4551
        %v5256 = vpop.f32.mrf.mxu0
        %v5257 = vadd.f32 %v4650, %v5256
        %v5258 = vpop.f32.mrf.mxu0
        %v5259 = vadd.f32 %v4654, %v5258
        %v5260 = vpop.f32.mrf.mxu0
        %v5261 = vadd.f32 %v4650, %v5260
        %v5262 = vpop.f32.mrf.mxu0
        %v5263 = vadd.f32 %v4654, %v5262
        %5264 = vmatprep.mubr.bf16.mxu0 %v4554
        %5265 = vmatmul.mubr.bf16.gmra.mxu0 %v4553
        %v5266 = vpop.f32.mrf.mxu0
        %v5267 = vadd.f32 %v4650, %v5266
        %v5268 = vpop.f32.mrf.mxu0
        %v5269 = vadd.f32 %v4654, %v5268
        %v5270 = vpop.f32.mrf.mxu0
        %v5271 = vadd.f32 %v4650, %v5270
        %v5272 = vpop.f32.mrf.mxu0
        %v5273 = vadd.f32 %v4654, %v5272
        %5274 = vmatprep.mubr.bf16.mxu0 %v4556
        %5275 = vmatmul.mubr.bf16.gmra.mxu0 %v4555
        %v5276 = vpop.f32.mrf.mxu0
        %v5277 = vadd.f32 %v4650, %v5276
        %v5278 = vpop.f32.mrf.mxu0
        %v5279 = vadd.f32 %v4654, %v5278
        %v5280 = vpop.f32.mrf.mxu0
        %v5281 = vadd.f32 %v4650, %v5280
        %v5282 = vpop.f32.mrf.mxu0
        %v5283 = vadd.f32 %v4654, %v5282
        %5284 = vmatprep.mubr.bf16.mxu0 %v4558
        %5285 = vmatmul.mubr.bf16.gmra.mxu0 %v4557
        %v5286 = vpop.f32.mrf.mxu0
        %v5287 = vadd.f32 %v4650, %v5286
        %v5288 = vpop.f32.mrf.mxu0
        %v5289 = vadd.f32 %v4654, %v5288
        %v5290 = vpop.f32.mrf.mxu0
        %v5291 = vadd.f32 %v4650, %v5290
        %v5292 = vpop.f32.mrf.mxu0
        %v5293 = vadd.f32 %v4654, %v5292
        %5294 = vmatprep.mubr.bf16.mxu0 %v4560
        %5295 = vmatmul.mubr.bf16.gmra.mxu0 %v4559
        %v5296 = vpop.f32.mrf.mxu0
        %v5297 = vadd.f32 %v4650, %v5296
        %v5298 = vpop.f32.mrf.mxu0
        %v5299 = vadd.f32 %v4654, %v5298
        %v5300 = vpop.f32.mrf.mxu0
        %v5301 = vadd.f32 %v4650, %v5300
        %v5302 = vpop.f32.mrf.mxu0
        %v5303 = vadd.f32 %v4654, %v5302
        %5304 = vmatprep.mubr.bf16.mxu0 %v4562
        %5305 = vmatmul.mubr.bf16.gmra.mxu0 %v4561
        %v5306 = vpop.f32.mrf.mxu0
        %v5307 = vadd.f32 %v4650, %v5306
        %v5308 = vpop.f32.mrf.mxu0
        %v5309 = vadd.f32 %v4654, %v5308
        %v5310 = vpop.f32.mrf.mxu0
        %v5311 = vadd.f32 %v4650, %v5310
        %v5312 = vpop.f32.mrf.mxu0
        %v5313 = vadd.f32 %v4654, %v5312
        %5314 = vmatprep.mubr.bf16.mxu0 %v4564
        %5315 = vmatmul.mubr.bf16.gmra.mxu0 %v4563
        %v5316 = vpop.f32.mrf.mxu0
        %v5317 = vadd.f32 %v4650, %v5316
        %v5318 = vpop.f32.mrf.mxu0
        %v5319 = vadd.f32 %v4654, %v5318
        %v5320 = vpop.f32.mrf.mxu0
        %v5321 = vadd.f32 %v4650, %v5320
        %v5322 = vpop.f32.mrf.mxu0
        %v5323 = vadd.f32 %v4654, %v5322
        %5324 = vmatprep.mubr.bf16.mxu0 %v4566
        %5325 = vmatmul.mubr.bf16.gmra.mxu0 %v4565
        %v5326 = vpop.f32.mrf.mxu0
        %v5327 = vadd.f32 %v4650, %v5326
        %v5328 = vpop.f32.mrf.mxu0
        %v5329 = vadd.f32 %v4654, %v5328
        %v5330 = vpop.f32.mrf.mxu0
        %v5331 = vadd.f32 %v4650, %v5330
        %v5332 = vpop.f32.mrf.mxu0
        %v5333 = vadd.f32 %v4654, %v5332
        %5334 = vmatprep.mubr.bf16.mxu0 %v4568
        %5335 = vmatmul.mubr.bf16.gmra.mxu0 %v4567
        %v5336 = vpop.f32.mrf.mxu0
        %v5337 = vadd.f32 %v4650, %v5336
        %v5338 = vpop.f32.mrf.mxu0
        %v5339 = vadd.f32 %v4654, %v5338
        %v5340 = vpop.f32.mrf.mxu0
        %v5341 = vadd.f32 %v4650, %v5340
        %v5342 = vpop.f32.mrf.mxu0
        %v5343 = vadd.f32 %v4654, %v5342
        %5344 = vmatprep.mubr.bf16.mxu0 %v4570
        %5345 = vmatmul.mubr.bf16.gmra.mxu0 %v4569
        %v5346 = vpop.f32.mrf.mxu0
        %v5347 = vadd.f32 %v4650, %v5346
        %v5348 = vpop.f32.mrf.mxu0
        %v5349 = vadd.f32 %v4654, %v5348
        %v5350 = vpop.f32.mrf.mxu0
        %v5351 = vadd.f32 %v4650, %v5350
        %v5352 = vpop.f32.mrf.mxu0
        %v5353 = vadd.f32 %v4654, %v5352
        %5354 = vmatprep.mubr.bf16.mxu0 %v4572
        %5355 = vmatmul.mubr.bf16.gmra.mxu0 %v4571
        %v5356 = vpop.f32.mrf.mxu0
        %v5357 = vadd.f32 %v4650, %v5356
        %v5358 = vpop.f32.mrf.mxu0
        %v5359 = vadd.f32 %v4654, %v5358
        %v5360 = vpop.f32.mrf.mxu0
        %v5361 = vadd.f32 %v4650, %v5360
        %v5362 = vpop.f32.mrf.mxu0
        %v5363 = vadd.f32 %v4654, %v5362
        %5364 = vdwg.mxu0
        %v5365 = vmax.f32 %v5014, 0.0
        %v5366 = vmax.f32 %v5016, 0.0
        %v5367 = vmax.f32 %v5207, 0.0
        %v5368 = vmax.f32 %v5209, 0.0
        %v5369 = vmax.f32 %v5018, 0.0
        %v5370 = vmax.f32 %v5020, 0.0
        %v5371 = vmax.f32 %v5211, 0.0
        %v5372 = vmax.f32 %v5213, 0.0
        %v5373 = vmax.f32 %v5024, 0.0
        %v5374 = vmax.f32 %v5026, 0.0
        %v5375 = vmax.f32 %v5217, 0.0
        %v5376 = vmax.f32 %v5219, 0.0
        %v5377 = vmax.f32 %v5028, 0.0
        %v5378 = vmax.f32 %v5030, 0.0
        %v5379 = vmax.f32 %v5221, 0.0
        %v5380 = vmax.f32 %v5223, 0.0
        %v5381 = vmax.f32 %v5034, 0.0
        %v5382 = vmax.f32 %v5036, 0.0
        %v5383 = vmax.f32 %v5227, 0.0
        %v5384 = vmax.f32 %v5229, 0.0
        %v5385 = vmax.f32 %v5038, 0.0
        %v5386 = vmax.f32 %v5040, 0.0
        %v5387 = vmax.f32 %v5231, 0.0
        %v5388 = vmax.f32 %v5233, 0.0
        %v5389 = vmax.f32 %v5044, 0.0
        %v5390 = vmax.f32 %v5046, 0.0
        %v5391 = vmax.f32 %v5237, 0.0
        %v5392 = vmax.f32 %v5239, 0.0
        %v5393 = vmax.f32 %v5048, 0.0
        %v5394 = vmax.f32 %v5050, 0.0
        %v5395 = vmax.f32 %v5241, 0.0
        %v5396 = vmax.f32 %v5243, 0.0
        %v5397 = vmax.f32 %v5054, 0.0
        %v5398 = vmax.f32 %v5056, 0.0
        %v5399 = vmax.f32 %v5247, 0.0
        %v5400 = vmax.f32 %v5249, 0.0
        %v5401 = vmax.f32 %v5058, 0.0
        %v5402 = vmax.f32 %v5060, 0.0
        %v5403 = vmax.f32 %v5251, 0.0
        %v5404 = vmax.f32 %v5253, 0.0
        %v5405 = vmax.f32 %v5064, 0.0
        %v5406 = vmax.f32 %v5066, 0.0
        %v5407 = vmax.f32 %v5257, 0.0
        %v5408 = vmax.f32 %v5259, 0.0
        %v5409 = vmax.f32 %v5068, 0.0
        %v5410 = vmax.f32 %v5070, 0.0
        %v5411 = vmax.f32 %v5261, 0.0
        %v5412 = vmax.f32 %v5263, 0.0
        %v5413 = vmax.f32 %v5074, 0.0
        %v5414 = vmax.f32 %v5076, 0.0
        %v5415 = vmax.f32 %v5267, 0.0
        %v5416 = vmax.f32 %v5269, 0.0
        %v5417 = vmax.f32 %v5078, 0.0
        %v5418 = vmax.f32 %v5080, 0.0
        %v5419 = vmax.f32 %v5271, 0.0
        %v5420 = vmax.f32 %v5273, 0.0
        %v5421 = vmax.f32 %v5084, 0.0
        %v5422 = vmax.f32 %v5086, 0.0
        %v5423 = vmax.f32 %v5277, 0.0
        %v5424 = vmax.f32 %v5279, 0.0
        %v5425 = vmax.f32 %v5088, 0.0
        %v5426 = vmax.f32 %v5090, 0.0
        %v5427 = vmax.f32 %v5281, 0.0
        %v5428 = vmax.f32 %v5283, 0.0
        %v5429 = vmax.f32 %v5094, 0.0
        %v5430 = vmax.f32 %v5096, 0.0
        %v5431 = vmax.f32 %v5287, 0.0
        %v5432 = vmax.f32 %v5289, 0.0
        %v5433 = vmax.f32 %v5098, 0.0
        %v5434 = vmax.f32 %v5100, 0.0
        %v5435 = vmax.f32 %v5291, 0.0
        %v5436 = vmax.f32 %v5293, 0.0
        %v5437 = vmax.f32 %v5104, 0.0
        %v5438 = vmax.f32 %v5106, 0.0
        %v5439 = vmax.f32 %v5297, 0.0
        %v5440 = vmax.f32 %v5299, 0.0
        %v5441 = vmax.f32 %v5108, 0.0
        %v5442 = vmax.f32 %v5110, 0.0
        %v5443 = vmax.f32 %v5301, 0.0
        %v5444 = vmax.f32 %v5303, 0.0
        %v5445 = vmax.f32 %v5114, 0.0
        %v5446 = vmax.f32 %v5116, 0.0
        %v5447 = vmax.f32 %v5307, 0.0
        %v5448 = vmax.f32 %v5309, 0.0
        %v5449 = vmax.f32 %v5118, 0.0
        %v5450 = vmax.f32 %v5120, 0.0
        %v5451 = vmax.f32 %v5311, 0.0
        %v5452 = vmax.f32 %v5313, 0.0
        %v5453 = vmax.f32 %v5124, 0.0
        %v5454 = vmax.f32 %v5126, 0.0
        %v5455 = vmax.f32 %v5317, 0.0
        %v5456 = vmax.f32 %v5319, 0.0
        %v5457 = vmax.f32 %v5128, 0.0
        %v5458 = vmax.f32 %v5130, 0.0
        %v5459 = vmax.f32 %v5321, 0.0
        %v5460 = vmax.f32 %v5323, 0.0
        %v5461 = vmax.f32 %v5134, 0.0
        %v5462 = vmax.f32 %v5136, 0.0
        %v5463 = vmax.f32 %v5327, 0.0
        %v5464 = vmax.f32 %v5329, 0.0
        %v5465 = vmax.f32 %v5138, 0.0
        %v5466 = vmax.f32 %v5140, 0.0
        %v5467 = vmax.f32 %v5331, 0.0
        %v5468 = vmax.f32 %v5333, 0.0
        %v5469 = vmax.f32 %v5144, 0.0
        %v5470 = vmax.f32 %v5146, 0.0
        %v5471 = vmax.f32 %v5337, 0.0
        %v5472 = vmax.f32 %v5339, 0.0
        %v5473 = vmax.f32 %v5148, 0.0
        %v5474 = vmax.f32 %v5150, 0.0
        %v5475 = vmax.f32 %v5341, 0.0
        %v5476 = vmax.f32 %v5343, 0.0
        %v5477 = vmax.f32 %v5154, 0.0
        %v5478 = vmax.f32 %v5156, 0.0
        %v5479 = vmax.f32 %v5347, 0.0
        %v5480 = vmax.f32 %v5349, 0.0
        %v5481 = vmax.f32 %v5158, 0.0
        %v5482 = vmax.f32 %v5160, 0.0
        %v5483 = vmax.f32 %v5351, 0.0
        %v5484 = vmax.f32 %v5353, 0.0
        %v5485 = vmax.f32 %v5164, 0.0
        %v5486 = vmax.f32 %v5166, 0.0
        %v5487 = vmax.f32 %v5357, 0.0
        %v5488 = vmax.f32 %v5359, 0.0
        %v5489 = vmax.f32 %v5168, 0.0
        %v5490 = vmax.f32 %v5170, 0.0
        %v5491 = vmax.f32 %v5361, 0.0
        %v5492 = vmax.f32 %v5363, 0.0
        %v5493 = vpack.c.bf16 %v5369, %v5365
        %v5494 = vpack.c.bf16 %v5370, %v5366
        %v5495 = vpack.c.bf16 %v5371, %v5367
        %v5496 = vpack.c.bf16 %v5372, %v5368
        %v5497 = vpack.c.bf16 %v5377, %v5373
        %v5498 = vpack.c.bf16 %v5378, %v5374
        %v5499 = vpack.c.bf16 %v5379, %v5375
        %v5500 = vpack.c.bf16 %v5380, %v5376
        %v5501 = vpack.c.bf16 %v5385, %v5381
        %v5502 = vpack.c.bf16 %v5386, %v5382
        %v5503 = vpack.c.bf16 %v5387, %v5383
        %v5504 = vpack.c.bf16 %v5388, %v5384
        %v5505 = vpack.c.bf16 %v5393, %v5389
        %v5506 = vpack.c.bf16 %v5394, %v5390
        %v5507 = vpack.c.bf16 %v5395, %v5391
        %v5508 = vpack.c.bf16 %v5396, %v5392
        %v5509 = vpack.c.bf16 %v5401, %v5397
        %v5510 = vpack.c.bf16 %v5402, %v5398
        %v5511 = vpack.c.bf16 %v5403, %v5399
        %v5512 = vpack.c.bf16 %v5404, %v5400
        %v5513 = vpack.c.bf16 %v5409, %v5405
        %v5514 = vpack.c.bf16 %v5410, %v5406
        %v5515 = vpack.c.bf16 %v5411, %v5407
        %v5516 = vpack.c.bf16 %v5412, %v5408
        %v5517 = vpack.c.bf16 %v5417, %v5413
        %v5518 = vpack.c.bf16 %v5418, %v5414
        %v5519 = vpack.c.bf16 %v5419, %v5415
        %v5520 = vpack.c.bf16 %v5420, %v5416
        %v5521 = vpack.c.bf16 %v5425, %v5421
        %v5522 = vpack.c.bf16 %v5426, %v5422
        %v5523 = vpack.c.bf16 %v5427, %v5423
        %v5524 = vpack.c.bf16 %v5428, %v5424
        %v5525 = vpack.c.bf16 %v5433, %v5429
        %v5526 = vpack.c.bf16 %v5434, %v5430
        %v5527 = vpack.c.bf16 %v5435, %v5431
        %v5528 = vpack.c.bf16 %v5436, %v5432
        %v5529 = vpack.c.bf16 %v5441, %v5437
        %v5530 = vpack.c.bf16 %v5442, %v5438
        %v5531 = vpack.c.bf16 %v5443, %v5439
        %v5532 = vpack.c.bf16 %v5444, %v5440
        %v5533 = vpack.c.bf16 %v5449, %v5445
        %v5534 = vpack.c.bf16 %v5450, %v5446
        %v5535 = vpack.c.bf16 %v5451, %v5447
        %v5536 = vpack.c.bf16 %v5452, %v5448
        %v5537 = vpack.c.bf16 %v5457, %v5453
        %v5538 = vpack.c.bf16 %v5458, %v5454
        %v5539 = vpack.c.bf16 %v5459, %v5455
        %v5540 = vpack.c.bf16 %v5460, %v5456
        %v5541 = vpack.c.bf16 %v5465, %v5461
        %v5542 = vpack.c.bf16 %v5466, %v5462
        %v5543 = vpack.c.bf16 %v5467, %v5463
        %v5544 = vpack.c.bf16 %v5468, %v5464
        %v5545 = vpack.c.bf16 %v5473, %v5469
        %v5546 = vpack.c.bf16 %v5474, %v5470
        %v5547 = vpack.c.bf16 %v5475, %v5471
        %v5548 = vpack.c.bf16 %v5476, %v5472
        %v5549 = vpack.c.bf16 %v5481, %v5477
        %v5550 = vpack.c.bf16 %v5482, %v5478
        %v5551 = vpack.c.bf16 %v5483, %v5479
        %v5552 = vpack.c.bf16 %v5484, %v5480
        %v5553 = vpack.c.bf16 %v5489, %v5485
        %v5554 = vpack.c.bf16 %v5490, %v5486
        %v5555 = vpack.c.bf16 %v5491, %v5487
        %v5556 = vpack.c.bf16 %v5492, %v5488
        %v5557 = vld [vmem:[#allocation4] sm:$0xff]
        %v5558 = vld [vmem:[#allocation4 + $0x8] sm:$0xff]
        %v5559 = vld [vmem:[#allocation4 + $0x10] sm:$0xff]
        %v5560 = vld [vmem:[#allocation4 + $0x18] sm:$0xff]
        %v5561 = vld [vmem:[#allocation4 + $0x20] sm:$0xff]
        %v5562 = vld [vmem:[#allocation4 + $0x28] sm:$0xff]
        %v5563 = vld [vmem:[#allocation4 + $0x30] sm:$0xff]
        %v5564 = vld [vmem:[#allocation4 + $0x38] sm:$0xff]
        %v5565 = vld [vmem:[#allocation4 + $0x40] sm:$0xff]
        %v5566 = vld [vmem:[#allocation4 + $0x48] sm:$0xff]
        %v5567 = vld [vmem:[#allocation4 + $0x50] sm:$0xff]
        %v5568 = vld [vmem:[#allocation4 + $0x58] sm:$0xff]
        %v5569 = vld [vmem:[#allocation4 + $0x60] sm:$0xff]
        %v5570 = vld [vmem:[#allocation4 + $0x68] sm:$0xff]
        %v5571 = vld [vmem:[#allocation4 + $0x70] sm:$0xff]
        %v5572 = vld [vmem:[#allocation4 + $0x78] sm:$0xff]
        %v5573 = vld [vmem:[#allocation4 + $0x80] sm:$0xff]
        %v5574 = vld [vmem:[#allocation4 + $0x88] sm:$0xff]
        %v5575 = vld [vmem:[#allocation4 + $0x90] sm:$0xff]
        %v5576 = vld [vmem:[#allocation4 + $0x98] sm:$0xff]
        %v5577 = vld [vmem:[#allocation4 + $0xa0] sm:$0xff]
        %v5578 = vld [vmem:[#allocation4 + $0xa8] sm:$0xff]
        %v5579 = vld [vmem:[#allocation4 + $0xb0] sm:$0xff]
        %v5580 = vld [vmem:[#allocation4 + $0xb8] sm:$0xff]
        %v5581 = vld [vmem:[#allocation4 + $0xc0] sm:$0xff]
        %v5582 = vld [vmem:[#allocation4 + $0xc8] sm:$0xff]
        %v5583 = vld [vmem:[#allocation4 + $0xd0] sm:$0xff]
        %v5584 = vld [vmem:[#allocation4 + $0xd8] sm:$0xff]
        %v5585 = vld [vmem:[#allocation4 + $0xe0] sm:$0xff]
        %v5586 = vld [vmem:[#allocation4 + $0xe8] sm:$0xff]
        %v5587 = vld [vmem:[#allocation4 + $0xf0] sm:$0xff]
        %v5588 = vld [vmem:[#allocation4 + $0xf8] sm:$0xff]
        %v5589 = vld [vmem:[#allocation4 + $0x100] sm:$0xff]
        %v5590 = vld [vmem:[#allocation4 + $0x108] sm:$0xff]
        %v5591 = vld [vmem:[#allocation4 + $0x110] sm:$0xff]
        %v5592 = vld [vmem:[#allocation4 + $0x118] sm:$0xff]
        %v5593 = vld [vmem:[#allocation4 + $0x120] sm:$0xff]
        %v5594 = vld [vmem:[#allocation4 + $0x128] sm:$0xff]
        %v5595 = vld [vmem:[#allocation4 + $0x130] sm:$0xff]
        %v5596 = vld [vmem:[#allocation4 + $0x138] sm:$0xff]
        %v5597 = vld [vmem:[#allocation4 + $0x140] sm:$0xff]
        %v5598 = vld [vmem:[#allocation4 + $0x148] sm:$0xff]
        %v5599 = vld [vmem:[#allocation4 + $0x150] sm:$0xff]
        %v5600 = vld [vmem:[#allocation4 + $0x158] sm:$0xff]
        %v5601 = vld [vmem:[#allocation4 + $0x160] sm:$0xff]
        %v5602 = vld [vmem:[#allocation4 + $0x168] sm:$0xff]
        %v5603 = vld [vmem:[#allocation4 + $0x170] sm:$0xff]
        %v5604 = vld [vmem:[#allocation4 + $0x178] sm:$0xff]
        %v5605 = vld [vmem:[#allocation4 + $0x180] sm:$0xff]
        %v5606 = vld [vmem:[#allocation4 + $0x188] sm:$0xff]
        %v5607 = vld [vmem:[#allocation4 + $0x190] sm:$0xff]
        %v5608 = vld [vmem:[#allocation4 + $0x198] sm:$0xff]
        %v5609 = vld [vmem:[#allocation4 + $0x1a0] sm:$0xff]
        %v5610 = vld [vmem:[#allocation4 + $0x1a8] sm:$0xff]
        %v5611 = vld [vmem:[#allocation4 + $0x1b0] sm:$0xff]
        %v5612 = vld [vmem:[#allocation4 + $0x1b8] sm:$0xff]
        %v5613 = vld [vmem:[#allocation4 + $0x1c0] sm:$0xff]
        %v5614 = vld [vmem:[#allocation4 + $0x1c8] sm:$0xff]
        %v5615 = vld [vmem:[#allocation4 + $0x1d0] sm:$0xff]
        %v5616 = vld [vmem:[#allocation4 + $0x1d8] sm:$0xff]
        %v5617 = vld [vmem:[#allocation4 + $0x1e0] sm:$0xff]
        %v5618 = vld [vmem:[#allocation4 + $0x1e8] sm:$0xff]
        %v5619 = vld [vmem:[#allocation4 + $0x1f0] sm:$0xff]
        %v5620 = vld [vmem:[#allocation4 + $0x1f8] sm:$0xff]
        %v5621 = vld [vmem:[%s10] sm:$0x3]
        %v5623 = vlaneseq
        %v5624 = vshrl.u32 %v5623, 7
        %v5625 = vsub.s32 0, %v5624
        %v5626 = vrot.slane %v5621, %v5625
        %v5627 = vlaneseq
        %v5628 = vshrl.u32 %v5627, 7
        %v5629 = vsub.s32 1, %v5628
        %v5630 = vrot.slane %v5621, %v5629
        %v5697 = vunpack.c.l.b16 %v5557
        %v5698 = vunpack.c.h.b16 %v5557
        %v5699 = vunpack.c.l.b16 %v5558
        %v5700 = vunpack.c.h.b16 %v5558
        %v5701 = vunpack.c.l.b16 %v5559
        %v5702 = vunpack.c.h.b16 %v5559
        %v5703 = vunpack.c.l.b16 %v5560
        %v5704 = vunpack.c.h.b16 %v5560
        %v5705 = vunpack.c.l.b16 %v5561
        %v5706 = vunpack.c.h.b16 %v5561
        %v5707 = vunpack.c.l.b16 %v5562
        %v5708 = vunpack.c.h.b16 %v5562
        %v5709 = vunpack.c.l.b16 %v5563
        %v5710 = vunpack.c.h.b16 %v5563
        %v5711 = vunpack.c.l.b16 %v5564
        %v5712 = vunpack.c.h.b16 %v5564
        %v5713 = vunpack.c.l.b16 %v5565
        %v5714 = vunpack.c.h.b16 %v5565
        %v5715 = vunpack.c.l.b16 %v5566
        %v5716 = vunpack.c.h.b16 %v5566
        %v5717 = vunpack.c.l.b16 %v5567
        %v5718 = vunpack.c.h.b16 %v5567
        %v5719 = vunpack.c.l.b16 %v5568
        %v5720 = vunpack.c.h.b16 %v5568
        %v5721 = vunpack.c.l.b16 %v5569
        %v5722 = vunpack.c.h.b16 %v5569
        %v5723 = vunpack.c.l.b16 %v5570
        %v5724 = vunpack.c.h.b16 %v5570
        %v5725 = vunpack.c.l.b16 %v5571
        %v5726 = vunpack.c.h.b16 %v5571
        %v5727 = vunpack.c.l.b16 %v5572
        %v5728 = vunpack.c.h.b16 %v5572
        %v5729 = vunpack.c.l.b16 %v5573
        %v5730 = vunpack.c.h.b16 %v5573
        %v5731 = vunpack.c.l.b16 %v5574
        %v5732 = vunpack.c.h.b16 %v5574
        %v5733 = vunpack.c.l.b16 %v5575
        %v5734 = vunpack.c.h.b16 %v5575
        %v5735 = vunpack.c.l.b16 %v5576
        %v5736 = vunpack.c.h.b16 %v5576
        %v5737 = vunpack.c.l.b16 %v5577
        %v5738 = vunpack.c.h.b16 %v5577
        %v5739 = vunpack.c.l.b16 %v5578
        %v5740 = vunpack.c.h.b16 %v5578
        %v5741 = vunpack.c.l.b16 %v5579
        %v5742 = vunpack.c.h.b16 %v5579
        %v5743 = vunpack.c.l.b16 %v5580
        %v5744 = vunpack.c.h.b16 %v5580
        %v5745 = vunpack.c.l.b16 %v5581
        %v5746 = vunpack.c.h.b16 %v5581
        %v5747 = vunpack.c.l.b16 %v5582
        %v5748 = vunpack.c.h.b16 %v5582
        %v5749 = vunpack.c.l.b16 %v5583
        %v5750 = vunpack.c.h.b16 %v5583
        %v5751 = vunpack.c.l.b16 %v5584
        %v5752 = vunpack.c.h.b16 %v5584
        %v5753 = vunpack.c.l.b16 %v5585
        %v5754 = vunpack.c.h.b16 %v5585
        %v5755 = vunpack.c.l.b16 %v5586
        %v5756 = vunpack.c.h.b16 %v5586
        %v5757 = vunpack.c.l.b16 %v5587
        %v5758 = vunpack.c.h.b16 %v5587
        %v5759 = vunpack.c.l.b16 %v5588
        %v5760 = vunpack.c.h.b16 %v5588
        %v5761 = vunpack.c.l.b16 %v5589
        %v5762 = vunpack.c.h.b16 %v5589
        %v5763 = vunpack.c.l.b16 %v5590
        %v5764 = vunpack.c.h.b16 %v5590
        %v5765 = vunpack.c.l.b16 %v5591
        %v5766 = vunpack.c.h.b16 %v5591
        %v5767 = vunpack.c.l.b16 %v5592
        %v5768 = vunpack.c.h.b16 %v5592
        %v5769 = vunpack.c.l.b16 %v5593
        %v5770 = vunpack.c.h.b16 %v5593
        %v5771 = vunpack.c.l.b16 %v5594
        %v5772 = vunpack.c.h.b16 %v5594
        %v5773 = vunpack.c.l.b16 %v5595
        %v5774 = vunpack.c.h.b16 %v5595
        %v5775 = vunpack.c.l.b16 %v5596
        %v5776 = vunpack.c.h.b16 %v5596
        %v5777 = vunpack.c.l.b16 %v5597
        %v5778 = vunpack.c.h.b16 %v5597
        %v5779 = vunpack.c.l.b16 %v5598
        %v5780 = vunpack.c.h.b16 %v5598
        %v5781 = vunpack.c.l.b16 %v5599
        %v5782 = vunpack.c.h.b16 %v5599
        %v5783 = vunpack.c.l.b16 %v5600
        %v5784 = vunpack.c.h.b16 %v5600
        %v5785 = vunpack.c.l.b16 %v5601
        %v5786 = vunpack.c.h.b16 %v5601
        %v5787 = vunpack.c.l.b16 %v5602
        %v5788 = vunpack.c.h.b16 %v5602
        %v5789 = vunpack.c.l.b16 %v5603
        %v5790 = vunpack.c.h.b16 %v5603
        %v5791 = vunpack.c.l.b16 %v5604
        %v5792 = vunpack.c.h.b16 %v5604
        %v5793 = vunpack.c.l.b16 %v5605
        %v5794 = vunpack.c.h.b16 %v5605
        %v5795 = vunpack.c.l.b16 %v5606
        %v5796 = vunpack.c.h.b16 %v5606
        %v5797 = vunpack.c.l.b16 %v5607
        %v5798 = vunpack.c.h.b16 %v5607
        %v5799 = vunpack.c.l.b16 %v5608
        %v5800 = vunpack.c.h.b16 %v5608
        %v5801 = vunpack.c.l.b16 %v5609
        %v5802 = vunpack.c.h.b16 %v5609
        %v5803 = vunpack.c.l.b16 %v5610
        %v5804 = vunpack.c.h.b16 %v5610
        %v5805 = vunpack.c.l.b16 %v5611
        %v5806 = vunpack.c.h.b16 %v5611
        %v5807 = vunpack.c.l.b16 %v5612
        %v5808 = vunpack.c.h.b16 %v5612
        %v5809 = vunpack.c.l.b16 %v5613
        %v5810 = vunpack.c.h.b16 %v5613
        %v5811 = vunpack.c.l.b16 %v5614
        %v5812 = vunpack.c.h.b16 %v5614
        %v5813 = vunpack.c.l.b16 %v5615
        %v5814 = vunpack.c.h.b16 %v5615
        %v5815 = vunpack.c.l.b16 %v5616
        %v5816 = vunpack.c.h.b16 %v5616
        %v5817 = vunpack.c.l.b16 %v5617
        %v5818 = vunpack.c.h.b16 %v5617
        %v5819 = vunpack.c.l.b16 %v5618
        %v5820 = vunpack.c.h.b16 %v5618
        %v5821 = vunpack.c.l.b16 %v5619
        %v5822 = vunpack.c.h.b16 %v5619
        %v5823 = vunpack.c.l.b16 %v5620
        %v5824 = vunpack.c.h.b16 %v5620
        %v5825 = vpack.c.b16 %v5699, %v5697
        %v5826 = vpack.c.b16 %v5700, %v5698
        %v5827 = vpack.c.b16 %v5703, %v5701
        %v5828 = vpack.c.b16 %v5704, %v5702
        %v5829 = vpack.c.b16 %v5707, %v5705
        %v5830 = vpack.c.b16 %v5708, %v5706
        %v5831 = vpack.c.b16 %v5711, %v5709
        %v5832 = vpack.c.b16 %v5712, %v5710
        %v5833 = vpack.c.b16 %v5715, %v5713
        %v5834 = vpack.c.b16 %v5716, %v5714
        %v5835 = vpack.c.b16 %v5719, %v5717
        %v5836 = vpack.c.b16 %v5720, %v5718
        %v5837 = vpack.c.b16 %v5723, %v5721
        %v5838 = vpack.c.b16 %v5724, %v5722
        %v5839 = vpack.c.b16 %v5727, %v5725
        %v5840 = vpack.c.b16 %v5728, %v5726
        %v5841 = vpack.c.b16 %v5731, %v5729
        %v5842 = vpack.c.b16 %v5732, %v5730
        %v5843 = vpack.c.b16 %v5735, %v5733
        %v5844 = vpack.c.b16 %v5736, %v5734
        %v5845 = vpack.c.b16 %v5739, %v5737
        %v5846 = vpack.c.b16 %v5740, %v5738
        %v5847 = vpack.c.b16 %v5743, %v5741
        %v5848 = vpack.c.b16 %v5744, %v5742
        %v5849 = vpack.c.b16 %v5747, %v5745
        %v5850 = vpack.c.b16 %v5748, %v5746
        %v5851 = vpack.c.b16 %v5751, %v5749
        %v5852 = vpack.c.b16 %v5752, %v5750
        %v5853 = vpack.c.b16 %v5755, %v5753
        %v5854 = vpack.c.b16 %v5756, %v5754
        %v5855 = vpack.c.b16 %v5759, %v5757
        %v5856 = vpack.c.b16 %v5760, %v5758
        %v5857 = vpack.c.b16 %v5763, %v5761
        %v5858 = vpack.c.b16 %v5764, %v5762
        %v5859 = vpack.c.b16 %v5767, %v5765
        %v5860 = vpack.c.b16 %v5768, %v5766
        %v5861 = vpack.c.b16 %v5771, %v5769
        %v5862 = vpack.c.b16 %v5772, %v5770
        %v5863 = vpack.c.b16 %v5775, %v5773
        %v5864 = vpack.c.b16 %v5776, %v5774
        %v5865 = vpack.c.b16 %v5779, %v5777
        %v5866 = vpack.c.b16 %v5780, %v5778
        %v5867 = vpack.c.b16 %v5783, %v5781
        %v5868 = vpack.c.b16 %v5784, %v5782
        %v5869 = vpack.c.b16 %v5787, %v5785
        %v5870 = vpack.c.b16 %v5788, %v5786
        %v5871 = vpack.c.b16 %v5791, %v5789
        %v5872 = vpack.c.b16 %v5792, %v5790
        %v5873 = vpack.c.b16 %v5795, %v5793
        %v5874 = vpack.c.b16 %v5796, %v5794
        %v5875 = vpack.c.b16 %v5799, %v5797
        %v5876 = vpack.c.b16 %v5800, %v5798
        %v5877 = vpack.c.b16 %v5803, %v5801
        %v5878 = vpack.c.b16 %v5804, %v5802
        %v5879 = vpack.c.b16 %v5807, %v5805
        %v5880 = vpack.c.b16 %v5808, %v5806
        %v5881 = vpack.c.b16 %v5811, %v5809
        %v5882 = vpack.c.b16 %v5812, %v5810
        %v5883 = vpack.c.b16 %v5815, %v5813
        %v5884 = vpack.c.b16 %v5816, %v5814
        %v5885 = vpack.c.b16 %v5819, %v5817
        %v5886 = vpack.c.b16 %v5820, %v5818
        %v5887 = vpack.c.b16 %v5823, %v5821
        %v5888 = vpack.c.b16 %v5824, %v5822
        %5953 = vmatprep.subr.bf16.mxu0 %v5840
        %5954 = vmatpush1.bf16.msra.mxu0 %v5839
        %5955 = vmatprep.subr.bf16.mxu0 %v5838
        %5956 = vmatpush1.bf16.msra.mxu0 %v5837
        %5957 = vmatprep.subr.bf16.mxu0 %v5836
        %5958 = vmatpush1.bf16.msra.mxu0 %v5835
        %5959 = vmatprep.subr.bf16.mxu0 %v5834
        %5960 = vmatpush1.bf16.msra.mxu0 %v5833
        %5961 = vmatprep.subr.bf16.mxu0 %v5832
        %5962 = vmatpush1.bf16.msra.mxu0 %v5831
        %5963 = vmatprep.subr.bf16.mxu0 %v5830
        %5964 = vmatpush1.bf16.msra.mxu0 %v5829
        %5965 = vmatprep.subr.bf16.mxu0 %v5828
        %5966 = vmatpush1.bf16.msra.mxu0 %v5827
        %5967 = vmatprep.subr.bf16.mxu0 %v5826
        %5968 = vmatpush1.bf16.msra.mxu0 %v5825
        %5969 = vmatprep.subr.bf16.mxu0 %v5856
        %5970 = vmatpush2.bf16.msra.mxu0 %v5855
        %5971 = vmatprep.subr.bf16.mxu0 %v5854
        %5972 = vmatpush2.bf16.msra.mxu0 %v5853
        %5973 = vmatprep.subr.bf16.mxu0 %v5852
        %5974 = vmatpush2.bf16.msra.mxu0 %v5851
        %5975 = vmatprep.subr.bf16.mxu0 %v5850
        %5976 = vmatpush2.bf16.msra.mxu0 %v5849
        %5977 = vmatprep.subr.bf16.mxu0 %v5848
        %5978 = vmatpush2.bf16.msra.mxu0 %v5847
        %5979 = vmatprep.subr.bf16.mxu0 %v5846
        %5980 = vmatpush2.bf16.msra.mxu0 %v5845
        %5981 = vmatprep.subr.bf16.mxu0 %v5844
        %5982 = vmatpush2.bf16.msra.mxu0 %v5843
        %5983 = vmatprep.subr.bf16.mxu0 %v5842
        %5984 = vmatpush2.bf16.msra.mxu0 %v5841
        %5985 = vmatprep.mubr.bf16.mxu0 %v5494
        %5986 = vmatmul.mubr.bf16.gmra.mxu0 %v5493
        %v5987 = vpop.f32.mrf.mxu0
        %v5988 = vadd.f32 %v5626, %v5987
        %v5989 = vpop.f32.mrf.mxu0
        %v5990 = vadd.f32 %v5630, %v5989
        %v5991 = vpop.f32.mrf.mxu0
        %v5992 = vadd.f32 %v5626, %v5991
        %v5993 = vpop.f32.mrf.mxu0
        %v5994 = vadd.f32 %v5630, %v5993
        %5995 = vmatprep.mubr.bf16.mxu0 %v5498
        %5996 = vmatmul.mubr.bf16.gmra.mxu0 %v5497
        %v5997 = vpop.f32.mrf.mxu0
        %v5998 = vadd.f32 %v5626, %v5997
        %v5999 = vpop.f32.mrf.mxu0
        %v6000 = vadd.f32 %v5630, %v5999
        %v6001 = vpop.f32.mrf.mxu0
        %v6002 = vadd.f32 %v5626, %v6001
        %v6003 = vpop.f32.mrf.mxu0
        %v6004 = vadd.f32 %v5630, %v6003
        %6005 = vmatprep.mubr.bf16.mxu0 %v5502
        %6006 = vmatmul.mubr.bf16.gmra.mxu0 %v5501
        %v6007 = vpop.f32.mrf.mxu0
        %v6008 = vadd.f32 %v5626, %v6007
        %v6009 = vpop.f32.mrf.mxu0
        %v6010 = vadd.f32 %v5630, %v6009
        %v6011 = vpop.f32.mrf.mxu0
        %v6012 = vadd.f32 %v5626, %v6011
        %v6013 = vpop.f32.mrf.mxu0
        %v6014 = vadd.f32 %v5630, %v6013
        %6015 = vmatprep.mubr.bf16.mxu0 %v5506
        %6016 = vmatmul.mubr.bf16.gmra.mxu0 %v5505
        %v6017 = vpop.f32.mrf.mxu0
        %v6018 = vadd.f32 %v5626, %v6017
        %v6019 = vpop.f32.mrf.mxu0
        %v6020 = vadd.f32 %v5630, %v6019
        %v6021 = vpop.f32.mrf.mxu0
        %v6022 = vadd.f32 %v5626, %v6021
        %v6023 = vpop.f32.mrf.mxu0
        %v6024 = vadd.f32 %v5630, %v6023
        %6025 = vmatprep.mubr.bf16.mxu0 %v5510
        %6026 = vmatmul.mubr.bf16.gmra.mxu0 %v5509
        %v6027 = vpop.f32.mrf.mxu0
        %v6028 = vadd.f32 %v5626, %v6027
        %v6029 = vpop.f32.mrf.mxu0
        %v6030 = vadd.f32 %v5630, %v6029
        %v6031 = vpop.f32.mrf.mxu0
        %v6032 = vadd.f32 %v5626, %v6031
        %v6033 = vpop.f32.mrf.mxu0
        %v6034 = vadd.f32 %v5630, %v6033
        %6035 = vmatprep.mubr.bf16.mxu0 %v5514
        %6036 = vmatmul.mubr.bf16.gmra.mxu0 %v5513
        %v6037 = vpop.f32.mrf.mxu0
        %v6038 = vadd.f32 %v5626, %v6037
        %v6039 = vpop.f32.mrf.mxu0
        %v6040 = vadd.f32 %v5630, %v6039
        %v6041 = vpop.f32.mrf.mxu0
        %v6042 = vadd.f32 %v5626, %v6041
        %v6043 = vpop.f32.mrf.mxu0
        %v6044 = vadd.f32 %v5630, %v6043
        %6045 = vmatprep.mubr.bf16.mxu0 %v5518
        %6046 = vmatmul.mubr.bf16.gmra.mxu0 %v5517
        %v6047 = vpop.f32.mrf.mxu0
        %v6048 = vadd.f32 %v5626, %v6047
        %v6049 = vpop.f32.mrf.mxu0
        %v6050 = vadd.f32 %v5630, %v6049
        %v6051 = vpop.f32.mrf.mxu0
        %v6052 = vadd.f32 %v5626, %v6051
        %v6053 = vpop.f32.mrf.mxu0
        %v6054 = vadd.f32 %v5630, %v6053
        %6055 = vmatprep.mubr.bf16.mxu0 %v5522
        %6056 = vmatmul.mubr.bf16.gmra.mxu0 %v5521
        %v6057 = vpop.f32.mrf.mxu0
        %v6058 = vadd.f32 %v5626, %v6057
        %v6059 = vpop.f32.mrf.mxu0
        %v6060 = vadd.f32 %v5630, %v6059
        %v6061 = vpop.f32.mrf.mxu0
        %v6062 = vadd.f32 %v5626, %v6061
        %v6063 = vpop.f32.mrf.mxu0
        %v6064 = vadd.f32 %v5630, %v6063
        %6065 = vmatprep.mubr.bf16.mxu0 %v5526
        %6066 = vmatmul.mubr.bf16.gmra.mxu0 %v5525
        %v6067 = vpop.f32.mrf.mxu0
        %v6068 = vadd.f32 %v5626, %v6067
        %v6069 = vpop.f32.mrf.mxu0
        %v6070 = vadd.f32 %v5630, %v6069
        %v6071 = vpop.f32.mrf.mxu0
        %v6072 = vadd.f32 %v5626, %v6071
        %v6073 = vpop.f32.mrf.mxu0
        %v6074 = vadd.f32 %v5630, %v6073
        %6075 = vmatprep.mubr.bf16.mxu0 %v5530
        %6076 = vmatmul.mubr.bf16.gmra.mxu0 %v5529
        %v6077 = vpop.f32.mrf.mxu0
        %v6078 = vadd.f32 %v5626, %v6077
        %v6079 = vpop.f32.mrf.mxu0
        %v6080 = vadd.f32 %v5630, %v6079
        %v6081 = vpop.f32.mrf.mxu0
        %v6082 = vadd.f32 %v5626, %v6081
        %v6083 = vpop.f32.mrf.mxu0
        %v6084 = vadd.f32 %v5630, %v6083
        %6085 = vmatprep.mubr.bf16.mxu0 %v5534
        %6086 = vmatmul.mubr.bf16.gmra.mxu0 %v5533
        %v6087 = vpop.f32.mrf.mxu0
        %v6088 = vadd.f32 %v5626, %v6087
        %v6089 = vpop.f32.mrf.mxu0
        %v6090 = vadd.f32 %v5630, %v6089
        %v6091 = vpop.f32.mrf.mxu0
        %v6092 = vadd.f32 %v5626, %v6091
        %v6093 = vpop.f32.mrf.mxu0
        %v6094 = vadd.f32 %v5630, %v6093
        %6095 = vmatprep.mubr.bf16.mxu0 %v5538
        %6096 = vmatmul.mubr.bf16.gmra.mxu0 %v5537
        %v6097 = vpop.f32.mrf.mxu0
        %v6098 = vadd.f32 %v5626, %v6097
        %v6099 = vpop.f32.mrf.mxu0
        %v6100 = vadd.f32 %v5630, %v6099
        %v6101 = vpop.f32.mrf.mxu0
        %v6102 = vadd.f32 %v5626, %v6101
        %v6103 = vpop.f32.mrf.mxu0
        %v6104 = vadd.f32 %v5630, %v6103
        %6105 = vmatprep.mubr.bf16.mxu0 %v5542
        %6106 = vmatmul.mubr.bf16.gmra.mxu0 %v5541
        %v6107 = vpop.f32.mrf.mxu0
        %v6108 = vadd.f32 %v5626, %v6107
        %v6109 = vpop.f32.mrf.mxu0
        %v6110 = vadd.f32 %v5630, %v6109
        %v6111 = vpop.f32.mrf.mxu0
        %v6112 = vadd.f32 %v5626, %v6111
        %v6113 = vpop.f32.mrf.mxu0
        %v6114 = vadd.f32 %v5630, %v6113
        %6115 = vmatprep.mubr.bf16.mxu0 %v5546
        %6116 = vmatmul.mubr.bf16.gmra.mxu0 %v5545
        %v6117 = vpop.f32.mrf.mxu0
        %v6118 = vadd.f32 %v5626, %v6117
        %v6119 = vpop.f32.mrf.mxu0
        %v6120 = vadd.f32 %v5630, %v6119
        %v6121 = vpop.f32.mrf.mxu0
        %v6122 = vadd.f32 %v5626, %v6121
        %v6123 = vpop.f32.mrf.mxu0
        %v6124 = vadd.f32 %v5630, %v6123
        %6125 = vmatprep.mubr.bf16.mxu0 %v5550
        %6126 = vmatmul.mubr.bf16.gmra.mxu0 %v5549
        %v6127 = vpop.f32.mrf.mxu0
        %v6128 = vadd.f32 %v5626, %v6127
        %v6129 = vpop.f32.mrf.mxu0
        %v6130 = vadd.f32 %v5630, %v6129
        %v6131 = vpop.f32.mrf.mxu0
        %v6132 = vadd.f32 %v5626, %v6131
        %v6133 = vpop.f32.mrf.mxu0
        %v6134 = vadd.f32 %v5630, %v6133
        %6135 = vmatprep.mubr.bf16.mxu0 %v5554
        %6136 = vmatmul.mubr.bf16.gmra.mxu0 %v5553
        %v6137 = vpop.f32.mrf.mxu0
        %v6138 = vadd.f32 %v5626, %v6137
        %v6139 = vpop.f32.mrf.mxu0
        %v6140 = vadd.f32 %v5630, %v6139
        %v6141 = vpop.f32.mrf.mxu0
        %v6142 = vadd.f32 %v5626, %v6141
        %v6143 = vpop.f32.mrf.mxu0
        %v6144 = vadd.f32 %v5630, %v6143
        %6145 = vdwg.mxu0
        %6146 = vmatprep.subr.bf16.mxu0 %v5872
        %6147 = vmatpush1.bf16.msra.mxu0 %v5871
        %6148 = vmatprep.subr.bf16.mxu0 %v5870
        %6149 = vmatpush1.bf16.msra.mxu0 %v5869
        %6150 = vmatprep.subr.bf16.mxu0 %v5868
        %6151 = vmatpush1.bf16.msra.mxu0 %v5867
        %6152 = vmatprep.subr.bf16.mxu0 %v5866
        %6153 = vmatpush1.bf16.msra.mxu0 %v5865
        %6154 = vmatprep.subr.bf16.mxu0 %v5864
        %6155 = vmatpush1.bf16.msra.mxu0 %v5863
        %6156 = vmatprep.subr.bf16.mxu0 %v5862
        %6157 = vmatpush1.bf16.msra.mxu0 %v5861
        %6158 = vmatprep.subr.bf16.mxu0 %v5860
        %6159 = vmatpush1.bf16.msra.mxu0 %v5859
        %6160 = vmatprep.subr.bf16.mxu0 %v5858
        %6161 = vmatpush1.bf16.msra.mxu0 %v5857
        %6162 = vmatprep.subr.bf16.mxu0 %v5888
        %6163 = vmatpush2.bf16.msra.mxu0 %v5887
        %6164 = vmatprep.subr.bf16.mxu0 %v5886
        %6165 = vmatpush2.bf16.msra.mxu0 %v5885
        %6166 = vmatprep.subr.bf16.mxu0 %v5884
        %6167 = vmatpush2.bf16.msra.mxu0 %v5883
        %6168 = vmatprep.subr.bf16.mxu0 %v5882
        %6169 = vmatpush2.bf16.msra.mxu0 %v5881
        %6170 = vmatprep.subr.bf16.mxu0 %v5880
        %6171 = vmatpush2.bf16.msra.mxu0 %v5879
        %6172 = vmatprep.subr.bf16.mxu0 %v5878
        %6173 = vmatpush2.bf16.msra.mxu0 %v5877
        %6174 = vmatprep.subr.bf16.mxu0 %v5876
        %6175 = vmatpush2.bf16.msra.mxu0 %v5875
        %6176 = vmatprep.subr.bf16.mxu0 %v5874
        %6177 = vmatpush2.bf16.msra.mxu0 %v5873
        %6178 = vmatprep.mubr.bf16.mxu0 %v5496
        %6179 = vmatmul.mubr.bf16.gmra.mxu0 %v5495
        %v6180 = vpop.f32.mrf.mxu0
        %v6181 = vadd.f32 %v5988, %v6180
        %v6182 = vpop.f32.mrf.mxu0
        %v6183 = vadd.f32 %v5990, %v6182
        %v6184 = vpop.f32.mrf.mxu0
        %v6185 = vadd.f32 %v5992, %v6184
        %v6186 = vpop.f32.mrf.mxu0
        %v6187 = vadd.f32 %v5994, %v6186
        %6188 = vmatprep.mubr.bf16.mxu0 %v5500
        %6189 = vmatmul.mubr.bf16.gmra.mxu0 %v5499
        %v6190 = vpop.f32.mrf.mxu0
        %v6191 = vadd.f32 %v5998, %v6190
        %v6192 = vpop.f32.mrf.mxu0
        %v6193 = vadd.f32 %v6000, %v6192
        %v6194 = vpop.f32.mrf.mxu0
        %v6195 = vadd.f32 %v6002, %v6194
        %v6196 = vpop.f32.mrf.mxu0
        %v6197 = vadd.f32 %v6004, %v6196
        %6198 = vmatprep.mubr.bf16.mxu0 %v5504
        %6199 = vmatmul.mubr.bf16.gmra.mxu0 %v5503
        %v6200 = vpop.f32.mrf.mxu0
        %v6201 = vadd.f32 %v6008, %v6200
        %v6202 = vpop.f32.mrf.mxu0
        %v6203 = vadd.f32 %v6010, %v6202
        %v6204 = vpop.f32.mrf.mxu0
        %v6205 = vadd.f32 %v6012, %v6204
        %v6206 = vpop.f32.mrf.mxu0
        %v6207 = vadd.f32 %v6014, %v6206
        %6208 = vmatprep.mubr.bf16.mxu0 %v5508
        %6209 = vmatmul.mubr.bf16.gmra.mxu0 %v5507
        %v6210 = vpop.f32.mrf.mxu0
        %v6211 = vadd.f32 %v6018, %v6210
        %v6212 = vpop.f32.mrf.mxu0
        %v6213 = vadd.f32 %v6020, %v6212
        %v6214 = vpop.f32.mrf.mxu0
        %v6215 = vadd.f32 %v6022, %v6214
        %v6216 = vpop.f32.mrf.mxu0
        %v6217 = vadd.f32 %v6024, %v6216
        %6218 = vmatprep.mubr.bf16.mxu0 %v5512
        %6219 = vmatmul.mubr.bf16.gmra.mxu0 %v5511
        %v6220 = vpop.f32.mrf.mxu0
        %v6221 = vadd.f32 %v6028, %v6220
        %v6222 = vpop.f32.mrf.mxu0
        %v6223 = vadd.f32 %v6030, %v6222
        %v6224 = vpop.f32.mrf.mxu0
        %v6225 = vadd.f32 %v6032, %v6224
        %v6226 = vpop.f32.mrf.mxu0
        %v6227 = vadd.f32 %v6034, %v6226
        %6228 = vmatprep.mubr.bf16.mxu0 %v5516
        %6229 = vmatmul.mubr.bf16.gmra.mxu0 %v5515
        %v6230 = vpop.f32.mrf.mxu0
        %v6231 = vadd.f32 %v6038, %v6230
        %v6232 = vpop.f32.mrf.mxu0
        %v6233 = vadd.f32 %v6040, %v6232
        %v6234 = vpop.f32.mrf.mxu0
        %v6235 = vadd.f32 %v6042, %v6234
        %v6236 = vpop.f32.mrf.mxu0
        %v6237 = vadd.f32 %v6044, %v6236
        %6238 = vmatprep.mubr.bf16.mxu0 %v5520
        %6239 = vmatmul.mubr.bf16.gmra.mxu0 %v5519
        %v6240 = vpop.f32.mrf.mxu0
        %v6241 = vadd.f32 %v6048, %v6240
        %v6242 = vpop.f32.mrf.mxu0
        %v6243 = vadd.f32 %v6050, %v6242
        %v6244 = vpop.f32.mrf.mxu0
        %v6245 = vadd.f32 %v6052, %v6244
        %v6246 = vpop.f32.mrf.mxu0
        %v6247 = vadd.f32 %v6054, %v6246
        %6248 = vmatprep.mubr.bf16.mxu0 %v5524
        %6249 = vmatmul.mubr.bf16.gmra.mxu0 %v5523
        %v6250 = vpop.f32.mrf.mxu0
        %v6251 = vadd.f32 %v6058, %v6250
        %v6252 = vpop.f32.mrf.mxu0
        %v6253 = vadd.f32 %v6060, %v6252
        %v6254 = vpop.f32.mrf.mxu0
        %v6255 = vadd.f32 %v6062, %v6254
        %v6256 = vpop.f32.mrf.mxu0
        %v6257 = vadd.f32 %v6064, %v6256
        %6258 = vmatprep.mubr.bf16.mxu0 %v5528
        %6259 = vmatmul.mubr.bf16.gmra.mxu0 %v5527
        %v6260 = vpop.f32.mrf.mxu0
        %v6261 = vadd.f32 %v6068, %v6260
        %v6262 = vpop.f32.mrf.mxu0
        %v6263 = vadd.f32 %v6070, %v6262
        %v6264 = vpop.f32.mrf.mxu0
        %v6265 = vadd.f32 %v6072, %v6264
        %v6266 = vpop.f32.mrf.mxu0
        %v6267 = vadd.f32 %v6074, %v6266
        %6268 = vmatprep.mubr.bf16.mxu0 %v5532
        %6269 = vmatmul.mubr.bf16.gmra.mxu0 %v5531
        %v6270 = vpop.f32.mrf.mxu0
        %v6271 = vadd.f32 %v6078, %v6270
        %v6272 = vpop.f32.mrf.mxu0
        %v6273 = vadd.f32 %v6080, %v6272
        %v6274 = vpop.f32.mrf.mxu0
        %v6275 = vadd.f32 %v6082, %v6274
        %v6276 = vpop.f32.mrf.mxu0
        %v6277 = vadd.f32 %v6084, %v6276
        %6278 = vmatprep.mubr.bf16.mxu0 %v5536
        %6279 = vmatmul.mubr.bf16.gmra.mxu0 %v5535
        %v6280 = vpop.f32.mrf.mxu0
        %v6281 = vadd.f32 %v6088, %v6280
        %v6282 = vpop.f32.mrf.mxu0
        %v6283 = vadd.f32 %v6090, %v6282
        %v6284 = vpop.f32.mrf.mxu0
        %v6285 = vadd.f32 %v6092, %v6284
        %v6286 = vpop.f32.mrf.mxu0
        %v6287 = vadd.f32 %v6094, %v6286
        %6288 = vmatprep.mubr.bf16.mxu0 %v5540
        %6289 = vmatmul.mubr.bf16.gmra.mxu0 %v5539
        %v6290 = vpop.f32.mrf.mxu0
        %v6291 = vadd.f32 %v6098, %v6290
        %v6292 = vpop.f32.mrf.mxu0
        %v6293 = vadd.f32 %v6100, %v6292
        %v6294 = vpop.f32.mrf.mxu0
        %v6295 = vadd.f32 %v6102, %v6294
        %v6296 = vpop.f32.mrf.mxu0
        %v6297 = vadd.f32 %v6104, %v6296
        %6298 = vmatprep.mubr.bf16.mxu0 %v5544
        %6299 = vmatmul.mubr.bf16.gmra.mxu0 %v5543
        %v6300 = vpop.f32.mrf.mxu0
        %v6301 = vadd.f32 %v6108, %v6300
        %v6302 = vpop.f32.mrf.mxu0
        %v6303 = vadd.f32 %v6110, %v6302
        %v6304 = vpop.f32.mrf.mxu0
        %v6305 = vadd.f32 %v6112, %v6304
        %v6306 = vpop.f32.mrf.mxu0
        %v6307 = vadd.f32 %v6114, %v6306
        %6308 = vmatprep.mubr.bf16.mxu0 %v5548
        %6309 = vmatmul.mubr.bf16.gmra.mxu0 %v5547
        %v6310 = vpop.f32.mrf.mxu0
        %v6311 = vadd.f32 %v6118, %v6310
        %v6312 = vpop.f32.mrf.mxu0
        %v6313 = vadd.f32 %v6120, %v6312
        %v6314 = vpop.f32.mrf.mxu0
        %v6315 = vadd.f32 %v6122, %v6314
        %v6316 = vpop.f32.mrf.mxu0
        %v6317 = vadd.f32 %v6124, %v6316
        %6318 = vmatprep.mubr.bf16.mxu0 %v5552
        %6319 = vmatmul.mubr.bf16.gmra.mxu0 %v5551
        %v6320 = vpop.f32.mrf.mxu0
        %v6321 = vadd.f32 %v6128, %v6320
        %v6322 = vpop.f32.mrf.mxu0
        %v6323 = vadd.f32 %v6130, %v6322
        %v6324 = vpop.f32.mrf.mxu0
        %v6325 = vadd.f32 %v6132, %v6324
        %v6326 = vpop.f32.mrf.mxu0
        %v6327 = vadd.f32 %v6134, %v6326
        %6328 = vmatprep.mubr.bf16.mxu0 %v5556
        %6329 = vmatmul.mubr.bf16.gmra.mxu0 %v5555
        %v6330 = vpop.f32.mrf.mxu0
        %v6331 = vadd.f32 %v6138, %v6330
        %v6332 = vpop.f32.mrf.mxu0
        %v6333 = vadd.f32 %v6140, %v6332
        %v6334 = vpop.f32.mrf.mxu0
        %v6335 = vadd.f32 %v6142, %v6334
        %v6336 = vpop.f32.mrf.mxu0
        %v6337 = vadd.f32 %v6144, %v6336
        %6338 = vdwg.mxu0
        %v6339 = vld [vmem:[%s11] sm:$0x3]
        %v6340 = vld [vmem:[%s12] sm:$0x3]
        %v6341 = vadd.f32 %v6181, %v6183
        %6342 = vadd.xlane.f32.xlu0 %v6341
        %v6343 = vpop.xlane.xlu0 %6342
        %v6344 = vadd.f32 %v6185, %v6187
        %6345 = vadd.xlane.f32.xlu0 %v6344
        %v6346 = vpop.xlane.xlu0 %6345
        %v6347 = vadd.f32 %v6191, %v6193
        %6348 = vadd.xlane.f32.xlu0 %v6347
        %v6349 = vpop.xlane.xlu0 %6348
        %v6350 = vadd.f32 %v6195, %v6197
        %6351 = vadd.xlane.f32.xlu0 %v6350
        %v6352 = vpop.xlane.xlu0 %6351
        %v6353 = vadd.f32 %v6201, %v6203
        %6354 = vadd.xlane.f32.xlu0 %v6353
        %v6355 = vpop.xlane.xlu0 %6354
        %v6356 = vadd.f32 %v6205, %v6207
        %6357 = vadd.xlane.f32.xlu0 %v6356
        %v6358 = vpop.xlane.xlu0 %6357
        %v6359 = vadd.f32 %v6211, %v6213
        %6360 = vadd.xlane.f32.xlu0 %v6359
        %v6361 = vpop.xlane.xlu0 %6360
        %v6362 = vadd.f32 %v6215, %v6217
        %6363 = vadd.xlane.f32.xlu0 %v6362
        %v6364 = vpop.xlane.xlu0 %6363
        %v6365 = vadd.f32 %v6221, %v6223
        %6366 = vadd.xlane.f32.xlu0 %v6365
        %v6367 = vpop.xlane.xlu0 %6366
        %v6368 = vadd.f32 %v6225, %v6227
        %6369 = vadd.xlane.f32.xlu0 %v6368
        %v6370 = vpop.xlane.xlu0 %6369
        %v6371 = vadd.f32 %v6231, %v6233
        %6372 = vadd.xlane.f32.xlu0 %v6371
        %v6373 = vpop.xlane.xlu0 %6372
        %v6374 = vadd.f32 %v6235, %v6237
        %6375 = vadd.xlane.f32.xlu0 %v6374
        %v6376 = vpop.xlane.xlu0 %6375
        %v6377 = vadd.f32 %v6241, %v6243
        %6378 = vadd.xlane.f32.xlu0 %v6377
        %v6379 = vpop.xlane.xlu0 %6378
        %v6380 = vadd.f32 %v6245, %v6247
        %6381 = vadd.xlane.f32.xlu0 %v6380
        %v6382 = vpop.xlane.xlu0 %6381
        %v6383 = vadd.f32 %v6251, %v6253
        %6384 = vadd.xlane.f32.xlu0 %v6383
        %v6385 = vpop.xlane.xlu0 %6384
        %v6386 = vadd.f32 %v6255, %v6257
        %6387 = vadd.xlane.f32.xlu0 %v6386
        %v6388 = vpop.xlane.xlu0 %6387
        %v6389 = vadd.f32 %v6261, %v6263
        %6390 = vadd.xlane.f32.xlu0 %v6389
        %v6391 = vpop.xlane.xlu0 %6390
        %v6392 = vadd.f32 %v6265, %v6267
        %6393 = vadd.xlane.f32.xlu0 %v6392
        %v6394 = vpop.xlane.xlu0 %6393
        %v6395 = vadd.f32 %v6271, %v6273
        %6396 = vadd.xlane.f32.xlu0 %v6395
        %v6397 = vpop.xlane.xlu0 %6396
        %v6398 = vadd.f32 %v6275, %v6277
        %6399 = vadd.xlane.f32.xlu0 %v6398
        %v6400 = vpop.xlane.xlu0 %6399
        %v6401 = vadd.f32 %v6281, %v6283
        %6402 = vadd.xlane.f32.xlu0 %v6401
        %v6403 = vpop.xlane.xlu0 %6402
        %v6404 = vadd.f32 %v6285, %v6287
        %6405 = vadd.xlane.f32.xlu0 %v6404
        %v6406 = vpop.xlane.xlu0 %6405
        %v6407 = vadd.f32 %v6291, %v6293
        %6408 = vadd.xlane.f32.xlu0 %v6407
        %v6409 = vpop.xlane.xlu0 %6408
        %v6410 = vadd.f32 %v6295, %v6297
        %6411 = vadd.xlane.f32.xlu0 %v6410
        %v6412 = vpop.xlane.xlu0 %6411
        %v6413 = vadd.f32 %v6301, %v6303
        %6414 = vadd.xlane.f32.xlu0 %v6413
        %v6415 = vpop.xlane.xlu0 %6414
        %v6416 = vadd.f32 %v6305, %v6307
        %6417 = vadd.xlane.f32.xlu0 %v6416
        %v6418 = vpop.xlane.xlu0 %6417
        %v6419 = vadd.f32 %v6311, %v6313
        %6420 = vadd.xlane.f32.xlu0 %v6419
        %v6421 = vpop.xlane.xlu0 %6420
        %v6422 = vadd.f32 %v6315, %v6317
        %6423 = vadd.xlane.f32.xlu0 %v6422
        %v6424 = vpop.xlane.xlu0 %6423
        %v6425 = vadd.f32 %v6321, %v6323
        %6426 = vadd.xlane.f32.xlu0 %v6425
        %v6427 = vpop.xlane.xlu0 %6426
        %v6428 = vadd.f32 %v6325, %v6327
        %6429 = vadd.xlane.f32.xlu0 %v6428
        %v6430 = vpop.xlane.xlu0 %6429
        %v6431 = vadd.f32 %v6331, %v6333
        %6432 = vadd.xlane.f32.xlu0 %v6431
        %v6433 = vpop.xlane.xlu0 %6432
        %v6434 = vadd.f32 %v6335, %v6337
        %6435 = vadd.xlane.f32.xlu0 %v6434
        %v6436 = vpop.xlane.xlu0 %6435
        %v6437 = vmul.f32 %v6343, %v3898
        %v6438 = vmul.f32 %v6346, %v3898
        %v6439 = vmul.f32 %v6349, %v3898
        %v6440 = vmul.f32 %v6352, %v3898
        %v6441 = vmul.f32 %v6355, %v3898
        %v6442 = vmul.f32 %v6358, %v3898
        %v6443 = vmul.f32 %v6361, %v3898
        %v6444 = vmul.f32 %v6364, %v3898
        %v6445 = vmul.f32 %v6367, %v3898
        %v6446 = vmul.f32 %v6370, %v3898
        %v6447 = vmul.f32 %v6373, %v3898
        %v6448 = vmul.f32 %v6376, %v3898
        %v6449 = vmul.f32 %v6379, %v3898
        %v6450 = vmul.f32 %v6382, %v3898
        %v6451 = vmul.f32 %v6385, %v3898
        %v6452 = vmul.f32 %v6388, %v3898
        %v6453 = vmul.f32 %v6391, %v3898
        %v6454 = vmul.f32 %v6394, %v3898
        %v6455 = vmul.f32 %v6397, %v3898
        %v6456 = vmul.f32 %v6400, %v3898
        %v6457 = vmul.f32 %v6403, %v3898
        %v6458 = vmul.f32 %v6406, %v3898
        %v6459 = vmul.f32 %v6409, %v3898
        %v6460 = vmul.f32 %v6412, %v3898
        %v6461 = vmul.f32 %v6415, %v3898
        %v6462 = vmul.f32 %v6418, %v3898
        %v6463 = vmul.f32 %v6421, %v3898
        %v6464 = vmul.f32 %v6424, %v3898
        %v6465 = vmul.f32 %v6427, %v3898
        %v6466 = vmul.f32 %v6430, %v3898
        %v6467 = vmul.f32 %v6433, %v3898
        %v6468 = vmul.f32 %v6436, %v3898
        %v6469 = vsub.f32 %v6181, %v6437
        %v6470 = vsub.f32 %v6183, %v6437
        %v6471 = vsub.f32 %v6185, %v6438
        %v6472 = vsub.f32 %v6187, %v6438
        %v6473 = vsub.f32 %v6191, %v6439
        %v6474 = vsub.f32 %v6193, %v6439
        %v6475 = vsub.f32 %v6195, %v6440
        %v6476 = vsub.f32 %v6197, %v6440
        %v6477 = vsub.f32 %v6201, %v6441
        %v6478 = vsub.f32 %v6203, %v6441
        %v6479 = vsub.f32 %v6205, %v6442
        %v6480 = vsub.f32 %v6207, %v6442
        %v6481 = vsub.f32 %v6211, %v6443
        %v6482 = vsub.f32 %v6213, %v6443
        %v6483 = vsub.f32 %v6215, %v6444
        %v6484 = vsub.f32 %v6217, %v6444
        %v6485 = vsub.f32 %v6221, %v6445
        %v6486 = vsub.f32 %v6223, %v6445
        %v6487 = vsub.f32 %v6225, %v6446
        %v6488 = vsub.f32 %v6227, %v6446
        %v6489 = vsub.f32 %v6231, %v6447
        %v6490 = vsub.f32 %v6233, %v6447
        %v6491 = vsub.f32 %v6235, %v6448
        %v6492 = vsub.f32 %v6237, %v6448
        %v6493 = vsub.f32 %v6241, %v6449
        %v6494 = vsub.f32 %v6243, %v6449
        %v6495 = vsub.f32 %v6245, %v6450
        %v6496 = vsub.f32 %v6247, %v6450
        %v6497 = vsub.f32 %v6251, %v6451
        %v6498 = vsub.f32 %v6253, %v6451
        %v6499 = vsub.f32 %v6255, %v6452
        %v6500 = vsub.f32 %v6257, %v6452
        %v6501 = vsub.f32 %v6261, %v6453
        %v6502 = vsub.f32 %v6263, %v6453
        %v6503 = vsub.f32 %v6265, %v6454
        %v6504 = vsub.f32 %v6267, %v6454
        %v6505 = vsub.f32 %v6271, %v6455
        %v6506 = vsub.f32 %v6273, %v6455
        %v6507 = vsub.f32 %v6275, %v6456
        %v6508 = vsub.f32 %v6277, %v6456
        %v6509 = vsub.f32 %v6281, %v6457
        %v6510 = vsub.f32 %v6283, %v6457
        %v6511 = vsub.f32 %v6285, %v6458
        %v6512 = vsub.f32 %v6287, %v6458
        %v6513 = vsub.f32 %v6291, %v6459
        %v6514 = vsub.f32 %v6293, %v6459
        %v6515 = vsub.f32 %v6295, %v6460
        %v6516 = vsub.f32 %v6297, %v6460
        %v6517 = vsub.f32 %v6301, %v6461
        %v6518 = vsub.f32 %v6303, %v6461
        %v6519 = vsub.f32 %v6305, %v6462
        %v6520 = vsub.f32 %v6307, %v6462
        %v6521 = vsub.f32 %v6311, %v6463
        %v6522 = vsub.f32 %v6313, %v6463
        %v6523 = vsub.f32 %v6315, %v6464
        %v6524 = vsub.f32 %v6317, %v6464
        %v6525 = vsub.f32 %v6321, %v6465
        %v6526 = vsub.f32 %v6323, %v6465
        %v6527 = vsub.f32 %v6325, %v6466
        %v6528 = vsub.f32 %v6327, %v6466
        %v6529 = vsub.f32 %v6331, %v6467
        %v6530 = vsub.f32 %v6333, %v6467
        %v6531 = vsub.f32 %v6335, %v6468
        %v6532 = vsub.f32 %v6337, %v6468
        %v6533 = vmul.f32 %v6469, %v6469
        %v6534 = vmul.f32 %v6470, %v6470
        %v6535 = vmul.f32 %v6471, %v6471
        %v6536 = vmul.f32 %v6472, %v6472
        %v6537 = vmul.f32 %v6473, %v6473
        %v6538 = vmul.f32 %v6474, %v6474
        %v6539 = vmul.f32 %v6475, %v6475
        %v6540 = vmul.f32 %v6476, %v6476
        %v6541 = vmul.f32 %v6477, %v6477
        %v6542 = vmul.f32 %v6478, %v6478
        %v6543 = vmul.f32 %v6479, %v6479
        %v6544 = vmul.f32 %v6480, %v6480
        %v6545 = vmul.f32 %v6481, %v6481
        %v6546 = vmul.f32 %v6482, %v6482
        %v6547 = vmul.f32 %v6483, %v6483
        %v6548 = vmul.f32 %v6484, %v6484
        %v6549 = vmul.f32 %v6485, %v6485
        %v6550 = vmul.f32 %v6486, %v6486
        %v6551 = vmul.f32 %v6487, %v6487
        %v6552 = vmul.f32 %v6488, %v6488
        %v6553 = vmul.f32 %v6489, %v6489
        %v6554 = vmul.f32 %v6490, %v6490
        %v6555 = vmul.f32 %v6491, %v6491
        %v6556 = vmul.f32 %v6492, %v6492
        %v6557 = vmul.f32 %v6493, %v6493
        %v6558 = vmul.f32 %v6494, %v6494
        %v6559 = vmul.f32 %v6495, %v6495
        %v6560 = vmul.f32 %v6496, %v6496
        %v6561 = vmul.f32 %v6497, %v6497
        %v6562 = vmul.f32 %v6498, %v6498
        %v6563 = vmul.f32 %v6499, %v6499
        %v6564 = vmul.f32 %v6500, %v6500
        %v6565 = vmul.f32 %v6501, %v6501
        %v6566 = vmul.f32 %v6502, %v6502
        %v6567 = vmul.f32 %v6503, %v6503
        %v6568 = vmul.f32 %v6504, %v6504
        %v6569 = vmul.f32 %v6505, %v6505
        %v6570 = vmul.f32 %v6506, %v6506
        %v6571 = vmul.f32 %v6507, %v6507
        %v6572 = vmul.f32 %v6508, %v6508
        %v6573 = vmul.f32 %v6509, %v6509
        %v6574 = vmul.f32 %v6510, %v6510
        %v6575 = vmul.f32 %v6511, %v6511
        %v6576 = vmul.f32 %v6512, %v6512
        %v6577 = vmul.f32 %v6513, %v6513
        %v6578 = vmul.f32 %v6514, %v6514
        %v6579 = vmul.f32 %v6515, %v6515
        %v6580 = vmul.f32 %v6516, %v6516
        %v6581 = vmul.f32 %v6517, %v6517
        %v6582 = vmul.f32 %v6518, %v6518
        %v6583 = vmul.f32 %v6519, %v6519
        %v6584 = vmul.f32 %v6520, %v6520
        %v6585 = vmul.f32 %v6521, %v6521
        %v6586 = vmul.f32 %v6522, %v6522
        %v6587 = vmul.f32 %v6523, %v6523
        %v6588 = vmul.f32 %v6524, %v6524
        %v6589 = vmul.f32 %v6525, %v6525
        %v6590 = vmul.f32 %v6526, %v6526
        %v6591 = vmul.f32 %v6527, %v6527
        %v6592 = vmul.f32 %v6528, %v6528
        %v6593 = vmul.f32 %v6529, %v6529
        %v6594 = vmul.f32 %v6530, %v6530
        %v6595 = vmul.f32 %v6531, %v6531
        %v6596 = vmul.f32 %v6532, %v6532
        %v6597 = vadd.f32 %v6533, %v6534
        %6598 = vadd.xlane.f32.xlu0 %v6597
        %v6599 = vpop.xlane.xlu0 %6598
        %v6600 = vadd.f32 %v6535, %v6536
        %6601 = vadd.xlane.f32.xlu0 %v6600
        %v6602 = vpop.xlane.xlu0 %6601
        %v6603 = vadd.f32 %v6537, %v6538
        %6604 = vadd.xlane.f32.xlu0 %v6603
        %v6605 = vpop.xlane.xlu0 %6604
        %v6606 = vadd.f32 %v6539, %v6540
        %6607 = vadd.xlane.f32.xlu0 %v6606
        %v6608 = vpop.xlane.xlu0 %6607
        %v6609 = vadd.f32 %v6541, %v6542
        %6610 = vadd.xlane.f32.xlu0 %v6609
        %v6611 = vpop.xlane.xlu0 %6610
        %v6612 = vadd.f32 %v6543, %v6544
        %6613 = vadd.xlane.f32.xlu0 %v6612
        %v6614 = vpop.xlane.xlu0 %6613
        %v6615 = vadd.f32 %v6545, %v6546
        %6616 = vadd.xlane.f32.xlu0 %v6615
        %v6617 = vpop.xlane.xlu0 %6616
        %v6618 = vadd.f32 %v6547, %v6548
        %6619 = vadd.xlane.f32.xlu0 %v6618
        %v6620 = vpop.xlane.xlu0 %6619
        %v6621 = vadd.f32 %v6549, %v6550
        %6622 = vadd.xlane.f32.xlu0 %v6621
        %v6623 = vpop.xlane.xlu0 %6622
        %v6624 = vadd.f32 %v6551, %v6552
        %6625 = vadd.xlane.f32.xlu0 %v6624
        %v6626 = vpop.xlane.xlu0 %6625
        %v6627 = vadd.f32 %v6553, %v6554
        %6628 = vadd.xlane.f32.xlu0 %v6627
        %v6629 = vpop.xlane.xlu0 %6628
        %v6630 = vadd.f32 %v6555, %v6556
        %6631 = vadd.xlane.f32.xlu0 %v6630
        %v6632 = vpop.xlane.xlu0 %6631
        %v6633 = vadd.f32 %v6557, %v6558
        %6634 = vadd.xlane.f32.xlu0 %v6633
        %v6635 = vpop.xlane.xlu0 %6634
        %v6636 = vadd.f32 %v6559, %v6560
        %6637 = vadd.xlane.f32.xlu0 %v6636
        %v6638 = vpop.xlane.xlu0 %6637
        %v6639 = vadd.f32 %v6561, %v6562
        %6640 = vadd.xlane.f32.xlu0 %v6639
        %v6641 = vpop.xlane.xlu0 %6640
        %v6642 = vadd.f32 %v6563, %v6564
        %6643 = vadd.xlane.f32.xlu0 %v6642
        %v6644 = vpop.xlane.xlu0 %6643
        %v6645 = vadd.f32 %v6565, %v6566
        %6646 = vadd.xlane.f32.xlu0 %v6645
        %v6647 = vpop.xlane.xlu0 %6646
        %v6648 = vadd.f32 %v6567, %v6568
        %6649 = vadd.xlane.f32.xlu0 %v6648
        %v6650 = vpop.xlane.xlu0 %6649
        %v6651 = vadd.f32 %v6569, %v6570
        %6652 = vadd.xlane.f32.xlu0 %v6651
        %v6653 = vpop.xlane.xlu0 %6652
        %v6654 = vadd.f32 %v6571, %v6572
        %6655 = vadd.xlane.f32.xlu0 %v6654
        %v6656 = vpop.xlane.xlu0 %6655
        %v6657 = vadd.f32 %v6573, %v6574
        %6658 = vadd.xlane.f32.xlu0 %v6657
        %v6659 = vpop.xlane.xlu0 %6658
        %v6660 = vadd.f32 %v6575, %v6576
        %6661 = vadd.xlane.f32.xlu0 %v6660
        %v6662 = vpop.xlane.xlu0 %6661
        %v6663 = vadd.f32 %v6577, %v6578
        %6664 = vadd.xlane.f32.xlu0 %v6663
        %v6665 = vpop.xlane.xlu0 %6664
        %v6666 = vadd.f32 %v6579, %v6580
        %6667 = vadd.xlane.f32.xlu0 %v6666
        %v6668 = vpop.xlane.xlu0 %6667
        %v6669 = vadd.f32 %v6581, %v6582
        %6670 = vadd.xlane.f32.xlu0 %v6669
        %v6671 = vpop.xlane.xlu0 %6670
        %v6672 = vadd.f32 %v6583, %v6584
        %6673 = vadd.xlane.f32.xlu0 %v6672
        %v6674 = vpop.xlane.xlu0 %6673
        %v6675 = vadd.f32 %v6585, %v6586
        %6676 = vadd.xlane.f32.xlu0 %v6675
        %v6677 = vpop.xlane.xlu0 %6676
        %v6678 = vadd.f32 %v6587, %v6588
        %6679 = vadd.xlane.f32.xlu0 %v6678
        %v6680 = vpop.xlane.xlu0 %6679
        %v6681 = vadd.f32 %v6589, %v6590
        %6682 = vadd.xlane.f32.xlu0 %v6681
        %v6683 = vpop.xlane.xlu0 %6682
        %v6684 = vadd.f32 %v6591, %v6592
        %6685 = vadd.xlane.f32.xlu0 %v6684
        %v6686 = vpop.xlane.xlu0 %6685
        %v6687 = vadd.f32 %v6593, %v6594
        %6688 = vadd.xlane.f32.xlu0 %v6687
        %v6689 = vpop.xlane.xlu0 %6688
        %v6690 = vadd.f32 %v6595, %v6596
        %6691 = vadd.xlane.f32.xlu0 %v6690
        %v6692 = vpop.xlane.xlu0 %6691
        %v6693 = vmul.f32 %v6599, %v3898
        %v6694 = vmul.f32 %v6602, %v3898
        %v6695 = vmul.f32 %v6605, %v3898
        %v6696 = vmul.f32 %v6608, %v3898
        %v6697 = vmul.f32 %v6611, %v3898
        %v6698 = vmul.f32 %v6614, %v3898
        %v6699 = vmul.f32 %v6617, %v3898
        %v6700 = vmul.f32 %v6620, %v3898
        %v6701 = vmul.f32 %v6623, %v3898
        %v6702 = vmul.f32 %v6626, %v3898
        %v6703 = vmul.f32 %v6629, %v3898
        %v6704 = vmul.f32 %v6632, %v3898
        %v6705 = vmul.f32 %v6635, %v3898
        %v6706 = vmul.f32 %v6638, %v3898
        %v6707 = vmul.f32 %v6641, %v3898
        %v6708 = vmul.f32 %v6644, %v3898
        %v6709 = vmul.f32 %v6647, %v3898
        %v6710 = vmul.f32 %v6650, %v3898
        %v6711 = vmul.f32 %v6653, %v3898
        %v6712 = vmul.f32 %v6656, %v3898
        %v6713 = vmul.f32 %v6659, %v3898
        %v6714 = vmul.f32 %v6662, %v3898
        %v6715 = vmul.f32 %v6665, %v3898
        %v6716 = vmul.f32 %v6668, %v3898
        %v6717 = vmul.f32 %v6671, %v3898
        %v6718 = vmul.f32 %v6674, %v3898
        %v6719 = vmul.f32 %v6677, %v3898
        %v6720 = vmul.f32 %v6680, %v3898
        %v6721 = vmul.f32 %v6683, %v3898
        %v6722 = vmul.f32 %v6686, %v3898
        %v6723 = vmul.f32 %v6689, %v3898
        %v6724 = vmul.f32 %v6692, %v3898
        %v6725 = vadd.f32 %v6693, 1e-06
        %v6726 = vadd.f32 %v6694, 1e-06
        %v6727 = vadd.f32 %v6695, 1e-06
        %v6728 = vadd.f32 %v6696, 1e-06
        %v6729 = vadd.f32 %v6697, 1e-06
        %v6730 = vadd.f32 %v6698, 1e-06
        %v6731 = vadd.f32 %v6699, 1e-06
        %v6732 = vadd.f32 %v6700, 1e-06
        %v6733 = vadd.f32 %v6701, 1e-06
        %v6734 = vadd.f32 %v6702, 1e-06
        %v6735 = vadd.f32 %v6703, 1e-06
        %v6736 = vadd.f32 %v6704, 1e-06
        %v6737 = vadd.f32 %v6705, 1e-06
        %v6738 = vadd.f32 %v6706, 1e-06
        %v6739 = vadd.f32 %v6707, 1e-06
        %v6740 = vadd.f32 %v6708, 1e-06
        %v6741 = vadd.f32 %v6709, 1e-06
        %v6742 = vadd.f32 %v6710, 1e-06
        %v6743 = vadd.f32 %v6711, 1e-06
        %v6744 = vadd.f32 %v6712, 1e-06
        %v6745 = vadd.f32 %v6713, 1e-06
        %v6746 = vadd.f32 %v6714, 1e-06
        %v6747 = vadd.f32 %v6715, 1e-06
        %v6748 = vadd.f32 %v6716, 1e-06
        %v6749 = vadd.f32 %v6717, 1e-06
        %v6750 = vadd.f32 %v6718, 1e-06
        %v6751 = vadd.f32 %v6719, 1e-06
        %v6752 = vadd.f32 %v6720, 1e-06
        %v6753 = vadd.f32 %v6721, 1e-06
        %v6754 = vadd.f32 %v6722, 1e-06
        %v6755 = vadd.f32 %v6723, 1e-06
        %v6756 = vadd.f32 %v6724, 1e-06
        %v6757 = vrsqrt.pop %v6725
        %v6758 = vrsqrt.pop %v6726
        %v6759 = vrsqrt.pop %v6727
        %v6760 = vrsqrt.pop %v6728
        %v6761 = vrsqrt.pop %v6729
        %v6762 = vrsqrt.pop %v6730
        %v6763 = vrsqrt.pop %v6731
        %v6764 = vrsqrt.pop %v6732
        %v6765 = vrsqrt.pop %v6733
        %v6766 = vrsqrt.pop %v6734
        %v6767 = vrsqrt.pop %v6735
        %v6768 = vrsqrt.pop %v6736
        %v6769 = vrsqrt.pop %v6737
        %v6770 = vrsqrt.pop %v6738
        %v6771 = vrsqrt.pop %v6739
        %v6772 = vrsqrt.pop %v6740
        %v6773 = vrsqrt.pop %v6741
        %v6774 = vrsqrt.pop %v6742
        %v6775 = vrsqrt.pop %v6743
        %v6776 = vrsqrt.pop %v6744
        %v6777 = vrsqrt.pop %v6745
        %v6778 = vrsqrt.pop %v6746
        %v6779 = vrsqrt.pop %v6747
        %v6780 = vrsqrt.pop %v6748
        %v6781 = vrsqrt.pop %v6749
        %v6782 = vrsqrt.pop %v6750
        %v6783 = vrsqrt.pop %v6751
        %v6784 = vrsqrt.pop %v6752
        %v6785 = vrsqrt.pop %v6753
        %v6786 = vrsqrt.pop %v6754
        %v6787 = vrsqrt.pop %v6755
        %v6788 = vrsqrt.pop %v6756
        %v6789 = vmul.f32 %v6469, %v6757
        %v6790 = vmul.f32 %v6470, %v6757
        %v6791 = vmul.f32 %v6471, %v6758
        %v6792 = vmul.f32 %v6472, %v6758
        %v6793 = vmul.f32 %v6473, %v6759
        %v6794 = vmul.f32 %v6474, %v6759
        %v6795 = vmul.f32 %v6475, %v6760
        %v6796 = vmul.f32 %v6476, %v6760
        %v6797 = vmul.f32 %v6477, %v6761
        %v6798 = vmul.f32 %v6478, %v6761
        %v6799 = vmul.f32 %v6479, %v6762
        %v6800 = vmul.f32 %v6480, %v6762
        %v6801 = vmul.f32 %v6481, %v6763
        %v6802 = vmul.f32 %v6482, %v6763
        %v6803 = vmul.f32 %v6483, %v6764
        %v6804 = vmul.f32 %v6484, %v6764
        %v6805 = vmul.f32 %v6485, %v6765
        %v6806 = vmul.f32 %v6486, %v6765
        %v6807 = vmul.f32 %v6487, %v6766
        %v6808 = vmul.f32 %v6488, %v6766
        %v6809 = vmul.f32 %v6489, %v6767
        %v6810 = vmul.f32 %v6490, %v6767
        %v6811 = vmul.f32 %v6491, %v6768
        %v6812 = vmul.f32 %v6492, %v6768
        %v6813 = vmul.f32 %v6493, %v6769
        %v6814 = vmul.f32 %v6494, %v6769
        %v6815 = vmul.f32 %v6495, %v6770
        %v6816 = vmul.f32 %v6496, %v6770
        %v6817 = vmul.f32 %v6497, %v6771
        %v6818 = vmul.f32 %v6498, %v6771
        %v6819 = vmul.f32 %v6499, %v6772
        %v6820 = vmul.f32 %v6500, %v6772
        %v6821 = vmul.f32 %v6501, %v6773
        %v6822 = vmul.f32 %v6502, %v6773
        %v6823 = vmul.f32 %v6503, %v6774
        %v6824 = vmul.f32 %v6504, %v6774
        %v6825 = vmul.f32 %v6505, %v6775
        %v6826 = vmul.f32 %v6506, %v6775
        %v6827 = vmul.f32 %v6507, %v6776
        %v6828 = vmul.f32 %v6508, %v6776
        %v6829 = vmul.f32 %v6509, %v6777
        %v6830 = vmul.f32 %v6510, %v6777
        %v6831 = vmul.f32 %v6511, %v6778
        %v6832 = vmul.f32 %v6512, %v6778
        %v6833 = vmul.f32 %v6513, %v6779
        %v6834 = vmul.f32 %v6514, %v6779
        %v6835 = vmul.f32 %v6515, %v6780
        %v6836 = vmul.f32 %v6516, %v6780
        %v6837 = vmul.f32 %v6517, %v6781
        %v6838 = vmul.f32 %v6518, %v6781
        %v6839 = vmul.f32 %v6519, %v6782
        %v6840 = vmul.f32 %v6520, %v6782
        %v6841 = vmul.f32 %v6521, %v6783
        %v6842 = vmul.f32 %v6522, %v6783
        %v6843 = vmul.f32 %v6523, %v6784
        %v6844 = vmul.f32 %v6524, %v6784
        %v6845 = vmul.f32 %v6525, %v6785
        %v6846 = vmul.f32 %v6526, %v6785
        %v6847 = vmul.f32 %v6527, %v6786
        %v6848 = vmul.f32 %v6528, %v6786
        %v6849 = vmul.f32 %v6529, %v6787
        %v6850 = vmul.f32 %v6530, %v6787
        %v6851 = vmul.f32 %v6531, %v6788
        %v6852 = vmul.f32 %v6532, %v6788
        %v6854 = vlaneseq
        %v6855 = vshrl.u32 %v6854, 7
        %v6856 = vsub.s32 0, %v6855
        %v6857 = vrot.slane %v6339, %v6856
        %v6858 = vlaneseq
        %v6859 = vshrl.u32 %v6858, 7
        %v6860 = vsub.s32 1, %v6859
        %v6861 = vrot.slane %v6339, %v6860
        %v6864 = vmul.f32 %v6789, %v6857
        %v6865 = vmul.f32 %v6790, %v6861
        %v6866 = vmul.f32 %v6791, %v6857
        %v6867 = vmul.f32 %v6792, %v6861
        %v6868 = vmul.f32 %v6793, %v6857
        %v6869 = vmul.f32 %v6794, %v6861
        %v6870 = vmul.f32 %v6795, %v6857
        %v6871 = vmul.f32 %v6796, %v6861
        %v6872 = vmul.f32 %v6797, %v6857
        %v6873 = vmul.f32 %v6798, %v6861
        %v6874 = vmul.f32 %v6799, %v6857
        %v6875 = vmul.f32 %v6800, %v6861
        %v6876 = vmul.f32 %v6801, %v6857
        %v6877 = vmul.f32 %v6802, %v6861
        %v6878 = vmul.f32 %v6803, %v6857
        %v6879 = vmul.f32 %v6804, %v6861
        %v6880 = vmul.f32 %v6805, %v6857
        %v6881 = vmul.f32 %v6806, %v6861
        %v6882 = vmul.f32 %v6807, %v6857
        %v6883 = vmul.f32 %v6808, %v6861
        %v6884 = vmul.f32 %v6809, %v6857
        %v6885 = vmul.f32 %v6810, %v6861
        %v6886 = vmul.f32 %v6811, %v6857
        %v6887 = vmul.f32 %v6812, %v6861
        %v6888 = vmul.f32 %v6813, %v6857
        %v6889 = vmul.f32 %v6814, %v6861
        %v6890 = vmul.f32 %v6815, %v6857
        %v6891 = vmul.f32 %v6816, %v6861
        %v6892 = vmul.f32 %v6817, %v6857
        %v6893 = vmul.f32 %v6818, %v6861
        %v6894 = vmul.f32 %v6819, %v6857
        %v6895 = vmul.f32 %v6820, %v6861
        %v6896 = vmul.f32 %v6821, %v6857
        %v6897 = vmul.f32 %v6822, %v6861
        %v6898 = vmul.f32 %v6823, %v6857
        %v6899 = vmul.f32 %v6824, %v6861
        %v6900 = vmul.f32 %v6825, %v6857
        %v6901 = vmul.f32 %v6826, %v6861
        %v6902 = vmul.f32 %v6827, %v6857
        %v6903 = vmul.f32 %v6828, %v6861
        %v6904 = vmul.f32 %v6829, %v6857
        %v6905 = vmul.f32 %v6830, %v6861
        %v6906 = vmul.f32 %v6831, %v6857
        %v6907 = vmul.f32 %v6832, %v6861
        %v6908 = vmul.f32 %v6833, %v6857
        %v6909 = vmul.f32 %v6834, %v6861
        %v6910 = vmul.f32 %v6835, %v6857
        %v6911 = vmul.f32 %v6836, %v6861
        %v6912 = vmul.f32 %v6837, %v6857
        %v6913 = vmul.f32 %v6838, %v6861
        %v6914 = vmul.f32 %v6839, %v6857
        %v6915 = vmul.f32 %v6840, %v6861
        %v6916 = vmul.f32 %v6841, %v6857
        %v6917 = vmul.f32 %v6842, %v6861
        %v6918 = vmul.f32 %v6843, %v6857
        %v6919 = vmul.f32 %v6844, %v6861
        %v6920 = vmul.f32 %v6845, %v6857
        %v6921 = vmul.f32 %v6846, %v6861
        %v6922 = vmul.f32 %v6847, %v6857
        %v6923 = vmul.f32 %v6848, %v6861
        %v6924 = vmul.f32 %v6849, %v6857
        %v6925 = vmul.f32 %v6850, %v6861
        %v6926 = vmul.f32 %v6851, %v6857
        %v6927 = vmul.f32 %v6852, %v6861
        %v6929 = vlaneseq
        %v6930 = vshrl.u32 %v6929, 7
        %v6931 = vsub.s32 0, %v6930
        %v6932 = vrot.slane %v6340, %v6931
        %v6933 = vlaneseq
        %v6934 = vshrl.u32 %v6933, 7
        %v6935 = vsub.s32 1, %v6934
        %v6936 = vrot.slane %v6340, %v6935
        %v6939 = vadd.f32 %v6864, %v6932
        %v6940 = vadd.f32 %v6865, %v6936
        %v6941 = vadd.f32 %v6866, %v6932
        %v6942 = vadd.f32 %v6867, %v6936
        %v6943 = vadd.f32 %v6868, %v6932
        %v6944 = vadd.f32 %v6869, %v6936
        %v6945 = vadd.f32 %v6870, %v6932
        %v6946 = vadd.f32 %v6871, %v6936
        %v6947 = vadd.f32 %v6872, %v6932
        %v6948 = vadd.f32 %v6873, %v6936
        %v6949 = vadd.f32 %v6874, %v6932
        %v6950 = vadd.f32 %v6875, %v6936
        %v6951 = vadd.f32 %v6876, %v6932
        %v6952 = vadd.f32 %v6877, %v6936
        %v6953 = vadd.f32 %v6878, %v6932
        %v6954 = vadd.f32 %v6879, %v6936
        %v6955 = vadd.f32 %v6880, %v6932
        %v6956 = vadd.f32 %v6881, %v6936
        %v6957 = vadd.f32 %v6882, %v6932
        %v6958 = vadd.f32 %v6883, %v6936
        %v6959 = vadd.f32 %v6884, %v6932
        %v6960 = vadd.f32 %v6885, %v6936
        %v6961 = vadd.f32 %v6886, %v6932
        %v6962 = vadd.f32 %v6887, %v6936
        %v6963 = vadd.f32 %v6888, %v6932
        %v6964 = vadd.f32 %v6889, %v6936
        %v6965 = vadd.f32 %v6890, %v6932
        %v6966 = vadd.f32 %v6891, %v6936
        %v6967 = vadd.f32 %v6892, %v6932
        %v6968 = vadd.f32 %v6893, %v6936
        %v6969 = vadd.f32 %v6894, %v6932
        %v6970 = vadd.f32 %v6895, %v6936
        %v6971 = vadd.f32 %v6896, %v6932
        %v6972 = vadd.f32 %v6897, %v6936
        %v6973 = vadd.f32 %v6898, %v6932
        %v6974 = vadd.f32 %v6899, %v6936
        %v6975 = vadd.f32 %v6900, %v6932
        %v6976 = vadd.f32 %v6901, %v6936
        %v6977 = vadd.f32 %v6902, %v6932
        %v6978 = vadd.f32 %v6903, %v6936
        %v6979 = vadd.f32 %v6904, %v6932
        %v6980 = vadd.f32 %v6905, %v6936
        %v6981 = vadd.f32 %v6906, %v6932
        %v6982 = vadd.f32 %v6907, %v6936
        %v6983 = vadd.f32 %v6908, %v6932
        %v6984 = vadd.f32 %v6909, %v6936
        %v6985 = vadd.f32 %v6910, %v6932
        %v6986 = vadd.f32 %v6911, %v6936
        %v6987 = vadd.f32 %v6912, %v6932
        %v6988 = vadd.f32 %v6913, %v6936
        %v6989 = vadd.f32 %v6914, %v6932
        %v6990 = vadd.f32 %v6915, %v6936
        %v6991 = vadd.f32 %v6916, %v6932
        %v6992 = vadd.f32 %v6917, %v6936
        %v6993 = vadd.f32 %v6918, %v6932
        %v6994 = vadd.f32 %v6919, %v6936
        %v6995 = vadd.f32 %v6920, %v6932
        %v6996 = vadd.f32 %v6921, %v6936
        %v6997 = vadd.f32 %v6922, %v6932
        %v6998 = vadd.f32 %v6923, %v6936
        %v6999 = vadd.f32 %v6924, %v6932
        %v7000 = vadd.f32 %v6925, %v6936
        %v7001 = vadd.f32 %v6926, %v6932
        %v7002 = vadd.f32 %v6927, %v6936
        %v7003 = vadd.f32 %v4465, %v6939
        %v7004 = vadd.f32 %v4466, %v6940
        %v7005 = vadd.f32 %v4467, %v6941
        %v7006 = vadd.f32 %v4468, %v6942
        %v7007 = vadd.f32 %v4469, %v6943
        %v7008 = vadd.f32 %v4470, %v6944
        %v7009 = vadd.f32 %v4471, %v6945
        %v7010 = vadd.f32 %v4472, %v6946
        %v7011 = vadd.f32 %v4473, %v6947
        %v7012 = vadd.f32 %v4474, %v6948
        %v7013 = vadd.f32 %v4475, %v6949
        %v7014 = vadd.f32 %v4476, %v6950
        %v7015 = vadd.f32 %v4477, %v6951
        %v7016 = vadd.f32 %v4478, %v6952
        %v7017 = vadd.f32 %v4479, %v6953
        %v7018 = vadd.f32 %v4480, %v6954
        %v7019 = vadd.f32 %v4481, %v6955
        %v7020 = vadd.f32 %v4482, %v6956
        %v7021 = vadd.f32 %v4483, %v6957
        %v7022 = vadd.f32 %v4484, %v6958
        %v7023 = vadd.f32 %v4485, %v6959
        %v7024 = vadd.f32 %v4486, %v6960
        %v7025 = vadd.f32 %v4487, %v6961
        %v7026 = vadd.f32 %v4488, %v6962
        %v7027 = vadd.f32 %v4489, %v6963
        %v7028 = vadd.f32 %v4490, %v6964
        %v7029 = vadd.f32 %v4491, %v6965
        %v7030 = vadd.f32 %v4492, %v6966
        %v7031 = vadd.f32 %v4493, %v6967
        %v7032 = vadd.f32 %v4494, %v6968
        %v7033 = vadd.f32 %v4495, %v6969
        %v7034 = vadd.f32 %v4496, %v6970
        %v7035 = vadd.f32 %v4497, %v6971
        %v7036 = vadd.f32 %v4498, %v6972
        %v7037 = vadd.f32 %v4499, %v6973
        %v7038 = vadd.f32 %v4500, %v6974
        %v7039 = vadd.f32 %v4501, %v6975
        %v7040 = vadd.f32 %v4502, %v6976
        %v7041 = vadd.f32 %v4503, %v6977
        %v7042 = vadd.f32 %v4504, %v6978
        %v7043 = vadd.f32 %v4505, %v6979
        %v7044 = vadd.f32 %v4506, %v6980
        %v7045 = vadd.f32 %v4507, %v6981
        %v7046 = vadd.f32 %v4508, %v6982
        %v7047 = vadd.f32 %v4509, %v6983
        %v7048 = vadd.f32 %v4510, %v6984
        %v7049 = vadd.f32 %v4511, %v6985
        %v7050 = vadd.f32 %v4512, %v6986
        %v7051 = vadd.f32 %v4513, %v6987
        %v7052 = vadd.f32 %v4514, %v6988
        %v7053 = vadd.f32 %v4515, %v6989
        %v7054 = vadd.f32 %v4516, %v6990
        %v7055 = vadd.f32 %v4517, %v6991
        %v7056 = vadd.f32 %v4518, %v6992
        %v7057 = vadd.f32 %v4519, %v6993
        %v7058 = vadd.f32 %v4520, %v6994
        %v7059 = vadd.f32 %v4521, %v6995
        %v7060 = vadd.f32 %v4522, %v6996
        %v7061 = vadd.f32 %v4523, %v6997
        %v7062 = vadd.f32 %v4524, %v6998
        %v7063 = vadd.f32 %v4525, %v6999
        %v7064 = vadd.f32 %v4526, %v7000
        %v7065 = vadd.f32 %v4527, %v7001
        %v7066 = vadd.f32 %v4528, %v7002
        %7067 = vst [vmem:[%s449] sm:$0xff] %v7003
        %7068 = vst [vmem:[%s449 + $0x8] sm:$0xff] %v7004
        %7069 = vst [vmem:[%s449 + $0x10] sm:$0xff] %v7005
        %7070 = vst [vmem:[%s449 + $0x18] sm:$0xff] %v7006
        %7071 = vst [vmem:[%s449 + $0x20] sm:$0xff] %v7007
        %7072 = vst [vmem:[%s449 + $0x28] sm:$0xff] %v7008
        %7073 = vst [vmem:[%s449 + $0x30] sm:$0xff] %v7009
        %7074 = vst [vmem:[%s449 + $0x38] sm:$0xff] %v7010
        %7075 = vst [vmem:[%s449 + $0x40] sm:$0xff] %v7011
        %7076 = vst [vmem:[%s449 + $0x48] sm:$0xff] %v7012
        %7077 = vst [vmem:[%s449 + $0x50] sm:$0xff] %v7013
        %7078 = vst [vmem:[%s449 + $0x58] sm:$0xff] %v7014
        %7079 = vst [vmem:[%s449 + $0x60] sm:$0xff] %v7015
        %7080 = vst [vmem:[%s449 + $0x68] sm:$0xff] %v7016
        %7081 = vst [vmem:[%s449 + $0x70] sm:$0xff] %v7017
        %7082 = vst [vmem:[%s449 + $0x78] sm:$0xff] %v7018
        %7083 = vst [vmem:[%s449 + $0x80] sm:$0xff] %v7019
        %7084 = vst [vmem:[%s449 + $0x88] sm:$0xff] %v7020
        %7085 = vst [vmem:[%s449 + $0x90] sm:$0xff] %v7021
        %7086 = vst [vmem:[%s449 + $0x98] sm:$0xff] %v7022
        %7087 = vst [vmem:[%s449 + $0xa0] sm:$0xff] %v7023
        %7088 = vst [vmem:[%s449 + $0xa8] sm:$0xff] %v7024
        %7089 = vst [vmem:[%s449 + $0xb0] sm:$0xff] %v7025
        %7090 = vst [vmem:[%s449 + $0xb8] sm:$0xff] %v7026
        %7091 = vst [vmem:[%s449 + $0xc0] sm:$0xff] %v7027
        %7092 = vst [vmem:[%s449 + $0xc8] sm:$0xff] %v7028
        %7093 = vst [vmem:[%s449 + $0xd0] sm:$0xff] %v7029
        %7094 = vst [vmem:[%s449 + $0xd8] sm:$0xff] %v7030
        %7095 = vst [vmem:[%s449 + $0xe0] sm:$0xff] %v7031
        %7096 = vst [vmem:[%s449 + $0xe8] sm:$0xff] %v7032
        %7097 = vst [vmem:[%s449 + $0xf0] sm:$0xff] %v7033
        %7098 = vst [vmem:[%s449 + $0xf8] sm:$0xff] %v7034
        %7099 = vst [vmem:[%s449 + $0x100] sm:$0xff] %v7035
        %7100 = vst [vmem:[%s449 + $0x108] sm:$0xff] %v7036
        %7101 = vst [vmem:[%s449 + $0x110] sm:$0xff] %v7037
        %7102 = vst [vmem:[%s449 + $0x118] sm:$0xff] %v7038
        %7103 = vst [vmem:[%s449 + $0x120] sm:$0xff] %v7039
        %7104 = vst [vmem:[%s449 + $0x128] sm:$0xff] %v7040
        %7105 = vst [vmem:[%s449 + $0x130] sm:$0xff] %v7041
        %7106 = vst [vmem:[%s449 + $0x138] sm:$0xff] %v7042
        %7107 = vst [vmem:[%s449 + $0x140] sm:$0xff] %v7043
        %7108 = vst [vmem:[%s449 + $0x148] sm:$0xff] %v7044
        %7109 = vst [vmem:[%s449 + $0x150] sm:$0xff] %v7045
        %7110 = vst [vmem:[%s449 + $0x158] sm:$0xff] %v7046
        %7111 = vst [vmem:[%s449 + $0x160] sm:$0xff] %v7047
        %7112 = vst [vmem:[%s449 + $0x168] sm:$0xff] %v7048
        %7113 = vst [vmem:[%s449 + $0x170] sm:$0xff] %v7049
        %7114 = vst [vmem:[%s449 + $0x178] sm:$0xff] %v7050
        %7115 = vst [vmem:[%s449 + $0x180] sm:$0xff] %v7051
        %7116 = vst [vmem:[%s449 + $0x188] sm:$0xff] %v7052
        %7117 = vst [vmem:[%s449 + $0x190] sm:$0xff] %v7053
        %7118 = vst [vmem:[%s449 + $0x198] sm:$0xff] %v7054
        %7119 = vst [vmem:[%s449 + $0x1a0] sm:$0xff] %v7055
        %7120 = vst [vmem:[%s449 + $0x1a8] sm:$0xff] %v7056
        %7121 = vst [vmem:[%s449 + $0x1b0] sm:$0xff] %v7057
        %7122 = vst [vmem:[%s449 + $0x1b8] sm:$0xff] %v7058
        %7123 = vst [vmem:[%s449 + $0x1c0] sm:$0xff] %v7059
        %7124 = vst [vmem:[%s449 + $0x1c8] sm:$0xff] %v7060
        %7125 = vst [vmem:[%s449 + $0x1d0] sm:$0xff] %v7061
        %7126 = vst [vmem:[%s449 + $0x1d8] sm:$0xff] %v7062
        %7127 = vst [vmem:[%s449 + $0x1e0] sm:$0xff] %v7063
        %7128 = vst [vmem:[%s449 + $0x1e8] sm:$0xff] %v7064
        %7129 = vst [vmem:[%s449 + $0x1f0] sm:$0xff] %v7065
        %7130 = vst [vmem:[%s449 + $0x1f8] sm:$0xff] %v7066
        %s7131 = sand.u32 %s276, 1
        %s7132 = scalar_lea.sflag [#allocation8], %s7131
        %s7133 = sand.u32 %s276, 1
        %s7134 = smul.addr %s7133, 512
        %s7135 = scalar_lea.vmem [#allocation14], %s7134
        // Predicated region
        $region97: #{tpu_custom_call.1} parent=63 // pred_check
          %p7136 = pneg %p286
        $region98: #{tpu_custom_call.1} parent=63 // pred_check_branch
          %7138 = sbr.rel (%p7136) target = $region100
        $region99: #{tpu_custom_call.1} parent=63 // pred_region
          %s7139 = smul.u32 2, %s32
          %s7141 = ssub.s32 8192, 8192
          %7142 = vsyncadd %s7132, %s7141
          %s7143 = smul.addr %s7139, 32
          %s7144 = smul.addr %s7143, 128
          %s7145 = scalar_lea.hbm %s13, %s7144
          %s7146 = sshll.u32 %s7135, 4
          %s7147 = int_to_ptr.vmem [resolvable:$true] %s7146
          %7152 = dma.vmem_to_hbm [thread:$0]  %s7147, 8192, %s7145, %s7132, 256, 256, 16
        $region100: #{tpu_custom_call.1} parent=63 // pred_fallthru
          _
      $region64: #{tpu_custom_call.1} parent=5 // pred_fallthru
        _
      %p7153 = scmp.le.s32.totalorder 2, %s27
      // Predicated region
      $region101: #{tpu_custom_call.1} parent=5 // pred_check
        %p7154 = pneg %p7153
      $region102: #{tpu_custom_call.1} parent=5 // pred_check_branch
        %7156 = sbr.rel (%p7154) target = $region104
      $region103: #{tpu_custom_call.1} parent=5 // pred_region
        %s7157 = ssub.s32 %s27, 2
        // Predicated region
        $region105: #{tpu_custom_call.1} parent=103 // pred_check
          %p7158 = pneg %p292
        $region106: #{tpu_custom_call.1} parent=103 // pred_check_branch
          %7160 = sbr.rel (%p7158) target = $region108
        $region107: #{tpu_custom_call.1} parent=103 // pred_region
          %s7161 = sand.u32 %s277, 1
          %s7162 = scalar_lea.sflag [#allocation8], %s7161
          %s7163 = sand.u32 %s277, 1
          %s7164 = smul.addr %s7163, 512
          %s7165 = scalar_lea.vmem [#allocation14], %s7164
          %7166 = dma.done %s7162, 8192
        $region108: #{tpu_custom_call.1} parent=103 // pred_fallthru
          _
      $region104: #{tpu_custom_call.1} parent=5 // pred_fallthru
        _
    $region6: #{tpu_custom_call.1} parent=1 // loop_footer
      %s31 = sadd.s32 1, %s27
    $region7: #{tpu_custom_call.1} parent=1 // loop_footer_branch
      %26 = sbr.rel target = $region3
    $region8: #{tpu_custom_call.1} parent=1 // loop_exit
      _
    %7167 = vsyncpa [#allocation7], 1
    %s7168 = scalar_lea.sflag [#allocation7], 1
    %7169 = vsyncpa %s7168, 1
    %7170 = vsyncpa [#allocation10], 1
    %7171 = vsyncpa [#allocation13], 1
    %7172 = vsyncpa [#allocation8], 1
    %s7173 = scalar_lea.sflag [#allocation8], 1
    %7174 = vsyncpa %s7173, 1
  %7175 = vsyncmov [#allocation5]
  %s7176 = vpop.sfrf %7175
  %p7177 = scmp.eq.s32.totalorder %s7176, 0
  %p7178 = pneg %p7177
  %7180 = shalt.err (%p7178)
  %s7181 = scalar_lea.sflag [#allocation5], 1
  %7182 = vsyncmov %s7181
  %s7183 = vpop.sfrf %7182
  %p7184 = scmp.eq.s32.totalorder %s7183, 0
  %p7185 = pneg %p7184
  %7187 = shalt.err (%p7185)

</llo_original>
